<compile_context>
chip_gen: v5e
topology: v5e:2x2
jax: 0.10.0
libtpu: 0.0.40
codegen_flags: <defaults>
</compile_context>

<pallas_src>
import functools

import jax
import jax.numpy as jnp
from jax.experimental import pallas as pl
from jax.experimental.pallas import tpu as pltpu


# ----------------------------- fused Pallas kernel -----------------------------


def fused_aspp_kernel(x_ref, w0_ref, s0_ref, b0_ref,
                      w1_ref, s1_ref, b1_ref, w2_ref, s2_ref, b2_ref,
                      w8_ref, s8_ref, b8_ref, wp_ref, sp_ref, bp_ref,
                      o_ref, *, W, HW, PAD, rates):
    """One batch element.  Layout: channels on sublanes, flattened H*W on lanes.

    x_ref : (C, L) bf16 -- x flattened to H*W and zero-padded by PAD = max_rate*(W+1) on both
                           sides, so any dilated tap is the contiguous slice
                           x_flat[PAD + dy*W + dx : ... + HW]; vertical out-of-bounds taps read
                           zeros, horizontal wrap-around is masked per column group.
    w0/w8 : (O, C) bf16; w1 : (NB, 9, O, C) bf16; w2 : (NB, O, O) bf16; wp : (9, O, O) bf16
    s*/b* : folded-BN per-channel scale/shift, (O, 1) or (NB, O, 1), f32
    o_ref : (O, HW) f32 -- projected output (lane-dense: HW is a multiple of 128)
    """
    f32 = jnp.float32
    bf16 = jnp.bfloat16

    def bn_relu(y, s, b):
        return jnp.maximum(y * s + b, 0.0)

    xc = x_ref[:, PAD:PAD + HW]                                   # (C, HW) original image
    col = jax.lax.broadcasted_iota(jnp.int32, (1, HW), 1) % W     # column index per lane

    # -- branch 0: 1x1 conv + BN + ReLU, accumulated straight into the projection --
    y0 = bn_relu(jnp.dot(w0_ref[...], xc, preferred_element_type=f32),
                 s0_ref[...], b0_ref[...]).astype(bf16)           # (O, HW)
    acc = jnp.dot(wp_ref[0], y0, preferred_element_type=f32)      # (O, HW) f32 accumulator

    # -- branches 1..7: dilated 3x3 conv + BN + ReLU + 1x1 conv + BN + ReLU --
    for bi, r in enumerate(rates):                                # static unroll (rates static)
        pre = None
        for kx in range(3):                                       # group taps by column shift
            dx = (kx - 1) * r
            part = None
            for ky in range(3):
                dy = (ky - 1) * r
                start = PAD + dy * W + dx
                patch = x_ref[:, start:start + HW]                # (C, HW) static lane slice
                t = jnp.dot(w1_ref[bi, ky * 3 + kx], patch,
                            preferred_element_type=f32)           # (O, HW)
                part = t if part is None else part + t
            # zero columns whose source column fell outside [0, W) (wrap into adjacent rows)
            if dx > 0:
                part = part * (col < (W - dx)).astype(f32)
            elif dx < 0:
                part = part * (col >= (-dx)).astype(f32)
            pre = part if pre is None else pre + part
        h1 = bn_relu(pre, s1_ref[bi], b1_ref[bi]).astype(bf16)                 # (O, HW)
        h2 = bn_relu(jnp.dot(w2_ref[bi], h1, preferred_element_type=f32),
                     s2_ref[bi], b2_ref[bi]).astype(bf16)                      # (O, HW)
        acc = acc + jnp.dot(wp_ref[1 + bi], h2, preferred_element_type=f32)

    # -- branch 8: global avg pool + 1x1 conv + BN + ReLU (constant over space) --
    xm = jnp.mean(xc.astype(f32), axis=1, keepdims=True).astype(bf16)          # (C, 1)
    y8 = bn_relu(jnp.dot(w8_ref[...], xm, preferred_element_type=f32),
                 s8_ref[...], b8_ref[...]).astype(bf16)                        # (O, 1)
    acc = acc + jnp.dot(wp_ref[8], y8, preferred_element_type=f32)             # broadcast over HW

    # -- projection BN + ReLU (Dropout2d(0.5) is identity in eval mode) --
    o_ref[...] = jnp.maximum(acc * sp_ref[...] + bp_ref[...], 0.0)


# ----------------------------- pallas_call wrapper ------------------------------


def _const_spec(shape):
    return pl.BlockSpec(shape, lambda n: (0,) * len(shape))


def aspp_module_plus(x_nchw, params, atrous_rates):
    """Forward pass of ASPPModule_plus (eval mode). x_nchw: (N, C, H, W) -> (N, O, H, W)."""
    N, C, H, W = x_nchw.shape
    O = params["w0"].shape[1]
    HW = H * W
    rates = tuple(int(r) for r in atrous_rates[1:8])
    NB = len(rates)
    R = max(rates)
    PAD = R * (W + 1)            # R rows of padding + R columns, in the flat layout
    L = HW + 2 * PAD

    bf16 = jnp.bfloat16

    # One shared flat zero-padded copy of x, channel-major (C on sublanes, H*W on lanes).
    xflat = jnp.pad(x_nchw.astype(bf16).reshape(N, C, HW), ((0, 0), (0, 0), (PAD, PAD)))

    # Output-channel-major weights for the (O,C)@(C,HW) orientation, cast to bf16 for the MXU.
    w0t = params["w0"].T.astype(bf16)                                           # (O, C)
    w1t = jnp.stack([jnp.transpose(params["branch"][i]["w1"], (0, 2, 1))
                     for i in range(1, 8)]).astype(bf16)                        # (NB, 9, O, C)
    w2t = jnp.stack([params["branch"][i]["w2"].T
                     for i in range(1, 8)]).astype(bf16)                        # (NB, O, O)
    w8t = params["w8"].T.astype(bf16)                                           # (O, C)
    wpt = jnp.transpose(params["wp"].reshape(9, O, O), (0, 2, 1)).astype(bf16)  # (9, O, O)

    def colv(v):                                                                # (1,O) -> (O,1)
        return v.reshape(O, 1)

    s1 = jnp.stack([colv(params["branch"][i]["s1"]) for i in range(1, 8)])
    b1 = jnp.stack([colv(params["branch"][i]["b1"]) for i in range(1, 8)])
    s2 = jnp.stack([colv(params["branch"][i]["s2"]) for i in range(1, 8)])
    b2 = jnp.stack([colv(params["branch"][i]["b2"]) for i in range(1, 8)])

    kern = functools.partial(fused_aspp_kernel, W=W, HW=HW, PAD=PAD, rates=rates)

    out = pl.pallas_call(
        kern,
        out_shape=jax.ShapeDtypeStruct((N, O, HW), jnp.float32),
        grid=(N,),
        in_specs=[
            pl.BlockSpec((None, C, L), lambda n: (n, 0, 0)),   # x (one batch element / step)
            _const_spec((O, C)),                               # w0
            _const_spec((O, 1)), _const_spec((O, 1)),          # s0, b0
            _const_spec((NB, 9, O, C)),                        # w1
            _const_spec((NB, O, 1)), _const_spec((NB, O, 1)),  # s1, b1
            _const_spec((NB, O, O)),                           # w2
            _const_spec((NB, O, 1)), _const_spec((NB, O, 1)),  # s2, b2
            _const_spec((O, C)),                               # w8
            _const_spec((O, 1)), _const_spec((O, 1)),          # s8, b8
            _const_spec((9, O, O)),                            # wp
            _const_spec((O, 1)), _const_spec((O, 1)),          # sp, bp
        ],
        out_specs=pl.BlockSpec((None, O, HW), lambda n: (n, 0, 0)),
        compiler_params=pltpu.CompilerParams(
            dimension_semantics=("parallel",)),                # megacore-friendly batch axis
    )(xflat, w0t, colv(params["s0"]), colv(params["b0"]),
      w1t, s1, b1, w2t, s2, b2,
      w8t, colv(params["s8"]), colv(params["b8"]),
      wpt, colv(params["sp"]), colv(params["bp"]))

    return out.reshape(N, O, H, W)    # (N, O, HW) -> NCHW: free reshape, no transpose


# ----------------------------- parameter init (deterministic) -------------------


def _bn_fold(key, O):
    kg, kb, km, kv = jax.random.split(key, 4)
    gamma = jax.random.uniform(kg, (1, O), jnp.float32, 0.5, 1.5)
    beta = 0.1 * jax.random.normal(kb, (1, O), jnp.float32)
    mean = 0.1 * jax.random.normal(km, (1, O), jnp.float32)
    var = jax.random.uniform(kv, (1, O), jnp.float32, 0.5, 1.5)
    scale = gamma * jax.lax.rsqrt(var + 1e-5)
    shift = beta - mean * scale
    return scale, shift


def init_params(key, C, O):
    keys = jax.random.split(key, 32)
    p = {}
    p["w0"] = jax.random.normal(keys[0], (C, O), jnp.float32) / jnp.sqrt(C)
    p["s0"], p["b0"] = _bn_fold(keys[1], O)
    p["branch"] = {}
    for i in range(1, 8):
        k1, k2, k3, k4 = jax.random.split(keys[1 + i], 4)
        p["branch"][i] = dict(
            w1=jax.random.normal(k1, (9, C, O), jnp.float32) / jnp.sqrt(9 * C),
            w2=jax.random.normal(k2, (O, O), jnp.float32) / jnp.sqrt(O),
        )
        p["branch"][i]["s1"], p["branch"][i]["b1"] = _bn_fold(k3, O)
        p["branch"][i]["s2"], p["branch"][i]["b2"] = _bn_fold(k4, O)
    p["w8"] = jax.random.normal(keys[20], (C, O), jnp.float32) / jnp.sqrt(C)
    p["s8"], p["b8"] = _bn_fold(keys[21], O)
    p["wp"] = jax.random.normal(keys[22], (9 * O, O), jnp.float32) / jnp.sqrt(9 * O)
    p["sp"], p["bp"] = _bn_fold(keys[23], O)
    return p


# ----------------------------- pure-JAX reference --------------------------------
# Mirrors the kernel's bf16 MXU-input quantization points exactly (f32 accumulation),
# so kernel-vs-reference differences come only from accumulation order.


def _q(a):
    return a.astype(jnp.bfloat16).astype(jnp.float32)


_HI = jax.lax.Precision.HIGHEST


def _ref_1x1(x, w, s, b):
    y = jnp.einsum("nhwc,co->nhwo", _q(x), _q(w), precision=_HI)
    return jnp.maximum(y * s + b, 0.0)


def _ref_dil3x3(x, w9, rate):
    N, H, W, C = x.shape
    xp = jnp.pad(_q(x), ((0, 0), (rate, rate), (rate, rate), (0, 0)))
    acc = 0.0
    for k in range(9):
        dy, dx = k // 3, k % 3
        acc = acc + jnp.einsum(
            "nhwc,co->nhwo",
            xp[:, dy * rate: dy * rate + H, dx * rate: dx * rate + W, :],
            _q(w9[k]), precision=_HI)
    return acc


def aspp_module_plus_ref(x_nchw, p, rates):
    x = jnp.transpose(x_nchw, (0, 2, 3, 1)).astype(jnp.float32)
    feats = [_ref_1x1(x, p["w0"], p["s0"], p["b0"])]
    for i in range(1, 8):
        b = p["branch"][i]
        h = jnp.maximum(_ref_dil3x3(x, b["w1"], rates[i]) * b["s1"] + b["b1"], 0.0)
        feats.append(_ref_1x1(h, b["w2"], b["s2"], b["b2"]))
    xm = jnp.mean(_q(x), axis=(1, 2), keepdims=True)
    pool = jnp.maximum(
        jnp.einsum("nhwc,co->nhwo", _q(xm), _q(p["w8"]), precision=_HI) * p["s8"] + p["b8"], 0.0)
    feats.append(jnp.broadcast_to(pool, feats[0].shape))
    y = jnp.concatenate(feats, axis=-1)
    out = _ref_1x1(y, p["wp"], p["sp"], p["bp"])
    return jnp.transpose(out, (0, 3, 1, 2))


# ----------------------------- main -----------------------------------------------


if __name__ == "__main__":
    key = jax.random.PRNGKey(0)
    kx, kp = jax.random.split(key)

    N, C, H, W = 2, 32, 16, 16               # in_channels=32 -> out_channels=4
    atrous_rates = [1, 1, 2, 3, 4, 5, 6, 7]  # indices 1..7 are used by the module
    O = C // 8

    x = jax.random.normal(kx, (N, C, H, W), jnp.float32)
    params = init_params(kp, C, O)

    fwd = jax.jit(lambda xx, pp: aspp_module_plus(xx, pp, atrous_rates))
    out = jax.block_until_ready(fwd(x, params))
    assert out.shape == (N, O, H, W), out.shape

    ref = jax.block_until_ready(aspp_module_plus_ref(x, params, atrous_rates))
    err = float(jnp.max(jnp.abs(out - ref)))
    assert err < 5e-3, err

    print("KERNEL_OK")
</pallas_src>

<mosaic_0001>
module attributes {stable_mosaic.version = 11 : i64} {
  func.func @fused_aspp_kernel(%arg0: i32, %arg1: memref<1x32x494xbf16, #tpu.memory_space<vmem>>, %arg2: memref<4x32xbf16, #tpu.memory_space<vmem>>, %arg3: memref<4x1xf32, #tpu.memory_space<vmem>>, %arg4: memref<4x1xf32, #tpu.memory_space<vmem>>, %arg5: memref<7x9x4x32xbf16, #tpu.memory_space<vmem>>, %arg6: memref<7x4x1xf32, #tpu.memory_space<vmem>>, %arg7: memref<7x4x1xf32, #tpu.memory_space<vmem>>, %arg8: memref<7x4x4xbf16, #tpu.memory_space<vmem>>, %arg9: memref<7x4x1xf32, #tpu.memory_space<vmem>>, %arg10: memref<7x4x1xf32, #tpu.memory_space<vmem>>, %arg11: memref<4x32xbf16, #tpu.memory_space<vmem>>, %arg12: memref<4x1xf32, #tpu.memory_space<vmem>>, %arg13: memref<4x1xf32, #tpu.memory_space<vmem>>, %arg14: memref<9x4x4xbf16, #tpu.memory_space<vmem>>, %arg15: memref<4x1xf32, #tpu.memory_space<vmem>>, %arg16: memref<4x1xf32, #tpu.memory_space<vmem>>, %arg17: memref<1x4x256xf32, #tpu.memory_space<vmem>>) attributes {dimension_semantics = [#tpu.dimension_semantics<parallel>], iteration_bounds = array<i64: 2>, scalar_prefetch = 0 : i64, scratch_operands = 0 : i64, tpu.core_type = #tpu.core_type<tc>, window_params = [{transform_indices = @transform_0, window_bounds = array<i64: 1, 32, 494>}, {pipeline_mode = #tpu.pipeline_mode<synchronous>, transform_indices = @transform_1, window_bounds = array<i64: 4, 32>}, {pipeline_mode = #tpu.pipeline_mode<synchronous>, transform_indices = @transform_2, window_bounds = array<i64: 4, 1>}, {pipeline_mode = #tpu.pipeline_mode<synchronous>, transform_indices = @transform_3, window_bounds = array<i64: 4, 1>}, {pipeline_mode = #tpu.pipeline_mode<synchronous>, transform_indices = @transform_4, window_bounds = array<i64: 7, 9, 4, 32>}, {pipeline_mode = #tpu.pipeline_mode<synchronous>, transform_indices = @transform_5, window_bounds = array<i64: 7, 4, 1>}, {pipeline_mode = #tpu.pipeline_mode<synchronous>, transform_indices = @transform_6, window_bounds = array<i64: 7, 4, 1>}, {pipeline_mode = #tpu.pipeline_mode<synchronous>, transform_indices = @transform_7, window_bounds = array<i64: 7, 4, 4>}, {pipeline_mode = #tpu.pipeline_mode<synchronous>, transform_indices = @transform_8, window_bounds = array<i64: 7, 4, 1>}, {pipeline_mode = #tpu.pipeline_mode<synchronous>, transform_indices = @transform_9, window_bounds = array<i64: 7, 4, 1>}, {pipeline_mode = #tpu.pipeline_mode<synchronous>, transform_indices = @transform_10, window_bounds = array<i64: 4, 32>}, {pipeline_mode = #tpu.pipeline_mode<synchronous>, transform_indices = @transform_11, window_bounds = array<i64: 4, 1>}, {pipeline_mode = #tpu.pipeline_mode<synchronous>, transform_indices = @transform_12, window_bounds = array<i64: 4, 1>}, {pipeline_mode = #tpu.pipeline_mode<synchronous>, transform_indices = @transform_13, window_bounds = array<i64: 9, 4, 4>}, {pipeline_mode = #tpu.pipeline_mode<synchronous>, transform_indices = @transform_14, window_bounds = array<i64: 4, 1>}, {pipeline_mode = #tpu.pipeline_mode<synchronous>, transform_indices = @transform_15, window_bounds = array<i64: 4, 1>}, {transform_indices = @transform_16, window_bounds = array<i64: 1, 4, 256>}]} {
    %c0 = arith.constant 0 : index
    %c0_0 = arith.constant 0 : index
    %c119 = arith.constant 119 : index
    %0 = vector.load %arg1[%c0, %c0_0, %c119] : memref<1x32x494xbf16, #tpu.memory_space<vmem>>, vector<1x32x256xbf16>
    %1 = vector.shape_cast %0 : vector<1x32x256xbf16> to vector<32x256xbf16>
    %2 = tpu.iota {dimensions = array<i32: 1>} : vector<1x256xi32>
    %c16_i32 = arith.constant 16 : i32
    %c0_i32 = arith.constant 0 : i32
    %3 = arith.cmpi eq, %c16_i32, %c0_i32 : i32
    %c1_i32 = arith.constant 1 : i32
    %4 = arith.select %3, %c1_i32, %c16_i32 : i32
    %5 = vector.broadcast %4 : i32 to vector<1x256xi32>
    %6 = arith.remsi %2, %5 : vector<1x256xi32>
    %c0_i32_1 = arith.constant 0 : i32
    %7 = vector.broadcast %c0_i32_1 : i32 to vector<1x256xi32>
    %8 = arith.cmpi ne, %6, %7 : vector<1x256xi32>
    %c0_i32_2 = arith.constant 0 : i32
    %9 = vector.broadcast %c0_i32_2 : i32 to vector<1x256xi32>
    %10 = arith.cmpi slt, %6, %9 : vector<1x256xi32>
    %c0_i32_3 = arith.constant 0 : i32
    %11 = arith.cmpi slt, %4, %c0_i32_3 : i32
    %12 = vector.broadcast %11 : i1 to vector<1x256xi1>
    %13 = vector.broadcast %12 : vector<1x256xi1> to vector<1x256xi1>
    %14 = arith.xori %10, %13 : vector<1x256xi1>
    %15 = arith.andi %14, %8 : vector<1x256xi1>
    %16 = vector.broadcast %4 : i32 to vector<1x256xi32>
    %17 = arith.addi %6, %16 : vector<1x256xi32>
    %18 = arith.select %15, %17, %6 : vector<1x256xi1>, vector<1x256xi32>
    %c0_4 = arith.constant 0 : index
    %c0_5 = arith.constant 0 : index
    %19 = vector.load %arg2[%c0_4, %c0_5] : memref<4x32xbf16, #tpu.memory_space<vmem>>, vector<4x32xbf16>
    %cst = arith.constant dense<0.000000e+00> : vector<4x256xf32>
    %20 = tpu.matmul %19, %1, %cst {dimension_numbers = #tpu.dot_dimension_numbers<[1], [0], [0], [1], [0, 0, 1, 1], [], []>} : vector<4x32xbf16>, vector<32x256xbf16>, vector<4x256xf32> -> vector<4x256xf32>
    %c0_6 = arith.constant 0 : index
    %c0_7 = arith.constant 0 : index
    %21 = vector.load %arg3[%c0_6, %c0_7] : memref<4x1xf32, #tpu.memory_space<vmem>>, vector<4x1xf32>
    %c0_8 = arith.constant 0 : index
    %c0_9 = arith.constant 0 : index
    %22 = vector.load %arg4[%c0_8, %c0_9] : memref<4x1xf32, #tpu.memory_space<vmem>>, vector<4x1xf32>
    %23 = vector.broadcast %21 : vector<4x1xf32> to vector<4x256xf32>
    %24 = arith.mulf %20, %23 : vector<4x256xf32>
    %25 = vector.broadcast %22 : vector<4x1xf32> to vector<4x256xf32>
    %26 = arith.addf %24, %25 : vector<4x256xf32>
    %cst_10 = arith.constant 0.000000e+00 : f32
    %27 = vector.broadcast %cst_10 : f32 to vector<4x256xf32>
    %28 = arith.maximumf %26, %27 : vector<4x256xf32>
    %29 = arith.truncf %28 : vector<4x256xf32> to vector<4x256xbf16>
    %c0_11 = arith.constant 0 : index
    %c0_12 = arith.constant 0 : index
    %c0_13 = arith.constant 0 : index
    %30 = vector.load %arg14[%c0_11, %c0_12, %c0_13] : memref<9x4x4xbf16, #tpu.memory_space<vmem>>, vector<1x4x4xbf16>
    %31 = vector.shape_cast %30 : vector<1x4x4xbf16> to vector<4x4xbf16>
    %cst_14 = arith.constant dense<0.000000e+00> : vector<4x256xf32>
    %32 = tpu.matmul %31, %29, %cst_14 {dimension_numbers = #tpu.dot_dimension_numbers<[1], [0], [0], [1], [0, 0, 1, 1], [], []>} : vector<4x4xbf16>, vector<4x256xbf16>, vector<4x256xf32> -> vector<4x256xf32>
    %c0_15 = arith.constant 0 : index
    %c0_16 = arith.constant 0 : index
    %c102 = arith.constant 102 : index
    %33 = vector.load %arg1[%c0_15, %c0_16, %c102] : memref<1x32x494xbf16, #tpu.memory_space<vmem>>, vector<1x32x256xbf16>
    %34 = vector.shape_cast %33 : vector<1x32x256xbf16> to vector<32x256xbf16>
    %c0_17 = arith.constant 0 : index
    %c0_18 = arith.constant 0 : index
    %c0_19 = arith.constant 0 : index
    %c0_20 = arith.constant 0 : index
    %35 = vector.load %arg5[%c0_17, %c0_18, %c0_19, %c0_20] : memref<7x9x4x32xbf16, #tpu.memory_space<vmem>>, vector<1x1x4x32xbf16>
    %36 = vector.shape_cast %35 : vector<1x1x4x32xbf16> to vector<4x32xbf16>
    %cst_21 = arith.constant dense<0.000000e+00> : vector<4x256xf32>
    %37 = tpu.matmul %36, %34, %cst_21 {dimension_numbers = #tpu.dot_dimension_numbers<[1], [0], [0], [1], [0, 0, 1, 1], [], []>} : vector<4x32xbf16>, vector<32x256xbf16>, vector<4x256xf32> -> vector<4x256xf32>
    %c0_22 = arith.constant 0 : index
    %c0_23 = arith.constant 0 : index
    %c118 = arith.constant 118 : index
    %38 = vector.load %arg1[%c0_22, %c0_23, %c118] : memref<1x32x494xbf16, #tpu.memory_space<vmem>>, vector<1x32x256xbf16>
    %39 = vector.shape_cast %38 : vector<1x32x256xbf16> to vector<32x256xbf16>
    %c0_24 = arith.constant 0 : index
    %c3 = arith.constant 3 : index
    %c0_25 = arith.constant 0 : index
    %c0_26 = arith.constant 0 : index
    %40 = vector.load %arg5[%c0_24, %c3, %c0_25, %c0_26] : memref<7x9x4x32xbf16, #tpu.memory_space<vmem>>, vector<1x1x4x32xbf16>
    %41 = vector.shape_cast %40 : vector<1x1x4x32xbf16> to vector<4x32xbf16>
    %cst_27 = arith.constant dense<0.000000e+00> : vector<4x256xf32>
    %42 = tpu.matmul %41, %39, %cst_27 {dimension_numbers = #tpu.dot_dimension_numbers<[1], [0], [0], [1], [0, 0, 1, 1], [], []>} : vector<4x32xbf16>, vector<32x256xbf16>, vector<4x256xf32> -> vector<4x256xf32>
    %43 = arith.addf %37, %42 : vector<4x256xf32>
    %c0_28 = arith.constant 0 : index
    %c0_29 = arith.constant 0 : index
    %c134 = arith.constant 134 : index
    %44 = vector.load %arg1[%c0_28, %c0_29, %c134] : memref<1x32x494xbf16, #tpu.memory_space<vmem>>, vector<1x32x256xbf16>
    %45 = vector.shape_cast %44 : vector<1x32x256xbf16> to vector<32x256xbf16>
    %c0_30 = arith.constant 0 : index
    %c6 = arith.constant 6 : index
    %c0_31 = arith.constant 0 : index
    %c0_32 = arith.constant 0 : index
    %46 = vector.load %arg5[%c0_30, %c6, %c0_31, %c0_32] : memref<7x9x4x32xbf16, #tpu.memory_space<vmem>>, vector<1x1x4x32xbf16>
    %47 = vector.shape_cast %46 : vector<1x1x4x32xbf16> to vector<4x32xbf16>
    %cst_33 = arith.constant dense<0.000000e+00> : vector<4x256xf32>
    %48 = tpu.matmul %47, %45, %cst_33 {dimension_numbers = #tpu.dot_dimension_numbers<[1], [0], [0], [1], [0, 0, 1, 1], [], []>} : vector<4x32xbf16>, vector<32x256xbf16>, vector<4x256xf32> -> vector<4x256xf32>
    %49 = arith.addf %43, %48 : vector<4x256xf32>
    %c1_i32_34 = arith.constant 1 : i32
    %50 = vector.broadcast %c1_i32_34 : i32 to vector<1x256xi32>
    %51 = arith.cmpi sge, %18, %50 : vector<1x256xi32>
    %52 = arith.extui %51 : vector<1x256xi1> to vector<1x256xi32>
    %53 = arith.sitofp %52 : vector<1x256xi32> to vector<1x256xf32>
    %54 = vector.broadcast %53 : vector<1x256xf32> to vector<4x256xf32>
    %55 = arith.mulf %49, %54 : vector<4x256xf32>
    %c0_35 = arith.constant 0 : index
    %c0_36 = arith.constant 0 : index
    %c103 = arith.constant 103 : index
    %56 = vector.load %arg1[%c0_35, %c0_36, %c103] : memref<1x32x494xbf16, #tpu.memory_space<vmem>>, vector<1x32x256xbf16>
    %57 = vector.shape_cast %56 : vector<1x32x256xbf16> to vector<32x256xbf16>
    %c0_37 = arith.constant 0 : index
    %c1 = arith.constant 1 : index
    %c0_38 = arith.constant 0 : index
    %c0_39 = arith.constant 0 : index
    %58 = vector.load %arg5[%c0_37, %c1, %c0_38, %c0_39] : memref<7x9x4x32xbf16, #tpu.memory_space<vmem>>, vector<1x1x4x32xbf16>
    %59 = vector.shape_cast %58 : vector<1x1x4x32xbf16> to vector<4x32xbf16>
    %cst_40 = arith.constant dense<0.000000e+00> : vector<4x256xf32>
    %60 = tpu.matmul %59, %57, %cst_40 {dimension_numbers = #tpu.dot_dimension_numbers<[1], [0], [0], [1], [0, 0, 1, 1], [], []>} : vector<4x32xbf16>, vector<32x256xbf16>, vector<4x256xf32> -> vector<4x256xf32>
    %c0_41 = arith.constant 0 : index
    %c0_42 = arith.constant 0 : index
    %c119_43 = arith.constant 119 : index
    %61 = vector.load %arg1[%c0_41, %c0_42, %c119_43] : memref<1x32x494xbf16, #tpu.memory_space<vmem>>, vector<1x32x256xbf16>
    %62 = vector.shape_cast %61 : vector<1x32x256xbf16> to vector<32x256xbf16>
    %c0_44 = arith.constant 0 : index
    %c4 = arith.constant 4 : index
    %c0_45 = arith.constant 0 : index
    %c0_46 = arith.constant 0 : index
    %63 = vector.load %arg5[%c0_44, %c4, %c0_45, %c0_46] : memref<7x9x4x32xbf16, #tpu.memory_space<vmem>>, vector<1x1x4x32xbf16>
    %64 = vector.shape_cast %63 : vector<1x1x4x32xbf16> to vector<4x32xbf16>
    %cst_47 = arith.constant dense<0.000000e+00> : vector<4x256xf32>
    %65 = tpu.matmul %64, %62, %cst_47 {dimension_numbers = #tpu.dot_dimension_numbers<[1], [0], [0], [1], [0, 0, 1, 1], [], []>} : vector<4x32xbf16>, vector<32x256xbf16>, vector<4x256xf32> -> vector<4x256xf32>
    %66 = arith.addf %60, %65 : vector<4x256xf32>
    %c0_48 = arith.constant 0 : index
    %c0_49 = arith.constant 0 : index
    %c135 = arith.constant 135 : index
    %67 = vector.load %arg1[%c0_48, %c0_49, %c135] : memref<1x32x494xbf16, #tpu.memory_space<vmem>>, vector<1x32x256xbf16>
    %68 = vector.shape_cast %67 : vector<1x32x256xbf16> to vector<32x256xbf16>
    %c0_50 = arith.constant 0 : index
    %c7 = arith.constant 7 : index
    %c0_51 = arith.constant 0 : index
    %c0_52 = arith.constant 0 : index
    %69 = vector.load %arg5[%c0_50, %c7, %c0_51, %c0_52] : memref<7x9x4x32xbf16, #tpu.memory_space<vmem>>, vector<1x1x4x32xbf16>
    %70 = vector.shape_cast %69 : vector<1x1x4x32xbf16> to vector<4x32xbf16>
    %cst_53 = arith.constant dense<0.000000e+00> : vector<4x256xf32>
    %71 = tpu.matmul %70, %68, %cst_53 {dimension_numbers = #tpu.dot_dimension_numbers<[1], [0], [0], [1], [0, 0, 1, 1], [], []>} : vector<4x32xbf16>, vector<32x256xbf16>, vector<4x256xf32> -> vector<4x256xf32>
    %72 = arith.addf %66, %71 : vector<4x256xf32>
    %73 = arith.addf %55, %72 : vector<4x256xf32>
    %c0_54 = arith.constant 0 : index
    %c0_55 = arith.constant 0 : index
    %c104 = arith.constant 104 : index
    %74 = vector.load %arg1[%c0_54, %c0_55, %c104] : memref<1x32x494xbf16, #tpu.memory_space<vmem>>, vector<1x32x256xbf16>
    %75 = vector.shape_cast %74 : vector<1x32x256xbf16> to vector<32x256xbf16>
    %c0_56 = arith.constant 0 : index
    %c2 = arith.constant 2 : index
    %c0_57 = arith.constant 0 : index
    %c0_58 = arith.constant 0 : index
    %76 = vector.load %arg5[%c0_56, %c2, %c0_57, %c0_58] : memref<7x9x4x32xbf16, #tpu.memory_space<vmem>>, vector<1x1x4x32xbf16>
    %77 = vector.shape_cast %76 : vector<1x1x4x32xbf16> to vector<4x32xbf16>
    %cst_59 = arith.constant dense<0.000000e+00> : vector<4x256xf32>
    %78 = tpu.matmul %77, %75, %cst_59 {dimension_numbers = #tpu.dot_dimension_numbers<[1], [0], [0], [1], [0, 0, 1, 1], [], []>} : vector<4x32xbf16>, vector<32x256xbf16>, vector<4x256xf32> -> vector<4x256xf32>
    %c0_60 = arith.constant 0 : index
    %c0_61 = arith.constant 0 : index
    %c120 = arith.constant 120 : index
    %79 = vector.load %arg1[%c0_60, %c0_61, %c120] : memref<1x32x494xbf16, #tpu.memory_space<vmem>>, vector<1x32x256xbf16>
    %80 = vector.shape_cast %79 : vector<1x32x256xbf16> to vector<32x256xbf16>
    %c0_62 = arith.constant 0 : index
    %c5 = arith.constant 5 : index
    %c0_63 = arith.constant 0 : index
    %c0_64 = arith.constant 0 : index
    %81 = vector.load %arg5[%c0_62, %c5, %c0_63, %c0_64] : memref<7x9x4x32xbf16, #tpu.memory_space<vmem>>, vector<1x1x4x32xbf16>
    %82 = vector.shape_cast %81 : vector<1x1x4x32xbf16> to vector<4x32xbf16>
    %cst_65 = arith.constant dense<0.000000e+00> : vector<4x256xf32>
    %83 = tpu.matmul %82, %80, %cst_65 {dimension_numbers = #tpu.dot_dimension_numbers<[1], [0], [0], [1], [0, 0, 1, 1], [], []>} : vector<4x32xbf16>, vector<32x256xbf16>, vector<4x256xf32> -> vector<4x256xf32>
    %84 = arith.addf %78, %83 : vector<4x256xf32>
    %c0_66 = arith.constant 0 : index
    %c0_67 = arith.constant 0 : index
    %c136 = arith.constant 136 : index
    %85 = vector.load %arg1[%c0_66, %c0_67, %c136] : memref<1x32x494xbf16, #tpu.memory_space<vmem>>, vector<1x32x256xbf16>
    %86 = vector.shape_cast %85 : vector<1x32x256xbf16> to vector<32x256xbf16>
    %c0_68 = arith.constant 0 : index
    %c8 = arith.constant 8 : index
    %c0_69 = arith.constant 0 : index
    %c0_70 = arith.constant 0 : index
    %87 = vector.load %arg5[%c0_68, %c8, %c0_69, %c0_70] : memref<7x9x4x32xbf16, #tpu.memory_space<vmem>>, vector<1x1x4x32xbf16>
    %88 = vector.shape_cast %87 : vector<1x1x4x32xbf16> to vector<4x32xbf16>
    %cst_71 = arith.constant dense<0.000000e+00> : vector<4x256xf32>
    %89 = tpu.matmul %88, %86, %cst_71 {dimension_numbers = #tpu.dot_dimension_numbers<[1], [0], [0], [1], [0, 0, 1, 1], [], []>} : vector<4x32xbf16>, vector<32x256xbf16>, vector<4x256xf32> -> vector<4x256xf32>
    %90 = arith.addf %84, %89 : vector<4x256xf32>
    %c15_i32 = arith.constant 15 : i32
    %91 = vector.broadcast %c15_i32 : i32 to vector<1x256xi32>
    %92 = arith.cmpi slt, %18, %91 : vector<1x256xi32>
    %93 = arith.extui %92 : vector<1x256xi1> to vector<1x256xi32>
    %94 = arith.sitofp %93 : vector<1x256xi32> to vector<1x256xf32>
    %95 = vector.broadcast %94 : vector<1x256xf32> to vector<4x256xf32>
    %96 = arith.mulf %90, %95 : vector<4x256xf32>
    %97 = arith.addf %73, %96 : vector<4x256xf32>
    %c0_72 = arith.constant 0 : index
    %c0_73 = arith.constant 0 : index
    %c0_74 = arith.constant 0 : index
    %98 = vector.load %arg6[%c0_72, %c0_73, %c0_74] : memref<7x4x1xf32, #tpu.memory_space<vmem>>, vector<1x4x1xf32>
    %99 = vector.shape_cast %98 : vector<1x4x1xf32> to vector<4x1xf32>
    %c0_75 = arith.constant 0 : index
    %c0_76 = arith.constant 0 : index
    %c0_77 = arith.constant 0 : index
    %100 = vector.load %arg7[%c0_75, %c0_76, %c0_77] : memref<7x4x1xf32, #tpu.memory_space<vmem>>, vector<1x4x1xf32>
    %101 = vector.shape_cast %100 : vector<1x4x1xf32> to vector<4x1xf32>
    %102 = vector.broadcast %99 : vector<4x1xf32> to vector<4x256xf32>
    %103 = arith.mulf %97, %102 : vector<4x256xf32>
    %104 = vector.broadcast %101 : vector<4x1xf32> to vector<4x256xf32>
    %105 = arith.addf %103, %104 : vector<4x256xf32>
    %cst_78 = arith.constant 0.000000e+00 : f32
    %106 = vector.broadcast %cst_78 : f32 to vector<4x256xf32>
    %107 = arith.maximumf %105, %106 : vector<4x256xf32>
    %108 = arith.truncf %107 : vector<4x256xf32> to vector<4x256xbf16>
    %c0_79 = arith.constant 0 : index
    %c0_80 = arith.constant 0 : index
    %c0_81 = arith.constant 0 : index
    %109 = vector.load %arg8[%c0_79, %c0_80, %c0_81] : memref<7x4x4xbf16, #tpu.memory_space<vmem>>, vector<1x4x4xbf16>
    %110 = vector.shape_cast %109 : vector<1x4x4xbf16> to vector<4x4xbf16>
    %cst_82 = arith.constant dense<0.000000e+00> : vector<4x256xf32>
    %111 = tpu.matmul %110, %108, %cst_82 {dimension_numbers = #tpu.dot_dimension_numbers<[1], [0], [0], [1], [0, 0, 1, 1], [], []>} : vector<4x4xbf16>, vector<4x256xbf16>, vector<4x256xf32> -> vector<4x256xf32>
    %c0_83 = arith.constant 0 : index
    %c0_84 = arith.constant 0 : index
    %c0_85 = arith.constant 0 : index
    %112 = vector.load %arg9[%c0_83, %c0_84, %c0_85] : memref<7x4x1xf32, #tpu.memory_space<vmem>>, vector<1x4x1xf32>
    %113 = vector.shape_cast %112 : vector<1x4x1xf32> to vector<4x1xf32>
    %c0_86 = arith.constant 0 : index
    %c0_87 = arith.constant 0 : index
    %c0_88 = arith.constant 0 : index
    %114 = vector.load %arg10[%c0_86, %c0_87, %c0_88] : memref<7x4x1xf32, #tpu.memory_space<vmem>>, vector<1x4x1xf32>
    %115 = vector.shape_cast %114 : vector<1x4x1xf32> to vector<4x1xf32>
    %116 = vector.broadcast %113 : vector<4x1xf32> to vector<4x256xf32>
    %117 = arith.mulf %111, %116 : vector<4x256xf32>
    %118 = vector.broadcast %115 : vector<4x1xf32> to vector<4x256xf32>
    %119 = arith.addf %117, %118 : vector<4x256xf32>
    %cst_89 = arith.constant 0.000000e+00 : f32
    %120 = vector.broadcast %cst_89 : f32 to vector<4x256xf32>
    %121 = arith.maximumf %119, %120 : vector<4x256xf32>
    %122 = arith.truncf %121 : vector<4x256xf32> to vector<4x256xbf16>
    %c1_90 = arith.constant 1 : index
    %c0_91 = arith.constant 0 : index
    %c0_92 = arith.constant 0 : index
    %123 = vector.load %arg14[%c1_90, %c0_91, %c0_92] : memref<9x4x4xbf16, #tpu.memory_space<vmem>>, vector<1x4x4xbf16>
    %124 = vector.shape_cast %123 : vector<1x4x4xbf16> to vector<4x4xbf16>
    %cst_93 = arith.constant dense<0.000000e+00> : vector<4x256xf32>
    %125 = tpu.matmul %124, %122, %cst_93 {dimension_numbers = #tpu.dot_dimension_numbers<[1], [0], [0], [1], [0, 0, 1, 1], [], []>} : vector<4x4xbf16>, vector<4x256xbf16>, vector<4x256xf32> -> vector<4x256xf32>
    %126 = arith.addf %32, %125 : vector<4x256xf32>
    %c0_94 = arith.constant 0 : index
    %c0_95 = arith.constant 0 : index
    %c85 = arith.constant 85 : index
    %127 = vector.load %arg1[%c0_94, %c0_95, %c85] : memref<1x32x494xbf16, #tpu.memory_space<vmem>>, vector<1x32x256xbf16>
    %128 = vector.shape_cast %127 : vector<1x32x256xbf16> to vector<32x256xbf16>
    %c1_96 = arith.constant 1 : index
    %c0_97 = arith.constant 0 : index
    %c0_98 = arith.constant 0 : index
    %c0_99 = arith.constant 0 : index
    %129 = vector.load %arg5[%c1_96, %c0_97, %c0_98, %c0_99] : memref<7x9x4x32xbf16, #tpu.memory_space<vmem>>, vector<1x1x4x32xbf16>
    %130 = vector.shape_cast %129 : vector<1x1x4x32xbf16> to vector<4x32xbf16>
    %cst_100 = arith.constant dense<0.000000e+00> : vector<4x256xf32>
    %131 = tpu.matmul %130, %128, %cst_100 {dimension_numbers = #tpu.dot_dimension_numbers<[1], [0], [0], [1], [0, 0, 1, 1], [], []>} : vector<4x32xbf16>, vector<32x256xbf16>, vector<4x256xf32> -> vector<4x256xf32>
    %c0_101 = arith.constant 0 : index
    %c0_102 = arith.constant 0 : index
    %c117 = arith.constant 117 : index
    %132 = vector.load %arg1[%c0_101, %c0_102, %c117] : memref<1x32x494xbf16, #tpu.memory_space<vmem>>, vector<1x32x256xbf16>
    %133 = vector.shape_cast %132 : vector<1x32x256xbf16> to vector<32x256xbf16>
    %c1_103 = arith.constant 1 : index
    %c3_104 = arith.constant 3 : index
    %c0_105 = arith.constant 0 : index
    %c0_106 = arith.constant 0 : index
    %134 = vector.load %arg5[%c1_103, %c3_104, %c0_105, %c0_106] : memref<7x9x4x32xbf16, #tpu.memory_space<vmem>>, vector<1x1x4x32xbf16>
    %135 = vector.shape_cast %134 : vector<1x1x4x32xbf16> to vector<4x32xbf16>
    %cst_107 = arith.constant dense<0.000000e+00> : vector<4x256xf32>
    %136 = tpu.matmul %135, %133, %cst_107 {dimension_numbers = #tpu.dot_dimension_numbers<[1], [0], [0], [1], [0, 0, 1, 1], [], []>} : vector<4x32xbf16>, vector<32x256xbf16>, vector<4x256xf32> -> vector<4x256xf32>
    %137 = arith.addf %131, %136 : vector<4x256xf32>
    %c0_108 = arith.constant 0 : index
    %c0_109 = arith.constant 0 : index
    %c149 = arith.constant 149 : index
    %138 = vector.load %arg1[%c0_108, %c0_109, %c149] : memref<1x32x494xbf16, #tpu.memory_space<vmem>>, vector<1x32x256xbf16>
    %139 = vector.shape_cast %138 : vector<1x32x256xbf16> to vector<32x256xbf16>
    %c1_110 = arith.constant 1 : index
    %c6_111 = arith.constant 6 : index
    %c0_112 = arith.constant 0 : index
    %c0_113 = arith.constant 0 : index
    %140 = vector.load %arg5[%c1_110, %c6_111, %c0_112, %c0_113] : memref<7x9x4x32xbf16, #tpu.memory_space<vmem>>, vector<1x1x4x32xbf16>
    %141 = vector.shape_cast %140 : vector<1x1x4x32xbf16> to vector<4x32xbf16>
    %cst_114 = arith.constant dense<0.000000e+00> : vector<4x256xf32>
    %142 = tpu.matmul %141, %139, %cst_114 {dimension_numbers = #tpu.dot_dimension_numbers<[1], [0], [0], [1], [0, 0, 1, 1], [], []>} : vector<4x32xbf16>, vector<32x256xbf16>, vector<4x256xf32> -> vector<4x256xf32>
    %143 = arith.addf %137, %142 : vector<4x256xf32>
    %c2_i32 = arith.constant 2 : i32
    %144 = vector.broadcast %c2_i32 : i32 to vector<1x256xi32>
    %145 = arith.cmpi sge, %18, %144 : vector<1x256xi32>
    %146 = arith.extui %145 : vector<1x256xi1> to vector<1x256xi32>
    %147 = arith.sitofp %146 : vector<1x256xi32> to vector<1x256xf32>
    %148 = vector.broadcast %147 : vector<1x256xf32> to vector<4x256xf32>
    %149 = arith.mulf %143, %148 : vector<4x256xf32>
    %c0_115 = arith.constant 0 : index
    %c0_116 = arith.constant 0 : index
    %c87 = arith.constant 87 : index
    %150 = vector.load %arg1[%c0_115, %c0_116, %c87] : memref<1x32x494xbf16, #tpu.memory_space<vmem>>, vector<1x32x256xbf16>
    %151 = vector.shape_cast %150 : vector<1x32x256xbf16> to vector<32x256xbf16>
    %c1_117 = arith.constant 1 : index
    %c1_118 = arith.constant 1 : index
    %c0_119 = arith.constant 0 : index
    %c0_120 = arith.constant 0 : index
    %152 = vector.load %arg5[%c1_117, %c1_118, %c0_119, %c0_120] : memref<7x9x4x32xbf16, #tpu.memory_space<vmem>>, vector<1x1x4x32xbf16>
    %153 = vector.shape_cast %152 : vector<1x1x4x32xbf16> to vector<4x32xbf16>
    %cst_121 = arith.constant dense<0.000000e+00> : vector<4x256xf32>
    %154 = tpu.matmul %153, %151, %cst_121 {dimension_numbers = #tpu.dot_dimension_numbers<[1], [0], [0], [1], [0, 0, 1, 1], [], []>} : vector<4x32xbf16>, vector<32x256xbf16>, vector<4x256xf32> -> vector<4x256xf32>
    %c0_122 = arith.constant 0 : index
    %c0_123 = arith.constant 0 : index
    %c119_124 = arith.constant 119 : index
    %155 = vector.load %arg1[%c0_122, %c0_123, %c119_124] : memref<1x32x494xbf16, #tpu.memory_space<vmem>>, vector<1x32x256xbf16>
    %156 = vector.shape_cast %155 : vector<1x32x256xbf16> to vector<32x256xbf16>
    %c1_125 = arith.constant 1 : index
    %c4_126 = arith.constant 4 : index
    %c0_127 = arith.constant 0 : index
    %c0_128 = arith.constant 0 : index
    %157 = vector.load %arg5[%c1_125, %c4_126, %c0_127, %c0_128] : memref<7x9x4x32xbf16, #tpu.memory_space<vmem>>, vector<1x1x4x32xbf16>
    %158 = vector.shape_cast %157 : vector<1x1x4x32xbf16> to vector<4x32xbf16>
    %cst_129 = arith.constant dense<0.000000e+00> : vector<4x256xf32>
    %159 = tpu.matmul %158, %156, %cst_129 {dimension_numbers = #tpu.dot_dimension_numbers<[1], [0], [0], [1], [0, 0, 1, 1], [], []>} : vector<4x32xbf16>, vector<32x256xbf16>, vector<4x256xf32> -> vector<4x256xf32>
    %160 = arith.addf %154, %159 : vector<4x256xf32>
    %c0_130 = arith.constant 0 : index
    %c0_131 = arith.constant 0 : index
    %c151 = arith.constant 151 : index
    %161 = vector.load %arg1[%c0_130, %c0_131, %c151] : memref<1x32x494xbf16, #tpu.memory_space<vmem>>, vector<1x32x256xbf16>
    %162 = vector.shape_cast %161 : vector<1x32x256xbf16> to vector<32x256xbf16>
    %c1_132 = arith.constant 1 : index
    %c7_133 = arith.constant 7 : index
    %c0_134 = arith.constant 0 : index
    %c0_135 = arith.constant 0 : index
    %163 = vector.load %arg5[%c1_132, %c7_133, %c0_134, %c0_135] : memref<7x9x4x32xbf16, #tpu.memory_space<vmem>>, vector<1x1x4x32xbf16>
    %164 = vector.shape_cast %163 : vector<1x1x4x32xbf16> to vector<4x32xbf16>
    %cst_136 = arith.constant dense<0.000000e+00> : vector<4x256xf32>
    %165 = tpu.matmul %164, %162, %cst_136 {dimension_numbers = #tpu.dot_dimension_numbers<[1], [0], [0], [1], [0, 0, 1, 1], [], []>} : vector<4x32xbf16>, vector<32x256xbf16>, vector<4x256xf32> -> vector<4x256xf32>
    %166 = arith.addf %160, %165 : vector<4x256xf32>
    %167 = arith.addf %149, %166 : vector<4x256xf32>
    %c0_137 = arith.constant 0 : index
    %c0_138 = arith.constant 0 : index
    %c89 = arith.constant 89 : index
    %168 = vector.load %arg1[%c0_137, %c0_138, %c89] : memref<1x32x494xbf16, #tpu.memory_space<vmem>>, vector<1x32x256xbf16>
    %169 = vector.shape_cast %168 : vector<1x32x256xbf16> to vector<32x256xbf16>
    %c1_139 = arith.constant 1 : index
    %c2_140 = arith.constant 2 : index
    %c0_141 = arith.constant 0 : index
    %c0_142 = arith.constant 0 : index
    %170 = vector.load %arg5[%c1_139, %c2_140, %c0_141, %c0_142] : memref<7x9x4x32xbf16, #tpu.memory_space<vmem>>, vector<1x1x4x32xbf16>
    %171 = vector.shape_cast %170 : vector<1x1x4x32xbf16> to vector<4x32xbf16>
    %cst_143 = arith.constant dense<0.000000e+00> : vector<4x256xf32>
    %172 = tpu.matmul %171, %169, %cst_143 {dimension_numbers = #tpu.dot_dimension_numbers<[1], [0], [0], [1], [0, 0, 1, 1], [], []>} : vector<4x32xbf16>, vector<32x256xbf16>, vector<4x256xf32> -> vector<4x256xf32>
    %c0_144 = arith.constant 0 : index
    %c0_145 = arith.constant 0 : index
    %c121 = arith.constant 121 : index
    %173 = vector.load %arg1[%c0_144, %c0_145, %c121] : memref<1x32x494xbf16, #tpu.memory_space<vmem>>, vector<1x32x256xbf16>
    %174 = vector.shape_cast %173 : vector<1x32x256xbf16> to vector<32x256xbf16>
    %c1_146 = arith.constant 1 : index
    %c5_147 = arith.constant 5 : index
    %c0_148 = arith.constant 0 : index
    %c0_149 = arith.constant 0 : index
    %175 = vector.load %arg5[%c1_146, %c5_147, %c0_148, %c0_149] : memref<7x9x4x32xbf16, #tpu.memory_space<vmem>>, vector<1x1x4x32xbf16>
    %176 = vector.shape_cast %175 : vector<1x1x4x32xbf16> to vector<4x32xbf16>
    %cst_150 = arith.constant dense<0.000000e+00> : vector<4x256xf32>
    %177 = tpu.matmul %176, %174, %cst_150 {dimension_numbers = #tpu.dot_dimension_numbers<[1], [0], [0], [1], [0, 0, 1, 1], [], []>} : vector<4x32xbf16>, vector<32x256xbf16>, vector<4x256xf32> -> vector<4x256xf32>
    %178 = arith.addf %172, %177 : vector<4x256xf32>
    %c0_151 = arith.constant 0 : index
    %c0_152 = arith.constant 0 : index
    %c153 = arith.constant 153 : index
    %179 = vector.load %arg1[%c0_151, %c0_152, %c153] : memref<1x32x494xbf16, #tpu.memory_space<vmem>>, vector<1x32x256xbf16>
    %180 = vector.shape_cast %179 : vector<1x32x256xbf16> to vector<32x256xbf16>
    %c1_153 = arith.constant 1 : index
    %c8_154 = arith.constant 8 : index
    %c0_155 = arith.constant 0 : index
    %c0_156 = arith.constant 0 : index
    %181 = vector.load %arg5[%c1_153, %c8_154, %c0_155, %c0_156] : memref<7x9x4x32xbf16, #tpu.memory_space<vmem>>, vector<1x1x4x32xbf16>
    %182 = vector.shape_cast %181 : vector<1x1x4x32xbf16> to vector<4x32xbf16>
    %cst_157 = arith.constant dense<0.000000e+00> : vector<4x256xf32>
    %183 = tpu.matmul %182, %180, %cst_157 {dimension_numbers = #tpu.dot_dimension_numbers<[1], [0], [0], [1], [0, 0, 1, 1], [], []>} : vector<4x32xbf16>, vector<32x256xbf16>, vector<4x256xf32> -> vector<4x256xf32>
    %184 = arith.addf %178, %183 : vector<4x256xf32>
    %c14_i32 = arith.constant 14 : i32
    %185 = vector.broadcast %c14_i32 : i32 to vector<1x256xi32>
    %186 = arith.cmpi slt, %18, %185 : vector<1x256xi32>
    %187 = arith.extui %186 : vector<1x256xi1> to vector<1x256xi32>
    %188 = arith.sitofp %187 : vector<1x256xi32> to vector<1x256xf32>
    %189 = vector.broadcast %188 : vector<1x256xf32> to vector<4x256xf32>
    %190 = arith.mulf %184, %189 : vector<4x256xf32>
    %191 = arith.addf %167, %190 : vector<4x256xf32>
    %c1_158 = arith.constant 1 : index
    %c0_159 = arith.constant 0 : index
    %c0_160 = arith.constant 0 : index
    %192 = vector.load %arg6[%c1_158, %c0_159, %c0_160] : memref<7x4x1xf32, #tpu.memory_space<vmem>>, vector<1x4x1xf32>
    %193 = vector.shape_cast %192 : vector<1x4x1xf32> to vector<4x1xf32>
    %c1_161 = arith.constant 1 : index
    %c0_162 = arith.constant 0 : index
    %c0_163 = arith.constant 0 : index
    %194 = vector.load %arg7[%c1_161, %c0_162, %c0_163] : memref<7x4x1xf32, #tpu.memory_space<vmem>>, vector<1x4x1xf32>
    %195 = vector.shape_cast %194 : vector<1x4x1xf32> to vector<4x1xf32>
    %196 = vector.broadcast %193 : vector<4x1xf32> to vector<4x256xf32>
    %197 = arith.mulf %191, %196 : vector<4x256xf32>
    %198 = vector.broadcast %195 : vector<4x1xf32> to vector<4x256xf32>
    %199 = arith.addf %197, %198 : vector<4x256xf32>
    %cst_164 = arith.constant 0.000000e+00 : f32
    %200 = vector.broadcast %cst_164 : f32 to vector<4x256xf32>
    %201 = arith.maximumf %199, %200 : vector<4x256xf32>
    %202 = arith.truncf %201 : vector<4x256xf32> to vector<4x256xbf16>
    %c1_165 = arith.constant 1 : index
    %c0_166 = arith.constant 0 : index
    %c0_167 = arith.constant 0 : index
    %203 = vector.load %arg8[%c1_165, %c0_166, %c0_167] : memref<7x4x4xbf16, #tpu.memory_space<vmem>>, vector<1x4x4xbf16>
    %204 = vector.shape_cast %203 : vector<1x4x4xbf16> to vector<4x4xbf16>
    %cst_168 = arith.constant dense<0.000000e+00> : vector<4x256xf32>
    %205 = tpu.matmul %204, %202, %cst_168 {dimension_numbers = #tpu.dot_dimension_numbers<[1], [0], [0], [1], [0, 0, 1, 1], [], []>} : vector<4x4xbf16>, vector<4x256xbf16>, vector<4x256xf32> -> vector<4x256xf32>
    %c1_169 = arith.constant 1 : index
    %c0_170 = arith.constant 0 : index
    %c0_171 = arith.constant 0 : index
    %206 = vector.load %arg9[%c1_169, %c0_170, %c0_171] : memref<7x4x1xf32, #tpu.memory_space<vmem>>, vector<1x4x1xf32>
    %207 = vector.shape_cast %206 : vector<1x4x1xf32> to vector<4x1xf32>
    %c1_172 = arith.constant 1 : index
    %c0_173 = arith.constant 0 : index
    %c0_174 = arith.constant 0 : index
    %208 = vector.load %arg10[%c1_172, %c0_173, %c0_174] : memref<7x4x1xf32, #tpu.memory_space<vmem>>, vector<1x4x1xf32>
    %209 = vector.shape_cast %208 : vector<1x4x1xf32> to vector<4x1xf32>
    %210 = vector.broadcast %207 : vector<4x1xf32> to vector<4x256xf32>
    %211 = arith.mulf %205, %210 : vector<4x256xf32>
    %212 = vector.broadcast %209 : vector<4x1xf32> to vector<4x256xf32>
    %213 = arith.addf %211, %212 : vector<4x256xf32>
    %cst_175 = arith.constant 0.000000e+00 : f32
    %214 = vector.broadcast %cst_175 : f32 to vector<4x256xf32>
    %215 = arith.maximumf %213, %214 : vector<4x256xf32>
    %216 = arith.truncf %215 : vector<4x256xf32> to vector<4x256xbf16>
    %c2_176 = arith.constant 2 : index
    %c0_177 = arith.constant 0 : index
    %c0_178 = arith.constant 0 : index
    %217 = vector.load %arg14[%c2_176, %c0_177, %c0_178] : memref<9x4x4xbf16, #tpu.memory_space<vmem>>, vector<1x4x4xbf16>
    %218 = vector.shape_cast %217 : vector<1x4x4xbf16> to vector<4x4xbf16>
    %cst_179 = arith.constant dense<0.000000e+00> : vector<4x256xf32>
    %219 = tpu.matmul %218, %216, %cst_179 {dimension_numbers = #tpu.dot_dimension_numbers<[1], [0], [0], [1], [0, 0, 1, 1], [], []>} : vector<4x4xbf16>, vector<4x256xbf16>, vector<4x256xf32> -> vector<4x256xf32>
    %220 = arith.addf %126, %219 : vector<4x256xf32>
    %c0_180 = arith.constant 0 : index
    %c0_181 = arith.constant 0 : index
    %c68 = arith.constant 68 : index
    %221 = vector.load %arg1[%c0_180, %c0_181, %c68] : memref<1x32x494xbf16, #tpu.memory_space<vmem>>, vector<1x32x256xbf16>
    %222 = vector.shape_cast %221 : vector<1x32x256xbf16> to vector<32x256xbf16>
    %c2_182 = arith.constant 2 : index
    %c0_183 = arith.constant 0 : index
    %c0_184 = arith.constant 0 : index
    %c0_185 = arith.constant 0 : index
    %223 = vector.load %arg5[%c2_182, %c0_183, %c0_184, %c0_185] : memref<7x9x4x32xbf16, #tpu.memory_space<vmem>>, vector<1x1x4x32xbf16>
    %224 = vector.shape_cast %223 : vector<1x1x4x32xbf16> to vector<4x32xbf16>
    %cst_186 = arith.constant dense<0.000000e+00> : vector<4x256xf32>
    %225 = tpu.matmul %224, %222, %cst_186 {dimension_numbers = #tpu.dot_dimension_numbers<[1], [0], [0], [1], [0, 0, 1, 1], [], []>} : vector<4x32xbf16>, vector<32x256xbf16>, vector<4x256xf32> -> vector<4x256xf32>
    %c0_187 = arith.constant 0 : index
    %c0_188 = arith.constant 0 : index
    %c116 = arith.constant 116 : index
    %226 = vector.load %arg1[%c0_187, %c0_188, %c116] : memref<1x32x494xbf16, #tpu.memory_space<vmem>>, vector<1x32x256xbf16>
    %227 = vector.shape_cast %226 : vector<1x32x256xbf16> to vector<32x256xbf16>
    %c2_189 = arith.constant 2 : index
    %c3_190 = arith.constant 3 : index
    %c0_191 = arith.constant 0 : index
    %c0_192 = arith.constant 0 : index
    %228 = vector.load %arg5[%c2_189, %c3_190, %c0_191, %c0_192] : memref<7x9x4x32xbf16, #tpu.memory_space<vmem>>, vector<1x1x4x32xbf16>
    %229 = vector.shape_cast %228 : vector<1x1x4x32xbf16> to vector<4x32xbf16>
    %cst_193 = arith.constant dense<0.000000e+00> : vector<4x256xf32>
    %230 = tpu.matmul %229, %227, %cst_193 {dimension_numbers = #tpu.dot_dimension_numbers<[1], [0], [0], [1], [0, 0, 1, 1], [], []>} : vector<4x32xbf16>, vector<32x256xbf16>, vector<4x256xf32> -> vector<4x256xf32>
    %231 = arith.addf %225, %230 : vector<4x256xf32>
    %c0_194 = arith.constant 0 : index
    %c0_195 = arith.constant 0 : index
    %c164 = arith.constant 164 : index
    %232 = vector.load %arg1[%c0_194, %c0_195, %c164] : memref<1x32x494xbf16, #tpu.memory_space<vmem>>, vector<1x32x256xbf16>
    %233 = vector.shape_cast %232 : vector<1x32x256xbf16> to vector<32x256xbf16>
    %c2_196 = arith.constant 2 : index
    %c6_197 = arith.constant 6 : index
    %c0_198 = arith.constant 0 : index
    %c0_199 = arith.constant 0 : index
    %234 = vector.load %arg5[%c2_196, %c6_197, %c0_198, %c0_199] : memref<7x9x4x32xbf16, #tpu.memory_space<vmem>>, vector<1x1x4x32xbf16>
    %235 = vector.shape_cast %234 : vector<1x1x4x32xbf16> to vector<4x32xbf16>
    %cst_200 = arith.constant dense<0.000000e+00> : vector<4x256xf32>
    %236 = tpu.matmul %235, %233, %cst_200 {dimension_numbers = #tpu.dot_dimension_numbers<[1], [0], [0], [1], [0, 0, 1, 1], [], []>} : vector<4x32xbf16>, vector<32x256xbf16>, vector<4x256xf32> -> vector<4x256xf32>
    %237 = arith.addf %231, %236 : vector<4x256xf32>
    %c3_i32 = arith.constant 3 : i32
    %238 = vector.broadcast %c3_i32 : i32 to vector<1x256xi32>
    %239 = arith.cmpi sge, %18, %238 : vector<1x256xi32>
    %240 = arith.extui %239 : vector<1x256xi1> to vector<1x256xi32>
    %241 = arith.sitofp %240 : vector<1x256xi32> to vector<1x256xf32>
    %242 = vector.broadcast %241 : vector<1x256xf32> to vector<4x256xf32>
    %243 = arith.mulf %237, %242 : vector<4x256xf32>
    %c0_201 = arith.constant 0 : index
    %c0_202 = arith.constant 0 : index
    %c71 = arith.constant 71 : index
    %244 = vector.load %arg1[%c0_201, %c0_202, %c71] : memref<1x32x494xbf16, #tpu.memory_space<vmem>>, vector<1x32x256xbf16>
    %245 = vector.shape_cast %244 : vector<1x32x256xbf16> to vector<32x256xbf16>
    %c2_203 = arith.constant 2 : index
    %c1_204 = arith.constant 1 : index
    %c0_205 = arith.constant 0 : index
    %c0_206 = arith.constant 0 : index
    %246 = vector.load %arg5[%c2_203, %c1_204, %c0_205, %c0_206] : memref<7x9x4x32xbf16, #tpu.memory_space<vmem>>, vector<1x1x4x32xbf16>
    %247 = vector.shape_cast %246 : vector<1x1x4x32xbf16> to vector<4x32xbf16>
    %cst_207 = arith.constant dense<0.000000e+00> : vector<4x256xf32>
    %248 = tpu.matmul %247, %245, %cst_207 {dimension_numbers = #tpu.dot_dimension_numbers<[1], [0], [0], [1], [0, 0, 1, 1], [], []>} : vector<4x32xbf16>, vector<32x256xbf16>, vector<4x256xf32> -> vector<4x256xf32>
    %c0_208 = arith.constant 0 : index
    %c0_209 = arith.constant 0 : index
    %c119_210 = arith.constant 119 : index
    %249 = vector.load %arg1[%c0_208, %c0_209, %c119_210] : memref<1x32x494xbf16, #tpu.memory_space<vmem>>, vector<1x32x256xbf16>
    %250 = vector.shape_cast %249 : vector<1x32x256xbf16> to vector<32x256xbf16>
    %c2_211 = arith.constant 2 : index
    %c4_212 = arith.constant 4 : index
    %c0_213 = arith.constant 0 : index
    %c0_214 = arith.constant 0 : index
    %251 = vector.load %arg5[%c2_211, %c4_212, %c0_213, %c0_214] : memref<7x9x4x32xbf16, #tpu.memory_space<vmem>>, vector<1x1x4x32xbf16>
    %252 = vector.shape_cast %251 : vector<1x1x4x32xbf16> to vector<4x32xbf16>
    %cst_215 = arith.constant dense<0.000000e+00> : vector<4x256xf32>
    %253 = tpu.matmul %252, %250, %cst_215 {dimension_numbers = #tpu.dot_dimension_numbers<[1], [0], [0], [1], [0, 0, 1, 1], [], []>} : vector<4x32xbf16>, vector<32x256xbf16>, vector<4x256xf32> -> vector<4x256xf32>
    %254 = arith.addf %248, %253 : vector<4x256xf32>
    %c0_216 = arith.constant 0 : index
    %c0_217 = arith.constant 0 : index
    %c167 = arith.constant 167 : index
    %255 = vector.load %arg1[%c0_216, %c0_217, %c167] : memref<1x32x494xbf16, #tpu.memory_space<vmem>>, vector<1x32x256xbf16>
    %256 = vector.shape_cast %255 : vector<1x32x256xbf16> to vector<32x256xbf16>
    %c2_218 = arith.constant 2 : index
    %c7_219 = arith.constant 7 : index
    %c0_220 = arith.constant 0 : index
    %c0_221 = arith.constant 0 : index
    %257 = vector.load %arg5[%c2_218, %c7_219, %c0_220, %c0_221] : memref<7x9x4x32xbf16, #tpu.memory_space<vmem>>, vector<1x1x4x32xbf16>
    %258 = vector.shape_cast %257 : vector<1x1x4x32xbf16> to vector<4x32xbf16>
    %cst_222 = arith.constant dense<0.000000e+00> : vector<4x256xf32>
    %259 = tpu.matmul %258, %256, %cst_222 {dimension_numbers = #tpu.dot_dimension_numbers<[1], [0], [0], [1], [0, 0, 1, 1], [], []>} : vector<4x32xbf16>, vector<32x256xbf16>, vector<4x256xf32> -> vector<4x256xf32>
    %260 = arith.addf %254, %259 : vector<4x256xf32>
    %261 = arith.addf %243, %260 : vector<4x256xf32>
    %c0_223 = arith.constant 0 : index
    %c0_224 = arith.constant 0 : index
    %c74 = arith.constant 74 : index
    %262 = vector.load %arg1[%c0_223, %c0_224, %c74] : memref<1x32x494xbf16, #tpu.memory_space<vmem>>, vector<1x32x256xbf16>
    %263 = vector.shape_cast %262 : vector<1x32x256xbf16> to vector<32x256xbf16>
    %c2_225 = arith.constant 2 : index
    %c2_226 = arith.constant 2 : index
    %c0_227 = arith.constant 0 : index
    %c0_228 = arith.constant 0 : index
    %264 = vector.load %arg5[%c2_225, %c2_226, %c0_227, %c0_228] : memref<7x9x4x32xbf16, #tpu.memory_space<vmem>>, vector<1x1x4x32xbf16>
    %265 = vector.shape_cast %264 : vector<1x1x4x32xbf16> to vector<4x32xbf16>
    %cst_229 = arith.constant dense<0.000000e+00> : vector<4x256xf32>
    %266 = tpu.matmul %265, %263, %cst_229 {dimension_numbers = #tpu.dot_dimension_numbers<[1], [0], [0], [1], [0, 0, 1, 1], [], []>} : vector<4x32xbf16>, vector<32x256xbf16>, vector<4x256xf32> -> vector<4x256xf32>
    %c0_230 = arith.constant 0 : index
    %c0_231 = arith.constant 0 : index
    %c122 = arith.constant 122 : index
    %267 = vector.load %arg1[%c0_230, %c0_231, %c122] : memref<1x32x494xbf16, #tpu.memory_space<vmem>>, vector<1x32x256xbf16>
    %268 = vector.shape_cast %267 : vector<1x32x256xbf16> to vector<32x256xbf16>
    %c2_232 = arith.constant 2 : index
    %c5_233 = arith.constant 5 : index
    %c0_234 = arith.constant 0 : index
    %c0_235 = arith.constant 0 : index
    %269 = vector.load %arg5[%c2_232, %c5_233, %c0_234, %c0_235] : memref<7x9x4x32xbf16, #tpu.memory_space<vmem>>, vector<1x1x4x32xbf16>
    %270 = vector.shape_cast %269 : vector<1x1x4x32xbf16> to vector<4x32xbf16>
    %cst_236 = arith.constant dense<0.000000e+00> : vector<4x256xf32>
    %271 = tpu.matmul %270, %268, %cst_236 {dimension_numbers = #tpu.dot_dimension_numbers<[1], [0], [0], [1], [0, 0, 1, 1], [], []>} : vector<4x32xbf16>, vector<32x256xbf16>, vector<4x256xf32> -> vector<4x256xf32>
    %272 = arith.addf %266, %271 : vector<4x256xf32>
    %c0_237 = arith.constant 0 : index
    %c0_238 = arith.constant 0 : index
    %c170 = arith.constant 170 : index
    %273 = vector.load %arg1[%c0_237, %c0_238, %c170] : memref<1x32x494xbf16, #tpu.memory_space<vmem>>, vector<1x32x256xbf16>
    %274 = vector.shape_cast %273 : vector<1x32x256xbf16> to vector<32x256xbf16>
    %c2_239 = arith.constant 2 : index
    %c8_240 = arith.constant 8 : index
    %c0_241 = arith.constant 0 : index
    %c0_242 = arith.constant 0 : index
    %275 = vector.load %arg5[%c2_239, %c8_240, %c0_241, %c0_242] : memref<7x9x4x32xbf16, #tpu.memory_space<vmem>>, vector<1x1x4x32xbf16>
    %276 = vector.shape_cast %275 : vector<1x1x4x32xbf16> to vector<4x32xbf16>
    %cst_243 = arith.constant dense<0.000000e+00> : vector<4x256xf32>
    %277 = tpu.matmul %276, %274, %cst_243 {dimension_numbers = #tpu.dot_dimension_numbers<[1], [0], [0], [1], [0, 0, 1, 1], [], []>} : vector<4x32xbf16>, vector<32x256xbf16>, vector<4x256xf32> -> vector<4x256xf32>
    %278 = arith.addf %272, %277 : vector<4x256xf32>
    %c13_i32 = arith.constant 13 : i32
    %279 = vector.broadcast %c13_i32 : i32 to vector<1x256xi32>
    %280 = arith.cmpi slt, %18, %279 : vector<1x256xi32>
    %281 = arith.extui %280 : vector<1x256xi1> to vector<1x256xi32>
    %282 = arith.sitofp %281 : vector<1x256xi32> to vector<1x256xf32>
    %283 = vector.broadcast %282 : vector<1x256xf32> to vector<4x256xf32>
    %284 = arith.mulf %278, %283 : vector<4x256xf32>
    %285 = arith.addf %261, %284 : vector<4x256xf32>
    %c2_244 = arith.constant 2 : index
    %c0_245 = arith.constant 0 : index
    %c0_246 = arith.constant 0 : index
    %286 = vector.load %arg6[%c2_244, %c0_245, %c0_246] : memref<7x4x1xf32, #tpu.memory_space<vmem>>, vector<1x4x1xf32>
    %287 = vector.shape_cast %286 : vector<1x4x1xf32> to vector<4x1xf32>
    %c2_247 = arith.constant 2 : index
    %c0_248 = arith.constant 0 : index
    %c0_249 = arith.constant 0 : index
    %288 = vector.load %arg7[%c2_247, %c0_248, %c0_249] : memref<7x4x1xf32, #tpu.memory_space<vmem>>, vector<1x4x1xf32>
    %289 = vector.shape_cast %288 : vector<1x4x1xf32> to vector<4x1xf32>
    %290 = vector.broadcast %287 : vector<4x1xf32> to vector<4x256xf32>
    %291 = arith.mulf %285, %290 : vector<4x256xf32>
    %292 = vector.broadcast %289 : vector<4x1xf32> to vector<4x256xf32>
    %293 = arith.addf %291, %292 : vector<4x256xf32>
    %cst_250 = arith.constant 0.000000e+00 : f32
    %294 = vector.broadcast %cst_250 : f32 to vector<4x256xf32>
    %295 = arith.maximumf %293, %294 : vector<4x256xf32>
    %296 = arith.truncf %295 : vector<4x256xf32> to vector<4x256xbf16>
    %c2_251 = arith.constant 2 : index
    %c0_252 = arith.constant 0 : index
    %c0_253 = arith.constant 0 : index
    %297 = vector.load %arg8[%c2_251, %c0_252, %c0_253] : memref<7x4x4xbf16, #tpu.memory_space<vmem>>, vector<1x4x4xbf16>
    %298 = vector.shape_cast %297 : vector<1x4x4xbf16> to vector<4x4xbf16>
    %cst_254 = arith.constant dense<0.000000e+00> : vector<4x256xf32>
    %299 = tpu.matmul %298, %296, %cst_254 {dimension_numbers = #tpu.dot_dimension_numbers<[1], [0], [0], [1], [0, 0, 1, 1], [], []>} : vector<4x4xbf16>, vector<4x256xbf16>, vector<4x256xf32> -> vector<4x256xf32>
    %c2_255 = arith.constant 2 : index
    %c0_256 = arith.constant 0 : index
    %c0_257 = arith.constant 0 : index
    %300 = vector.load %arg9[%c2_255, %c0_256, %c0_257] : memref<7x4x1xf32, #tpu.memory_space<vmem>>, vector<1x4x1xf32>
    %301 = vector.shape_cast %300 : vector<1x4x1xf32> to vector<4x1xf32>
    %c2_258 = arith.constant 2 : index
    %c0_259 = arith.constant 0 : index
    %c0_260 = arith.constant 0 : index
    %302 = vector.load %arg10[%c2_258, %c0_259, %c0_260] : memref<7x4x1xf32, #tpu.memory_space<vmem>>, vector<1x4x1xf32>
    %303 = vector.shape_cast %302 : vector<1x4x1xf32> to vector<4x1xf32>
    %304 = vector.broadcast %301 : vector<4x1xf32> to vector<4x256xf32>
    %305 = arith.mulf %299, %304 : vector<4x256xf32>
    %306 = vector.broadcast %303 : vector<4x1xf32> to vector<4x256xf32>
    %307 = arith.addf %305, %306 : vector<4x256xf32>
    %cst_261 = arith.constant 0.000000e+00 : f32
    %308 = vector.broadcast %cst_261 : f32 to vector<4x256xf32>
    %309 = arith.maximumf %307, %308 : vector<4x256xf32>
    %310 = arith.truncf %309 : vector<4x256xf32> to vector<4x256xbf16>
    %c3_262 = arith.constant 3 : index
    %c0_263 = arith.constant 0 : index
    %c0_264 = arith.constant 0 : index
    %311 = vector.load %arg14[%c3_262, %c0_263, %c0_264] : memref<9x4x4xbf16, #tpu.memory_space<vmem>>, vector<1x4x4xbf16>
    %312 = vector.shape_cast %311 : vector<1x4x4xbf16> to vector<4x4xbf16>
    %cst_265 = arith.constant dense<0.000000e+00> : vector<4x256xf32>
    %313 = tpu.matmul %312, %310, %cst_265 {dimension_numbers = #tpu.dot_dimension_numbers<[1], [0], [0], [1], [0, 0, 1, 1], [], []>} : vector<4x4xbf16>, vector<4x256xbf16>, vector<4x256xf32> -> vector<4x256xf32>
    %314 = arith.addf %220, %313 : vector<4x256xf32>
    %c0_266 = arith.constant 0 : index
    %c0_267 = arith.constant 0 : index
    %c51 = arith.constant 51 : index
    %315 = vector.load %arg1[%c0_266, %c0_267, %c51] : memref<1x32x494xbf16, #tpu.memory_space<vmem>>, vector<1x32x256xbf16>
    %316 = vector.shape_cast %315 : vector<1x32x256xbf16> to vector<32x256xbf16>
    %c3_268 = arith.constant 3 : index
    %c0_269 = arith.constant 0 : index
    %c0_270 = arith.constant 0 : index
    %c0_271 = arith.constant 0 : index
    %317 = vector.load %arg5[%c3_268, %c0_269, %c0_270, %c0_271] : memref<7x9x4x32xbf16, #tpu.memory_space<vmem>>, vector<1x1x4x32xbf16>
    %318 = vector.shape_cast %317 : vector<1x1x4x32xbf16> to vector<4x32xbf16>
    %cst_272 = arith.constant dense<0.000000e+00> : vector<4x256xf32>
    %319 = tpu.matmul %318, %316, %cst_272 {dimension_numbers = #tpu.dot_dimension_numbers<[1], [0], [0], [1], [0, 0, 1, 1], [], []>} : vector<4x32xbf16>, vector<32x256xbf16>, vector<4x256xf32> -> vector<4x256xf32>
    %c0_273 = arith.constant 0 : index
    %c0_274 = arith.constant 0 : index
    %c115 = arith.constant 115 : index
    %320 = vector.load %arg1[%c0_273, %c0_274, %c115] : memref<1x32x494xbf16, #tpu.memory_space<vmem>>, vector<1x32x256xbf16>
    %321 = vector.shape_cast %320 : vector<1x32x256xbf16> to vector<32x256xbf16>
    %c3_275 = arith.constant 3 : index
    %c3_276 = arith.constant 3 : index
    %c0_277 = arith.constant 0 : index
    %c0_278 = arith.constant 0 : index
    %322 = vector.load %arg5[%c3_275, %c3_276, %c0_277, %c0_278] : memref<7x9x4x32xbf16, #tpu.memory_space<vmem>>, vector<1x1x4x32xbf16>
    %323 = vector.shape_cast %322 : vector<1x1x4x32xbf16> to vector<4x32xbf16>
    %cst_279 = arith.constant dense<0.000000e+00> : vector<4x256xf32>
    %324 = tpu.matmul %323, %321, %cst_279 {dimension_numbers = #tpu.dot_dimension_numbers<[1], [0], [0], [1], [0, 0, 1, 1], [], []>} : vector<4x32xbf16>, vector<32x256xbf16>, vector<4x256xf32> -> vector<4x256xf32>
    %325 = arith.addf %319, %324 : vector<4x256xf32>
    %c0_280 = arith.constant 0 : index
    %c0_281 = arith.constant 0 : index
    %c179 = arith.constant 179 : index
    %326 = vector.load %arg1[%c0_280, %c0_281, %c179] : memref<1x32x494xbf16, #tpu.memory_space<vmem>>, vector<1x32x256xbf16>
    %327 = vector.shape_cast %326 : vector<1x32x256xbf16> to vector<32x256xbf16>
    %c3_282 = arith.constant 3 : index
    %c6_283 = arith.constant 6 : index
    %c0_284 = arith.constant 0 : index
    %c0_285 = arith.constant 0 : index
    %328 = vector.load %arg5[%c3_282, %c6_283, %c0_284, %c0_285] : memref<7x9x4x32xbf16, #tpu.memory_space<vmem>>, vector<1x1x4x32xbf16>
    %329 = vector.shape_cast %328 : vector<1x1x4x32xbf16> to vector<4x32xbf16>
    %cst_286 = arith.constant dense<0.000000e+00> : vector<4x256xf32>
    %330 = tpu.matmul %329, %327, %cst_286 {dimension_numbers = #tpu.dot_dimension_numbers<[1], [0], [0], [1], [0, 0, 1, 1], [], []>} : vector<4x32xbf16>, vector<32x256xbf16>, vector<4x256xf32> -> vector<4x256xf32>
    %331 = arith.addf %325, %330 : vector<4x256xf32>
    %c4_i32 = arith.constant 4 : i32
    %332 = vector.broadcast %c4_i32 : i32 to vector<1x256xi32>
    %333 = arith.cmpi sge, %18, %332 : vector<1x256xi32>
    %334 = arith.extui %333 : vector<1x256xi1> to vector<1x256xi32>
    %335 = arith.sitofp %334 : vector<1x256xi32> to vector<1x256xf32>
    %336 = vector.broadcast %335 : vector<1x256xf32> to vector<4x256xf32>
    %337 = arith.mulf %331, %336 : vector<4x256xf32>
    %c0_287 = arith.constant 0 : index
    %c0_288 = arith.constant 0 : index
    %c55 = arith.constant 55 : index
    %338 = vector.load %arg1[%c0_287, %c0_288, %c55] : memref<1x32x494xbf16, #tpu.memory_space<vmem>>, vector<1x32x256xbf16>
    %339 = vector.shape_cast %338 : vector<1x32x256xbf16> to vector<32x256xbf16>
    %c3_289 = arith.constant 3 : index
    %c1_290 = arith.constant 1 : index
    %c0_291 = arith.constant 0 : index
    %c0_292 = arith.constant 0 : index
    %340 = vector.load %arg5[%c3_289, %c1_290, %c0_291, %c0_292] : memref<7x9x4x32xbf16, #tpu.memory_space<vmem>>, vector<1x1x4x32xbf16>
    %341 = vector.shape_cast %340 : vector<1x1x4x32xbf16> to vector<4x32xbf16>
    %cst_293 = arith.constant dense<0.000000e+00> : vector<4x256xf32>
    %342 = tpu.matmul %341, %339, %cst_293 {dimension_numbers = #tpu.dot_dimension_numbers<[1], [0], [0], [1], [0, 0, 1, 1], [], []>} : vector<4x32xbf16>, vector<32x256xbf16>, vector<4x256xf32> -> vector<4x256xf32>
    %c0_294 = arith.constant 0 : index
    %c0_295 = arith.constant 0 : index
    %c119_296 = arith.constant 119 : index
    %343 = vector.load %arg1[%c0_294, %c0_295, %c119_296] : memref<1x32x494xbf16, #tpu.memory_space<vmem>>, vector<1x32x256xbf16>
    %344 = vector.shape_cast %343 : vector<1x32x256xbf16> to vector<32x256xbf16>
    %c3_297 = arith.constant 3 : index
    %c4_298 = arith.constant 4 : index
    %c0_299 = arith.constant 0 : index
    %c0_300 = arith.constant 0 : index
    %345 = vector.load %arg5[%c3_297, %c4_298, %c0_299, %c0_300] : memref<7x9x4x32xbf16, #tpu.memory_space<vmem>>, vector<1x1x4x32xbf16>
    %346 = vector.shape_cast %345 : vector<1x1x4x32xbf16> to vector<4x32xbf16>
    %cst_301 = arith.constant dense<0.000000e+00> : vector<4x256xf32>
    %347 = tpu.matmul %346, %344, %cst_301 {dimension_numbers = #tpu.dot_dimension_numbers<[1], [0], [0], [1], [0, 0, 1, 1], [], []>} : vector<4x32xbf16>, vector<32x256xbf16>, vector<4x256xf32> -> vector<4x256xf32>
    %348 = arith.addf %342, %347 : vector<4x256xf32>
    %c0_302 = arith.constant 0 : index
    %c0_303 = arith.constant 0 : index
    %c183 = arith.constant 183 : index
    %349 = vector.load %arg1[%c0_302, %c0_303, %c183] : memref<1x32x494xbf16, #tpu.memory_space<vmem>>, vector<1x32x256xbf16>
    %350 = vector.shape_cast %349 : vector<1x32x256xbf16> to vector<32x256xbf16>
    %c3_304 = arith.constant 3 : index
    %c7_305 = arith.constant 7 : index
    %c0_306 = arith.constant 0 : index
    %c0_307 = arith.constant 0 : index
    %351 = vector.load %arg5[%c3_304, %c7_305, %c0_306, %c0_307] : memref<7x9x4x32xbf16, #tpu.memory_space<vmem>>, vector<1x1x4x32xbf16>
    %352 = vector.shape_cast %351 : vector<1x1x4x32xbf16> to vector<4x32xbf16>
    %cst_308 = arith.constant dense<0.000000e+00> : vector<4x256xf32>
    %353 = tpu.matmul %352, %350, %cst_308 {dimension_numbers = #tpu.dot_dimension_numbers<[1], [0], [0], [1], [0, 0, 1, 1], [], []>} : vector<4x32xbf16>, vector<32x256xbf16>, vector<4x256xf32> -> vector<4x256xf32>
    %354 = arith.addf %348, %353 : vector<4x256xf32>
    %355 = arith.addf %337, %354 : vector<4x256xf32>
    %c0_309 = arith.constant 0 : index
    %c0_310 = arith.constant 0 : index
    %c59 = arith.constant 59 : index
    %356 = vector.load %arg1[%c0_309, %c0_310, %c59] : memref<1x32x494xbf16, #tpu.memory_space<vmem>>, vector<1x32x256xbf16>
    %357 = vector.shape_cast %356 : vector<1x32x256xbf16> to vector<32x256xbf16>
    %c3_311 = arith.constant 3 : index
    %c2_312 = arith.constant 2 : index
    %c0_313 = arith.constant 0 : index
    %c0_314 = arith.constant 0 : index
    %358 = vector.load %arg5[%c3_311, %c2_312, %c0_313, %c0_314] : memref<7x9x4x32xbf16, #tpu.memory_space<vmem>>, vector<1x1x4x32xbf16>
    %359 = vector.shape_cast %358 : vector<1x1x4x32xbf16> to vector<4x32xbf16>
    %cst_315 = arith.constant dense<0.000000e+00> : vector<4x256xf32>
    %360 = tpu.matmul %359, %357, %cst_315 {dimension_numbers = #tpu.dot_dimension_numbers<[1], [0], [0], [1], [0, 0, 1, 1], [], []>} : vector<4x32xbf16>, vector<32x256xbf16>, vector<4x256xf32> -> vector<4x256xf32>
    %c0_316 = arith.constant 0 : index
    %c0_317 = arith.constant 0 : index
    %c123 = arith.constant 123 : index
    %361 = vector.load %arg1[%c0_316, %c0_317, %c123] : memref<1x32x494xbf16, #tpu.memory_space<vmem>>, vector<1x32x256xbf16>
    %362 = vector.shape_cast %361 : vector<1x32x256xbf16> to vector<32x256xbf16>
    %c3_318 = arith.constant 3 : index
    %c5_319 = arith.constant 5 : index
    %c0_320 = arith.constant 0 : index
    %c0_321 = arith.constant 0 : index
    %363 = vector.load %arg5[%c3_318, %c5_319, %c0_320, %c0_321] : memref<7x9x4x32xbf16, #tpu.memory_space<vmem>>, vector<1x1x4x32xbf16>
    %364 = vector.shape_cast %363 : vector<1x1x4x32xbf16> to vector<4x32xbf16>
    %cst_322 = arith.constant dense<0.000000e+00> : vector<4x256xf32>
    %365 = tpu.matmul %364, %362, %cst_322 {dimension_numbers = #tpu.dot_dimension_numbers<[1], [0], [0], [1], [0, 0, 1, 1], [], []>} : vector<4x32xbf16>, vector<32x256xbf16>, vector<4x256xf32> -> vector<4x256xf32>
    %366 = arith.addf %360, %365 : vector<4x256xf32>
    %c0_323 = arith.constant 0 : index
    %c0_324 = arith.constant 0 : index
    %c187 = arith.constant 187 : index
    %367 = vector.load %arg1[%c0_323, %c0_324, %c187] : memref<1x32x494xbf16, #tpu.memory_space<vmem>>, vector<1x32x256xbf16>
    %368 = vector.shape_cast %367 : vector<1x32x256xbf16> to vector<32x256xbf16>
    %c3_325 = arith.constant 3 : index
    %c8_326 = arith.constant 8 : index
    %c0_327 = arith.constant 0 : index
    %c0_328 = arith.constant 0 : index
    %369 = vector.load %arg5[%c3_325, %c8_326, %c0_327, %c0_328] : memref<7x9x4x32xbf16, #tpu.memory_space<vmem>>, vector<1x1x4x32xbf16>
    %370 = vector.shape_cast %369 : vector<1x1x4x32xbf16> to vector<4x32xbf16>
    %cst_329 = arith.constant dense<0.000000e+00> : vector<4x256xf32>
    %371 = tpu.matmul %370, %368, %cst_329 {dimension_numbers = #tpu.dot_dimension_numbers<[1], [0], [0], [1], [0, 0, 1, 1], [], []>} : vector<4x32xbf16>, vector<32x256xbf16>, vector<4x256xf32> -> vector<4x256xf32>
    %372 = arith.addf %366, %371 : vector<4x256xf32>
    %c12_i32 = arith.constant 12 : i32
    %373 = vector.broadcast %c12_i32 : i32 to vector<1x256xi32>
    %374 = arith.cmpi slt, %18, %373 : vector<1x256xi32>
    %375 = arith.extui %374 : vector<1x256xi1> to vector<1x256xi32>
    %376 = arith.sitofp %375 : vector<1x256xi32> to vector<1x256xf32>
    %377 = vector.broadcast %376 : vector<1x256xf32> to vector<4x256xf32>
    %378 = arith.mulf %372, %377 : vector<4x256xf32>
    %379 = arith.addf %355, %378 : vector<4x256xf32>
    %c3_330 = arith.constant 3 : index
    %c0_331 = arith.constant 0 : index
    %c0_332 = arith.constant 0 : index
    %380 = vector.load %arg6[%c3_330, %c0_331, %c0_332] : memref<7x4x1xf32, #tpu.memory_space<vmem>>, vector<1x4x1xf32>
    %381 = vector.shape_cast %380 : vector<1x4x1xf32> to vector<4x1xf32>
    %c3_333 = arith.constant 3 : index
    %c0_334 = arith.constant 0 : index
    %c0_335 = arith.constant 0 : index
    %382 = vector.load %arg7[%c3_333, %c0_334, %c0_335] : memref<7x4x1xf32, #tpu.memory_space<vmem>>, vector<1x4x1xf32>
    %383 = vector.shape_cast %382 : vector<1x4x1xf32> to vector<4x1xf32>
    %384 = vector.broadcast %381 : vector<4x1xf32> to vector<4x256xf32>
    %385 = arith.mulf %379, %384 : vector<4x256xf32>
    %386 = vector.broadcast %383 : vector<4x1xf32> to vector<4x256xf32>
    %387 = arith.addf %385, %386 : vector<4x256xf32>
    %cst_336 = arith.constant 0.000000e+00 : f32
    %388 = vector.broadcast %cst_336 : f32 to vector<4x256xf32>
    %389 = arith.maximumf %387, %388 : vector<4x256xf32>
    %390 = arith.truncf %389 : vector<4x256xf32> to vector<4x256xbf16>
    %c3_337 = arith.constant 3 : index
    %c0_338 = arith.constant 0 : index
    %c0_339 = arith.constant 0 : index
    %391 = vector.load %arg8[%c3_337, %c0_338, %c0_339] : memref<7x4x4xbf16, #tpu.memory_space<vmem>>, vector<1x4x4xbf16>
    %392 = vector.shape_cast %391 : vector<1x4x4xbf16> to vector<4x4xbf16>
    %cst_340 = arith.constant dense<0.000000e+00> : vector<4x256xf32>
    %393 = tpu.matmul %392, %390, %cst_340 {dimension_numbers = #tpu.dot_dimension_numbers<[1], [0], [0], [1], [0, 0, 1, 1], [], []>} : vector<4x4xbf16>, vector<4x256xbf16>, vector<4x256xf32> -> vector<4x256xf32>
    %c3_341 = arith.constant 3 : index
    %c0_342 = arith.constant 0 : index
    %c0_343 = arith.constant 0 : index
    %394 = vector.load %arg9[%c3_341, %c0_342, %c0_343] : memref<7x4x1xf32, #tpu.memory_space<vmem>>, vector<1x4x1xf32>
    %395 = vector.shape_cast %394 : vector<1x4x1xf32> to vector<4x1xf32>
    %c3_344 = arith.constant 3 : index
    %c0_345 = arith.constant 0 : index
    %c0_346 = arith.constant 0 : index
    %396 = vector.load %arg10[%c3_344, %c0_345, %c0_346] : memref<7x4x1xf32, #tpu.memory_space<vmem>>, vector<1x4x1xf32>
    %397 = vector.shape_cast %396 : vector<1x4x1xf32> to vector<4x1xf32>
    %398 = vector.broadcast %395 : vector<4x1xf32> to vector<4x256xf32>
    %399 = arith.mulf %393, %398 : vector<4x256xf32>
    %400 = vector.broadcast %397 : vector<4x1xf32> to vector<4x256xf32>
    %401 = arith.addf %399, %400 : vector<4x256xf32>
    %cst_347 = arith.constant 0.000000e+00 : f32
    %402 = vector.broadcast %cst_347 : f32 to vector<4x256xf32>
    %403 = arith.maximumf %401, %402 : vector<4x256xf32>
    %404 = arith.truncf %403 : vector<4x256xf32> to vector<4x256xbf16>
    %c4_348 = arith.constant 4 : index
    %c0_349 = arith.constant 0 : index
    %c0_350 = arith.constant 0 : index
    %405 = vector.load %arg14[%c4_348, %c0_349, %c0_350] : memref<9x4x4xbf16, #tpu.memory_space<vmem>>, vector<1x4x4xbf16>
    %406 = vector.shape_cast %405 : vector<1x4x4xbf16> to vector<4x4xbf16>
    %cst_351 = arith.constant dense<0.000000e+00> : vector<4x256xf32>
    %407 = tpu.matmul %406, %404, %cst_351 {dimension_numbers = #tpu.dot_dimension_numbers<[1], [0], [0], [1], [0, 0, 1, 1], [], []>} : vector<4x4xbf16>, vector<4x256xbf16>, vector<4x256xf32> -> vector<4x256xf32>
    %408 = arith.addf %314, %407 : vector<4x256xf32>
    %c0_352 = arith.constant 0 : index
    %c0_353 = arith.constant 0 : index
    %c34 = arith.constant 34 : index
    %409 = vector.load %arg1[%c0_352, %c0_353, %c34] : memref<1x32x494xbf16, #tpu.memory_space<vmem>>, vector<1x32x256xbf16>
    %410 = vector.shape_cast %409 : vector<1x32x256xbf16> to vector<32x256xbf16>
    %c4_354 = arith.constant 4 : index
    %c0_355 = arith.constant 0 : index
    %c0_356 = arith.constant 0 : index
    %c0_357 = arith.constant 0 : index
    %411 = vector.load %arg5[%c4_354, %c0_355, %c0_356, %c0_357] : memref<7x9x4x32xbf16, #tpu.memory_space<vmem>>, vector<1x1x4x32xbf16>
    %412 = vector.shape_cast %411 : vector<1x1x4x32xbf16> to vector<4x32xbf16>
    %cst_358 = arith.constant dense<0.000000e+00> : vector<4x256xf32>
    %413 = tpu.matmul %412, %410, %cst_358 {dimension_numbers = #tpu.dot_dimension_numbers<[1], [0], [0], [1], [0, 0, 1, 1], [], []>} : vector<4x32xbf16>, vector<32x256xbf16>, vector<4x256xf32> -> vector<4x256xf32>
    %c0_359 = arith.constant 0 : index
    %c0_360 = arith.constant 0 : index
    %c114 = arith.constant 114 : index
    %414 = vector.load %arg1[%c0_359, %c0_360, %c114] : memref<1x32x494xbf16, #tpu.memory_space<vmem>>, vector<1x32x256xbf16>
    %415 = vector.shape_cast %414 : vector<1x32x256xbf16> to vector<32x256xbf16>
    %c4_361 = arith.constant 4 : index
    %c3_362 = arith.constant 3 : index
    %c0_363 = arith.constant 0 : index
    %c0_364 = arith.constant 0 : index
    %416 = vector.load %arg5[%c4_361, %c3_362, %c0_363, %c0_364] : memref<7x9x4x32xbf16, #tpu.memory_space<vmem>>, vector<1x1x4x32xbf16>
    %417 = vector.shape_cast %416 : vector<1x1x4x32xbf16> to vector<4x32xbf16>
    %cst_365 = arith.constant dense<0.000000e+00> : vector<4x256xf32>
    %418 = tpu.matmul %417, %415, %cst_365 {dimension_numbers = #tpu.dot_dimension_numbers<[1], [0], [0], [1], [0, 0, 1, 1], [], []>} : vector<4x32xbf16>, vector<32x256xbf16>, vector<4x256xf32> -> vector<4x256xf32>
    %419 = arith.addf %413, %418 : vector<4x256xf32>
    %c0_366 = arith.constant 0 : index
    %c0_367 = arith.constant 0 : index
    %c194 = arith.constant 194 : index
    %420 = vector.load %arg1[%c0_366, %c0_367, %c194] : memref<1x32x494xbf16, #tpu.memory_space<vmem>>, vector<1x32x256xbf16>
    %421 = vector.shape_cast %420 : vector<1x32x256xbf16> to vector<32x256xbf16>
    %c4_368 = arith.constant 4 : index
    %c6_369 = arith.constant 6 : index
    %c0_370 = arith.constant 0 : index
    %c0_371 = arith.constant 0 : index
    %422 = vector.load %arg5[%c4_368, %c6_369, %c0_370, %c0_371] : memref<7x9x4x32xbf16, #tpu.memory_space<vmem>>, vector<1x1x4x32xbf16>
    %423 = vector.shape_cast %422 : vector<1x1x4x32xbf16> to vector<4x32xbf16>
    %cst_372 = arith.constant dense<0.000000e+00> : vector<4x256xf32>
    %424 = tpu.matmul %423, %421, %cst_372 {dimension_numbers = #tpu.dot_dimension_numbers<[1], [0], [0], [1], [0, 0, 1, 1], [], []>} : vector<4x32xbf16>, vector<32x256xbf16>, vector<4x256xf32> -> vector<4x256xf32>
    %425 = arith.addf %419, %424 : vector<4x256xf32>
    %c5_i32 = arith.constant 5 : i32
    %426 = vector.broadcast %c5_i32 : i32 to vector<1x256xi32>
    %427 = arith.cmpi sge, %18, %426 : vector<1x256xi32>
    %428 = arith.extui %427 : vector<1x256xi1> to vector<1x256xi32>
    %429 = arith.sitofp %428 : vector<1x256xi32> to vector<1x256xf32>
    %430 = vector.broadcast %429 : vector<1x256xf32> to vector<4x256xf32>
    %431 = arith.mulf %425, %430 : vector<4x256xf32>
    %c0_373 = arith.constant 0 : index
    %c0_374 = arith.constant 0 : index
    %c39 = arith.constant 39 : index
    %432 = vector.load %arg1[%c0_373, %c0_374, %c39] : memref<1x32x494xbf16, #tpu.memory_space<vmem>>, vector<1x32x256xbf16>
    %433 = vector.shape_cast %432 : vector<1x32x256xbf16> to vector<32x256xbf16>
    %c4_375 = arith.constant 4 : index
    %c1_376 = arith.constant 1 : index
    %c0_377 = arith.constant 0 : index
    %c0_378 = arith.constant 0 : index
    %434 = vector.load %arg5[%c4_375, %c1_376, %c0_377, %c0_378] : memref<7x9x4x32xbf16, #tpu.memory_space<vmem>>, vector<1x1x4x32xbf16>
    %435 = vector.shape_cast %434 : vector<1x1x4x32xbf16> to vector<4x32xbf16>
    %cst_379 = arith.constant dense<0.000000e+00> : vector<4x256xf32>
    %436 = tpu.matmul %435, %433, %cst_379 {dimension_numbers = #tpu.dot_dimension_numbers<[1], [0], [0], [1], [0, 0, 1, 1], [], []>} : vector<4x32xbf16>, vector<32x256xbf16>, vector<4x256xf32> -> vector<4x256xf32>
    %c0_380 = arith.constant 0 : index
    %c0_381 = arith.constant 0 : index
    %c119_382 = arith.constant 119 : index
    %437 = vector.load %arg1[%c0_380, %c0_381, %c119_382] : memref<1x32x494xbf16, #tpu.memory_space<vmem>>, vector<1x32x256xbf16>
    %438 = vector.shape_cast %437 : vector<1x32x256xbf16> to vector<32x256xbf16>
    %c4_383 = arith.constant 4 : index
    %c4_384 = arith.constant 4 : index
    %c0_385 = arith.constant 0 : index
    %c0_386 = arith.constant 0 : index
    %439 = vector.load %arg5[%c4_383, %c4_384, %c0_385, %c0_386] : memref<7x9x4x32xbf16, #tpu.memory_space<vmem>>, vector<1x1x4x32xbf16>
    %440 = vector.shape_cast %439 : vector<1x1x4x32xbf16> to vector<4x32xbf16>
    %cst_387 = arith.constant dense<0.000000e+00> : vector<4x256xf32>
    %441 = tpu.matmul %440, %438, %cst_387 {dimension_numbers = #tpu.dot_dimension_numbers<[1], [0], [0], [1], [0, 0, 1, 1], [], []>} : vector<4x32xbf16>, vector<32x256xbf16>, vector<4x256xf32> -> vector<4x256xf32>
    %442 = arith.addf %436, %441 : vector<4x256xf32>
    %c0_388 = arith.constant 0 : index
    %c0_389 = arith.constant 0 : index
    %c199 = arith.constant 199 : index
    %443 = vector.load %arg1[%c0_388, %c0_389, %c199] : memref<1x32x494xbf16, #tpu.memory_space<vmem>>, vector<1x32x256xbf16>
    %444 = vector.shape_cast %443 : vector<1x32x256xbf16> to vector<32x256xbf16>
    %c4_390 = arith.constant 4 : index
    %c7_391 = arith.constant 7 : index
    %c0_392 = arith.constant 0 : index
    %c0_393 = arith.constant 0 : index
    %445 = vector.load %arg5[%c4_390, %c7_391, %c0_392, %c0_393] : memref<7x9x4x32xbf16, #tpu.memory_space<vmem>>, vector<1x1x4x32xbf16>
    %446 = vector.shape_cast %445 : vector<1x1x4x32xbf16> to vector<4x32xbf16>
    %cst_394 = arith.constant dense<0.000000e+00> : vector<4x256xf32>
    %447 = tpu.matmul %446, %444, %cst_394 {dimension_numbers = #tpu.dot_dimension_numbers<[1], [0], [0], [1], [0, 0, 1, 1], [], []>} : vector<4x32xbf16>, vector<32x256xbf16>, vector<4x256xf32> -> vector<4x256xf32>
    %448 = arith.addf %442, %447 : vector<4x256xf32>
    %449 = arith.addf %431, %448 : vector<4x256xf32>
    %c0_395 = arith.constant 0 : index
    %c0_396 = arith.constant 0 : index
    %c44 = arith.constant 44 : index
    %450 = vector.load %arg1[%c0_395, %c0_396, %c44] : memref<1x32x494xbf16, #tpu.memory_space<vmem>>, vector<1x32x256xbf16>
    %451 = vector.shape_cast %450 : vector<1x32x256xbf16> to vector<32x256xbf16>
    %c4_397 = arith.constant 4 : index
    %c2_398 = arith.constant 2 : index
    %c0_399 = arith.constant 0 : index
    %c0_400 = arith.constant 0 : index
    %452 = vector.load %arg5[%c4_397, %c2_398, %c0_399, %c0_400] : memref<7x9x4x32xbf16, #tpu.memory_space<vmem>>, vector<1x1x4x32xbf16>
    %453 = vector.shape_cast %452 : vector<1x1x4x32xbf16> to vector<4x32xbf16>
    %cst_401 = arith.constant dense<0.000000e+00> : vector<4x256xf32>
    %454 = tpu.matmul %453, %451, %cst_401 {dimension_numbers = #tpu.dot_dimension_numbers<[1], [0], [0], [1], [0, 0, 1, 1], [], []>} : vector<4x32xbf16>, vector<32x256xbf16>, vector<4x256xf32> -> vector<4x256xf32>
    %c0_402 = arith.constant 0 : index
    %c0_403 = arith.constant 0 : index
    %c124 = arith.constant 124 : index
    %455 = vector.load %arg1[%c0_402, %c0_403, %c124] : memref<1x32x494xbf16, #tpu.memory_space<vmem>>, vector<1x32x256xbf16>
    %456 = vector.shape_cast %455 : vector<1x32x256xbf16> to vector<32x256xbf16>
    %c4_404 = arith.constant 4 : index
    %c5_405 = arith.constant 5 : index
    %c0_406 = arith.constant 0 : index
    %c0_407 = arith.constant 0 : index
    %457 = vector.load %arg5[%c4_404, %c5_405, %c0_406, %c0_407] : memref<7x9x4x32xbf16, #tpu.memory_space<vmem>>, vector<1x1x4x32xbf16>
    %458 = vector.shape_cast %457 : vector<1x1x4x32xbf16> to vector<4x32xbf16>
    %cst_408 = arith.constant dense<0.000000e+00> : vector<4x256xf32>
    %459 = tpu.matmul %458, %456, %cst_408 {dimension_numbers = #tpu.dot_dimension_numbers<[1], [0], [0], [1], [0, 0, 1, 1], [], []>} : vector<4x32xbf16>, vector<32x256xbf16>, vector<4x256xf32> -> vector<4x256xf32>
    %460 = arith.addf %454, %459 : vector<4x256xf32>
    %c0_409 = arith.constant 0 : index
    %c0_410 = arith.constant 0 : index
    %c204 = arith.constant 204 : index
    %461 = vector.load %arg1[%c0_409, %c0_410, %c204] : memref<1x32x494xbf16, #tpu.memory_space<vmem>>, vector<1x32x256xbf16>
    %462 = vector.shape_cast %461 : vector<1x32x256xbf16> to vector<32x256xbf16>
    %c4_411 = arith.constant 4 : index
    %c8_412 = arith.constant 8 : index
    %c0_413 = arith.constant 0 : index
    %c0_414 = arith.constant 0 : index
    %463 = vector.load %arg5[%c4_411, %c8_412, %c0_413, %c0_414] : memref<7x9x4x32xbf16, #tpu.memory_space<vmem>>, vector<1x1x4x32xbf16>
    %464 = vector.shape_cast %463 : vector<1x1x4x32xbf16> to vector<4x32xbf16>
    %cst_415 = arith.constant dense<0.000000e+00> : vector<4x256xf32>
    %465 = tpu.matmul %464, %462, %cst_415 {dimension_numbers = #tpu.dot_dimension_numbers<[1], [0], [0], [1], [0, 0, 1, 1], [], []>} : vector<4x32xbf16>, vector<32x256xbf16>, vector<4x256xf32> -> vector<4x256xf32>
    %466 = arith.addf %460, %465 : vector<4x256xf32>
    %c11_i32 = arith.constant 11 : i32
    %467 = vector.broadcast %c11_i32 : i32 to vector<1x256xi32>
    %468 = arith.cmpi slt, %18, %467 : vector<1x256xi32>
    %469 = arith.extui %468 : vector<1x256xi1> to vector<1x256xi32>
    %470 = arith.sitofp %469 : vector<1x256xi32> to vector<1x256xf32>
    %471 = vector.broadcast %470 : vector<1x256xf32> to vector<4x256xf32>
    %472 = arith.mulf %466, %471 : vector<4x256xf32>
    %473 = arith.addf %449, %472 : vector<4x256xf32>
    %c4_416 = arith.constant 4 : index
    %c0_417 = arith.constant 0 : index
    %c0_418 = arith.constant 0 : index
    %474 = vector.load %arg6[%c4_416, %c0_417, %c0_418] : memref<7x4x1xf32, #tpu.memory_space<vmem>>, vector<1x4x1xf32>
    %475 = vector.shape_cast %474 : vector<1x4x1xf32> to vector<4x1xf32>
    %c4_419 = arith.constant 4 : index
    %c0_420 = arith.constant 0 : index
    %c0_421 = arith.constant 0 : index
    %476 = vector.load %arg7[%c4_419, %c0_420, %c0_421] : memref<7x4x1xf32, #tpu.memory_space<vmem>>, vector<1x4x1xf32>
    %477 = vector.shape_cast %476 : vector<1x4x1xf32> to vector<4x1xf32>
    %478 = vector.broadcast %475 : vector<4x1xf32> to vector<4x256xf32>
    %479 = arith.mulf %473, %478 : vector<4x256xf32>
    %480 = vector.broadcast %477 : vector<4x1xf32> to vector<4x256xf32>
    %481 = arith.addf %479, %480 : vector<4x256xf32>
    %cst_422 = arith.constant 0.000000e+00 : f32
    %482 = vector.broadcast %cst_422 : f32 to vector<4x256xf32>
    %483 = arith.maximumf %481, %482 : vector<4x256xf32>
    %484 = arith.truncf %483 : vector<4x256xf32> to vector<4x256xbf16>
    %c4_423 = arith.constant 4 : index
    %c0_424 = arith.constant 0 : index
    %c0_425 = arith.constant 0 : index
    %485 = vector.load %arg8[%c4_423, %c0_424, %c0_425] : memref<7x4x4xbf16, #tpu.memory_space<vmem>>, vector<1x4x4xbf16>
    %486 = vector.shape_cast %485 : vector<1x4x4xbf16> to vector<4x4xbf16>
    %cst_426 = arith.constant dense<0.000000e+00> : vector<4x256xf32>
    %487 = tpu.matmul %486, %484, %cst_426 {dimension_numbers = #tpu.dot_dimension_numbers<[1], [0], [0], [1], [0, 0, 1, 1], [], []>} : vector<4x4xbf16>, vector<4x256xbf16>, vector<4x256xf32> -> vector<4x256xf32>
    %c4_427 = arith.constant 4 : index
    %c0_428 = arith.constant 0 : index
    %c0_429 = arith.constant 0 : index
    %488 = vector.load %arg9[%c4_427, %c0_428, %c0_429] : memref<7x4x1xf32, #tpu.memory_space<vmem>>, vector<1x4x1xf32>
    %489 = vector.shape_cast %488 : vector<1x4x1xf32> to vector<4x1xf32>
    %c4_430 = arith.constant 4 : index
    %c0_431 = arith.constant 0 : index
    %c0_432 = arith.constant 0 : index
    %490 = vector.load %arg10[%c4_430, %c0_431, %c0_432] : memref<7x4x1xf32, #tpu.memory_space<vmem>>, vector<1x4x1xf32>
    %491 = vector.shape_cast %490 : vector<1x4x1xf32> to vector<4x1xf32>
    %492 = vector.broadcast %489 : vector<4x1xf32> to vector<4x256xf32>
    %493 = arith.mulf %487, %492 : vector<4x256xf32>
    %494 = vector.broadcast %491 : vector<4x1xf32> to vector<4x256xf32>
    %495 = arith.addf %493, %494 : vector<4x256xf32>
    %cst_433 = arith.constant 0.000000e+00 : f32
    %496 = vector.broadcast %cst_433 : f32 to vector<4x256xf32>
    %497 = arith.maximumf %495, %496 : vector<4x256xf32>
    %498 = arith.truncf %497 : vector<4x256xf32> to vector<4x256xbf16>
    %c5_434 = arith.constant 5 : index
    %c0_435 = arith.constant 0 : index
    %c0_436 = arith.constant 0 : index
    %499 = vector.load %arg14[%c5_434, %c0_435, %c0_436] : memref<9x4x4xbf16, #tpu.memory_space<vmem>>, vector<1x4x4xbf16>
    %500 = vector.shape_cast %499 : vector<1x4x4xbf16> to vector<4x4xbf16>
    %cst_437 = arith.constant dense<0.000000e+00> : vector<4x256xf32>
    %501 = tpu.matmul %500, %498, %cst_437 {dimension_numbers = #tpu.dot_dimension_numbers<[1], [0], [0], [1], [0, 0, 1, 1], [], []>} : vector<4x4xbf16>, vector<4x256xbf16>, vector<4x256xf32> -> vector<4x256xf32>
    %502 = arith.addf %408, %501 : vector<4x256xf32>
    %c0_438 = arith.constant 0 : index
    %c0_439 = arith.constant 0 : index
    %c17 = arith.constant 17 : index
    %503 = vector.load %arg1[%c0_438, %c0_439, %c17] : memref<1x32x494xbf16, #tpu.memory_space<vmem>>, vector<1x32x256xbf16>
    %504 = vector.shape_cast %503 : vector<1x32x256xbf16> to vector<32x256xbf16>
    %c5_440 = arith.constant 5 : index
    %c0_441 = arith.constant 0 : index
    %c0_442 = arith.constant 0 : index
    %c0_443 = arith.constant 0 : index
    %505 = vector.load %arg5[%c5_440, %c0_441, %c0_442, %c0_443] : memref<7x9x4x32xbf16, #tpu.memory_space<vmem>>, vector<1x1x4x32xbf16>
    %506 = vector.shape_cast %505 : vector<1x1x4x32xbf16> to vector<4x32xbf16>
    %cst_444 = arith.constant dense<0.000000e+00> : vector<4x256xf32>
    %507 = tpu.matmul %506, %504, %cst_444 {dimension_numbers = #tpu.dot_dimension_numbers<[1], [0], [0], [1], [0, 0, 1, 1], [], []>} : vector<4x32xbf16>, vector<32x256xbf16>, vector<4x256xf32> -> vector<4x256xf32>
    %c0_445 = arith.constant 0 : index
    %c0_446 = arith.constant 0 : index
    %c113 = arith.constant 113 : index
    %508 = vector.load %arg1[%c0_445, %c0_446, %c113] : memref<1x32x494xbf16, #tpu.memory_space<vmem>>, vector<1x32x256xbf16>
    %509 = vector.shape_cast %508 : vector<1x32x256xbf16> to vector<32x256xbf16>
    %c5_447 = arith.constant 5 : index
    %c3_448 = arith.constant 3 : index
    %c0_449 = arith.constant 0 : index
    %c0_450 = arith.constant 0 : index
    %510 = vector.load %arg5[%c5_447, %c3_448, %c0_449, %c0_450] : memref<7x9x4x32xbf16, #tpu.memory_space<vmem>>, vector<1x1x4x32xbf16>
    %511 = vector.shape_cast %510 : vector<1x1x4x32xbf16> to vector<4x32xbf16>
    %cst_451 = arith.constant dense<0.000000e+00> : vector<4x256xf32>
    %512 = tpu.matmul %511, %509, %cst_451 {dimension_numbers = #tpu.dot_dimension_numbers<[1], [0], [0], [1], [0, 0, 1, 1], [], []>} : vector<4x32xbf16>, vector<32x256xbf16>, vector<4x256xf32> -> vector<4x256xf32>
    %513 = arith.addf %507, %512 : vector<4x256xf32>
    %c0_452 = arith.constant 0 : index
    %c0_453 = arith.constant 0 : index
    %c209 = arith.constant 209 : index
    %514 = vector.load %arg1[%c0_452, %c0_453, %c209] : memref<1x32x494xbf16, #tpu.memory_space<vmem>>, vector<1x32x256xbf16>
    %515 = vector.shape_cast %514 : vector<1x32x256xbf16> to vector<32x256xbf16>
    %c5_454 = arith.constant 5 : index
    %c6_455 = arith.constant 6 : index
    %c0_456 = arith.constant 0 : index
    %c0_457 = arith.constant 0 : index
    %516 = vector.load %arg5[%c5_454, %c6_455, %c0_456, %c0_457] : memref<7x9x4x32xbf16, #tpu.memory_space<vmem>>, vector<1x1x4x32xbf16>
    %517 = vector.shape_cast %516 : vector<1x1x4x32xbf16> to vector<4x32xbf16>
    %cst_458 = arith.constant dense<0.000000e+00> : vector<4x256xf32>
    %518 = tpu.matmul %517, %515, %cst_458 {dimension_numbers = #tpu.dot_dimension_numbers<[1], [0], [0], [1], [0, 0, 1, 1], [], []>} : vector<4x32xbf16>, vector<32x256xbf16>, vector<4x256xf32> -> vector<4x256xf32>
    %519 = arith.addf %513, %518 : vector<4x256xf32>
    %c6_i32 = arith.constant 6 : i32
    %520 = vector.broadcast %c6_i32 : i32 to vector<1x256xi32>
    %521 = arith.cmpi sge, %18, %520 : vector<1x256xi32>
    %522 = arith.extui %521 : vector<1x256xi1> to vector<1x256xi32>
    %523 = arith.sitofp %522 : vector<1x256xi32> to vector<1x256xf32>
    %524 = vector.broadcast %523 : vector<1x256xf32> to vector<4x256xf32>
    %525 = arith.mulf %519, %524 : vector<4x256xf32>
    %c0_459 = arith.constant 0 : index
    %c0_460 = arith.constant 0 : index
    %c23 = arith.constant 23 : index
    %526 = vector.load %arg1[%c0_459, %c0_460, %c23] : memref<1x32x494xbf16, #tpu.memory_space<vmem>>, vector<1x32x256xbf16>
    %527 = vector.shape_cast %526 : vector<1x32x256xbf16> to vector<32x256xbf16>
    %c5_461 = arith.constant 5 : index
    %c1_462 = arith.constant 1 : index
    %c0_463 = arith.constant 0 : index
    %c0_464 = arith.constant 0 : index
    %528 = vector.load %arg5[%c5_461, %c1_462, %c0_463, %c0_464] : memref<7x9x4x32xbf16, #tpu.memory_space<vmem>>, vector<1x1x4x32xbf16>
    %529 = vector.shape_cast %528 : vector<1x1x4x32xbf16> to vector<4x32xbf16>
    %cst_465 = arith.constant dense<0.000000e+00> : vector<4x256xf32>
    %530 = tpu.matmul %529, %527, %cst_465 {dimension_numbers = #tpu.dot_dimension_numbers<[1], [0], [0], [1], [0, 0, 1, 1], [], []>} : vector<4x32xbf16>, vector<32x256xbf16>, vector<4x256xf32> -> vector<4x256xf32>
    %c0_466 = arith.constant 0 : index
    %c0_467 = arith.constant 0 : index
    %c119_468 = arith.constant 119 : index
    %531 = vector.load %arg1[%c0_466, %c0_467, %c119_468] : memref<1x32x494xbf16, #tpu.memory_space<vmem>>, vector<1x32x256xbf16>
    %532 = vector.shape_cast %531 : vector<1x32x256xbf16> to vector<32x256xbf16>
    %c5_469 = arith.constant 5 : index
    %c4_470 = arith.constant 4 : index
    %c0_471 = arith.constant 0 : index
    %c0_472 = arith.constant 0 : index
    %533 = vector.load %arg5[%c5_469, %c4_470, %c0_471, %c0_472] : memref<7x9x4x32xbf16, #tpu.memory_space<vmem>>, vector<1x1x4x32xbf16>
    %534 = vector.shape_cast %533 : vector<1x1x4x32xbf16> to vector<4x32xbf16>
    %cst_473 = arith.constant dense<0.000000e+00> : vector<4x256xf32>
    %535 = tpu.matmul %534, %532, %cst_473 {dimension_numbers = #tpu.dot_dimension_numbers<[1], [0], [0], [1], [0, 0, 1, 1], [], []>} : vector<4x32xbf16>, vector<32x256xbf16>, vector<4x256xf32> -> vector<4x256xf32>
    %536 = arith.addf %530, %535 : vector<4x256xf32>
    %c0_474 = arith.constant 0 : index
    %c0_475 = arith.constant 0 : index
    %c215 = arith.constant 215 : index
    %537 = vector.load %arg1[%c0_474, %c0_475, %c215] : memref<1x32x494xbf16, #tpu.memory_space<vmem>>, vector<1x32x256xbf16>
    %538 = vector.shape_cast %537 : vector<1x32x256xbf16> to vector<32x256xbf16>
    %c5_476 = arith.constant 5 : index
    %c7_477 = arith.constant 7 : index
    %c0_478 = arith.constant 0 : index
    %c0_479 = arith.constant 0 : index
    %539 = vector.load %arg5[%c5_476, %c7_477, %c0_478, %c0_479] : memref<7x9x4x32xbf16, #tpu.memory_space<vmem>>, vector<1x1x4x32xbf16>
    %540 = vector.shape_cast %539 : vector<1x1x4x32xbf16> to vector<4x32xbf16>
    %cst_480 = arith.constant dense<0.000000e+00> : vector<4x256xf32>
    %541 = tpu.matmul %540, %538, %cst_480 {dimension_numbers = #tpu.dot_dimension_numbers<[1], [0], [0], [1], [0, 0, 1, 1], [], []>} : vector<4x32xbf16>, vector<32x256xbf16>, vector<4x256xf32> -> vector<4x256xf32>
    %542 = arith.addf %536, %541 : vector<4x256xf32>
    %543 = arith.addf %525, %542 : vector<4x256xf32>
    %c0_481 = arith.constant 0 : index
    %c0_482 = arith.constant 0 : index
    %c29 = arith.constant 29 : index
    %544 = vector.load %arg1[%c0_481, %c0_482, %c29] : memref<1x32x494xbf16, #tpu.memory_space<vmem>>, vector<1x32x256xbf16>
    %545 = vector.shape_cast %544 : vector<1x32x256xbf16> to vector<32x256xbf16>
    %c5_483 = arith.constant 5 : index
    %c2_484 = arith.constant 2 : index
    %c0_485 = arith.constant 0 : index
    %c0_486 = arith.constant 0 : index
    %546 = vector.load %arg5[%c5_483, %c2_484, %c0_485, %c0_486] : memref<7x9x4x32xbf16, #tpu.memory_space<vmem>>, vector<1x1x4x32xbf16>
    %547 = vector.shape_cast %546 : vector<1x1x4x32xbf16> to vector<4x32xbf16>
    %cst_487 = arith.constant dense<0.000000e+00> : vector<4x256xf32>
    %548 = tpu.matmul %547, %545, %cst_487 {dimension_numbers = #tpu.dot_dimension_numbers<[1], [0], [0], [1], [0, 0, 1, 1], [], []>} : vector<4x32xbf16>, vector<32x256xbf16>, vector<4x256xf32> -> vector<4x256xf32>
    %c0_488 = arith.constant 0 : index
    %c0_489 = arith.constant 0 : index
    %c125 = arith.constant 125 : index
    %549 = vector.load %arg1[%c0_488, %c0_489, %c125] : memref<1x32x494xbf16, #tpu.memory_space<vmem>>, vector<1x32x256xbf16>
    %550 = vector.shape_cast %549 : vector<1x32x256xbf16> to vector<32x256xbf16>
    %c5_490 = arith.constant 5 : index
    %c5_491 = arith.constant 5 : index
    %c0_492 = arith.constant 0 : index
    %c0_493 = arith.constant 0 : index
    %551 = vector.load %arg5[%c5_490, %c5_491, %c0_492, %c0_493] : memref<7x9x4x32xbf16, #tpu.memory_space<vmem>>, vector<1x1x4x32xbf16>
    %552 = vector.shape_cast %551 : vector<1x1x4x32xbf16> to vector<4x32xbf16>
    %cst_494 = arith.constant dense<0.000000e+00> : vector<4x256xf32>
    %553 = tpu.matmul %552, %550, %cst_494 {dimension_numbers = #tpu.dot_dimension_numbers<[1], [0], [0], [1], [0, 0, 1, 1], [], []>} : vector<4x32xbf16>, vector<32x256xbf16>, vector<4x256xf32> -> vector<4x256xf32>
    %554 = arith.addf %548, %553 : vector<4x256xf32>
    %c0_495 = arith.constant 0 : index
    %c0_496 = arith.constant 0 : index
    %c221 = arith.constant 221 : index
    %555 = vector.load %arg1[%c0_495, %c0_496, %c221] : memref<1x32x494xbf16, #tpu.memory_space<vmem>>, vector<1x32x256xbf16>
    %556 = vector.shape_cast %555 : vector<1x32x256xbf16> to vector<32x256xbf16>
    %c5_497 = arith.constant 5 : index
    %c8_498 = arith.constant 8 : index
    %c0_499 = arith.constant 0 : index
    %c0_500 = arith.constant 0 : index
    %557 = vector.load %arg5[%c5_497, %c8_498, %c0_499, %c0_500] : memref<7x9x4x32xbf16, #tpu.memory_space<vmem>>, vector<1x1x4x32xbf16>
    %558 = vector.shape_cast %557 : vector<1x1x4x32xbf16> to vector<4x32xbf16>
    %cst_501 = arith.constant dense<0.000000e+00> : vector<4x256xf32>
    %559 = tpu.matmul %558, %556, %cst_501 {dimension_numbers = #tpu.dot_dimension_numbers<[1], [0], [0], [1], [0, 0, 1, 1], [], []>} : vector<4x32xbf16>, vector<32x256xbf16>, vector<4x256xf32> -> vector<4x256xf32>
    %560 = arith.addf %554, %559 : vector<4x256xf32>
    %c10_i32 = arith.constant 10 : i32
    %561 = vector.broadcast %c10_i32 : i32 to vector<1x256xi32>
    %562 = arith.cmpi slt, %18, %561 : vector<1x256xi32>
    %563 = arith.extui %562 : vector<1x256xi1> to vector<1x256xi32>
    %564 = arith.sitofp %563 : vector<1x256xi32> to vector<1x256xf32>
    %565 = vector.broadcast %564 : vector<1x256xf32> to vector<4x256xf32>
    %566 = arith.mulf %560, %565 : vector<4x256xf32>
    %567 = arith.addf %543, %566 : vector<4x256xf32>
    %c5_502 = arith.constant 5 : index
    %c0_503 = arith.constant 0 : index
    %c0_504 = arith.constant 0 : index
    %568 = vector.load %arg6[%c5_502, %c0_503, %c0_504] : memref<7x4x1xf32, #tpu.memory_space<vmem>>, vector<1x4x1xf32>
    %569 = vector.shape_cast %568 : vector<1x4x1xf32> to vector<4x1xf32>
    %c5_505 = arith.constant 5 : index
    %c0_506 = arith.constant 0 : index
    %c0_507 = arith.constant 0 : index
    %570 = vector.load %arg7[%c5_505, %c0_506, %c0_507] : memref<7x4x1xf32, #tpu.memory_space<vmem>>, vector<1x4x1xf32>
    %571 = vector.shape_cast %570 : vector<1x4x1xf32> to vector<4x1xf32>
    %572 = vector.broadcast %569 : vector<4x1xf32> to vector<4x256xf32>
    %573 = arith.mulf %567, %572 : vector<4x256xf32>
    %574 = vector.broadcast %571 : vector<4x1xf32> to vector<4x256xf32>
    %575 = arith.addf %573, %574 : vector<4x256xf32>
    %cst_508 = arith.constant 0.000000e+00 : f32
    %576 = vector.broadcast %cst_508 : f32 to vector<4x256xf32>
    %577 = arith.maximumf %575, %576 : vector<4x256xf32>
    %578 = arith.truncf %577 : vector<4x256xf32> to vector<4x256xbf16>
    %c5_509 = arith.constant 5 : index
    %c0_510 = arith.constant 0 : index
    %c0_511 = arith.constant 0 : index
    %579 = vector.load %arg8[%c5_509, %c0_510, %c0_511] : memref<7x4x4xbf16, #tpu.memory_space<vmem>>, vector<1x4x4xbf16>
    %580 = vector.shape_cast %579 : vector<1x4x4xbf16> to vector<4x4xbf16>
    %cst_512 = arith.constant dense<0.000000e+00> : vector<4x256xf32>
    %581 = tpu.matmul %580, %578, %cst_512 {dimension_numbers = #tpu.dot_dimension_numbers<[1], [0], [0], [1], [0, 0, 1, 1], [], []>} : vector<4x4xbf16>, vector<4x256xbf16>, vector<4x256xf32> -> vector<4x256xf32>
    %c5_513 = arith.constant 5 : index
    %c0_514 = arith.constant 0 : index
    %c0_515 = arith.constant 0 : index
    %582 = vector.load %arg9[%c5_513, %c0_514, %c0_515] : memref<7x4x1xf32, #tpu.memory_space<vmem>>, vector<1x4x1xf32>
    %583 = vector.shape_cast %582 : vector<1x4x1xf32> to vector<4x1xf32>
    %c5_516 = arith.constant 5 : index
    %c0_517 = arith.constant 0 : index
    %c0_518 = arith.constant 0 : index
    %584 = vector.load %arg10[%c5_516, %c0_517, %c0_518] : memref<7x4x1xf32, #tpu.memory_space<vmem>>, vector<1x4x1xf32>
    %585 = vector.shape_cast %584 : vector<1x4x1xf32> to vector<4x1xf32>
    %586 = vector.broadcast %583 : vector<4x1xf32> to vector<4x256xf32>
    %587 = arith.mulf %581, %586 : vector<4x256xf32>
    %588 = vector.broadcast %585 : vector<4x1xf32> to vector<4x256xf32>
    %589 = arith.addf %587, %588 : vector<4x256xf32>
    %cst_519 = arith.constant 0.000000e+00 : f32
    %590 = vector.broadcast %cst_519 : f32 to vector<4x256xf32>
    %591 = arith.maximumf %589, %590 : vector<4x256xf32>
    %592 = arith.truncf %591 : vector<4x256xf32> to vector<4x256xbf16>
    %c6_520 = arith.constant 6 : index
    %c0_521 = arith.constant 0 : index
    %c0_522 = arith.constant 0 : index
    %593 = vector.load %arg14[%c6_520, %c0_521, %c0_522] : memref<9x4x4xbf16, #tpu.memory_space<vmem>>, vector<1x4x4xbf16>
    %594 = vector.shape_cast %593 : vector<1x4x4xbf16> to vector<4x4xbf16>
    %cst_523 = arith.constant dense<0.000000e+00> : vector<4x256xf32>
    %595 = tpu.matmul %594, %592, %cst_523 {dimension_numbers = #tpu.dot_dimension_numbers<[1], [0], [0], [1], [0, 0, 1, 1], [], []>} : vector<4x4xbf16>, vector<4x256xbf16>, vector<4x256xf32> -> vector<4x256xf32>
    %596 = arith.addf %502, %595 : vector<4x256xf32>
    %c0_524 = arith.constant 0 : index
    %c0_525 = arith.constant 0 : index
    %c0_526 = arith.constant 0 : index
    %597 = vector.load %arg1[%c0_524, %c0_525, %c0_526] : memref<1x32x494xbf16, #tpu.memory_space<vmem>>, vector<1x32x256xbf16>
    %598 = vector.shape_cast %597 : vector<1x32x256xbf16> to vector<32x256xbf16>
    %c6_527 = arith.constant 6 : index
    %c0_528 = arith.constant 0 : index
    %c0_529 = arith.constant 0 : index
    %c0_530 = arith.constant 0 : index
    %599 = vector.load %arg5[%c6_527, %c0_528, %c0_529, %c0_530] : memref<7x9x4x32xbf16, #tpu.memory_space<vmem>>, vector<1x1x4x32xbf16>
    %600 = vector.shape_cast %599 : vector<1x1x4x32xbf16> to vector<4x32xbf16>
    %cst_531 = arith.constant dense<0.000000e+00> : vector<4x256xf32>
    %601 = tpu.matmul %600, %598, %cst_531 {dimension_numbers = #tpu.dot_dimension_numbers<[1], [0], [0], [1], [0, 0, 1, 1], [], []>} : vector<4x32xbf16>, vector<32x256xbf16>, vector<4x256xf32> -> vector<4x256xf32>
    %c0_532 = arith.constant 0 : index
    %c0_533 = arith.constant 0 : index
    %c112 = arith.constant 112 : index
    %602 = vector.load %arg1[%c0_532, %c0_533, %c112] : memref<1x32x494xbf16, #tpu.memory_space<vmem>>, vector<1x32x256xbf16>
    %603 = vector.shape_cast %602 : vector<1x32x256xbf16> to vector<32x256xbf16>
    %c6_534 = arith.constant 6 : index
    %c3_535 = arith.constant 3 : index
    %c0_536 = arith.constant 0 : index
    %c0_537 = arith.constant 0 : index
    %604 = vector.load %arg5[%c6_534, %c3_535, %c0_536, %c0_537] : memref<7x9x4x32xbf16, #tpu.memory_space<vmem>>, vector<1x1x4x32xbf16>
    %605 = vector.shape_cast %604 : vector<1x1x4x32xbf16> to vector<4x32xbf16>
    %cst_538 = arith.constant dense<0.000000e+00> : vector<4x256xf32>
    %606 = tpu.matmul %605, %603, %cst_538 {dimension_numbers = #tpu.dot_dimension_numbers<[1], [0], [0], [1], [0, 0, 1, 1], [], []>} : vector<4x32xbf16>, vector<32x256xbf16>, vector<4x256xf32> -> vector<4x256xf32>
    %607 = arith.addf %601, %606 : vector<4x256xf32>
    %c0_539 = arith.constant 0 : index
    %c0_540 = arith.constant 0 : index
    %c224 = arith.constant 224 : index
    %608 = vector.load %arg1[%c0_539, %c0_540, %c224] : memref<1x32x494xbf16, #tpu.memory_space<vmem>>, vector<1x32x256xbf16>
    %609 = vector.shape_cast %608 : vector<1x32x256xbf16> to vector<32x256xbf16>
    %c6_541 = arith.constant 6 : index
    %c6_542 = arith.constant 6 : index
    %c0_543 = arith.constant 0 : index
    %c0_544 = arith.constant 0 : index
    %610 = vector.load %arg5[%c6_541, %c6_542, %c0_543, %c0_544] : memref<7x9x4x32xbf16, #tpu.memory_space<vmem>>, vector<1x1x4x32xbf16>
    %611 = vector.shape_cast %610 : vector<1x1x4x32xbf16> to vector<4x32xbf16>
    %cst_545 = arith.constant dense<0.000000e+00> : vector<4x256xf32>
    %612 = tpu.matmul %611, %609, %cst_545 {dimension_numbers = #tpu.dot_dimension_numbers<[1], [0], [0], [1], [0, 0, 1, 1], [], []>} : vector<4x32xbf16>, vector<32x256xbf16>, vector<4x256xf32> -> vector<4x256xf32>
    %613 = arith.addf %607, %612 : vector<4x256xf32>
    %c7_i32 = arith.constant 7 : i32
    %614 = vector.broadcast %c7_i32 : i32 to vector<1x256xi32>
    %615 = arith.cmpi sge, %18, %614 : vector<1x256xi32>
    %616 = arith.extui %615 : vector<1x256xi1> to vector<1x256xi32>
    %617 = arith.sitofp %616 : vector<1x256xi32> to vector<1x256xf32>
    %618 = vector.broadcast %617 : vector<1x256xf32> to vector<4x256xf32>
    %619 = arith.mulf %613, %618 : vector<4x256xf32>
    %c0_546 = arith.constant 0 : index
    %c0_547 = arith.constant 0 : index
    %c7_548 = arith.constant 7 : index
    %620 = vector.load %arg1[%c0_546, %c0_547, %c7_548] : memref<1x32x494xbf16, #tpu.memory_space<vmem>>, vector<1x32x256xbf16>
    %621 = vector.shape_cast %620 : vector<1x32x256xbf16> to vector<32x256xbf16>
    %c6_549 = arith.constant 6 : index
    %c1_550 = arith.constant 1 : index
    %c0_551 = arith.constant 0 : index
    %c0_552 = arith.constant 0 : index
    %622 = vector.load %arg5[%c6_549, %c1_550, %c0_551, %c0_552] : memref<7x9x4x32xbf16, #tpu.memory_space<vmem>>, vector<1x1x4x32xbf16>
    %623 = vector.shape_cast %622 : vector<1x1x4x32xbf16> to vector<4x32xbf16>
    %cst_553 = arith.constant dense<0.000000e+00> : vector<4x256xf32>
    %624 = tpu.matmul %623, %621, %cst_553 {dimension_numbers = #tpu.dot_dimension_numbers<[1], [0], [0], [1], [0, 0, 1, 1], [], []>} : vector<4x32xbf16>, vector<32x256xbf16>, vector<4x256xf32> -> vector<4x256xf32>
    %c0_554 = arith.constant 0 : index
    %c0_555 = arith.constant 0 : index
    %c119_556 = arith.constant 119 : index
    %625 = vector.load %arg1[%c0_554, %c0_555, %c119_556] : memref<1x32x494xbf16, #tpu.memory_space<vmem>>, vector<1x32x256xbf16>
    %626 = vector.shape_cast %625 : vector<1x32x256xbf16> to vector<32x256xbf16>
    %c6_557 = arith.constant 6 : index
    %c4_558 = arith.constant 4 : index
    %c0_559 = arith.constant 0 : index
    %c0_560 = arith.constant 0 : index
    %627 = vector.load %arg5[%c6_557, %c4_558, %c0_559, %c0_560] : memref<7x9x4x32xbf16, #tpu.memory_space<vmem>>, vector<1x1x4x32xbf16>
    %628 = vector.shape_cast %627 : vector<1x1x4x32xbf16> to vector<4x32xbf16>
    %cst_561 = arith.constant dense<0.000000e+00> : vector<4x256xf32>
    %629 = tpu.matmul %628, %626, %cst_561 {dimension_numbers = #tpu.dot_dimension_numbers<[1], [0], [0], [1], [0, 0, 1, 1], [], []>} : vector<4x32xbf16>, vector<32x256xbf16>, vector<4x256xf32> -> vector<4x256xf32>
    %630 = arith.addf %624, %629 : vector<4x256xf32>
    %c0_562 = arith.constant 0 : index
    %c0_563 = arith.constant 0 : index
    %c231 = arith.constant 231 : index
    %631 = vector.load %arg1[%c0_562, %c0_563, %c231] : memref<1x32x494xbf16, #tpu.memory_space<vmem>>, vector<1x32x256xbf16>
    %632 = vector.shape_cast %631 : vector<1x32x256xbf16> to vector<32x256xbf16>
    %c6_564 = arith.constant 6 : index
    %c7_565 = arith.constant 7 : index
    %c0_566 = arith.constant 0 : index
    %c0_567 = arith.constant 0 : index
    %633 = vector.load %arg5[%c6_564, %c7_565, %c0_566, %c0_567] : memref<7x9x4x32xbf16, #tpu.memory_space<vmem>>, vector<1x1x4x32xbf16>
    %634 = vector.shape_cast %633 : vector<1x1x4x32xbf16> to vector<4x32xbf16>
    %cst_568 = arith.constant dense<0.000000e+00> : vector<4x256xf32>
    %635 = tpu.matmul %634, %632, %cst_568 {dimension_numbers = #tpu.dot_dimension_numbers<[1], [0], [0], [1], [0, 0, 1, 1], [], []>} : vector<4x32xbf16>, vector<32x256xbf16>, vector<4x256xf32> -> vector<4x256xf32>
    %636 = arith.addf %630, %635 : vector<4x256xf32>
    %637 = arith.addf %619, %636 : vector<4x256xf32>
    %c0_569 = arith.constant 0 : index
    %c0_570 = arith.constant 0 : index
    %c14 = arith.constant 14 : index
    %638 = vector.load %arg1[%c0_569, %c0_570, %c14] : memref<1x32x494xbf16, #tpu.memory_space<vmem>>, vector<1x32x256xbf16>
    %639 = vector.shape_cast %638 : vector<1x32x256xbf16> to vector<32x256xbf16>
    %c6_571 = arith.constant 6 : index
    %c2_572 = arith.constant 2 : index
    %c0_573 = arith.constant 0 : index
    %c0_574 = arith.constant 0 : index
    %640 = vector.load %arg5[%c6_571, %c2_572, %c0_573, %c0_574] : memref<7x9x4x32xbf16, #tpu.memory_space<vmem>>, vector<1x1x4x32xbf16>
    %641 = vector.shape_cast %640 : vector<1x1x4x32xbf16> to vector<4x32xbf16>
    %cst_575 = arith.constant dense<0.000000e+00> : vector<4x256xf32>
    %642 = tpu.matmul %641, %639, %cst_575 {dimension_numbers = #tpu.dot_dimension_numbers<[1], [0], [0], [1], [0, 0, 1, 1], [], []>} : vector<4x32xbf16>, vector<32x256xbf16>, vector<4x256xf32> -> vector<4x256xf32>
    %c0_576 = arith.constant 0 : index
    %c0_577 = arith.constant 0 : index
    %c126 = arith.constant 126 : index
    %643 = vector.load %arg1[%c0_576, %c0_577, %c126] : memref<1x32x494xbf16, #tpu.memory_space<vmem>>, vector<1x32x256xbf16>
    %644 = vector.shape_cast %643 : vector<1x32x256xbf16> to vector<32x256xbf16>
    %c6_578 = arith.constant 6 : index
    %c5_579 = arith.constant 5 : index
    %c0_580 = arith.constant 0 : index
    %c0_581 = arith.constant 0 : index
    %645 = vector.load %arg5[%c6_578, %c5_579, %c0_580, %c0_581] : memref<7x9x4x32xbf16, #tpu.memory_space<vmem>>, vector<1x1x4x32xbf16>
    %646 = vector.shape_cast %645 : vector<1x1x4x32xbf16> to vector<4x32xbf16>
    %cst_582 = arith.constant dense<0.000000e+00> : vector<4x256xf32>
    %647 = tpu.matmul %646, %644, %cst_582 {dimension_numbers = #tpu.dot_dimension_numbers<[1], [0], [0], [1], [0, 0, 1, 1], [], []>} : vector<4x32xbf16>, vector<32x256xbf16>, vector<4x256xf32> -> vector<4x256xf32>
    %648 = arith.addf %642, %647 : vector<4x256xf32>
    %c0_583 = arith.constant 0 : index
    %c0_584 = arith.constant 0 : index
    %c238 = arith.constant 238 : index
    %649 = vector.load %arg1[%c0_583, %c0_584, %c238] : memref<1x32x494xbf16, #tpu.memory_space<vmem>>, vector<1x32x256xbf16>
    %650 = vector.shape_cast %649 : vector<1x32x256xbf16> to vector<32x256xbf16>
    %c6_585 = arith.constant 6 : index
    %c8_586 = arith.constant 8 : index
    %c0_587 = arith.constant 0 : index
    %c0_588 = arith.constant 0 : index
    %651 = vector.load %arg5[%c6_585, %c8_586, %c0_587, %c0_588] : memref<7x9x4x32xbf16, #tpu.memory_space<vmem>>, vector<1x1x4x32xbf16>
    %652 = vector.shape_cast %651 : vector<1x1x4x32xbf16> to vector<4x32xbf16>
    %cst_589 = arith.constant dense<0.000000e+00> : vector<4x256xf32>
    %653 = tpu.matmul %652, %650, %cst_589 {dimension_numbers = #tpu.dot_dimension_numbers<[1], [0], [0], [1], [0, 0, 1, 1], [], []>} : vector<4x32xbf16>, vector<32x256xbf16>, vector<4x256xf32> -> vector<4x256xf32>
    %654 = arith.addf %648, %653 : vector<4x256xf32>
    %c9_i32 = arith.constant 9 : i32
    %655 = vector.broadcast %c9_i32 : i32 to vector<1x256xi32>
    %656 = arith.cmpi slt, %18, %655 : vector<1x256xi32>
    %657 = arith.extui %656 : vector<1x256xi1> to vector<1x256xi32>
    %658 = arith.sitofp %657 : vector<1x256xi32> to vector<1x256xf32>
    %659 = vector.broadcast %658 : vector<1x256xf32> to vector<4x256xf32>
    %660 = arith.mulf %654, %659 : vector<4x256xf32>
    %661 = arith.addf %637, %660 : vector<4x256xf32>
    %c6_590 = arith.constant 6 : index
    %c0_591 = arith.constant 0 : index
    %c0_592 = arith.constant 0 : index
    %662 = vector.load %arg6[%c6_590, %c0_591, %c0_592] : memref<7x4x1xf32, #tpu.memory_space<vmem>>, vector<1x4x1xf32>
    %663 = vector.shape_cast %662 : vector<1x4x1xf32> to vector<4x1xf32>
    %c6_593 = arith.constant 6 : index
    %c0_594 = arith.constant 0 : index
    %c0_595 = arith.constant 0 : index
    %664 = vector.load %arg7[%c6_593, %c0_594, %c0_595] : memref<7x4x1xf32, #tpu.memory_space<vmem>>, vector<1x4x1xf32>
    %665 = vector.shape_cast %664 : vector<1x4x1xf32> to vector<4x1xf32>
    %666 = vector.broadcast %663 : vector<4x1xf32> to vector<4x256xf32>
    %667 = arith.mulf %661, %666 : vector<4x256xf32>
    %668 = vector.broadcast %665 : vector<4x1xf32> to vector<4x256xf32>
    %669 = arith.addf %667, %668 : vector<4x256xf32>
    %cst_596 = arith.constant 0.000000e+00 : f32
    %670 = vector.broadcast %cst_596 : f32 to vector<4x256xf32>
    %671 = arith.maximumf %669, %670 : vector<4x256xf32>
    %672 = arith.truncf %671 : vector<4x256xf32> to vector<4x256xbf16>
    %c6_597 = arith.constant 6 : index
    %c0_598 = arith.constant 0 : index
    %c0_599 = arith.constant 0 : index
    %673 = vector.load %arg8[%c6_597, %c0_598, %c0_599] : memref<7x4x4xbf16, #tpu.memory_space<vmem>>, vector<1x4x4xbf16>
    %674 = vector.shape_cast %673 : vector<1x4x4xbf16> to vector<4x4xbf16>
    %cst_600 = arith.constant dense<0.000000e+00> : vector<4x256xf32>
    %675 = tpu.matmul %674, %672, %cst_600 {dimension_numbers = #tpu.dot_dimension_numbers<[1], [0], [0], [1], [0, 0, 1, 1], [], []>} : vector<4x4xbf16>, vector<4x256xbf16>, vector<4x256xf32> -> vector<4x256xf32>
    %c6_601 = arith.constant 6 : index
    %c0_602 = arith.constant 0 : index
    %c0_603 = arith.constant 0 : index
    %676 = vector.load %arg9[%c6_601, %c0_602, %c0_603] : memref<7x4x1xf32, #tpu.memory_space<vmem>>, vector<1x4x1xf32>
    %677 = vector.shape_cast %676 : vector<1x4x1xf32> to vector<4x1xf32>
    %c6_604 = arith.constant 6 : index
    %c0_605 = arith.constant 0 : index
    %c0_606 = arith.constant 0 : index
    %678 = vector.load %arg10[%c6_604, %c0_605, %c0_606] : memref<7x4x1xf32, #tpu.memory_space<vmem>>, vector<1x4x1xf32>
    %679 = vector.shape_cast %678 : vector<1x4x1xf32> to vector<4x1xf32>
    %680 = vector.broadcast %677 : vector<4x1xf32> to vector<4x256xf32>
    %681 = arith.mulf %675, %680 : vector<4x256xf32>
    %682 = vector.broadcast %679 : vector<4x1xf32> to vector<4x256xf32>
    %683 = arith.addf %681, %682 : vector<4x256xf32>
    %cst_607 = arith.constant 0.000000e+00 : f32
    %684 = vector.broadcast %cst_607 : f32 to vector<4x256xf32>
    %685 = arith.maximumf %683, %684 : vector<4x256xf32>
    %686 = arith.truncf %685 : vector<4x256xf32> to vector<4x256xbf16>
    %c7_608 = arith.constant 7 : index
    %c0_609 = arith.constant 0 : index
    %c0_610 = arith.constant 0 : index
    %687 = vector.load %arg14[%c7_608, %c0_609, %c0_610] : memref<9x4x4xbf16, #tpu.memory_space<vmem>>, vector<1x4x4xbf16>
    %688 = vector.shape_cast %687 : vector<1x4x4xbf16> to vector<4x4xbf16>
    %cst_611 = arith.constant dense<0.000000e+00> : vector<4x256xf32>
    %689 = tpu.matmul %688, %686, %cst_611 {dimension_numbers = #tpu.dot_dimension_numbers<[1], [0], [0], [1], [0, 0, 1, 1], [], []>} : vector<4x4xbf16>, vector<4x256xbf16>, vector<4x256xf32> -> vector<4x256xf32>
    %690 = arith.addf %596, %689 : vector<4x256xf32>
    %691 = arith.extf %1 : vector<32x256xbf16> to vector<32x256xf32>
    %cst_612 = arith.constant dense<0.000000e+00> : vector<32xf32>
    %692 = vector.multi_reduction <add>, %691, %cst_612 [1] : vector<32x256xf32> to vector<32xf32>
    %693 = vector.shape_cast %692 : vector<32xf32> to vector<32x1xf32>
    %cst_613 = arith.constant 2.560000e+02 : f32
    %694 = vector.broadcast %cst_613 : f32 to vector<32x1xf32>
    %695 = arith.divf %693, %694 : vector<32x1xf32>
    %696 = arith.truncf %695 : vector<32x1xf32> to vector<32x1xbf16>
    %c0_614 = arith.constant 0 : index
    %c0_615 = arith.constant 0 : index
    %697 = vector.load %arg11[%c0_614, %c0_615] : memref<4x32xbf16, #tpu.memory_space<vmem>>, vector<4x32xbf16>
    %cst_616 = arith.constant dense<0.000000e+00> : vector<4x1xf32>
    %698 = tpu.matmul %697, %696, %cst_616 {dimension_numbers = #tpu.dot_dimension_numbers<[1], [0], [0], [1], [0, 0, 1, 1], [], []>} : vector<4x32xbf16>, vector<32x1xbf16>, vector<4x1xf32> -> vector<4x1xf32>
    %c0_617 = arith.constant 0 : index
    %c0_618 = arith.constant 0 : index
    %699 = vector.load %arg12[%c0_617, %c0_618] : memref<4x1xf32, #tpu.memory_space<vmem>>, vector<4x1xf32>
    %c0_619 = arith.constant 0 : index
    %c0_620 = arith.constant 0 : index
    %700 = vector.load %arg13[%c0_619, %c0_620] : memref<4x1xf32, #tpu.memory_space<vmem>>, vector<4x1xf32>
    %701 = arith.mulf %698, %699 : vector<4x1xf32>
    %702 = arith.addf %701, %700 : vector<4x1xf32>
    %cst_621 = arith.constant 0.000000e+00 : f32
    %703 = vector.broadcast %cst_621 : f32 to vector<4x1xf32>
    %704 = arith.maximumf %702, %703 : vector<4x1xf32>
    %705 = arith.truncf %704 : vector<4x1xf32> to vector<4x1xbf16>
    %c8_622 = arith.constant 8 : index
    %c0_623 = arith.constant 0 : index
    %c0_624 = arith.constant 0 : index
    %706 = vector.load %arg14[%c8_622, %c0_623, %c0_624] : memref<9x4x4xbf16, #tpu.memory_space<vmem>>, vector<1x4x4xbf16>
    %707 = vector.shape_cast %706 : vector<1x4x4xbf16> to vector<4x4xbf16>
    %cst_625 = arith.constant dense<0.000000e+00> : vector<4x1xf32>
    %708 = tpu.matmul %707, %705, %cst_625 {dimension_numbers = #tpu.dot_dimension_numbers<[1], [0], [0], [1], [0, 0, 1, 1], [], []>} : vector<4x4xbf16>, vector<4x1xbf16>, vector<4x1xf32> -> vector<4x1xf32>
    %709 = vector.broadcast %708 : vector<4x1xf32> to vector<4x256xf32>
    %710 = arith.addf %690, %709 : vector<4x256xf32>
    %c0_626 = arith.constant 0 : index
    %c0_627 = arith.constant 0 : index
    %711 = vector.load %arg15[%c0_626, %c0_627] : memref<4x1xf32, #tpu.memory_space<vmem>>, vector<4x1xf32>
    %712 = vector.broadcast %711 : vector<4x1xf32> to vector<4x256xf32>
    %713 = arith.mulf %710, %712 : vector<4x256xf32>
    %c0_628 = arith.constant 0 : index
    %c0_629 = arith.constant 0 : index
    %714 = vector.load %arg16[%c0_628, %c0_629] : memref<4x1xf32, #tpu.memory_space<vmem>>, vector<4x1xf32>
    %715 = vector.broadcast %714 : vector<4x1xf32> to vector<4x256xf32>
    %716 = arith.addf %713, %715 : vector<4x256xf32>
    %cst_630 = arith.constant 0.000000e+00 : f32
    %717 = vector.broadcast %cst_630 : f32 to vector<4x256xf32>
    %718 = arith.maximumf %716, %717 : vector<4x256xf32>
    %c0_631 = arith.constant 0 : index
    %c0_632 = arith.constant 0 : index
    %c0_633 = arith.constant 0 : index
    %719 = vector.load %arg17[%c0_631, %c0_632, %c0_633] : memref<1x4x256xf32, #tpu.memory_space<vmem>>, vector<1x4x256xf32>
    %720 = vector.shape_cast %719 : vector<1x4x256xf32> to vector<4x256xf32>
    %721 = vector.shape_cast %718 : vector<4x256xf32> to vector<1x4x256xf32>
    tpu.vector_store %arg17[%c0_631, %c0_632, %c0_633], %721 {strides = array<i32>} : memref<1x4x256xf32, #tpu.memory_space<vmem>>, vector<1x4x256xf32>,
    return
  }
  func.func @transform_0(%arg0: i32) -> (i32, i32, i32) {
    %c0_i32 = arith.constant 0 : i32
    %c0_i32_0 = arith.constant 0 : i32
    %c0_i32_1 = arith.constant 0 : i32
    return %arg0, %c0_i32, %c0_i32_0 : i32, i32, i32
  }
  func.func @transform_1(%arg0: i32) -> (i32, i32) {
    %c0_i32 = arith.constant 0 : i32
    %c0_i32_0 = arith.constant 0 : i32
    %c0_i32_1 = arith.constant 0 : i32
    return %c0_i32, %c0_i32_0 : i32, i32
  }
  func.func @transform_2(%arg0: i32) -> (i32, i32) {
    %c0_i32 = arith.constant 0 : i32
    %c0_i32_0 = arith.constant 0 : i32
    %c0_i32_1 = arith.constant 0 : i32
    return %c0_i32, %c0_i32_0 : i32, i32
  }
  func.func @transform_3(%arg0: i32) -> (i32, i32) {
    %c0_i32 = arith.constant 0 : i32
    %c0_i32_0 = arith.constant 0 : i32
    %c0_i32_1 = arith.constant 0 : i32
    return %c0_i32, %c0_i32_0 : i32, i32
  }
  func.func @transform_4(%arg0: i32) -> (i32, i32, i32, i32) {
    %c0_i32 = arith.constant 0 : i32
    %c0_i32_0 = arith.constant 0 : i32
    %c0_i32_1 = arith.constant 0 : i32
    %c0_i32_2 = arith.constant 0 : i32
    %c0_i32_3 = arith.constant 0 : i32
    return %c0_i32, %c0_i32_0, %c0_i32_1, %c0_i32_2 : i32, i32, i32, i32
  }
  func.func @transform_5(%arg0: i32) -> (i32, i32, i32) {
    %c0_i32 = arith.constant 0 : i32
    %c0_i32_0 = arith.constant 0 : i32
    %c0_i32_1 = arith.constant 0 : i32
    %c0_i32_2 = arith.constant 0 : i32
    return %c0_i32, %c0_i32_0, %c0_i32_1 : i32, i32, i32
  }
  func.func @transform_6(%arg0: i32) -> (i32, i32, i32) {
    %c0_i32 = arith.constant 0 : i32
    %c0_i32_0 = arith.constant 0 : i32
    %c0_i32_1 = arith.constant 0 : i32
    %c0_i32_2 = arith.constant 0 : i32
    return %c0_i32, %c0_i32_0, %c0_i32_1 : i32, i32, i32
  }
  func.func @transform_7(%arg0: i32) -> (i32, i32, i32) {
    %c0_i32 = arith.constant 0 : i32
    %c0_i32_0 = arith.constant 0 : i32
    %c0_i32_1 = arith.constant 0 : i32
    %c0_i32_2 = arith.constant 0 : i32
    return %c0_i32, %c0_i32_0, %c0_i32_1 : i32, i32, i32
  }
  func.func @transform_8(%arg0: i32) -> (i32, i32, i32) {
    %c0_i32 = arith.constant 0 : i32
    %c0_i32_0 = arith.constant 0 : i32
    %c0_i32_1 = arith.constant 0 : i32
    %c0_i32_2 = arith.constant 0 : i32
    return %c0_i32, %c0_i32_0, %c0_i32_1 : i32, i32, i32
  }
  func.func @transform_9(%arg0: i32) -> (i32, i32, i32) {
    %c0_i32 = arith.constant 0 : i32
    %c0_i32_0 = arith.constant 0 : i32
    %c0_i32_1 = arith.constant 0 : i32
    %c0_i32_2 = arith.constant 0 : i32
    return %c0_i32, %c0_i32_0, %c0_i32_1 : i32, i32, i32
  }
  func.func @transform_10(%arg0: i32) -> (i32, i32) {
    %c0_i32 = arith.constant 0 : i32
    %c0_i32_0 = arith.constant 0 : i32
    %c0_i32_1 = arith.constant 0 : i32
    return %c0_i32, %c0_i32_0 : i32, i32
  }
  func.func @transform_11(%arg0: i32) -> (i32, i32) {
    %c0_i32 = arith.constant 0 : i32
    %c0_i32_0 = arith.constant 0 : i32
    %c0_i32_1 = arith.constant 0 : i32
    return %c0_i32, %c0_i32_0 : i32, i32
  }
  func.func @transform_12(%arg0: i32) -> (i32, i32) {
    %c0_i32 = arith.constant 0 : i32
    %c0_i32_0 = arith.constant 0 : i32
    %c0_i32_1 = arith.constant 0 : i32
    return %c0_i32, %c0_i32_0 : i32, i32
  }
  func.func @transform_13(%arg0: i32) -> (i32, i32, i32) {
    %c0_i32 = arith.constant 0 : i32
    %c0_i32_0 = arith.constant 0 : i32
    %c0_i32_1 = arith.constant 0 : i32
    %c0_i32_2 = arith.constant 0 : i32
    return %c0_i32, %c0_i32_0, %c0_i32_1 : i32, i32, i32
  }
  func.func @transform_14(%arg0: i32) -> (i32, i32) {
    %c0_i32 = arith.constant 0 : i32
    %c0_i32_0 = arith.constant 0 : i32
    %c0_i32_1 = arith.constant 0 : i32
    return %c0_i32, %c0_i32_0 : i32, i32
  }
  func.func @transform_15(%arg0: i32) -> (i32, i32) {
    %c0_i32 = arith.constant 0 : i32
    %c0_i32_0 = arith.constant 0 : i32
    %c0_i32_1 = arith.constant 0 : i32
    return %c0_i32, %c0_i32_0 : i32, i32
  }
  func.func @transform_16(%arg0: i32) -> (i32, i32, i32) {
    %c0_i32 = arith.constant 0 : i32
    %c0_i32_0 = arith.constant 0 : i32
    %c0_i32_1 = arith.constant 0 : i32
    return %arg0, %c0_i32, %c0_i32_0 : i32, i32, i32
  }
}

</mosaic_0001>

<llo_original>
// kernel: _lambda_.1
$region0: #{_lambda_.1}
  #allocation0 [shape = 'u32[]', space=smem, size = 0x4, offset = 0x4, fixed_abs, tag = 'smem constant byte address 0x4 - core index']
  #allocation1 [shape = 'u32[72,128]{1,0:T(1,128)}', space=vmem, size = 0x9000, scoped, tag = 'internal scratch']
  %s0 = inlined_call_operand.vmem [shape: bf16[2,32,494], index: 0, kind: input, shape index: {}]
  %s1 = inlined_call_operand.vmem [shape: bf16[4,32], index: 1, kind: input, shape index: {}]
  %s2 = inlined_call_operand.vmem [shape: f32[4,1], index: 2, kind: input, shape index: {}]
  %s3 = inlined_call_operand.vmem [shape: f32[4,1], index: 3, kind: input, shape index: {}]
  %s4 = inlined_call_operand.vmem [shape: bf16[7,9,4,32], index: 4, kind: input, shape index: {}]
  %s5 = inlined_call_operand.vmem [shape: f32[7,4,1], index: 5, kind: input, shape index: {}]
  %s6 = inlined_call_operand.vmem [shape: f32[7,4,1], index: 6, kind: input, shape index: {}]
  %s7 = inlined_call_operand.vmem [shape: bf16[7,4,4], index: 7, kind: input, shape index: {}]
  %s8 = inlined_call_operand.vmem [shape: f32[7,4,1], index: 8, kind: input, shape index: {}]
  %s9 = inlined_call_operand.vmem [shape: f32[7,4,1], index: 9, kind: input, shape index: {}]
  %s10 = inlined_call_operand.vmem [shape: bf16[4,32], index: 10, kind: input, shape index: {}]
  %s11 = inlined_call_operand.vmem [shape: f32[4,1], index: 11, kind: input, shape index: {}]
  %s12 = inlined_call_operand.vmem [shape: f32[4,1], index: 12, kind: input, shape index: {}]
  %s13 = inlined_call_operand.vmem [shape: bf16[9,4,4], index: 13, kind: input, shape index: {}]
  %s14 = inlined_call_operand.vmem [shape: f32[4,1], index: 14, kind: input, shape index: {}]
  %s15 = inlined_call_operand.vmem [shape: f32[4,1], index: 15, kind: input, shape index: {}]
  %s16 = inlined_call_operand.vmem [shape: f32[2,4,256], index: 16, kind: output, shape index: {}]
  %s17 = sld [smem:[#allocation0]]
  $region97: #{_lambda_.1} parent=0
    _
  %s19 = ssub.s32 1, %s17
  %s20 = scalar_select 0, %s19, %s17
  loop: start=0, step=1, limit=4
  $region2: #{_lambda_.1} parent=0 // loop_pre_header
    _
  $region3: #{_lambda_.1} parent=0 // loop_header
    %s22 = sphi 0, %s26
    %p23 = scmp.ge.s32.totalorder %s22, 4
    %s32 = sphi 0, %s34
    %s35 = sphi 0, %s32
    %s36 = sphi 0, %s35
    %s52 = sphi 0, %s36
    %s56 = sphi 0, %s56
    %s58 = sphi 0, %s56
    %s59 = sphi 0, %s58
    %s73 = sphi 0, %s59
    %s77 = sphi 0, %s77
    %s79 = sphi 0, %s77
    %s80 = sphi 0, %s79
    %s94 = sphi 0, %s80
    %s98 = sphi 0, %s98
    %s100 = sphi 0, %s98
    %s101 = sphi 0, %s100
    %s115 = sphi 0, %s101
    %s119 = sphi 0, %s119
    %s121 = sphi 0, %s119
    %s122 = sphi 0, %s121
    %s136 = sphi 0, %s122
    %s140 = sphi 0, %s140
    %s142 = sphi 0, %s140
    %s143 = sphi 0, %s142
    %s157 = sphi 0, %s143
    %s161 = sphi 0, %s161
    %s163 = sphi 0, %s161
    %s164 = sphi 0, %s163
    %s178 = sphi 0, %s164
    %s182 = sphi 0, %s182
    %s184 = sphi 0, %s182
    %s185 = sphi 0, %s184
    %s199 = sphi 0, %s185
    %s203 = sphi 0, %s203
    %s205 = sphi 0, %s203
    %s206 = sphi 0, %s205
    %s220 = sphi 0, %s206
    %s224 = sphi 0, %s224
    %s226 = sphi 0, %s224
    %s227 = sphi 0, %s226
    %s241 = sphi 0, %s227
    %s245 = sphi 0, %s245
    %s247 = sphi 0, %s245
    %s248 = sphi 0, %s247
    %s262 = sphi 0, %s248
    %s266 = sphi 0, %s266
    %s268 = sphi 0, %s266
    %s269 = sphi 0, %s268
    %s283 = sphi 0, %s269
    %s287 = sphi 0, %s287
    %s289 = sphi 0, %s287
    %s290 = sphi 0, %s289
    %s304 = sphi 0, %s290
    %s308 = sphi 0, %s308
    %s310 = sphi 0, %s308
    %s311 = sphi 0, %s310
    %s325 = sphi 0, %s311
    %s329 = sphi 0, %s329
    %s331 = sphi 0, %s329
    %s332 = sphi 0, %s331
    %s346 = sphi 0, %s332
    %s350 = sphi 0, %s350
    %s352 = sphi 0, %s350
    %s353 = sphi 0, %s352
    %s367 = sphi 0, %s353
    %s373 = sphi 0, %s375
    %s376 = sphi 0, %s373
    %s377 = sphi 0, %s376
    %s393 = sphi 0, %s377
  $region4: #{_lambda_.1} parent=0 // loop_header_branch
    %25 = sbr.rel (%p23) target = $region8
  $region5: #{_lambda_.1} parent=0 // loop_body
    %s27 = ssub.s32 %s22, 1
    %s28 = ssub.s32 %s22, 2
    %s29 = sadd.s32 %s22, 1
    %s30 = ssub.s32 %s22, %s29
    %p31 = scmp.eq.s32.totalorder %s30, 0
    %s33 = sadd.s32 %s32, 1
    %s34 = scalar_select %p31, %s32, %s33
    %p37 = pneg %p31
    %p38 = scmp.eq.s32.totalorder %s22, 1
    %p39 = por %p37, %p38
    %p40 = scmp.ne.s32.totalorder %s32, %s35
    %p41 = scmp.eq.s32.totalorder %s22, 0
    %p42 = por %p40, %p41
    %p43 = scmp.ne.s32.totalorder %s32, %s35
    %p44 = scmp.eq.s32.totalorder %s27, 1
    %p45 = por %p43, %p44
    %p46 = scmp.ne.s32.totalorder %s35, %s36
    %p47 = scmp.eq.s32.totalorder %s27, 0
    %p48 = por %p46, %p47
    %p49 = scmp.ne.s32.totalorder %s35, %s36
    %p50 = scmp.eq.s32.totalorder %s28, 1
    %p51 = por %p49, %p50
    %p53 = scmp.ne.s32.totalorder %s36, %s52
    %p54 = scmp.eq.s32.totalorder %s28, 0
    %p55 = por %p53, %p54
    %s57 = sadd.s32 %s56, 1
    %p60 = scmp.eq.s32.totalorder %s22, 1
    %p61 = scmp.ne.s32.totalorder %s56, %s58
    %p62 = scmp.eq.s32.totalorder %s22, 0
    %p63 = por %p61, %p62
    %p64 = scmp.ne.s32.totalorder %s56, %s58
    %p65 = scmp.eq.s32.totalorder %s27, 1
    %p66 = por %p64, %p65
    %p67 = scmp.ne.s32.totalorder %s58, %s59
    %p68 = scmp.eq.s32.totalorder %s27, 0
    %p69 = por %p67, %p68
    %p70 = scmp.ne.s32.totalorder %s58, %s59
    %p71 = scmp.eq.s32.totalorder %s28, 1
    %p72 = por %p70, %p71
    %p74 = scmp.ne.s32.totalorder %s59, %s73
    %p75 = scmp.eq.s32.totalorder %s28, 0
    %p76 = por %p74, %p75
    %s78 = sadd.s32 %s77, 1
    %p81 = scmp.eq.s32.totalorder %s22, 1
    %p82 = scmp.ne.s32.totalorder %s77, %s79
    %p83 = scmp.eq.s32.totalorder %s22, 0
    %p84 = por %p82, %p83
    %p85 = scmp.ne.s32.totalorder %s77, %s79
    %p86 = scmp.eq.s32.totalorder %s27, 1
    %p87 = por %p85, %p86
    %p88 = scmp.ne.s32.totalorder %s79, %s80
    %p89 = scmp.eq.s32.totalorder %s27, 0
    %p90 = por %p88, %p89
    %p91 = scmp.ne.s32.totalorder %s79, %s80
    %p92 = scmp.eq.s32.totalorder %s28, 1
    %p93 = por %p91, %p92
    %p95 = scmp.ne.s32.totalorder %s80, %s94
    %p96 = scmp.eq.s32.totalorder %s28, 0
    %p97 = por %p95, %p96
    %s99 = sadd.s32 %s98, 1
    %p102 = scmp.eq.s32.totalorder %s22, 1
    %p103 = scmp.ne.s32.totalorder %s98, %s100
    %p104 = scmp.eq.s32.totalorder %s22, 0
    %p105 = por %p103, %p104
    %p106 = scmp.ne.s32.totalorder %s98, %s100
    %p107 = scmp.eq.s32.totalorder %s27, 1
    %p108 = por %p106, %p107
    %p109 = scmp.ne.s32.totalorder %s100, %s101
    %p110 = scmp.eq.s32.totalorder %s27, 0
    %p111 = por %p109, %p110
    %p112 = scmp.ne.s32.totalorder %s100, %s101
    %p113 = scmp.eq.s32.totalorder %s28, 1
    %p114 = por %p112, %p113
    %p116 = scmp.ne.s32.totalorder %s101, %s115
    %p117 = scmp.eq.s32.totalorder %s28, 0
    %p118 = por %p116, %p117
    %s120 = sadd.s32 %s119, 1
    %p123 = scmp.eq.s32.totalorder %s22, 1
    %p124 = scmp.ne.s32.totalorder %s119, %s121
    %p125 = scmp.eq.s32.totalorder %s22, 0
    %p126 = por %p124, %p125
    %p127 = scmp.ne.s32.totalorder %s119, %s121
    %p128 = scmp.eq.s32.totalorder %s27, 1
    %p129 = por %p127, %p128
    %p130 = scmp.ne.s32.totalorder %s121, %s122
    %p131 = scmp.eq.s32.totalorder %s27, 0
    %p132 = por %p130, %p131
    %p133 = scmp.ne.s32.totalorder %s121, %s122
    %p134 = scmp.eq.s32.totalorder %s28, 1
    %p135 = por %p133, %p134
    %p137 = scmp.ne.s32.totalorder %s122, %s136
    %p138 = scmp.eq.s32.totalorder %s28, 0
    %p139 = por %p137, %p138
    %s141 = sadd.s32 %s140, 1
    %p144 = scmp.eq.s32.totalorder %s22, 1
    %p145 = scmp.ne.s32.totalorder %s140, %s142
    %p146 = scmp.eq.s32.totalorder %s22, 0
    %p147 = por %p145, %p146
    %p148 = scmp.ne.s32.totalorder %s140, %s142
    %p149 = scmp.eq.s32.totalorder %s27, 1
    %p150 = por %p148, %p149
    %p151 = scmp.ne.s32.totalorder %s142, %s143
    %p152 = scmp.eq.s32.totalorder %s27, 0
    %p153 = por %p151, %p152
    %p154 = scmp.ne.s32.totalorder %s142, %s143
    %p155 = scmp.eq.s32.totalorder %s28, 1
    %p156 = por %p154, %p155
    %p158 = scmp.ne.s32.totalorder %s143, %s157
    %p159 = scmp.eq.s32.totalorder %s28, 0
    %p160 = por %p158, %p159
    %s162 = sadd.s32 %s161, 1
    %p165 = scmp.eq.s32.totalorder %s22, 1
    %p166 = scmp.ne.s32.totalorder %s161, %s163
    %p167 = scmp.eq.s32.totalorder %s22, 0
    %p168 = por %p166, %p167
    %p169 = scmp.ne.s32.totalorder %s161, %s163
    %p170 = scmp.eq.s32.totalorder %s27, 1
    %p171 = por %p169, %p170
    %p172 = scmp.ne.s32.totalorder %s163, %s164
    %p173 = scmp.eq.s32.totalorder %s27, 0
    %p174 = por %p172, %p173
    %p175 = scmp.ne.s32.totalorder %s163, %s164
    %p176 = scmp.eq.s32.totalorder %s28, 1
    %p177 = por %p175, %p176
    %p179 = scmp.ne.s32.totalorder %s164, %s178
    %p180 = scmp.eq.s32.totalorder %s28, 0
    %p181 = por %p179, %p180
    %s183 = sadd.s32 %s182, 1
    %p186 = scmp.eq.s32.totalorder %s22, 1
    %p187 = scmp.ne.s32.totalorder %s182, %s184
    %p188 = scmp.eq.s32.totalorder %s22, 0
    %p189 = por %p187, %p188
    %p190 = scmp.ne.s32.totalorder %s182, %s184
    %p191 = scmp.eq.s32.totalorder %s27, 1
    %p192 = por %p190, %p191
    %p193 = scmp.ne.s32.totalorder %s184, %s185
    %p194 = scmp.eq.s32.totalorder %s27, 0
    %p195 = por %p193, %p194
    %p196 = scmp.ne.s32.totalorder %s184, %s185
    %p197 = scmp.eq.s32.totalorder %s28, 1
    %p198 = por %p196, %p197
    %p200 = scmp.ne.s32.totalorder %s185, %s199
    %p201 = scmp.eq.s32.totalorder %s28, 0
    %p202 = por %p200, %p201
    %s204 = sadd.s32 %s203, 1
    %p207 = scmp.eq.s32.totalorder %s22, 1
    %p208 = scmp.ne.s32.totalorder %s203, %s205
    %p209 = scmp.eq.s32.totalorder %s22, 0
    %p210 = por %p208, %p209
    %p211 = scmp.ne.s32.totalorder %s203, %s205
    %p212 = scmp.eq.s32.totalorder %s27, 1
    %p213 = por %p211, %p212
    %p214 = scmp.ne.s32.totalorder %s205, %s206
    %p215 = scmp.eq.s32.totalorder %s27, 0
    %p216 = por %p214, %p215
    %p217 = scmp.ne.s32.totalorder %s205, %s206
    %p218 = scmp.eq.s32.totalorder %s28, 1
    %p219 = por %p217, %p218
    %p221 = scmp.ne.s32.totalorder %s206, %s220
    %p222 = scmp.eq.s32.totalorder %s28, 0
    %p223 = por %p221, %p222
    %s225 = sadd.s32 %s224, 1
    %p228 = scmp.eq.s32.totalorder %s22, 1
    %p229 = scmp.ne.s32.totalorder %s224, %s226
    %p230 = scmp.eq.s32.totalorder %s22, 0
    %p231 = por %p229, %p230
    %p232 = scmp.ne.s32.totalorder %s224, %s226
    %p233 = scmp.eq.s32.totalorder %s27, 1
    %p234 = por %p232, %p233
    %p235 = scmp.ne.s32.totalorder %s226, %s227
    %p236 = scmp.eq.s32.totalorder %s27, 0
    %p237 = por %p235, %p236
    %p238 = scmp.ne.s32.totalorder %s226, %s227
    %p239 = scmp.eq.s32.totalorder %s28, 1
    %p240 = por %p238, %p239
    %p242 = scmp.ne.s32.totalorder %s227, %s241
    %p243 = scmp.eq.s32.totalorder %s28, 0
    %p244 = por %p242, %p243
    %s246 = sadd.s32 %s245, 1
    %p249 = scmp.eq.s32.totalorder %s22, 1
    %p250 = scmp.ne.s32.totalorder %s245, %s247
    %p251 = scmp.eq.s32.totalorder %s22, 0
    %p252 = por %p250, %p251
    %p253 = scmp.ne.s32.totalorder %s245, %s247
    %p254 = scmp.eq.s32.totalorder %s27, 1
    %p255 = por %p253, %p254
    %p256 = scmp.ne.s32.totalorder %s247, %s248
    %p257 = scmp.eq.s32.totalorder %s27, 0
    %p258 = por %p256, %p257
    %p259 = scmp.ne.s32.totalorder %s247, %s248
    %p260 = scmp.eq.s32.totalorder %s28, 1
    %p261 = por %p259, %p260
    %p263 = scmp.ne.s32.totalorder %s248, %s262
    %p264 = scmp.eq.s32.totalorder %s28, 0
    %p265 = por %p263, %p264
    %s267 = sadd.s32 %s266, 1
    %p270 = scmp.eq.s32.totalorder %s22, 1
    %p271 = scmp.ne.s32.totalorder %s266, %s268
    %p272 = scmp.eq.s32.totalorder %s22, 0
    %p273 = por %p271, %p272
    %p274 = scmp.ne.s32.totalorder %s266, %s268
    %p275 = scmp.eq.s32.totalorder %s27, 1
    %p276 = por %p274, %p275
    %p277 = scmp.ne.s32.totalorder %s268, %s269
    %p278 = scmp.eq.s32.totalorder %s27, 0
    %p279 = por %p277, %p278
    %p280 = scmp.ne.s32.totalorder %s268, %s269
    %p281 = scmp.eq.s32.totalorder %s28, 1
    %p282 = por %p280, %p281
    %p284 = scmp.ne.s32.totalorder %s269, %s283
    %p285 = scmp.eq.s32.totalorder %s28, 0
    %p286 = por %p284, %p285
    %s288 = sadd.s32 %s287, 1
    %p291 = scmp.eq.s32.totalorder %s22, 1
    %p292 = scmp.ne.s32.totalorder %s287, %s289
    %p293 = scmp.eq.s32.totalorder %s22, 0
    %p294 = por %p292, %p293
    %p295 = scmp.ne.s32.totalorder %s287, %s289
    %p296 = scmp.eq.s32.totalorder %s27, 1
    %p297 = por %p295, %p296
    %p298 = scmp.ne.s32.totalorder %s289, %s290
    %p299 = scmp.eq.s32.totalorder %s27, 0
    %p300 = por %p298, %p299
    %p301 = scmp.ne.s32.totalorder %s289, %s290
    %p302 = scmp.eq.s32.totalorder %s28, 1
    %p303 = por %p301, %p302
    %p305 = scmp.ne.s32.totalorder %s290, %s304
    %p306 = scmp.eq.s32.totalorder %s28, 0
    %p307 = por %p305, %p306
    %s309 = sadd.s32 %s308, 1
    %p312 = scmp.eq.s32.totalorder %s22, 1
    %p313 = scmp.ne.s32.totalorder %s308, %s310
    %p314 = scmp.eq.s32.totalorder %s22, 0
    %p315 = por %p313, %p314
    %p316 = scmp.ne.s32.totalorder %s308, %s310
    %p317 = scmp.eq.s32.totalorder %s27, 1
    %p318 = por %p316, %p317
    %p319 = scmp.ne.s32.totalorder %s310, %s311
    %p320 = scmp.eq.s32.totalorder %s27, 0
    %p321 = por %p319, %p320
    %p322 = scmp.ne.s32.totalorder %s310, %s311
    %p323 = scmp.eq.s32.totalorder %s28, 1
    %p324 = por %p322, %p323
    %p326 = scmp.ne.s32.totalorder %s311, %s325
    %p327 = scmp.eq.s32.totalorder %s28, 0
    %p328 = por %p326, %p327
    %s330 = sadd.s32 %s329, 1
    %p333 = scmp.eq.s32.totalorder %s22, 1
    %p334 = scmp.ne.s32.totalorder %s329, %s331
    %p335 = scmp.eq.s32.totalorder %s22, 0
    %p336 = por %p334, %p335
    %p337 = scmp.ne.s32.totalorder %s329, %s331
    %p338 = scmp.eq.s32.totalorder %s27, 1
    %p339 = por %p337, %p338
    %p340 = scmp.ne.s32.totalorder %s331, %s332
    %p341 = scmp.eq.s32.totalorder %s27, 0
    %p342 = por %p340, %p341
    %p343 = scmp.ne.s32.totalorder %s331, %s332
    %p344 = scmp.eq.s32.totalorder %s28, 1
    %p345 = por %p343, %p344
    %p347 = scmp.ne.s32.totalorder %s332, %s346
    %p348 = scmp.eq.s32.totalorder %s28, 0
    %p349 = por %p347, %p348
    %s351 = sadd.s32 %s350, 1
    %p354 = scmp.eq.s32.totalorder %s22, 1
    %p355 = scmp.ne.s32.totalorder %s350, %s352
    %p356 = scmp.eq.s32.totalorder %s22, 0
    %p357 = por %p355, %p356
    %p358 = scmp.ne.s32.totalorder %s350, %s352
    %p359 = scmp.eq.s32.totalorder %s27, 1
    %p360 = por %p358, %p359
    %p361 = scmp.ne.s32.totalorder %s352, %s353
    %p362 = scmp.eq.s32.totalorder %s27, 0
    %p363 = por %p361, %p362
    %p364 = scmp.ne.s32.totalorder %s352, %s353
    %p365 = scmp.eq.s32.totalorder %s28, 1
    %p366 = por %p364, %p365
    %p368 = scmp.ne.s32.totalorder %s353, %s367
    %p369 = scmp.eq.s32.totalorder %s28, 0
    %p370 = por %p368, %p369
    %s371 = ssub.s32 %s22, %s29
    %p372 = scmp.eq.s32.totalorder %s371, 0
    %s374 = sadd.s32 %s373, 1
    %s375 = scalar_select %p372, %s373, %s374
    %p378 = pneg %p372
    %p379 = scmp.eq.s32.totalorder %s22, 1
    %p380 = por %p378, %p379
    %p381 = scmp.ne.s32.totalorder %s373, %s376
    %p382 = scmp.eq.s32.totalorder %s22, 0
    %p383 = por %p381, %p382
    %p384 = scmp.ne.s32.totalorder %s373, %s376
    %p385 = scmp.eq.s32.totalorder %s27, 1
    %p386 = por %p384, %p385
    %p387 = scmp.ne.s32.totalorder %s376, %s377
    %p388 = scmp.eq.s32.totalorder %s27, 0
    %p389 = por %p387, %p388
    %p390 = scmp.ne.s32.totalorder %s376, %s377
    %p391 = scmp.eq.s32.totalorder %s28, 1
    %p392 = por %p390, %p391
    %p394 = scmp.ne.s32.totalorder %s377, %s393
    %p395 = scmp.eq.s32.totalorder %s28, 0
    %p396 = por %p394, %p395
    %p397 = scmp.le.s32.totalorder 1, %s22
    %p398 = scmp.lt.s32.totalorder %s22, 3
    %p399 = pnand %p397, %p398
    %p400 = pneg %p399
    // Predicated region
    $region9: #{_lambda_.1} parent=5 // pred_check
      _
    $region10: #{_lambda_.1} parent=5 // pred_check_branch
      %402 = sbr.rel (%p399) target = $region12
    $region11: #{_lambda_.1} parent=5 // pred_region
      %s403 = ssub.s32 %s22, 1
      // Predicated region
      $region13: #{_lambda_.1} parent=11 // pred_check
        %p404 = pneg %p69
      $region14: #{_lambda_.1} parent=11 // pred_check_branch
        %406 = sbr.rel (%p404) target = $region16
      $region15: #{_lambda_.1} parent=11 // pred_region
        _
      $region16: #{_lambda_.1} parent=11 // pred_fallthru
        _
      // Predicated region
      $region17: #{_lambda_.1} parent=11 // pred_check
        %p407 = pneg %p90
      $region18: #{_lambda_.1} parent=11 // pred_check_branch
        %409 = sbr.rel (%p407) target = $region20
      $region19: #{_lambda_.1} parent=11 // pred_region
        _
      $region20: #{_lambda_.1} parent=11 // pred_fallthru
        _
      // Predicated region
      $region21: #{_lambda_.1} parent=11 // pred_check
        %p410 = pneg %p111
      $region22: #{_lambda_.1} parent=11 // pred_check_branch
        %412 = sbr.rel (%p410) target = $region24
      $region23: #{_lambda_.1} parent=11 // pred_region
        _
      $region24: #{_lambda_.1} parent=11 // pred_fallthru
        _
      // Predicated region
      $region25: #{_lambda_.1} parent=11 // pred_check
        %p413 = pneg %p132
      $region26: #{_lambda_.1} parent=11 // pred_check_branch
        %415 = sbr.rel (%p413) target = $region28
      $region27: #{_lambda_.1} parent=11 // pred_region
        _
      $region28: #{_lambda_.1} parent=11 // pred_fallthru
        _
      // Predicated region
      $region29: #{_lambda_.1} parent=11 // pred_check
        %p416 = pneg %p153
      $region30: #{_lambda_.1} parent=11 // pred_check_branch
        %418 = sbr.rel (%p416) target = $region32
      $region31: #{_lambda_.1} parent=11 // pred_region
        _
      $region32: #{_lambda_.1} parent=11 // pred_fallthru
        _
      // Predicated region
      $region33: #{_lambda_.1} parent=11 // pred_check
        %p419 = pneg %p174
      $region34: #{_lambda_.1} parent=11 // pred_check_branch
        %421 = sbr.rel (%p419) target = $region36
      $region35: #{_lambda_.1} parent=11 // pred_region
        _
      $region36: #{_lambda_.1} parent=11 // pred_fallthru
        _
      // Predicated region
      $region37: #{_lambda_.1} parent=11 // pred_check
        %p422 = pneg %p195
      $region38: #{_lambda_.1} parent=11 // pred_check_branch
        %424 = sbr.rel (%p422) target = $region40
      $region39: #{_lambda_.1} parent=11 // pred_region
        _
      $region40: #{_lambda_.1} parent=11 // pred_fallthru
        _
      // Predicated region
      $region41: #{_lambda_.1} parent=11 // pred_check
        %p425 = pneg %p216
      $region42: #{_lambda_.1} parent=11 // pred_check_branch
        %427 = sbr.rel (%p425) target = $region44
      $region43: #{_lambda_.1} parent=11 // pred_region
        _
      $region44: #{_lambda_.1} parent=11 // pred_fallthru
        _
      // Predicated region
      $region45: #{_lambda_.1} parent=11 // pred_check
        %p428 = pneg %p237
      $region46: #{_lambda_.1} parent=11 // pred_check_branch
        %430 = sbr.rel (%p428) target = $region48
      $region47: #{_lambda_.1} parent=11 // pred_region
        _
      $region48: #{_lambda_.1} parent=11 // pred_fallthru
        _
      // Predicated region
      $region49: #{_lambda_.1} parent=11 // pred_check
        %p431 = pneg %p258
      $region50: #{_lambda_.1} parent=11 // pred_check_branch
        %433 = sbr.rel (%p431) target = $region52
      $region51: #{_lambda_.1} parent=11 // pred_region
        _
      $region52: #{_lambda_.1} parent=11 // pred_fallthru
        _
      // Predicated region
      $region53: #{_lambda_.1} parent=11 // pred_check
        %p434 = pneg %p279
      $region54: #{_lambda_.1} parent=11 // pred_check_branch
        %436 = sbr.rel (%p434) target = $region56
      $region55: #{_lambda_.1} parent=11 // pred_region
        _
      $region56: #{_lambda_.1} parent=11 // pred_fallthru
        _
      // Predicated region
      $region57: #{_lambda_.1} parent=11 // pred_check
        %p437 = pneg %p300
      $region58: #{_lambda_.1} parent=11 // pred_check_branch
        %439 = sbr.rel (%p437) target = $region60
      $region59: #{_lambda_.1} parent=11 // pred_region
        _
      $region60: #{_lambda_.1} parent=11 // pred_fallthru
        _
      // Predicated region
      $region61: #{_lambda_.1} parent=11 // pred_check
        %p440 = pneg %p321
      $region62: #{_lambda_.1} parent=11 // pred_check_branch
        %442 = sbr.rel (%p440) target = $region64
      $region63: #{_lambda_.1} parent=11 // pred_region
        _
      $region64: #{_lambda_.1} parent=11 // pred_fallthru
        _
      // Predicated region
      $region65: #{_lambda_.1} parent=11 // pred_check
        %p443 = pneg %p342
      $region66: #{_lambda_.1} parent=11 // pred_check_branch
        %445 = sbr.rel (%p443) target = $region68
      $region67: #{_lambda_.1} parent=11 // pred_region
        _
      $region68: #{_lambda_.1} parent=11 // pred_fallthru
        _
      // Predicated region
      $region69: #{_lambda_.1} parent=11 // pred_check
        %p446 = pneg %p363
      $region70: #{_lambda_.1} parent=11 // pred_check_branch
        %448 = sbr.rel (%p446) target = $region72
      $region71: #{_lambda_.1} parent=11 // pred_region
        _
      $region72: #{_lambda_.1} parent=11 // pred_fallthru
        _
    $region12: #{_lambda_.1} parent=5 // pred_fallthru
      _
    %p449 = scmp.lt.s32.totalorder %s22, 2
    // Predicated region
    $region73: #{_lambda_.1} parent=5 // pred_check
      %p450 = pneg %p449
    $region74: #{_lambda_.1} parent=5 // pred_check_branch
      %452 = sbr.rel (%p450) target = $region76
    $region75: #{_lambda_.1} parent=5 // pred_region
      // Predicated region
      $region77: #{_lambda_.1} parent=75 // pred_check
        %p453 = pneg %p42
      $region78: #{_lambda_.1} parent=75 // pred_check_branch
        %455 = sbr.rel (%p453) target = $region80
      $region79: #{_lambda_.1} parent=75 // pred_region
        %p456 = scmp.lt.s32.totalorder %s22, 1
        %s457 = scalar_select %p456, %s22, 1
        %s458 = smul.addr %s457, 16
        %s459 = smul.addr %s458, 4
        %s460 = scalar_lea.vmem %s0, %s459
      $region80: #{_lambda_.1} parent=75 // pred_fallthru
        _
    $region76: #{_lambda_.1} parent=5 // pred_fallthru
      _
    %p461 = scmp.le.s32.totalorder 1, %s22
    %p462 = scmp.lt.s32.totalorder %s22, 3
    %p463 = pnand %p461, %p462
    %p464 = pneg %p463
    // Predicated region
    $region81: #{_lambda_.1} parent=5 // pred_check
      _
    $region82: #{_lambda_.1} parent=5 // pred_check_branch
      %466 = sbr.rel (%p463) target = $region84
    $region83: #{_lambda_.1} parent=5 // pred_region
      %s467 = ssub.s32 %s22, 1
      %p468 = scmp.lt.s32.totalorder %s27, 1
      %s469 = scalar_select %p468, %s27, 1
      %s470 = smul.addr %s469, 16
      %s471 = smul.addr %s470, 4
      %s472 = scalar_lea.vmem %s0, %s471
      %p473 = pneg %p48
      %p474 = pneg %p45
      %p475 = pneg %p69
      %p476 = pneg %p66
      %p477 = pneg %p90
      %p478 = pneg %p87
      %p479 = pneg %p111
      %p480 = pneg %p108
      %p481 = pneg %p132
      %p482 = pneg %p129
      %p483 = pneg %p153
      %p484 = pneg %p150
      %p485 = pneg %p174
      %p486 = pneg %p171
      %p487 = pneg %p195
      %p488 = pneg %p192
      %p489 = pneg %p216
      %p490 = pneg %p213
      %p491 = pneg %p237
      %p492 = pneg %p234
      %p493 = pneg %p258
      %p494 = pneg %p255
      %p495 = pneg %p279
      %p496 = pneg %p276
      %p497 = pneg %p300
      %p498 = pneg %p297
      %p499 = pneg %p321
      %p500 = pneg %p318
      %p501 = pneg %p342
      %p502 = pneg %p339
      %p503 = pneg %p363
      %p504 = pneg %p360
      %p505 = pneg %p389
      %p506 = pneg %p386
      %p507 = scmp.lt.s32.totalorder %s27, 1
      %s508 = scalar_select %p507, %s27, 1
      %s509 = smul.addr %s508, 2
      %s510 = smul.addr %s509, 4
      %s511 = scalar_lea.vmem %s16, %s510
      %p512 = scmp.lt.s32.totalorder %s27, 1
      %s513 = scalar_select %p512, %s27, 1
      %s514 = smul.addr %s513, 16
      %s515 = smul.addr %s514, 4
      %s516 = scalar_lea.vmem %s0, %s515
      %p517 = scmp.lt.s32.totalorder %s27, 1
      %s518 = scalar_select %p517, %s27, 1
      %s519 = smul.addr %s518, 2
      %s520 = smul.addr %s519, 4
      %s521 = scalar_lea.vmem %s16, %s520
      %v523 = vld [vmem:[%s516] sm:$0xff]
      %v524 = vld [vmem:[%s516 + $0x8] sm:$0xf]
      %v525 = vld [vmem:[%s516 + $0x10] sm:$0xff]
      %v526 = vld [vmem:[%s516 + $0x18] sm:$0xf]
      %v527 = vld [vmem:[%s516 + $0x20] sm:$0xff]
      %v528 = vld [vmem:[%s516 + $0x28] sm:$0xf]
      %v529 = vld [vmem:[%s516 + $0x30] sm:$0xff]
      %v530 = vld [vmem:[%s516 + $0x38] sm:$0xf]
      %v531 = vlaneseq
      %v532 = vand.u32 %v531, 127
      %v533 = vadd.s32 %v532, 128
      %vm534 = vcmp.lt.s32.totalorder %v532, 0
      %v535 = vsub.s32 0, %v532
      %v536 = vsel %vm534, %v535, %v532
      %v537 = vshrl.u32 %v536, 4
      %v538 = vand.u32 %v536, 15
      %v539 = vsub.s32 0, %v538
      %v540 = vsel %vm534, %v539, %v538
      %vm541 = vcmp.lt.s32.totalorder %v533, 0
      %v542 = vsub.s32 0, %v533
      %v543 = vsel %vm541, %v542, %v533
      %v544 = vshrl.u32 %v543, 4
      %v545 = vand.u32 %v543, 15
      %v546 = vsub.s32 0, %v545
      %v547 = vsel %vm541, %v546, %v545
      %vm548 = vcmp.ne.s32.totalorder %v540, 0
      %vm549 = vcmp.ne.s32.totalorder %v547, 0
      %vm550 = vcmp.lt.s32.totalorder %v540, 0
      %vm551 = vcmp.lt.s32.totalorder %v547, 0
      %vm552 = vmand %vm550, %vm548
      %vm553 = vmand %vm551, %vm549
      %v554 = vadd.s32 %v540, 16
      %v555 = vadd.s32 %v547, 16
      %v556 = vsel %vm552, %v554, %v540
      %v557 = vsel %vm553, %v555, %v547
      %v558 = vld [vmem:[%s1] sm:$0x3]
      %v567 = vunpack.c.l.b16 %v523
      %v568 = vunpack.c.h.b16 %v523
      %v569 = vunpack.c.l.b16 %v524
      %v570 = vunpack.c.l.b16 %v525
      %v571 = vunpack.c.h.b16 %v525
      %v572 = vunpack.c.l.b16 %v526
      %v573 = vunpack.c.l.b16 %v527
      %v574 = vunpack.c.h.b16 %v527
      %v575 = vunpack.c.l.b16 %v528
      %v576 = vunpack.c.l.b16 %v529
      %v577 = vunpack.c.h.b16 %v529
      %v578 = vunpack.c.l.b16 %v530
      %v579 = vpack.c.b16 %v570, %v567
      %v580 = vpack.c.b16 %v571, %v568
      %v581 = vpack.c.b16 %v572, %v569
      %v582 = vpack.c.b16 %v576, %v573
      %v583 = vpack.c.b16 %v577, %v574
      %v584 = vpack.c.b16 %v578, %v575
      %585 = vrot.lane.b32.xlu0 %v579, 9
      %v586 = vpop.permute.xlu0 %585
      %587 = vrot.lane.b32.xlu0 %v580, 9
      %v588 = vpop.permute.xlu0 %587
      %589 = vrot.lane.b32.xlu0 %v581, 9
      %v590 = vpop.permute.xlu0 %589
      %591 = vrot.lane.b32.xlu0 %v582, 9
      %v592 = vpop.permute.xlu0 %591
      %593 = vrot.lane.b32.xlu0 %v583, 9
      %v594 = vpop.permute.xlu0 %593
      %595 = vrot.lane.b32.xlu0 %v584, 9
      %v596 = vpop.permute.xlu0 %595
      %vm597 = vcmask 72704
      %v598 = vsel %vm597, %v586, %v588
      %v599 = vsel %vm597, %v588, %v590
      %v600 = vsel %vm597, %v592, %v594
      %v601 = vsel %vm597, %v594, %v596
      %vm606 = vcmask 261120
      %v608 = vsel %vm606, %v558, 0
      %610 = vmatpush.bf16.msra.mxu0 0
      %611 = vmatpush.bf16.msra.mxu0 0
      %612 = vmatpush.bf16.msra.mxu0 0
      %613 = vmatpush.bf16.msra.mxu0 0
      %614 = vmatpush.bf16.msra.mxu0 0
      %615 = vmatpush.bf16.msra.mxu0 0
      %616 = vmatpush.bf16.msra.mxu0 %v600
      %617 = vmatpush.bf16.msra.mxu0 %v598
      %618 = vmatmul.bf16.gmra.mxu0 %v608
      %v619 = vpop.f32.mrf.mxu0
      %v620 = vadd.f32 0.0, %v619
      %v621 = vpop.f32.mrf.mxu0
      %622 = vdwg.mxu0
      %623 = vmatpush.bf16.msra.mxu0 0
      %624 = vmatpush.bf16.msra.mxu0 0
      %625 = vmatpush.bf16.msra.mxu0 0
      %626 = vmatpush.bf16.msra.mxu0 0
      %627 = vmatpush.bf16.msra.mxu0 0
      %628 = vmatpush.bf16.msra.mxu0 0
      %629 = vmatpush.bf16.msra.mxu0 %v601
      %630 = vmatpush.bf16.msra.mxu0 %v599
      %631 = vmatmul.bf16.gmra.mxu0 %v608
      %v632 = vpop.f32.mrf.mxu0
      %v633 = vadd.f32 0.0, %v632
      %v634 = vpop.f32.mrf.mxu0
      %635 = vdwg.mxu0
      %v636 = vld [vmem:[%s2] sm:$0xf]
      %v637 = vld [vmem:[%s3] sm:$0xf]
      %639 = vset.pattern.permute.xlu0 0
      %640 = vperm.xlu0 %639, %v636
      %v641 = vpop.permute.xlu0 %640
      %v643 = vmul.f32 %v620, %v641
      %v644 = vmul.f32 %v633, %v641
      %646 = vset.pattern.permute.xlu0 0
      %647 = vperm.xlu0 %646, %v637
      %v648 = vpop.permute.xlu0 %647
      %v650 = vadd.f32 %v643, %v648
      %v651 = vadd.f32 %v644, %v648
      %v652 = vmax.f32 %v650, 0.0
      %v653 = vmax.f32 %v651, 0.0
      %v654 = vpack.c.bf16 %v652, %v652
      %v655 = vpack.c.bf16 %v653, %v653
      %v656 = vld [vmem:[%s13] sm:$0x3]
      %v657 = vld [vmem:[%s4] sm:$0x3]
      %s658 = scalar_lea.vmem %s4, 6
      %v659 = vld [vmem:[%s658] sm:$0x3]
      %660 = vrot.lane.b32.xlu0 %v579, 10
      %v661 = vpop.permute.xlu0 %660
      %662 = vrot.lane.b32.xlu0 %v580, 10
      %v663 = vpop.permute.xlu0 %662
      %664 = vrot.lane.b32.xlu0 %v581, 10
      %v665 = vpop.permute.xlu0 %664
      %666 = vrot.lane.b32.xlu0 %v582, 10
      %v667 = vpop.permute.xlu0 %666
      %668 = vrot.lane.b32.xlu0 %v583, 10
      %v669 = vpop.permute.xlu0 %668
      %670 = vrot.lane.b32.xlu0 %v584, 10
      %v671 = vpop.permute.xlu0 %670
      %vm672 = vcmask 80896
      %v673 = vsel %vm672, %v661, %v663
      %v674 = vsel %vm672, %v663, %v665
      %v675 = vsel %vm672, %v667, %v669
      %v676 = vsel %vm672, %v669, %v671
      %v682 = vsel %vm606, %v659, 0
      %684 = vmatpush.bf16.msra.mxu0 0
      %685 = vmatpush.bf16.msra.mxu0 0
      %686 = vmatpush.bf16.msra.mxu0 0
      %687 = vmatpush.bf16.msra.mxu0 0
      %688 = vmatpush.bf16.msra.mxu0 0
      %689 = vmatpush.bf16.msra.mxu0 0
      %690 = vmatpush.bf16.msra.mxu0 %v675
      %691 = vmatpush.bf16.msra.mxu0 %v673
      %692 = vmatmul.bf16.gmra.mxu0 %v682
      %v693 = vpop.f32.mrf.mxu0
      %v694 = vadd.f32 0.0, %v693
      %v695 = vpop.f32.mrf.mxu0
      %696 = vdwg.mxu0
      %697 = vmatpush.bf16.msra.mxu0 0
      %698 = vmatpush.bf16.msra.mxu0 0
      %699 = vmatpush.bf16.msra.mxu0 0
      %700 = vmatpush.bf16.msra.mxu0 0
      %701 = vmatpush.bf16.msra.mxu0 0
      %702 = vmatpush.bf16.msra.mxu0 0
      %703 = vmatpush.bf16.msra.mxu0 %v676
      %704 = vmatpush.bf16.msra.mxu0 %v674
      %705 = vmatmul.bf16.gmra.mxu0 %v682
      %v706 = vpop.f32.mrf.mxu0
      %v707 = vadd.f32 0.0, %v706
      %v708 = vpop.f32.mrf.mxu0
      %709 = vdwg.mxu0
      %710 = vrot.lane.b32.xlu0 %v579, 26
      %v711 = vpop.permute.xlu0 %710
      %712 = vrot.lane.b32.xlu0 %v580, 26
      %v713 = vpop.permute.xlu0 %712
      %714 = vrot.lane.b32.xlu0 %v581, 26
      %v715 = vpop.permute.xlu0 %714
      %716 = vrot.lane.b32.xlu0 %v582, 26
      %v717 = vpop.permute.xlu0 %716
      %718 = vrot.lane.b32.xlu0 %v583, 26
      %v719 = vpop.permute.xlu0 %718
      %720 = vrot.lane.b32.xlu0 %v584, 26
      %v721 = vpop.permute.xlu0 %720
      %vm722 = vcmask 211968
      %v723 = vsel %vm722, %v711, %v713
      %v724 = vsel %vm722, %v713, %v715
      %v725 = vsel %vm722, %v717, %v719
      %v726 = vsel %vm722, %v719, %v721
      %v732 = vsel %vm606, %v657, 0
      %734 = vmatpush.bf16.msra.mxu0 0
      %735 = vmatpush.bf16.msra.mxu0 0
      %736 = vmatpush.bf16.msra.mxu0 0
      %737 = vmatpush.bf16.msra.mxu0 0
      %738 = vmatpush.bf16.msra.mxu0 0
      %739 = vmatpush.bf16.msra.mxu0 0
      %740 = vmatpush.bf16.msra.mxu0 %v725
      %741 = vmatpush.bf16.msra.mxu0 %v723
      %742 = vmatmul.bf16.gmra.mxu0 %v732
      %v743 = vpop.f32.mrf.mxu0
      %v744 = vadd.f32 %v694, %v743
      %v745 = vpop.f32.mrf.mxu0
      %746 = vdwg.mxu0
      %747 = vmatpush.bf16.msra.mxu0 0
      %748 = vmatpush.bf16.msra.mxu0 0
      %749 = vmatpush.bf16.msra.mxu0 0
      %750 = vmatpush.bf16.msra.mxu0 0
      %751 = vmatpush.bf16.msra.mxu0 0
      %752 = vmatpush.bf16.msra.mxu0 0
      %753 = vmatpush.bf16.msra.mxu0 %v726
      %754 = vmatpush.bf16.msra.mxu0 %v724
      %755 = vmatmul.bf16.gmra.mxu0 %v732
      %v756 = vpop.f32.mrf.mxu0
      %v757 = vadd.f32 %v707, %v756
      %v758 = vpop.f32.mrf.mxu0
      %759 = vdwg.mxu0
      %v760 = vld [vmem:[%s516 + $0x4] sm:$0xff]
      %v761 = vld [vmem:[%s516 + $0xc] sm:$0xf]
      %v762 = vld [vmem:[%s516 + $0x14] sm:$0xff]
      %v763 = vld [vmem:[%s516 + $0x1c] sm:$0xf]
      %v764 = vld [vmem:[%s516 + $0x24] sm:$0xff]
      %v765 = vld [vmem:[%s516 + $0x2c] sm:$0xf]
      %v766 = vld [vmem:[%s516 + $0x34] sm:$0xff]
      %v767 = vld [vmem:[%s516 + $0x3c] sm:$0xf]
      %s768 = scalar_lea.vmem %s4, 12
      %v769 = vld [vmem:[%s768] sm:$0x3]
      %v778 = vunpack.c.l.b16 %v760
      %v779 = vunpack.c.h.b16 %v760
      %v780 = vunpack.c.l.b16 %v761
      %v781 = vunpack.c.l.b16 %v762
      %v782 = vunpack.c.h.b16 %v762
      %v783 = vunpack.c.l.b16 %v763
      %v784 = vunpack.c.l.b16 %v764
      %v785 = vunpack.c.h.b16 %v764
      %v786 = vunpack.c.l.b16 %v765
      %v787 = vunpack.c.l.b16 %v766
      %v788 = vunpack.c.h.b16 %v766
      %v789 = vunpack.c.l.b16 %v767
      %v790 = vpack.c.b16 %v781, %v778
      %v791 = vpack.c.b16 %v782, %v779
      %v792 = vpack.c.b16 %v783, %v780
      %v793 = vpack.c.b16 %v787, %v784
      %v794 = vpack.c.b16 %v788, %v785
      %v795 = vpack.c.b16 %v789, %v786
      %796 = vrot.lane.b32.xlu0 %v790, 122
      %v797 = vpop.permute.xlu0 %796
      %798 = vrot.lane.b32.xlu0 %v791, 122
      %v799 = vpop.permute.xlu0 %798
      %800 = vrot.lane.b32.xlu0 %v792, 122
      %v801 = vpop.permute.xlu0 %800
      %802 = vrot.lane.b32.xlu0 %v793, 122
      %v803 = vpop.permute.xlu0 %802
      %804 = vrot.lane.b32.xlu0 %v794, 122
      %v805 = vpop.permute.xlu0 %804
      %806 = vrot.lane.b32.xlu0 %v795, 122
      %v807 = vpop.permute.xlu0 %806
      %vm808 = vcmask 998400
      %v809 = vsel %vm808, %v797, %v799
      %v810 = vsel %vm808, %v799, %v801
      %v811 = vsel %vm808, %v803, %v805
      %v812 = vsel %vm808, %v805, %v807
      %v818 = vsel %vm606, %v769, 0
      %820 = vmatpush.bf16.msra.mxu0 0
      %821 = vmatpush.bf16.msra.mxu0 0
      %822 = vmatpush.bf16.msra.mxu0 0
      %823 = vmatpush.bf16.msra.mxu0 0
      %824 = vmatpush.bf16.msra.mxu0 0
      %825 = vmatpush.bf16.msra.mxu0 0
      %826 = vmatpush.bf16.msra.mxu0 %v811
      %827 = vmatpush.bf16.msra.mxu0 %v809
      %828 = vmatmul.bf16.gmra.mxu0 %v818
      %v829 = vpop.f32.mrf.mxu0
      %v830 = vadd.f32 0.0, %v829
      %v831 = vpop.f32.mrf.mxu0
      %832 = vdwg.mxu0
      %833 = vmatpush.bf16.msra.mxu0 0
      %834 = vmatpush.bf16.msra.mxu0 0
      %835 = vmatpush.bf16.msra.mxu0 0
      %836 = vmatpush.bf16.msra.mxu0 0
      %837 = vmatpush.bf16.msra.mxu0 0
      %838 = vmatpush.bf16.msra.mxu0 0
      %839 = vmatpush.bf16.msra.mxu0 %v812
      %840 = vmatpush.bf16.msra.mxu0 %v810
      %841 = vmatmul.bf16.gmra.mxu0 %v818
      %v842 = vpop.f32.mrf.mxu0
      %v843 = vadd.f32 0.0, %v842
      %v844 = vpop.f32.mrf.mxu0
      %845 = vdwg.mxu0
      %v846 = vadd.f32 %v744, %v830
      %v847 = vadd.f32 %v757, %v843
      %vm848 = vcmp.ge.s32.totalorder %v556, 1
      %vm849 = vcmp.ge.s32.totalorder %v557, 1
      %v850 = vsel %vm848, 1, 0
      %v851 = vsel %vm849, 1, 0
      %v852 = vcvt.s32.f32 %v850
      %v853 = vcvt.s32.f32 %v851
      %v854 = vmul.f32 %v846, %v852
      %v855 = vmul.f32 %v847, %v853
      %s856 = scalar_lea.vmem %s4, 2
      %v857 = vld [vmem:[%s856] sm:$0x3]
      %s858 = scalar_lea.vmem %s4, 8
      %v859 = vld [vmem:[%s858] sm:$0x3]
      %v861 = vsel %vm606, %v859, 0
      %863 = vmatpush.bf16.msra.mxu0 0
      %864 = vmatpush.bf16.msra.mxu0 0
      %865 = vmatpush.bf16.msra.mxu0 0
      %866 = vmatpush.bf16.msra.mxu0 0
      %867 = vmatpush.bf16.msra.mxu0 0
      %868 = vmatpush.bf16.msra.mxu0 0
      %869 = vmatpush.bf16.msra.mxu0 %v600
      %870 = vmatpush.bf16.msra.mxu0 %v598
      %871 = vmatmul.bf16.gmra.mxu0 %v861
      %v872 = vpop.f32.mrf.mxu0
      %v873 = vadd.f32 0.0, %v872
      %v874 = vpop.f32.mrf.mxu0
      %875 = vdwg.mxu0
      %876 = vmatpush.bf16.msra.mxu0 0
      %877 = vmatpush.bf16.msra.mxu0 0
      %878 = vmatpush.bf16.msra.mxu0 0
      %879 = vmatpush.bf16.msra.mxu0 0
      %880 = vmatpush.bf16.msra.mxu0 0
      %881 = vmatpush.bf16.msra.mxu0 0
      %882 = vmatpush.bf16.msra.mxu0 %v601
      %883 = vmatpush.bf16.msra.mxu0 %v599
      %884 = vmatmul.bf16.gmra.mxu0 %v861
      %v885 = vpop.f32.mrf.mxu0
      %v886 = vadd.f32 0.0, %v885
      %v887 = vpop.f32.mrf.mxu0
      %888 = vdwg.mxu0
      %889 = vrot.lane.b32.xlu0 %v579, 25
      %v890 = vpop.permute.xlu0 %889
      %891 = vrot.lane.b32.xlu0 %v580, 25
      %v892 = vpop.permute.xlu0 %891
      %893 = vrot.lane.b32.xlu0 %v581, 25
      %v894 = vpop.permute.xlu0 %893
      %895 = vrot.lane.b32.xlu0 %v582, 25
      %v896 = vpop.permute.xlu0 %895
      %897 = vrot.lane.b32.xlu0 %v583, 25
      %v898 = vpop.permute.xlu0 %897
      %899 = vrot.lane.b32.xlu0 %v584, 25
      %v900 = vpop.permute.xlu0 %899
      %vm901 = vcmask 203776
      %v902 = vsel %vm901, %v890, %v892
      %v903 = vsel %vm901, %v892, %v894
      %v904 = vsel %vm901, %v896, %v898
      %v905 = vsel %vm901, %v898, %v900
      %v911 = vsel %vm606, %v857, 0
      %913 = vmatpush.bf16.msra.mxu0 0
      %914 = vmatpush.bf16.msra.mxu0 0
      %915 = vmatpush.bf16.msra.mxu0 0
      %916 = vmatpush.bf16.msra.mxu0 0
      %917 = vmatpush.bf16.msra.mxu0 0
      %918 = vmatpush.bf16.msra.mxu0 0
      %919 = vmatpush.bf16.msra.mxu0 %v904
      %920 = vmatpush.bf16.msra.mxu0 %v902
      %921 = vmatmul.bf16.gmra.mxu0 %v911
      %v922 = vpop.f32.mrf.mxu0
      %v923 = vadd.f32 %v873, %v922
      %v924 = vpop.f32.mrf.mxu0
      %925 = vdwg.mxu0
      %926 = vmatpush.bf16.msra.mxu0 0
      %927 = vmatpush.bf16.msra.mxu0 0
      %928 = vmatpush.bf16.msra.mxu0 0
      %929 = vmatpush.bf16.msra.mxu0 0
      %930 = vmatpush.bf16.msra.mxu0 0
      %931 = vmatpush.bf16.msra.mxu0 0
      %932 = vmatpush.bf16.msra.mxu0 %v905
      %933 = vmatpush.bf16.msra.mxu0 %v903
      %934 = vmatmul.bf16.gmra.mxu0 %v911
      %v935 = vpop.f32.mrf.mxu0
      %v936 = vadd.f32 %v886, %v935
      %v937 = vpop.f32.mrf.mxu0
      %938 = vdwg.mxu0
      %s939 = scalar_lea.vmem %s4, 14
      %v940 = vld [vmem:[%s939] sm:$0x3]
      %941 = vrot.lane.b32.xlu0 %v790, 121
      %v942 = vpop.permute.xlu0 %941
      %943 = vrot.lane.b32.xlu0 %v791, 121
      %v944 = vpop.permute.xlu0 %943
      %945 = vrot.lane.b32.xlu0 %v792, 121
      %v946 = vpop.permute.xlu0 %945
      %947 = vrot.lane.b32.xlu0 %v793, 121
      %v948 = vpop.permute.xlu0 %947
      %949 = vrot.lane.b32.xlu0 %v794, 121
      %v950 = vpop.permute.xlu0 %949
      %951 = vrot.lane.b32.xlu0 %v795, 121
      %v952 = vpop.permute.xlu0 %951
      %vm953 = vcmask 990208
      %v954 = vsel %vm953, %v942, %v944
      %v955 = vsel %vm953, %v944, %v946
      %v956 = vsel %vm953, %v948, %v950
      %v957 = vsel %vm953, %v950, %v952
      %v963 = vsel %vm606, %v940, 0
      %965 = vmatpush.bf16.msra.mxu0 0
      %966 = vmatpush.bf16.msra.mxu0 0
      %967 = vmatpush.bf16.msra.mxu0 0
      %968 = vmatpush.bf16.msra.mxu0 0
      %969 = vmatpush.bf16.msra.mxu0 0
      %970 = vmatpush.bf16.msra.mxu0 0
      %971 = vmatpush.bf16.msra.mxu0 %v956
      %972 = vmatpush.bf16.msra.mxu0 %v954
      %973 = vmatmul.bf16.gmra.mxu0 %v963
      %v974 = vpop.f32.mrf.mxu0
      %v975 = vadd.f32 0.0, %v974
      %v976 = vpop.f32.mrf.mxu0
      %977 = vdwg.mxu0
      %978 = vmatpush.bf16.msra.mxu0 0
      %979 = vmatpush.bf16.msra.mxu0 0
      %980 = vmatpush.bf16.msra.mxu0 0
      %981 = vmatpush.bf16.msra.mxu0 0
      %982 = vmatpush.bf16.msra.mxu0 0
      %983 = vmatpush.bf16.msra.mxu0 0
      %984 = vmatpush.bf16.msra.mxu0 %v957
      %985 = vmatpush.bf16.msra.mxu0 %v955
      %986 = vmatmul.bf16.gmra.mxu0 %v963
      %v987 = vpop.f32.mrf.mxu0
      %v988 = vadd.f32 0.0, %v987
      %v989 = vpop.f32.mrf.mxu0
      %990 = vdwg.mxu0
      %v991 = vadd.f32 %v923, %v975
      %v992 = vadd.f32 %v936, %v988
      %v993 = vadd.f32 %v854, %v991
      %v994 = vadd.f32 %v855, %v992
      %s995 = scalar_lea.vmem %s4, 4
      %v996 = vld [vmem:[%s995] sm:$0x3]
      %s997 = scalar_lea.vmem %s4, 10
      %v998 = vld [vmem:[%s997] sm:$0x3]
      %999 = vrot.lane.b32.xlu0 %v579, 8
      %v1000 = vpop.permute.xlu0 %999
      %1001 = vrot.lane.b32.xlu0 %v580, 8
      %v1002 = vpop.permute.xlu0 %1001
      %1003 = vrot.lane.b32.xlu0 %v581, 8
      %v1004 = vpop.permute.xlu0 %1003
      %1005 = vrot.lane.b32.xlu0 %v582, 8
      %v1006 = vpop.permute.xlu0 %1005
      %1007 = vrot.lane.b32.xlu0 %v583, 8
      %v1008 = vpop.permute.xlu0 %1007
      %1009 = vrot.lane.b32.xlu0 %v584, 8
      %v1010 = vpop.permute.xlu0 %1009
      %vm1011 = vcmask 64512
      %v1012 = vsel %vm1011, %v1000, %v1002
      %v1013 = vsel %vm1011, %v1002, %v1004
      %v1014 = vsel %vm1011, %v1006, %v1008
      %v1015 = vsel %vm1011, %v1008, %v1010
      %v1021 = vsel %vm606, %v998, 0
      %1023 = vmatpush.bf16.msra.mxu0 0
      %1024 = vmatpush.bf16.msra.mxu0 0
      %1025 = vmatpush.bf16.msra.mxu0 0
      %1026 = vmatpush.bf16.msra.mxu0 0
      %1027 = vmatpush.bf16.msra.mxu0 0
      %1028 = vmatpush.bf16.msra.mxu0 0
      %1029 = vmatpush.bf16.msra.mxu0 %v1014
      %1030 = vmatpush.bf16.msra.mxu0 %v1012
      %1031 = vmatmul.bf16.gmra.mxu0 %v1021
      %v1032 = vpop.f32.mrf.mxu0
      %v1033 = vadd.f32 0.0, %v1032
      %v1034 = vpop.f32.mrf.mxu0
      %1035 = vdwg.mxu0
      %1036 = vmatpush.bf16.msra.mxu0 0
      %1037 = vmatpush.bf16.msra.mxu0 0
      %1038 = vmatpush.bf16.msra.mxu0 0
      %1039 = vmatpush.bf16.msra.mxu0 0
      %1040 = vmatpush.bf16.msra.mxu0 0
      %1041 = vmatpush.bf16.msra.mxu0 0
      %1042 = vmatpush.bf16.msra.mxu0 %v1015
      %1043 = vmatpush.bf16.msra.mxu0 %v1013
      %1044 = vmatmul.bf16.gmra.mxu0 %v1021
      %v1045 = vpop.f32.mrf.mxu0
      %v1046 = vadd.f32 0.0, %v1045
      %v1047 = vpop.f32.mrf.mxu0
      %1048 = vdwg.mxu0
      %1049 = vrot.lane.b32.xlu0 %v579, 24
      %v1050 = vpop.permute.xlu0 %1049
      %1051 = vrot.lane.b32.xlu0 %v580, 24
      %v1052 = vpop.permute.xlu0 %1051
      %1053 = vrot.lane.b32.xlu0 %v581, 24
      %v1054 = vpop.permute.xlu0 %1053
      %1055 = vrot.lane.b32.xlu0 %v582, 24
      %v1056 = vpop.permute.xlu0 %1055
      %1057 = vrot.lane.b32.xlu0 %v583, 24
      %v1058 = vpop.permute.xlu0 %1057
      %1059 = vrot.lane.b32.xlu0 %v584, 24
      %v1060 = vpop.permute.xlu0 %1059
      %vm1061 = vcmask 195584
      %v1062 = vsel %vm1061, %v1050, %v1052
      %v1063 = vsel %vm1061, %v1052, %v1054
      %v1064 = vsel %vm1061, %v1056, %v1058
      %v1065 = vsel %vm1061, %v1058, %v1060
      %v1071 = vsel %vm606, %v996, 0
      %1073 = vmatpush.bf16.msra.mxu0 0
      %1074 = vmatpush.bf16.msra.mxu0 0
      %1075 = vmatpush.bf16.msra.mxu0 0
      %1076 = vmatpush.bf16.msra.mxu0 0
      %1077 = vmatpush.bf16.msra.mxu0 0
      %1078 = vmatpush.bf16.msra.mxu0 0
      %1079 = vmatpush.bf16.msra.mxu0 %v1064
      %1080 = vmatpush.bf16.msra.mxu0 %v1062
      %1081 = vmatmul.bf16.gmra.mxu0 %v1071
      %v1082 = vpop.f32.mrf.mxu0
      %v1083 = vadd.f32 %v1033, %v1082
      %v1084 = vpop.f32.mrf.mxu0
      %1085 = vdwg.mxu0
      %1086 = vmatpush.bf16.msra.mxu0 0
      %1087 = vmatpush.bf16.msra.mxu0 0
      %1088 = vmatpush.bf16.msra.mxu0 0
      %1089 = vmatpush.bf16.msra.mxu0 0
      %1090 = vmatpush.bf16.msra.mxu0 0
      %1091 = vmatpush.bf16.msra.mxu0 0
      %1092 = vmatpush.bf16.msra.mxu0 %v1065
      %1093 = vmatpush.bf16.msra.mxu0 %v1063
      %1094 = vmatmul.bf16.gmra.mxu0 %v1071
      %v1095 = vpop.f32.mrf.mxu0
      %v1096 = vadd.f32 %v1046, %v1095
      %v1097 = vpop.f32.mrf.mxu0
      %1098 = vdwg.mxu0
      %s1099 = scalar_lea.vmem %s4, 16
      %v1100 = vld [vmem:[%s1099] sm:$0x3]
      %1101 = vrot.lane.b32.xlu0 %v790, 120
      %v1102 = vpop.permute.xlu0 %1101
      %1103 = vrot.lane.b32.xlu0 %v791, 120
      %v1104 = vpop.permute.xlu0 %1103
      %1105 = vrot.lane.b32.xlu0 %v792, 120
      %v1106 = vpop.permute.xlu0 %1105
      %1107 = vrot.lane.b32.xlu0 %v793, 120
      %v1108 = vpop.permute.xlu0 %1107
      %1109 = vrot.lane.b32.xlu0 %v794, 120
      %v1110 = vpop.permute.xlu0 %1109
      %1111 = vrot.lane.b32.xlu0 %v795, 120
      %v1112 = vpop.permute.xlu0 %1111
      %vm1113 = vcmask 982016
      %v1114 = vsel %vm1113, %v1102, %v1104
      %v1115 = vsel %vm1113, %v1104, %v1106
      %v1116 = vsel %vm1113, %v1108, %v1110
      %v1117 = vsel %vm1113, %v1110, %v1112
      %v1123 = vsel %vm606, %v1100, 0
      %1125 = vmatpush.bf16.msra.mxu0 0
      %1126 = vmatpush.bf16.msra.mxu0 0
      %1127 = vmatpush.bf16.msra.mxu0 0
      %1128 = vmatpush.bf16.msra.mxu0 0
      %1129 = vmatpush.bf16.msra.mxu0 0
      %1130 = vmatpush.bf16.msra.mxu0 0
      %1131 = vmatpush.bf16.msra.mxu0 %v1116
      %1132 = vmatpush.bf16.msra.mxu0 %v1114
      %1133 = vmatmul.bf16.gmra.mxu0 %v1123
      %v1134 = vpop.f32.mrf.mxu0
      %v1135 = vadd.f32 0.0, %v1134
      %v1136 = vpop.f32.mrf.mxu0
      %1137 = vdwg.mxu0
      %1138 = vmatpush.bf16.msra.mxu0 0
      %1139 = vmatpush.bf16.msra.mxu0 0
      %1140 = vmatpush.bf16.msra.mxu0 0
      %1141 = vmatpush.bf16.msra.mxu0 0
      %1142 = vmatpush.bf16.msra.mxu0 0
      %1143 = vmatpush.bf16.msra.mxu0 0
      %1144 = vmatpush.bf16.msra.mxu0 %v1117
      %1145 = vmatpush.bf16.msra.mxu0 %v1115
      %1146 = vmatmul.bf16.gmra.mxu0 %v1123
      %v1147 = vpop.f32.mrf.mxu0
      %v1148 = vadd.f32 0.0, %v1147
      %v1149 = vpop.f32.mrf.mxu0
      %1150 = vdwg.mxu0
      %v1151 = vadd.f32 %v1083, %v1135
      %v1152 = vadd.f32 %v1096, %v1148
      %vm1153 = vcmp.lt.s32.totalorder %v556, 15
      %vm1154 = vcmp.lt.s32.totalorder %v557, 15
      %v1155 = vsel %vm1153, 1, 0
      %v1156 = vsel %vm1154, 1, 0
      %v1157 = vcvt.s32.f32 %v1155
      %v1158 = vcvt.s32.f32 %v1156
      %v1159 = vmul.f32 %v1151, %v1157
      %v1160 = vmul.f32 %v1152, %v1158
      %v1161 = vadd.f32 %v993, %v1159
      %v1162 = vadd.f32 %v994, %v1160
      %v1163 = vld [vmem:[%s5] sm:$0xf]
      %v1164 = vld [vmem:[%s6] sm:$0xf]
      %1166 = vset.pattern.permute.xlu0 0
      %1167 = vperm.xlu0 %1166, %v1163
      %v1168 = vpop.permute.xlu0 %1167
      %v1170 = vmul.f32 %v1161, %v1168
      %v1171 = vmul.f32 %v1162, %v1168
      %1173 = vset.pattern.permute.xlu0 0
      %1174 = vperm.xlu0 %1173, %v1164
      %v1175 = vpop.permute.xlu0 %1174
      %v1177 = vadd.f32 %v1170, %v1175
      %v1178 = vadd.f32 %v1171, %v1175
      %v1179 = vmax.f32 %v1177, 0.0
      %v1180 = vmax.f32 %v1178, 0.0
      %v1181 = vpack.c.bf16 %v1179, %v1179
      %v1182 = vpack.c.bf16 %v1180, %v1180
      %v1183 = vld [vmem:[%s7] sm:$0x3]
      %vm1184 = vcmask 31744
      %v1186 = vsel %vm1184, %v1183, 0
      %vm1188 = vcmask 1041408
      %v1190 = vsel %vm1188, %v1181, 0
      %v1193 = vsel %vm1188, %v1182, 0
      %1195 = vmatpush.bf16.msra.mxu0 0
      %1196 = vmatpush.bf16.msra.mxu0 0
      %1197 = vmatpush.bf16.msra.mxu0 0
      %1198 = vmatpush.bf16.msra.mxu0 0
      %1199 = vmatpush.bf16.msra.mxu0 0
      %1200 = vmatpush.bf16.msra.mxu0 0
      %1201 = vmatpush.bf16.msra.mxu0 0
      %1202 = vmatpush.bf16.msra.mxu0 %v1190
      %1203 = vmatmul.bf16.gmra.mxu0 %v1186
      %v1204 = vpop.f32.mrf.mxu0
      %v1205 = vadd.f32 0.0, %v1204
      %v1206 = vpop.f32.mrf.mxu0
      %1207 = vdwg.mxu0
      %1208 = vmatpush.bf16.msra.mxu0 0
      %1209 = vmatpush.bf16.msra.mxu0 0
      %1210 = vmatpush.bf16.msra.mxu0 0
      %1211 = vmatpush.bf16.msra.mxu0 0
      %1212 = vmatpush.bf16.msra.mxu0 0
      %1213 = vmatpush.bf16.msra.mxu0 0
      %1214 = vmatpush.bf16.msra.mxu0 0
      %1215 = vmatpush.bf16.msra.mxu0 %v1193
      %1216 = vmatmul.bf16.gmra.mxu0 %v1186
      %v1217 = vpop.f32.mrf.mxu0
      %v1218 = vadd.f32 0.0, %v1217
      %v1219 = vpop.f32.mrf.mxu0
      %1220 = vdwg.mxu0
      %v1221 = vld [vmem:[%s8] sm:$0xf]
      %v1222 = vld [vmem:[%s9] sm:$0xf]
      %1224 = vset.pattern.permute.xlu0 0
      %1225 = vperm.xlu0 %1224, %v1221
      %v1226 = vpop.permute.xlu0 %1225
      %v1228 = vmul.f32 %v1205, %v1226
      %v1229 = vmul.f32 %v1218, %v1226
      %1231 = vset.pattern.permute.xlu0 0
      %1232 = vperm.xlu0 %1231, %v1222
      %v1233 = vpop.permute.xlu0 %1232
      %v1235 = vadd.f32 %v1228, %v1233
      %v1236 = vadd.f32 %v1229, %v1233
      %v1237 = vmax.f32 %v1235, 0.0
      %v1238 = vmax.f32 %v1236, 0.0
      %v1239 = vpack.c.bf16 %v1237, %v1237
      %v1240 = vpack.c.bf16 %v1238, %v1238
      %s1241 = scalar_lea.vmem %s13, 2
      %v1242 = vld [vmem:[%s1241] sm:$0x3]
      %v1244 = vsel %vm1184, %v1242, 0
      %v1247 = vsel %vm1188, %v1239, 0
      %v1250 = vsel %vm1188, %v1240, 0
      %1252 = vmatpush.bf16.msra.mxu0 0
      %1253 = vmatpush.bf16.msra.mxu0 0
      %1254 = vmatpush.bf16.msra.mxu0 0
      %1255 = vmatpush.bf16.msra.mxu0 0
      %1256 = vmatpush.bf16.msra.mxu0 0
      %1257 = vmatpush.bf16.msra.mxu0 0
      %1258 = vmatpush.bf16.msra.mxu0 0
      %1259 = vmatpush.bf16.msra.mxu0 %v1247
      %1260 = vmatmul.bf16.gmra.mxu0 %v1244
      %v1261 = vpop.f32.mrf.mxu0
      %v1262 = vadd.f32 0.0, %v1261
      %v1263 = vpop.f32.mrf.mxu0
      %1264 = vdwg.mxu0
      %1265 = vmatpush.bf16.msra.mxu0 0
      %1266 = vmatpush.bf16.msra.mxu0 0
      %1267 = vmatpush.bf16.msra.mxu0 0
      %1268 = vmatpush.bf16.msra.mxu0 0
      %1269 = vmatpush.bf16.msra.mxu0 0
      %1270 = vmatpush.bf16.msra.mxu0 0
      %1271 = vmatpush.bf16.msra.mxu0 0
      %1272 = vmatpush.bf16.msra.mxu0 %v1250
      %1273 = vmatmul.bf16.gmra.mxu0 %v1244
      %v1274 = vpop.f32.mrf.mxu0
      %v1275 = vadd.f32 0.0, %v1274
      %v1276 = vpop.f32.mrf.mxu0
      %1277 = vdwg.mxu0
      %v1279 = vsel %vm1184, %v656, 0
      %v1282 = vsel %vm1188, %v654, 0
      %v1285 = vsel %vm1188, %v655, 0
      %1287 = vmatpush.bf16.msra.mxu0 0
      %1288 = vmatpush.bf16.msra.mxu0 0
      %1289 = vmatpush.bf16.msra.mxu0 0
      %1290 = vmatpush.bf16.msra.mxu0 0
      %1291 = vmatpush.bf16.msra.mxu0 0
      %1292 = vmatpush.bf16.msra.mxu0 0
      %1293 = vmatpush.bf16.msra.mxu0 0
      %1294 = vmatpush.bf16.msra.mxu0 %v1282
      %1295 = vmatmul.bf16.gmra.mxu0 %v1279
      %v1296 = vpop.f32.mrf.mxu0
      %v1297 = vadd.f32 %v1262, %v1296
      %v1298 = vpop.f32.mrf.mxu0
      %1299 = vdwg.mxu0
      %1300 = vmatpush.bf16.msra.mxu0 0
      %1301 = vmatpush.bf16.msra.mxu0 0
      %1302 = vmatpush.bf16.msra.mxu0 0
      %1303 = vmatpush.bf16.msra.mxu0 0
      %1304 = vmatpush.bf16.msra.mxu0 0
      %1305 = vmatpush.bf16.msra.mxu0 0
      %1306 = vmatpush.bf16.msra.mxu0 0
      %1307 = vmatpush.bf16.msra.mxu0 %v1285
      %1308 = vmatmul.bf16.gmra.mxu0 %v1279
      %v1309 = vpop.f32.mrf.mxu0
      %v1310 = vadd.f32 %v1275, %v1309
      %v1311 = vpop.f32.mrf.mxu0
      %1312 = vdwg.mxu0
      %s1313 = scalar_lea.vmem %s4, 18
      %v1314 = vld [vmem:[%s1313] sm:$0x3]
      %s1315 = scalar_lea.vmem %s4, 24
      %v1316 = vld [vmem:[%s1315] sm:$0x3]
      %1317 = vrot.lane.b32.xlu0 %v579, 11
      %v1318 = vpop.permute.xlu0 %1317
      %1319 = vrot.lane.b32.xlu0 %v580, 11
      %v1320 = vpop.permute.xlu0 %1319
      %1321 = vrot.lane.b32.xlu0 %v581, 11
      %v1322 = vpop.permute.xlu0 %1321
      %1323 = vrot.lane.b32.xlu0 %v582, 11
      %v1324 = vpop.permute.xlu0 %1323
      %1325 = vrot.lane.b32.xlu0 %v583, 11
      %v1326 = vpop.permute.xlu0 %1325
      %1327 = vrot.lane.b32.xlu0 %v584, 11
      %v1328 = vpop.permute.xlu0 %1327
      %vm1329 = vcmask 89088
      %v1330 = vsel %vm1329, %v1318, %v1320
      %v1331 = vsel %vm1329, %v1320, %v1322
      %v1332 = vsel %vm1329, %v1324, %v1326
      %v1333 = vsel %vm1329, %v1326, %v1328
      %v1339 = vsel %vm606, %v1316, 0
      %1341 = vmatpush.bf16.msra.mxu0 0
      %1342 = vmatpush.bf16.msra.mxu0 0
      %1343 = vmatpush.bf16.msra.mxu0 0
      %1344 = vmatpush.bf16.msra.mxu0 0
      %1345 = vmatpush.bf16.msra.mxu0 0
      %1346 = vmatpush.bf16.msra.mxu0 0
      %1347 = vmatpush.bf16.msra.mxu0 %v1332
      %1348 = vmatpush.bf16.msra.mxu0 %v1330
      %1349 = vmatmul.bf16.gmra.mxu0 %v1339
      %v1350 = vpop.f32.mrf.mxu0
      %v1351 = vadd.f32 0.0, %v1350
      %v1352 = vpop.f32.mrf.mxu0
      %1353 = vdwg.mxu0
      %1354 = vmatpush.bf16.msra.mxu0 0
      %1355 = vmatpush.bf16.msra.mxu0 0
      %1356 = vmatpush.bf16.msra.mxu0 0
      %1357 = vmatpush.bf16.msra.mxu0 0
      %1358 = vmatpush.bf16.msra.mxu0 0
      %1359 = vmatpush.bf16.msra.mxu0 0
      %1360 = vmatpush.bf16.msra.mxu0 %v1333
      %1361 = vmatpush.bf16.msra.mxu0 %v1331
      %1362 = vmatmul.bf16.gmra.mxu0 %v1339
      %v1363 = vpop.f32.mrf.mxu0
      %v1364 = vadd.f32 0.0, %v1363
      %v1365 = vpop.f32.mrf.mxu0
      %1366 = vdwg.mxu0
      %1367 = vrot.lane.b32.xlu0 %v579, 43
      %v1368 = vpop.permute.xlu0 %1367
      %1369 = vrot.lane.b32.xlu0 %v580, 43
      %v1370 = vpop.permute.xlu0 %1369
      %1371 = vrot.lane.b32.xlu0 %v581, 43
      %v1372 = vpop.permute.xlu0 %1371
      %1373 = vrot.lane.b32.xlu0 %v582, 43
      %v1374 = vpop.permute.xlu0 %1373
      %1375 = vrot.lane.b32.xlu0 %v583, 43
      %v1376 = vpop.permute.xlu0 %1375
      %1377 = vrot.lane.b32.xlu0 %v584, 43
      %v1378 = vpop.permute.xlu0 %1377
      %vm1379 = vcmask 351232
      %v1380 = vsel %vm1379, %v1368, %v1370
      %v1381 = vsel %vm1379, %v1370, %v1372
      %v1382 = vsel %vm1379, %v1374, %v1376
      %v1383 = vsel %vm1379, %v1376, %v1378
      %v1389 = vsel %vm606, %v1314, 0
      %1391 = vmatpush.bf16.msra.mxu0 0
      %1392 = vmatpush.bf16.msra.mxu0 0
      %1393 = vmatpush.bf16.msra.mxu0 0
      %1394 = vmatpush.bf16.msra.mxu0 0
      %1395 = vmatpush.bf16.msra.mxu0 0
      %1396 = vmatpush.bf16.msra.mxu0 0
      %1397 = vmatpush.bf16.msra.mxu0 %v1382
      %1398 = vmatpush.bf16.msra.mxu0 %v1380
      %1399 = vmatmul.bf16.gmra.mxu0 %v1389
      %v1400 = vpop.f32.mrf.mxu0
      %v1401 = vadd.f32 %v1351, %v1400
      %v1402 = vpop.f32.mrf.mxu0
      %1403 = vdwg.mxu0
      %1404 = vmatpush.bf16.msra.mxu0 0
      %1405 = vmatpush.bf16.msra.mxu0 0
      %1406 = vmatpush.bf16.msra.mxu0 0
      %1407 = vmatpush.bf16.msra.mxu0 0
      %1408 = vmatpush.bf16.msra.mxu0 0
      %1409 = vmatpush.bf16.msra.mxu0 0
      %1410 = vmatpush.bf16.msra.mxu0 %v1383
      %1411 = vmatpush.bf16.msra.mxu0 %v1381
      %1412 = vmatmul.bf16.gmra.mxu0 %v1389
      %v1413 = vpop.f32.mrf.mxu0
      %v1414 = vadd.f32 %v1364, %v1413
      %v1415 = vpop.f32.mrf.mxu0
      %1416 = vdwg.mxu0
      %s1417 = scalar_lea.vmem %s4, 30
      %v1418 = vld [vmem:[%s1417] sm:$0x3]
      %1419 = vrot.lane.b32.xlu0 %v790, 107
      %v1420 = vpop.permute.xlu0 %1419
      %1421 = vrot.lane.b32.xlu0 %v791, 107
      %v1422 = vpop.permute.xlu0 %1421
      %1423 = vrot.lane.b32.xlu0 %v792, 107
      %v1424 = vpop.permute.xlu0 %1423
      %1425 = vrot.lane.b32.xlu0 %v793, 107
      %v1426 = vpop.permute.xlu0 %1425
      %1427 = vrot.lane.b32.xlu0 %v794, 107
      %v1428 = vpop.permute.xlu0 %1427
      %1429 = vrot.lane.b32.xlu0 %v795, 107
      %v1430 = vpop.permute.xlu0 %1429
      %vm1431 = vcmask 875520
      %v1432 = vsel %vm1431, %v1420, %v1422
      %v1433 = vsel %vm1431, %v1422, %v1424
      %v1434 = vsel %vm1431, %v1426, %v1428
      %v1435 = vsel %vm1431, %v1428, %v1430
      %v1441 = vsel %vm606, %v1418, 0
      %1443 = vmatpush.bf16.msra.mxu0 0
      %1444 = vmatpush.bf16.msra.mxu0 0
      %1445 = vmatpush.bf16.msra.mxu0 0
      %1446 = vmatpush.bf16.msra.mxu0 0
      %1447 = vmatpush.bf16.msra.mxu0 0
      %1448 = vmatpush.bf16.msra.mxu0 0
      %1449 = vmatpush.bf16.msra.mxu0 %v1434
      %1450 = vmatpush.bf16.msra.mxu0 %v1432
      %1451 = vmatmul.bf16.gmra.mxu0 %v1441
      %v1452 = vpop.f32.mrf.mxu0
      %v1453 = vadd.f32 0.0, %v1452
      %v1454 = vpop.f32.mrf.mxu0
      %1455 = vdwg.mxu0
      %1456 = vmatpush.bf16.msra.mxu0 0
      %1457 = vmatpush.bf16.msra.mxu0 0
      %1458 = vmatpush.bf16.msra.mxu0 0
      %1459 = vmatpush.bf16.msra.mxu0 0
      %1460 = vmatpush.bf16.msra.mxu0 0
      %1461 = vmatpush.bf16.msra.mxu0 0
      %1462 = vmatpush.bf16.msra.mxu0 %v1435
      %1463 = vmatpush.bf16.msra.mxu0 %v1433
      %1464 = vmatmul.bf16.gmra.mxu0 %v1441
      %v1465 = vpop.f32.mrf.mxu0
      %v1466 = vadd.f32 0.0, %v1465
      %v1467 = vpop.f32.mrf.mxu0
      %1468 = vdwg.mxu0
      %v1469 = vadd.f32 %v1401, %v1453
      %v1470 = vadd.f32 %v1414, %v1466
      %vm1471 = vcmp.ge.s32.totalorder %v556, 2
      %vm1472 = vcmp.ge.s32.totalorder %v557, 2
      %v1473 = vsel %vm1471, 1, 0
      %v1474 = vsel %vm1472, 1, 0
      %v1475 = vcvt.s32.f32 %v1473
      %v1476 = vcvt.s32.f32 %v1474
      %v1477 = vmul.f32 %v1469, %v1475
      %v1478 = vmul.f32 %v1470, %v1476
      %s1479 = scalar_lea.vmem %s4, 20
      %v1480 = vld [vmem:[%s1479] sm:$0x3]
      %s1481 = scalar_lea.vmem %s4, 26
      %v1482 = vld [vmem:[%s1481] sm:$0x3]
      %v1484 = vsel %vm606, %v1482, 0
      %1486 = vmatpush.bf16.msra.mxu0 0
      %1487 = vmatpush.bf16.msra.mxu0 0
      %1488 = vmatpush.bf16.msra.mxu0 0
      %1489 = vmatpush.bf16.msra.mxu0 0
      %1490 = vmatpush.bf16.msra.mxu0 0
      %1491 = vmatpush.bf16.msra.mxu0 0
      %1492 = vmatpush.bf16.msra.mxu0 %v600
      %1493 = vmatpush.bf16.msra.mxu0 %v598
      %1494 = vmatmul.bf16.gmra.mxu0 %v1484
      %v1495 = vpop.f32.mrf.mxu0
      %v1496 = vadd.f32 0.0, %v1495
      %v1497 = vpop.f32.mrf.mxu0
      %1498 = vdwg.mxu0
      %1499 = vmatpush.bf16.msra.mxu0 0
      %1500 = vmatpush.bf16.msra.mxu0 0
      %1501 = vmatpush.bf16.msra.mxu0 0
      %1502 = vmatpush.bf16.msra.mxu0 0
      %1503 = vmatpush.bf16.msra.mxu0 0
      %1504 = vmatpush.bf16.msra.mxu0 0
      %1505 = vmatpush.bf16.msra.mxu0 %v601
      %1506 = vmatpush.bf16.msra.mxu0 %v599
      %1507 = vmatmul.bf16.gmra.mxu0 %v1484
      %v1508 = vpop.f32.mrf.mxu0
      %v1509 = vadd.f32 0.0, %v1508
      %v1510 = vpop.f32.mrf.mxu0
      %1511 = vdwg.mxu0
      %1512 = vrot.lane.b32.xlu0 %v579, 41
      %v1513 = vpop.permute.xlu0 %1512
      %1514 = vrot.lane.b32.xlu0 %v580, 41
      %v1515 = vpop.permute.xlu0 %1514
      %1516 = vrot.lane.b32.xlu0 %v581, 41
      %v1517 = vpop.permute.xlu0 %1516
      %1518 = vrot.lane.b32.xlu0 %v582, 41
      %v1519 = vpop.permute.xlu0 %1518
      %1520 = vrot.lane.b32.xlu0 %v583, 41
      %v1521 = vpop.permute.xlu0 %1520
      %1522 = vrot.lane.b32.xlu0 %v584, 41
      %v1523 = vpop.permute.xlu0 %1522
      %vm1524 = vcmask 334848
      %v1525 = vsel %vm1524, %v1513, %v1515
      %v1526 = vsel %vm1524, %v1515, %v1517
      %v1527 = vsel %vm1524, %v1519, %v1521
      %v1528 = vsel %vm1524, %v1521, %v1523
      %v1534 = vsel %vm606, %v1480, 0
      %1536 = vmatpush.bf16.msra.mxu0 0
      %1537 = vmatpush.bf16.msra.mxu0 0
      %1538 = vmatpush.bf16.msra.mxu0 0
      %1539 = vmatpush.bf16.msra.mxu0 0
      %1540 = vmatpush.bf16.msra.mxu0 0
      %1541 = vmatpush.bf16.msra.mxu0 0
      %1542 = vmatpush.bf16.msra.mxu0 %v1527
      %1543 = vmatpush.bf16.msra.mxu0 %v1525
      %1544 = vmatmul.bf16.gmra.mxu0 %v1534
      %v1545 = vpop.f32.mrf.mxu0
      %v1546 = vadd.f32 %v1496, %v1545
      %v1547 = vpop.f32.mrf.mxu0
      %1548 = vdwg.mxu0
      %1549 = vmatpush.bf16.msra.mxu0 0
      %1550 = vmatpush.bf16.msra.mxu0 0
      %1551 = vmatpush.bf16.msra.mxu0 0
      %1552 = vmatpush.bf16.msra.mxu0 0
      %1553 = vmatpush.bf16.msra.mxu0 0
      %1554 = vmatpush.bf16.msra.mxu0 0
      %1555 = vmatpush.bf16.msra.mxu0 %v1528
      %1556 = vmatpush.bf16.msra.mxu0 %v1526
      %1557 = vmatmul.bf16.gmra.mxu0 %v1534
      %v1558 = vpop.f32.mrf.mxu0
      %v1559 = vadd.f32 %v1509, %v1558
      %v1560 = vpop.f32.mrf.mxu0
      %1561 = vdwg.mxu0
      %s1562 = scalar_lea.vmem %s4, 32
      %v1563 = vld [vmem:[%s1562] sm:$0x3]
      %1564 = vrot.lane.b32.xlu0 %v790, 105
      %v1565 = vpop.permute.xlu0 %1564
      %1566 = vrot.lane.b32.xlu0 %v791, 105
      %v1567 = vpop.permute.xlu0 %1566
      %1568 = vrot.lane.b32.xlu0 %v792, 105
      %v1569 = vpop.permute.xlu0 %1568
      %1570 = vrot.lane.b32.xlu0 %v793, 105
      %v1571 = vpop.permute.xlu0 %1570
      %1572 = vrot.lane.b32.xlu0 %v794, 105
      %v1573 = vpop.permute.xlu0 %1572
      %1574 = vrot.lane.b32.xlu0 %v795, 105
      %v1575 = vpop.permute.xlu0 %1574
      %vm1576 = vcmask 859136
      %v1577 = vsel %vm1576, %v1565, %v1567
      %v1578 = vsel %vm1576, %v1567, %v1569
      %v1579 = vsel %vm1576, %v1571, %v1573
      %v1580 = vsel %vm1576, %v1573, %v1575
      %v1586 = vsel %vm606, %v1563, 0
      %1588 = vmatpush.bf16.msra.mxu0 0
      %1589 = vmatpush.bf16.msra.mxu0 0
      %1590 = vmatpush.bf16.msra.mxu0 0
      %1591 = vmatpush.bf16.msra.mxu0 0
      %1592 = vmatpush.bf16.msra.mxu0 0
      %1593 = vmatpush.bf16.msra.mxu0 0
      %1594 = vmatpush.bf16.msra.mxu0 %v1579
      %1595 = vmatpush.bf16.msra.mxu0 %v1577
      %1596 = vmatmul.bf16.gmra.mxu0 %v1586
      %v1597 = vpop.f32.mrf.mxu0
      %v1598 = vadd.f32 0.0, %v1597
      %v1599 = vpop.f32.mrf.mxu0
      %1600 = vdwg.mxu0
      %1601 = vmatpush.bf16.msra.mxu0 0
      %1602 = vmatpush.bf16.msra.mxu0 0
      %1603 = vmatpush.bf16.msra.mxu0 0
      %1604 = vmatpush.bf16.msra.mxu0 0
      %1605 = vmatpush.bf16.msra.mxu0 0
      %1606 = vmatpush.bf16.msra.mxu0 0
      %1607 = vmatpush.bf16.msra.mxu0 %v1580
      %1608 = vmatpush.bf16.msra.mxu0 %v1578
      %1609 = vmatmul.bf16.gmra.mxu0 %v1586
      %v1610 = vpop.f32.mrf.mxu0
      %v1611 = vadd.f32 0.0, %v1610
      %v1612 = vpop.f32.mrf.mxu0
      %1613 = vdwg.mxu0
      %v1614 = vadd.f32 %v1546, %v1598
      %v1615 = vadd.f32 %v1559, %v1611
      %v1616 = vadd.f32 %v1477, %v1614
      %v1617 = vadd.f32 %v1478, %v1615
      %s1618 = scalar_lea.vmem %s4, 22
      %v1619 = vld [vmem:[%s1618] sm:$0x3]
      %s1620 = scalar_lea.vmem %s4, 28
      %v1621 = vld [vmem:[%s1620] sm:$0x3]
      %1622 = vrot.lane.b32.xlu0 %v579, 7
      %v1623 = vpop.permute.xlu0 %1622
      %1624 = vrot.lane.b32.xlu0 %v580, 7
      %v1625 = vpop.permute.xlu0 %1624
      %1626 = vrot.lane.b32.xlu0 %v581, 7
      %v1627 = vpop.permute.xlu0 %1626
      %1628 = vrot.lane.b32.xlu0 %v582, 7
      %v1629 = vpop.permute.xlu0 %1628
      %1630 = vrot.lane.b32.xlu0 %v583, 7
      %v1631 = vpop.permute.xlu0 %1630
      %1632 = vrot.lane.b32.xlu0 %v584, 7
      %v1633 = vpop.permute.xlu0 %1632
      %vm1634 = vcmask 56320
      %v1635 = vsel %vm1634, %v1623, %v1625
      %v1636 = vsel %vm1634, %v1625, %v1627
      %v1637 = vsel %vm1634, %v1629, %v1631
      %v1638 = vsel %vm1634, %v1631, %v1633
      %v1644 = vsel %vm606, %v1621, 0
      %1646 = vmatpush.bf16.msra.mxu0 0
      %1647 = vmatpush.bf16.msra.mxu0 0
      %1648 = vmatpush.bf16.msra.mxu0 0
      %1649 = vmatpush.bf16.msra.mxu0 0
      %1650 = vmatpush.bf16.msra.mxu0 0
      %1651 = vmatpush.bf16.msra.mxu0 0
      %1652 = vmatpush.bf16.msra.mxu0 %v1637
      %1653 = vmatpush.bf16.msra.mxu0 %v1635
      %1654 = vmatmul.bf16.gmra.mxu0 %v1644
      %v1655 = vpop.f32.mrf.mxu0
      %v1656 = vadd.f32 0.0, %v1655
      %v1657 = vpop.f32.mrf.mxu0
      %1658 = vdwg.mxu0
      %1659 = vmatpush.bf16.msra.mxu0 0
      %1660 = vmatpush.bf16.msra.mxu0 0
      %1661 = vmatpush.bf16.msra.mxu0 0
      %1662 = vmatpush.bf16.msra.mxu0 0
      %1663 = vmatpush.bf16.msra.mxu0 0
      %1664 = vmatpush.bf16.msra.mxu0 0
      %1665 = vmatpush.bf16.msra.mxu0 %v1638
      %1666 = vmatpush.bf16.msra.mxu0 %v1636
      %1667 = vmatmul.bf16.gmra.mxu0 %v1644
      %v1668 = vpop.f32.mrf.mxu0
      %v1669 = vadd.f32 0.0, %v1668
      %v1670 = vpop.f32.mrf.mxu0
      %1671 = vdwg.mxu0
      %1672 = vrot.lane.b32.xlu0 %v579, 39
      %v1673 = vpop.permute.xlu0 %1672
      %1674 = vrot.lane.b32.xlu0 %v580, 39
      %v1675 = vpop.permute.xlu0 %1674
      %1676 = vrot.lane.b32.xlu0 %v581, 39
      %v1677 = vpop.permute.xlu0 %1676
      %1678 = vrot.lane.b32.xlu0 %v582, 39
      %v1679 = vpop.permute.xlu0 %1678
      %1680 = vrot.lane.b32.xlu0 %v583, 39
      %v1681 = vpop.permute.xlu0 %1680
      %1682 = vrot.lane.b32.xlu0 %v584, 39
      %v1683 = vpop.permute.xlu0 %1682
      %vm1684 = vcmask 318464
      %v1685 = vsel %vm1684, %v1673, %v1675
      %v1686 = vsel %vm1684, %v1675, %v1677
      %v1687 = vsel %vm1684, %v1679, %v1681
      %v1688 = vsel %vm1684, %v1681, %v1683
      %v1694 = vsel %vm606, %v1619, 0
      %1696 = vmatpush.bf16.msra.mxu0 0
      %1697 = vmatpush.bf16.msra.mxu0 0
      %1698 = vmatpush.bf16.msra.mxu0 0
      %1699 = vmatpush.bf16.msra.mxu0 0
      %1700 = vmatpush.bf16.msra.mxu0 0
      %1701 = vmatpush.bf16.msra.mxu0 0
      %1702 = vmatpush.bf16.msra.mxu0 %v1687
      %1703 = vmatpush.bf16.msra.mxu0 %v1685
      %1704 = vmatmul.bf16.gmra.mxu0 %v1694
      %v1705 = vpop.f32.mrf.mxu0
      %v1706 = vadd.f32 %v1656, %v1705
      %v1707 = vpop.f32.mrf.mxu0
      %1708 = vdwg.mxu0
      %1709 = vmatpush.bf16.msra.mxu0 0
      %1710 = vmatpush.bf16.msra.mxu0 0
      %1711 = vmatpush.bf16.msra.mxu0 0
      %1712 = vmatpush.bf16.msra.mxu0 0
      %1713 = vmatpush.bf16.msra.mxu0 0
      %1714 = vmatpush.bf16.msra.mxu0 0
      %1715 = vmatpush.bf16.msra.mxu0 %v1688
      %1716 = vmatpush.bf16.msra.mxu0 %v1686
      %1717 = vmatmul.bf16.gmra.mxu0 %v1694
      %v1718 = vpop.f32.mrf.mxu0
      %v1719 = vadd.f32 %v1669, %v1718
      %v1720 = vpop.f32.mrf.mxu0
      %1721 = vdwg.mxu0
      %s1722 = scalar_lea.vmem %s4, 34
      %v1723 = vld [vmem:[%s1722] sm:$0x3]
      %1724 = vrot.lane.b32.xlu0 %v790, 103
      %v1725 = vpop.permute.xlu0 %1724
      %1726 = vrot.lane.b32.xlu0 %v791, 103
      %v1727 = vpop.permute.xlu0 %1726
      %1728 = vrot.lane.b32.xlu0 %v792, 103
      %v1729 = vpop.permute.xlu0 %1728
      %1730 = vrot.lane.b32.xlu0 %v793, 103
      %v1731 = vpop.permute.xlu0 %1730
      %1732 = vrot.lane.b32.xlu0 %v794, 103
      %v1733 = vpop.permute.xlu0 %1732
      %1734 = vrot.lane.b32.xlu0 %v795, 103
      %v1735 = vpop.permute.xlu0 %1734
      %vm1736 = vcmask 842752
      %v1737 = vsel %vm1736, %v1725, %v1727
      %v1738 = vsel %vm1736, %v1727, %v1729
      %v1739 = vsel %vm1736, %v1731, %v1733
      %v1740 = vsel %vm1736, %v1733, %v1735
      %v1746 = vsel %vm606, %v1723, 0
      %1748 = vmatpush.bf16.msra.mxu0 0
      %1749 = vmatpush.bf16.msra.mxu0 0
      %1750 = vmatpush.bf16.msra.mxu0 0
      %1751 = vmatpush.bf16.msra.mxu0 0
      %1752 = vmatpush.bf16.msra.mxu0 0
      %1753 = vmatpush.bf16.msra.mxu0 0
      %1754 = vmatpush.bf16.msra.mxu0 %v1739
      %1755 = vmatpush.bf16.msra.mxu0 %v1737
      %1756 = vmatmul.bf16.gmra.mxu0 %v1746
      %v1757 = vpop.f32.mrf.mxu0
      %v1758 = vadd.f32 0.0, %v1757
      %v1759 = vpop.f32.mrf.mxu0
      %1760 = vdwg.mxu0
      %1761 = vmatpush.bf16.msra.mxu0 0
      %1762 = vmatpush.bf16.msra.mxu0 0
      %1763 = vmatpush.bf16.msra.mxu0 0
      %1764 = vmatpush.bf16.msra.mxu0 0
      %1765 = vmatpush.bf16.msra.mxu0 0
      %1766 = vmatpush.bf16.msra.mxu0 0
      %1767 = vmatpush.bf16.msra.mxu0 %v1740
      %1768 = vmatpush.bf16.msra.mxu0 %v1738
      %1769 = vmatmul.bf16.gmra.mxu0 %v1746
      %v1770 = vpop.f32.mrf.mxu0
      %v1771 = vadd.f32 0.0, %v1770
      %v1772 = vpop.f32.mrf.mxu0
      %1773 = vdwg.mxu0
      %v1774 = vadd.f32 %v1706, %v1758
      %v1775 = vadd.f32 %v1719, %v1771
      %vm1776 = vcmp.lt.s32.totalorder %v556, 14
      %vm1777 = vcmp.lt.s32.totalorder %v557, 14
      %v1778 = vsel %vm1776, 1, 0
      %v1779 = vsel %vm1777, 1, 0
      %v1780 = vcvt.s32.f32 %v1778
      %v1781 = vcvt.s32.f32 %v1779
      %v1782 = vmul.f32 %v1774, %v1780
      %v1783 = vmul.f32 %v1775, %v1781
      %v1784 = vadd.f32 %v1616, %v1782
      %v1785 = vadd.f32 %v1617, %v1783
      %s1786 = scalar_lea.vmem %s5, 4
      %v1787 = vld [vmem:[%s1786] sm:$0xf]
      %s1788 = scalar_lea.vmem %s6, 4
      %v1789 = vld [vmem:[%s1788] sm:$0xf]
      %1791 = vset.pattern.permute.xlu0 0
      %1792 = vperm.xlu0 %1791, %v1787
      %v1793 = vpop.permute.xlu0 %1792
      %v1795 = vmul.f32 %v1784, %v1793
      %v1796 = vmul.f32 %v1785, %v1793
      %1798 = vset.pattern.permute.xlu0 0
      %1799 = vperm.xlu0 %1798, %v1789
      %v1800 = vpop.permute.xlu0 %1799
      %v1802 = vadd.f32 %v1795, %v1800
      %v1803 = vadd.f32 %v1796, %v1800
      %v1804 = vmax.f32 %v1802, 0.0
      %v1805 = vmax.f32 %v1803, 0.0
      %v1806 = vpack.c.bf16 %v1804, %v1804
      %v1807 = vpack.c.bf16 %v1805, %v1805
      %s1808 = scalar_lea.vmem %s7, 2
      %v1809 = vld [vmem:[%s1808] sm:$0x3]
      %v1811 = vsel %vm1184, %v1809, 0
      %v1814 = vsel %vm1188, %v1806, 0
      %v1817 = vsel %vm1188, %v1807, 0
      %1819 = vmatpush.bf16.msra.mxu0 0
      %1820 = vmatpush.bf16.msra.mxu0 0
      %1821 = vmatpush.bf16.msra.mxu0 0
      %1822 = vmatpush.bf16.msra.mxu0 0
      %1823 = vmatpush.bf16.msra.mxu0 0
      %1824 = vmatpush.bf16.msra.mxu0 0
      %1825 = vmatpush.bf16.msra.mxu0 0
      %1826 = vmatpush.bf16.msra.mxu0 %v1814
      %1827 = vmatmul.bf16.gmra.mxu0 %v1811
      %v1828 = vpop.f32.mrf.mxu0
      %v1829 = vadd.f32 0.0, %v1828
      %v1830 = vpop.f32.mrf.mxu0
      %1831 = vdwg.mxu0
      %1832 = vmatpush.bf16.msra.mxu0 0
      %1833 = vmatpush.bf16.msra.mxu0 0
      %1834 = vmatpush.bf16.msra.mxu0 0
      %1835 = vmatpush.bf16.msra.mxu0 0
      %1836 = vmatpush.bf16.msra.mxu0 0
      %1837 = vmatpush.bf16.msra.mxu0 0
      %1838 = vmatpush.bf16.msra.mxu0 0
      %1839 = vmatpush.bf16.msra.mxu0 %v1817
      %1840 = vmatmul.bf16.gmra.mxu0 %v1811
      %v1841 = vpop.f32.mrf.mxu0
      %v1842 = vadd.f32 0.0, %v1841
      %v1843 = vpop.f32.mrf.mxu0
      %1844 = vdwg.mxu0
      %s1845 = scalar_lea.vmem %s8, 4
      %v1846 = vld [vmem:[%s1845] sm:$0xf]
      %s1847 = scalar_lea.vmem %s9, 4
      %v1848 = vld [vmem:[%s1847] sm:$0xf]
      %1850 = vset.pattern.permute.xlu0 0
      %1851 = vperm.xlu0 %1850, %v1846
      %v1852 = vpop.permute.xlu0 %1851
      %v1854 = vmul.f32 %v1829, %v1852
      %v1855 = vmul.f32 %v1842, %v1852
      %1857 = vset.pattern.permute.xlu0 0
      %1858 = vperm.xlu0 %1857, %v1848
      %v1859 = vpop.permute.xlu0 %1858
      %v1861 = vadd.f32 %v1854, %v1859
      %v1862 = vadd.f32 %v1855, %v1859
      %v1863 = vmax.f32 %v1861, 0.0
      %v1864 = vmax.f32 %v1862, 0.0
      %v1865 = vpack.c.bf16 %v1863, %v1863
      %v1866 = vpack.c.bf16 %v1864, %v1864
      %s1867 = scalar_lea.vmem %s13, 4
      %v1868 = vld [vmem:[%s1867] sm:$0x3]
      %v1870 = vsel %vm1184, %v1868, 0
      %v1873 = vsel %vm1188, %v1865, 0
      %v1876 = vsel %vm1188, %v1866, 0
      %1878 = vmatpush.bf16.msra.mxu0 0
      %1879 = vmatpush.bf16.msra.mxu0 0
      %1880 = vmatpush.bf16.msra.mxu0 0
      %1881 = vmatpush.bf16.msra.mxu0 0
      %1882 = vmatpush.bf16.msra.mxu0 0
      %1883 = vmatpush.bf16.msra.mxu0 0
      %1884 = vmatpush.bf16.msra.mxu0 0
      %1885 = vmatpush.bf16.msra.mxu0 %v1873
      %1886 = vmatmul.bf16.gmra.mxu0 %v1870
      %v1887 = vpop.f32.mrf.mxu0
      %v1888 = vadd.f32 0.0, %v1887
      %v1889 = vpop.f32.mrf.mxu0
      %1890 = vdwg.mxu0
      %1891 = vmatpush.bf16.msra.mxu0 0
      %1892 = vmatpush.bf16.msra.mxu0 0
      %1893 = vmatpush.bf16.msra.mxu0 0
      %1894 = vmatpush.bf16.msra.mxu0 0
      %1895 = vmatpush.bf16.msra.mxu0 0
      %1896 = vmatpush.bf16.msra.mxu0 0
      %1897 = vmatpush.bf16.msra.mxu0 0
      %1898 = vmatpush.bf16.msra.mxu0 %v1876
      %1899 = vmatmul.bf16.gmra.mxu0 %v1870
      %v1900 = vpop.f32.mrf.mxu0
      %v1901 = vadd.f32 0.0, %v1900
      %v1902 = vpop.f32.mrf.mxu0
      %1903 = vdwg.mxu0
      %v1904 = vadd.f32 %v1297, %v1888
      %v1905 = vadd.f32 %v1310, %v1901
      %s1906 = scalar_lea.vmem %s4, 36
      %v1907 = vld [vmem:[%s1906] sm:$0x3]
      %s1908 = scalar_lea.vmem %s4, 42
      %v1909 = vld [vmem:[%s1908] sm:$0x3]
      %1910 = vrot.lane.b32.xlu0 %v579, 12
      %v1911 = vpop.permute.xlu0 %1910
      %1912 = vrot.lane.b32.xlu0 %v580, 12
      %v1913 = vpop.permute.xlu0 %1912
      %1914 = vrot.lane.b32.xlu0 %v581, 12
      %v1915 = vpop.permute.xlu0 %1914
      %1916 = vrot.lane.b32.xlu0 %v582, 12
      %v1917 = vpop.permute.xlu0 %1916
      %1918 = vrot.lane.b32.xlu0 %v583, 12
      %v1919 = vpop.permute.xlu0 %1918
      %1920 = vrot.lane.b32.xlu0 %v584, 12
      %v1921 = vpop.permute.xlu0 %1920
      %vm1922 = vcmask 97280
      %v1923 = vsel %vm1922, %v1911, %v1913
      %v1924 = vsel %vm1922, %v1913, %v1915
      %v1925 = vsel %vm1922, %v1917, %v1919
      %v1926 = vsel %vm1922, %v1919, %v1921
      %v1932 = vsel %vm606, %v1909, 0
      %1934 = vmatpush.bf16.msra.mxu0 0
      %1935 = vmatpush.bf16.msra.mxu0 0
      %1936 = vmatpush.bf16.msra.mxu0 0
      %1937 = vmatpush.bf16.msra.mxu0 0
      %1938 = vmatpush.bf16.msra.mxu0 0
      %1939 = vmatpush.bf16.msra.mxu0 0
      %1940 = vmatpush.bf16.msra.mxu0 %v1925
      %1941 = vmatpush.bf16.msra.mxu0 %v1923
      %1942 = vmatmul.bf16.gmra.mxu0 %v1932
      %v1943 = vpop.f32.mrf.mxu0
      %v1944 = vadd.f32 0.0, %v1943
      %v1945 = vpop.f32.mrf.mxu0
      %1946 = vdwg.mxu0
      %1947 = vmatpush.bf16.msra.mxu0 0
      %1948 = vmatpush.bf16.msra.mxu0 0
      %1949 = vmatpush.bf16.msra.mxu0 0
      %1950 = vmatpush.bf16.msra.mxu0 0
      %1951 = vmatpush.bf16.msra.mxu0 0
      %1952 = vmatpush.bf16.msra.mxu0 0
      %1953 = vmatpush.bf16.msra.mxu0 %v1926
      %1954 = vmatpush.bf16.msra.mxu0 %v1924
      %1955 = vmatmul.bf16.gmra.mxu0 %v1932
      %v1956 = vpop.f32.mrf.mxu0
      %v1957 = vadd.f32 0.0, %v1956
      %v1958 = vpop.f32.mrf.mxu0
      %1959 = vdwg.mxu0
      %1960 = vrot.lane.b32.xlu0 %v579, 60
      %v1961 = vpop.permute.xlu0 %1960
      %1962 = vrot.lane.b32.xlu0 %v580, 60
      %v1963 = vpop.permute.xlu0 %1962
      %1964 = vrot.lane.b32.xlu0 %v581, 60
      %v1965 = vpop.permute.xlu0 %1964
      %1966 = vrot.lane.b32.xlu0 %v582, 60
      %v1967 = vpop.permute.xlu0 %1966
      %1968 = vrot.lane.b32.xlu0 %v583, 60
      %v1969 = vpop.permute.xlu0 %1968
      %1970 = vrot.lane.b32.xlu0 %v584, 60
      %v1971 = vpop.permute.xlu0 %1970
      %vm1972 = vcmask 490496
      %v1973 = vsel %vm1972, %v1961, %v1963
      %v1974 = vsel %vm1972, %v1963, %v1965
      %v1975 = vsel %vm1972, %v1967, %v1969
      %v1976 = vsel %vm1972, %v1969, %v1971
      %v1982 = vsel %vm606, %v1907, 0
      %1984 = vmatpush.bf16.msra.mxu0 0
      %1985 = vmatpush.bf16.msra.mxu0 0
      %1986 = vmatpush.bf16.msra.mxu0 0
      %1987 = vmatpush.bf16.msra.mxu0 0
      %1988 = vmatpush.bf16.msra.mxu0 0
      %1989 = vmatpush.bf16.msra.mxu0 0
      %1990 = vmatpush.bf16.msra.mxu0 %v1975
      %1991 = vmatpush.bf16.msra.mxu0 %v1973
      %1992 = vmatmul.bf16.gmra.mxu0 %v1982
      %v1993 = vpop.f32.mrf.mxu0
      %v1994 = vadd.f32 %v1944, %v1993
      %v1995 = vpop.f32.mrf.mxu0
      %1996 = vdwg.mxu0
      %1997 = vmatpush.bf16.msra.mxu0 0
      %1998 = vmatpush.bf16.msra.mxu0 0
      %1999 = vmatpush.bf16.msra.mxu0 0
      %2000 = vmatpush.bf16.msra.mxu0 0
      %2001 = vmatpush.bf16.msra.mxu0 0
      %2002 = vmatpush.bf16.msra.mxu0 0
      %2003 = vmatpush.bf16.msra.mxu0 %v1976
      %2004 = vmatpush.bf16.msra.mxu0 %v1974
      %2005 = vmatmul.bf16.gmra.mxu0 %v1982
      %v2006 = vpop.f32.mrf.mxu0
      %v2007 = vadd.f32 %v1957, %v2006
      %v2008 = vpop.f32.mrf.mxu0
      %2009 = vdwg.mxu0
      %s2010 = scalar_lea.vmem %s4, 48
      %v2011 = vld [vmem:[%s2010] sm:$0x3]
      %2012 = vrot.lane.b32.xlu0 %v790, 92
      %v2013 = vpop.permute.xlu0 %2012
      %2014 = vrot.lane.b32.xlu0 %v791, 92
      %v2015 = vpop.permute.xlu0 %2014
      %2016 = vrot.lane.b32.xlu0 %v792, 92
      %v2017 = vpop.permute.xlu0 %2016
      %2018 = vrot.lane.b32.xlu0 %v793, 92
      %v2019 = vpop.permute.xlu0 %2018
      %2020 = vrot.lane.b32.xlu0 %v794, 92
      %v2021 = vpop.permute.xlu0 %2020
      %2022 = vrot.lane.b32.xlu0 %v795, 92
      %v2023 = vpop.permute.xlu0 %2022
      %vm2024 = vcmask 752640
      %v2025 = vsel %vm2024, %v2013, %v2015
      %v2026 = vsel %vm2024, %v2015, %v2017
      %v2027 = vsel %vm2024, %v2019, %v2021
      %v2028 = vsel %vm2024, %v2021, %v2023
      %v2034 = vsel %vm606, %v2011, 0
      %2036 = vmatpush.bf16.msra.mxu0 0
      %2037 = vmatpush.bf16.msra.mxu0 0
      %2038 = vmatpush.bf16.msra.mxu0 0
      %2039 = vmatpush.bf16.msra.mxu0 0
      %2040 = vmatpush.bf16.msra.mxu0 0
      %2041 = vmatpush.bf16.msra.mxu0 0
      %2042 = vmatpush.bf16.msra.mxu0 %v2027
      %2043 = vmatpush.bf16.msra.mxu0 %v2025
      %2044 = vmatmul.bf16.gmra.mxu0 %v2034
      %v2045 = vpop.f32.mrf.mxu0
      %v2046 = vadd.f32 0.0, %v2045
      %v2047 = vpop.f32.mrf.mxu0
      %2048 = vdwg.mxu0
      %2049 = vmatpush.bf16.msra.mxu0 0
      %2050 = vmatpush.bf16.msra.mxu0 0
      %2051 = vmatpush.bf16.msra.mxu0 0
      %2052 = vmatpush.bf16.msra.mxu0 0
      %2053 = vmatpush.bf16.msra.mxu0 0
      %2054 = vmatpush.bf16.msra.mxu0 0
      %2055 = vmatpush.bf16.msra.mxu0 %v2028
      %2056 = vmatpush.bf16.msra.mxu0 %v2026
      %2057 = vmatmul.bf16.gmra.mxu0 %v2034
      %v2058 = vpop.f32.mrf.mxu0
      %v2059 = vadd.f32 0.0, %v2058
      %v2060 = vpop.f32.mrf.mxu0
      %2061 = vdwg.mxu0
      %v2062 = vadd.f32 %v1994, %v2046
      %v2063 = vadd.f32 %v2007, %v2059
      %vm2064 = vcmp.ge.s32.totalorder %v556, 3
      %vm2065 = vcmp.ge.s32.totalorder %v557, 3
      %v2066 = vsel %vm2064, 1, 0
      %v2067 = vsel %vm2065, 1, 0
      %v2068 = vcvt.s32.f32 %v2066
      %v2069 = vcvt.s32.f32 %v2067
      %v2070 = vmul.f32 %v2062, %v2068
      %v2071 = vmul.f32 %v2063, %v2069
      %s2072 = scalar_lea.vmem %s4, 38
      %v2073 = vld [vmem:[%s2072] sm:$0x3]
      %s2074 = scalar_lea.vmem %s4, 44
      %v2075 = vld [vmem:[%s2074] sm:$0x3]
      %v2077 = vsel %vm606, %v2075, 0
      %2079 = vmatpush.bf16.msra.mxu0 0
      %2080 = vmatpush.bf16.msra.mxu0 0
      %2081 = vmatpush.bf16.msra.mxu0 0
      %2082 = vmatpush.bf16.msra.mxu0 0
      %2083 = vmatpush.bf16.msra.mxu0 0
      %2084 = vmatpush.bf16.msra.mxu0 0
      %2085 = vmatpush.bf16.msra.mxu0 %v600
      %2086 = vmatpush.bf16.msra.mxu0 %v598
      %2087 = vmatmul.bf16.gmra.mxu0 %v2077
      %v2088 = vpop.f32.mrf.mxu0
      %v2089 = vadd.f32 0.0, %v2088
      %v2090 = vpop.f32.mrf.mxu0
      %2091 = vdwg.mxu0
      %2092 = vmatpush.bf16.msra.mxu0 0
      %2093 = vmatpush.bf16.msra.mxu0 0
      %2094 = vmatpush.bf16.msra.mxu0 0
      %2095 = vmatpush.bf16.msra.mxu0 0
      %2096 = vmatpush.bf16.msra.mxu0 0
      %2097 = vmatpush.bf16.msra.mxu0 0
      %2098 = vmatpush.bf16.msra.mxu0 %v601
      %2099 = vmatpush.bf16.msra.mxu0 %v599
      %2100 = vmatmul.bf16.gmra.mxu0 %v2077
      %v2101 = vpop.f32.mrf.mxu0
      %v2102 = vadd.f32 0.0, %v2101
      %v2103 = vpop.f32.mrf.mxu0
      %2104 = vdwg.mxu0
      %2105 = vrot.lane.b32.xlu0 %v579, 57
      %v2106 = vpop.permute.xlu0 %2105
      %2107 = vrot.lane.b32.xlu0 %v580, 57
      %v2108 = vpop.permute.xlu0 %2107
      %2109 = vrot.lane.b32.xlu0 %v581, 57
      %v2110 = vpop.permute.xlu0 %2109
      %2111 = vrot.lane.b32.xlu0 %v582, 57
      %v2112 = vpop.permute.xlu0 %2111
      %2113 = vrot.lane.b32.xlu0 %v583, 57
      %v2114 = vpop.permute.xlu0 %2113
      %2115 = vrot.lane.b32.xlu0 %v584, 57
      %v2116 = vpop.permute.xlu0 %2115
      %vm2117 = vcmask 465920
      %v2118 = vsel %vm2117, %v2106, %v2108
      %v2119 = vsel %vm2117, %v2108, %v2110
      %v2120 = vsel %vm2117, %v2112, %v2114
      %v2121 = vsel %vm2117, %v2114, %v2116
      %v2127 = vsel %vm606, %v2073, 0
      %2129 = vmatpush.bf16.msra.mxu0 0
      %2130 = vmatpush.bf16.msra.mxu0 0
      %2131 = vmatpush.bf16.msra.mxu0 0
      %2132 = vmatpush.bf16.msra.mxu0 0
      %2133 = vmatpush.bf16.msra.mxu0 0
      %2134 = vmatpush.bf16.msra.mxu0 0
      %2135 = vmatpush.bf16.msra.mxu0 %v2120
      %2136 = vmatpush.bf16.msra.mxu0 %v2118
      %2137 = vmatmul.bf16.gmra.mxu0 %v2127
      %v2138 = vpop.f32.mrf.mxu0
      %v2139 = vadd.f32 %v2089, %v2138
      %v2140 = vpop.f32.mrf.mxu0
      %2141 = vdwg.mxu0
      %2142 = vmatpush.bf16.msra.mxu0 0
      %2143 = vmatpush.bf16.msra.mxu0 0
      %2144 = vmatpush.bf16.msra.mxu0 0
      %2145 = vmatpush.bf16.msra.mxu0 0
      %2146 = vmatpush.bf16.msra.mxu0 0
      %2147 = vmatpush.bf16.msra.mxu0 0
      %2148 = vmatpush.bf16.msra.mxu0 %v2121
      %2149 = vmatpush.bf16.msra.mxu0 %v2119
      %2150 = vmatmul.bf16.gmra.mxu0 %v2127
      %v2151 = vpop.f32.mrf.mxu0
      %v2152 = vadd.f32 %v2102, %v2151
      %v2153 = vpop.f32.mrf.mxu0
      %2154 = vdwg.mxu0
      %s2155 = scalar_lea.vmem %s4, 50
      %v2156 = vld [vmem:[%s2155] sm:$0x3]
      %2157 = vrot.lane.b32.xlu0 %v790, 89
      %v2158 = vpop.permute.xlu0 %2157
      %2159 = vrot.lane.b32.xlu0 %v791, 89
      %v2160 = vpop.permute.xlu0 %2159
      %2161 = vrot.lane.b32.xlu0 %v792, 89
      %v2162 = vpop.permute.xlu0 %2161
      %2163 = vrot.lane.b32.xlu0 %v793, 89
      %v2164 = vpop.permute.xlu0 %2163
      %2165 = vrot.lane.b32.xlu0 %v794, 89
      %v2166 = vpop.permute.xlu0 %2165
      %2167 = vrot.lane.b32.xlu0 %v795, 89
      %v2168 = vpop.permute.xlu0 %2167
      %vm2169 = vcmask 728064
      %v2170 = vsel %vm2169, %v2158, %v2160
      %v2171 = vsel %vm2169, %v2160, %v2162
      %v2172 = vsel %vm2169, %v2164, %v2166
      %v2173 = vsel %vm2169, %v2166, %v2168
      %v2179 = vsel %vm606, %v2156, 0
      %2181 = vmatpush.bf16.msra.mxu0 0
      %2182 = vmatpush.bf16.msra.mxu0 0
      %2183 = vmatpush.bf16.msra.mxu0 0
      %2184 = vmatpush.bf16.msra.mxu0 0
      %2185 = vmatpush.bf16.msra.mxu0 0
      %2186 = vmatpush.bf16.msra.mxu0 0
      %2187 = vmatpush.bf16.msra.mxu0 %v2172
      %2188 = vmatpush.bf16.msra.mxu0 %v2170
      %2189 = vmatmul.bf16.gmra.mxu0 %v2179
      %v2190 = vpop.f32.mrf.mxu0
      %v2191 = vadd.f32 0.0, %v2190
      %v2192 = vpop.f32.mrf.mxu0
      %2193 = vdwg.mxu0
      %2194 = vmatpush.bf16.msra.mxu0 0
      %2195 = vmatpush.bf16.msra.mxu0 0
      %2196 = vmatpush.bf16.msra.mxu0 0
      %2197 = vmatpush.bf16.msra.mxu0 0
      %2198 = vmatpush.bf16.msra.mxu0 0
      %2199 = vmatpush.bf16.msra.mxu0 0
      %2200 = vmatpush.bf16.msra.mxu0 %v2173
      %2201 = vmatpush.bf16.msra.mxu0 %v2171
      %2202 = vmatmul.bf16.gmra.mxu0 %v2179
      %v2203 = vpop.f32.mrf.mxu0
      %v2204 = vadd.f32 0.0, %v2203
      %v2205 = vpop.f32.mrf.mxu0
      %2206 = vdwg.mxu0
      %v2207 = vadd.f32 %v2139, %v2191
      %v2208 = vadd.f32 %v2152, %v2204
      %v2209 = vadd.f32 %v2070, %v2207
      %v2210 = vadd.f32 %v2071, %v2208
      %s2211 = scalar_lea.vmem %s4, 40
      %v2212 = vld [vmem:[%s2211] sm:$0x3]
      %s2213 = scalar_lea.vmem %s4, 46
      %v2214 = vld [vmem:[%s2213] sm:$0x3]
      %2215 = vrot.lane.b32.xlu0 %v579, 6
      %v2216 = vpop.permute.xlu0 %2215
      %2217 = vrot.lane.b32.xlu0 %v580, 6
      %v2218 = vpop.permute.xlu0 %2217
      %2219 = vrot.lane.b32.xlu0 %v581, 6
      %v2220 = vpop.permute.xlu0 %2219
      %2221 = vrot.lane.b32.xlu0 %v582, 6
      %v2222 = vpop.permute.xlu0 %2221
      %2223 = vrot.lane.b32.xlu0 %v583, 6
      %v2224 = vpop.permute.xlu0 %2223
      %2225 = vrot.lane.b32.xlu0 %v584, 6
      %v2226 = vpop.permute.xlu0 %2225
      %vm2227 = vcmask 48128
      %v2228 = vsel %vm2227, %v2216, %v2218
      %v2229 = vsel %vm2227, %v2218, %v2220
      %v2230 = vsel %vm2227, %v2222, %v2224
      %v2231 = vsel %vm2227, %v2224, %v2226
      %v2237 = vsel %vm606, %v2214, 0
      %2239 = vmatpush.bf16.msra.mxu0 0
      %2240 = vmatpush.bf16.msra.mxu0 0
      %2241 = vmatpush.bf16.msra.mxu0 0
      %2242 = vmatpush.bf16.msra.mxu0 0
      %2243 = vmatpush.bf16.msra.mxu0 0
      %2244 = vmatpush.bf16.msra.mxu0 0
      %2245 = vmatpush.bf16.msra.mxu0 %v2230
      %2246 = vmatpush.bf16.msra.mxu0 %v2228
      %2247 = vmatmul.bf16.gmra.mxu0 %v2237
      %v2248 = vpop.f32.mrf.mxu0
      %v2249 = vadd.f32 0.0, %v2248
      %v2250 = vpop.f32.mrf.mxu0
      %2251 = vdwg.mxu0
      %2252 = vmatpush.bf16.msra.mxu0 0
      %2253 = vmatpush.bf16.msra.mxu0 0
      %2254 = vmatpush.bf16.msra.mxu0 0
      %2255 = vmatpush.bf16.msra.mxu0 0
      %2256 = vmatpush.bf16.msra.mxu0 0
      %2257 = vmatpush.bf16.msra.mxu0 0
      %2258 = vmatpush.bf16.msra.mxu0 %v2231
      %2259 = vmatpush.bf16.msra.mxu0 %v2229
      %2260 = vmatmul.bf16.gmra.mxu0 %v2237
      %v2261 = vpop.f32.mrf.mxu0
      %v2262 = vadd.f32 0.0, %v2261
      %v2263 = vpop.f32.mrf.mxu0
      %2264 = vdwg.mxu0
      %2265 = vrot.lane.b32.xlu0 %v579, 54
      %v2266 = vpop.permute.xlu0 %2265
      %2267 = vrot.lane.b32.xlu0 %v580, 54
      %v2268 = vpop.permute.xlu0 %2267
      %2269 = vrot.lane.b32.xlu0 %v581, 54
      %v2270 = vpop.permute.xlu0 %2269
      %2271 = vrot.lane.b32.xlu0 %v582, 54
      %v2272 = vpop.permute.xlu0 %2271
      %2273 = vrot.lane.b32.xlu0 %v583, 54
      %v2274 = vpop.permute.xlu0 %2273
      %2275 = vrot.lane.b32.xlu0 %v584, 54
      %v2276 = vpop.permute.xlu0 %2275
      %vm2277 = vcmask 441344
      %v2278 = vsel %vm2277, %v2266, %v2268
      %v2279 = vsel %vm2277, %v2268, %v2270
      %v2280 = vsel %vm2277, %v2272, %v2274
      %v2281 = vsel %vm2277, %v2274, %v2276
      %v2287 = vsel %vm606, %v2212, 0
      %2289 = vmatpush.bf16.msra.mxu0 0
      %2290 = vmatpush.bf16.msra.mxu0 0
      %2291 = vmatpush.bf16.msra.mxu0 0
      %2292 = vmatpush.bf16.msra.mxu0 0
      %2293 = vmatpush.bf16.msra.mxu0 0
      %2294 = vmatpush.bf16.msra.mxu0 0
      %2295 = vmatpush.bf16.msra.mxu0 %v2280
      %2296 = vmatpush.bf16.msra.mxu0 %v2278
      %2297 = vmatmul.bf16.gmra.mxu0 %v2287
      %v2298 = vpop.f32.mrf.mxu0
      %v2299 = vadd.f32 %v2249, %v2298
      %v2300 = vpop.f32.mrf.mxu0
      %2301 = vdwg.mxu0
      %2302 = vmatpush.bf16.msra.mxu0 0
      %2303 = vmatpush.bf16.msra.mxu0 0
      %2304 = vmatpush.bf16.msra.mxu0 0
      %2305 = vmatpush.bf16.msra.mxu0 0
      %2306 = vmatpush.bf16.msra.mxu0 0
      %2307 = vmatpush.bf16.msra.mxu0 0
      %2308 = vmatpush.bf16.msra.mxu0 %v2281
      %2309 = vmatpush.bf16.msra.mxu0 %v2279
      %2310 = vmatmul.bf16.gmra.mxu0 %v2287
      %v2311 = vpop.f32.mrf.mxu0
      %v2312 = vadd.f32 %v2262, %v2311
      %v2313 = vpop.f32.mrf.mxu0
      %2314 = vdwg.mxu0
      %s2315 = scalar_lea.vmem %s4, 52
      %v2316 = vld [vmem:[%s2315] sm:$0x3]
      %2317 = vrot.lane.b32.xlu0 %v790, 86
      %v2318 = vpop.permute.xlu0 %2317
      %2319 = vrot.lane.b32.xlu0 %v791, 86
      %v2320 = vpop.permute.xlu0 %2319
      %2321 = vrot.lane.b32.xlu0 %v792, 86
      %v2322 = vpop.permute.xlu0 %2321
      %2323 = vrot.lane.b32.xlu0 %v793, 86
      %v2324 = vpop.permute.xlu0 %2323
      %2325 = vrot.lane.b32.xlu0 %v794, 86
      %v2326 = vpop.permute.xlu0 %2325
      %2327 = vrot.lane.b32.xlu0 %v795, 86
      %v2328 = vpop.permute.xlu0 %2327
      %vm2329 = vcmask 703488
      %v2330 = vsel %vm2329, %v2318, %v2320
      %v2331 = vsel %vm2329, %v2320, %v2322
      %v2332 = vsel %vm2329, %v2324, %v2326
      %v2333 = vsel %vm2329, %v2326, %v2328
      %v2339 = vsel %vm606, %v2316, 0
      %2341 = vmatpush.bf16.msra.mxu0 0
      %2342 = vmatpush.bf16.msra.mxu0 0
      %2343 = vmatpush.bf16.msra.mxu0 0
      %2344 = vmatpush.bf16.msra.mxu0 0
      %2345 = vmatpush.bf16.msra.mxu0 0
      %2346 = vmatpush.bf16.msra.mxu0 0
      %2347 = vmatpush.bf16.msra.mxu0 %v2332
      %2348 = vmatpush.bf16.msra.mxu0 %v2330
      %2349 = vmatmul.bf16.gmra.mxu0 %v2339
      %v2350 = vpop.f32.mrf.mxu0
      %v2351 = vadd.f32 0.0, %v2350
      %v2352 = vpop.f32.mrf.mxu0
      %2353 = vdwg.mxu0
      %2354 = vmatpush.bf16.msra.mxu0 0
      %2355 = vmatpush.bf16.msra.mxu0 0
      %2356 = vmatpush.bf16.msra.mxu0 0
      %2357 = vmatpush.bf16.msra.mxu0 0
      %2358 = vmatpush.bf16.msra.mxu0 0
      %2359 = vmatpush.bf16.msra.mxu0 0
      %2360 = vmatpush.bf16.msra.mxu0 %v2333
      %2361 = vmatpush.bf16.msra.mxu0 %v2331
      %2362 = vmatmul.bf16.gmra.mxu0 %v2339
      %v2363 = vpop.f32.mrf.mxu0
      %v2364 = vadd.f32 0.0, %v2363
      %v2365 = vpop.f32.mrf.mxu0
      %2366 = vdwg.mxu0
      %v2367 = vadd.f32 %v2299, %v2351
      %v2368 = vadd.f32 %v2312, %v2364
      %vm2369 = vcmp.lt.s32.totalorder %v556, 13
      %vm2370 = vcmp.lt.s32.totalorder %v557, 13
      %v2371 = vsel %vm2369, 1, 0
      %v2372 = vsel %vm2370, 1, 0
      %v2373 = vcvt.s32.f32 %v2371
      %v2374 = vcvt.s32.f32 %v2372
      %v2375 = vmul.f32 %v2367, %v2373
      %v2376 = vmul.f32 %v2368, %v2374
      %v2377 = vadd.f32 %v2209, %v2375
      %v2378 = vadd.f32 %v2210, %v2376
      %s2379 = scalar_lea.vmem %s5, 8
      %v2380 = vld [vmem:[%s2379] sm:$0xf]
      %s2381 = scalar_lea.vmem %s6, 8
      %v2382 = vld [vmem:[%s2381] sm:$0xf]
      %2384 = vset.pattern.permute.xlu0 0
      %2385 = vperm.xlu0 %2384, %v2380
      %v2386 = vpop.permute.xlu0 %2385
      %v2388 = vmul.f32 %v2377, %v2386
      %v2389 = vmul.f32 %v2378, %v2386
      %2391 = vset.pattern.permute.xlu0 0
      %2392 = vperm.xlu0 %2391, %v2382
      %v2393 = vpop.permute.xlu0 %2392
      %v2395 = vadd.f32 %v2388, %v2393
      %v2396 = vadd.f32 %v2389, %v2393
      %v2397 = vmax.f32 %v2395, 0.0
      %v2398 = vmax.f32 %v2396, 0.0
      %v2399 = vpack.c.bf16 %v2397, %v2397
      %v2400 = vpack.c.bf16 %v2398, %v2398
      %s2401 = scalar_lea.vmem %s7, 4
      %v2402 = vld [vmem:[%s2401] sm:$0x3]
      %v2404 = vsel %vm1184, %v2402, 0
      %v2407 = vsel %vm1188, %v2399, 0
      %v2410 = vsel %vm1188, %v2400, 0
      %2412 = vmatpush.bf16.msra.mxu0 0
      %2413 = vmatpush.bf16.msra.mxu0 0
      %2414 = vmatpush.bf16.msra.mxu0 0
      %2415 = vmatpush.bf16.msra.mxu0 0
      %2416 = vmatpush.bf16.msra.mxu0 0
      %2417 = vmatpush.bf16.msra.mxu0 0
      %2418 = vmatpush.bf16.msra.mxu0 0
      %2419 = vmatpush.bf16.msra.mxu0 %v2407
      %2420 = vmatmul.bf16.gmra.mxu0 %v2404
      %v2421 = vpop.f32.mrf.mxu0
      %v2422 = vadd.f32 0.0, %v2421
      %v2423 = vpop.f32.mrf.mxu0
      %2424 = vdwg.mxu0
      %2425 = vmatpush.bf16.msra.mxu0 0
      %2426 = vmatpush.bf16.msra.mxu0 0
      %2427 = vmatpush.bf16.msra.mxu0 0
      %2428 = vmatpush.bf16.msra.mxu0 0
      %2429 = vmatpush.bf16.msra.mxu0 0
      %2430 = vmatpush.bf16.msra.mxu0 0
      %2431 = vmatpush.bf16.msra.mxu0 0
      %2432 = vmatpush.bf16.msra.mxu0 %v2410
      %2433 = vmatmul.bf16.gmra.mxu0 %v2404
      %v2434 = vpop.f32.mrf.mxu0
      %v2435 = vadd.f32 0.0, %v2434
      %v2436 = vpop.f32.mrf.mxu0
      %2437 = vdwg.mxu0
      %s2438 = scalar_lea.vmem %s8, 8
      %v2439 = vld [vmem:[%s2438] sm:$0xf]
      %s2440 = scalar_lea.vmem %s9, 8
      %v2441 = vld [vmem:[%s2440] sm:$0xf]
      %2443 = vset.pattern.permute.xlu0 0
      %2444 = vperm.xlu0 %2443, %v2439
      %v2445 = vpop.permute.xlu0 %2444
      %v2447 = vmul.f32 %v2422, %v2445
      %v2448 = vmul.f32 %v2435, %v2445
      %2450 = vset.pattern.permute.xlu0 0
      %2451 = vperm.xlu0 %2450, %v2441
      %v2452 = vpop.permute.xlu0 %2451
      %v2454 = vadd.f32 %v2447, %v2452
      %v2455 = vadd.f32 %v2448, %v2452
      %v2456 = vmax.f32 %v2454, 0.0
      %v2457 = vmax.f32 %v2455, 0.0
      %v2458 = vpack.c.bf16 %v2456, %v2456
      %v2459 = vpack.c.bf16 %v2457, %v2457
      %s2460 = scalar_lea.vmem %s13, 6
      %v2461 = vld [vmem:[%s2460] sm:$0x3]
      %v2463 = vsel %vm1184, %v2461, 0
      %v2466 = vsel %vm1188, %v2458, 0
      %v2469 = vsel %vm1188, %v2459, 0
      %2471 = vmatpush.bf16.msra.mxu0 0
      %2472 = vmatpush.bf16.msra.mxu0 0
      %2473 = vmatpush.bf16.msra.mxu0 0
      %2474 = vmatpush.bf16.msra.mxu0 0
      %2475 = vmatpush.bf16.msra.mxu0 0
      %2476 = vmatpush.bf16.msra.mxu0 0
      %2477 = vmatpush.bf16.msra.mxu0 0
      %2478 = vmatpush.bf16.msra.mxu0 %v2466
      %2479 = vmatmul.bf16.gmra.mxu0 %v2463
      %v2480 = vpop.f32.mrf.mxu0
      %v2481 = vadd.f32 0.0, %v2480
      %v2482 = vpop.f32.mrf.mxu0
      %2483 = vdwg.mxu0
      %2484 = vmatpush.bf16.msra.mxu0 0
      %2485 = vmatpush.bf16.msra.mxu0 0
      %2486 = vmatpush.bf16.msra.mxu0 0
      %2487 = vmatpush.bf16.msra.mxu0 0
      %2488 = vmatpush.bf16.msra.mxu0 0
      %2489 = vmatpush.bf16.msra.mxu0 0
      %2490 = vmatpush.bf16.msra.mxu0 0
      %2491 = vmatpush.bf16.msra.mxu0 %v2469
      %2492 = vmatmul.bf16.gmra.mxu0 %v2463
      %v2493 = vpop.f32.mrf.mxu0
      %v2494 = vadd.f32 0.0, %v2493
      %v2495 = vpop.f32.mrf.mxu0
      %2496 = vdwg.mxu0
      %v2497 = vadd.f32 %v1904, %v2481
      %v2498 = vadd.f32 %v1905, %v2494
      %s2499 = scalar_lea.vmem %s4, 54
      %v2500 = vld [vmem:[%s2499] sm:$0x3]
      %s2501 = scalar_lea.vmem %s4, 60
      %v2502 = vld [vmem:[%s2501] sm:$0x3]
      %2503 = vrot.lane.b32.xlu0 %v579, 13
      %v2504 = vpop.permute.xlu0 %2503
      %2505 = vrot.lane.b32.xlu0 %v580, 13
      %v2506 = vpop.permute.xlu0 %2505
      %2507 = vrot.lane.b32.xlu0 %v581, 13
      %v2508 = vpop.permute.xlu0 %2507
      %2509 = vrot.lane.b32.xlu0 %v582, 13
      %v2510 = vpop.permute.xlu0 %2509
      %2511 = vrot.lane.b32.xlu0 %v583, 13
      %v2512 = vpop.permute.xlu0 %2511
      %2513 = vrot.lane.b32.xlu0 %v584, 13
      %v2514 = vpop.permute.xlu0 %2513
      %vm2515 = vcmask 105472
      %v2516 = vsel %vm2515, %v2504, %v2506
      %v2517 = vsel %vm2515, %v2506, %v2508
      %v2518 = vsel %vm2515, %v2510, %v2512
      %v2519 = vsel %vm2515, %v2512, %v2514
      %v2525 = vsel %vm606, %v2502, 0
      %2527 = vmatpush.bf16.msra.mxu0 0
      %2528 = vmatpush.bf16.msra.mxu0 0
      %2529 = vmatpush.bf16.msra.mxu0 0
      %2530 = vmatpush.bf16.msra.mxu0 0
      %2531 = vmatpush.bf16.msra.mxu0 0
      %2532 = vmatpush.bf16.msra.mxu0 0
      %2533 = vmatpush.bf16.msra.mxu0 %v2518
      %2534 = vmatpush.bf16.msra.mxu0 %v2516
      %2535 = vmatmul.bf16.gmra.mxu0 %v2525
      %v2536 = vpop.f32.mrf.mxu0
      %v2537 = vadd.f32 0.0, %v2536
      %v2538 = vpop.f32.mrf.mxu0
      %2539 = vdwg.mxu0
      %2540 = vmatpush.bf16.msra.mxu0 0
      %2541 = vmatpush.bf16.msra.mxu0 0
      %2542 = vmatpush.bf16.msra.mxu0 0
      %2543 = vmatpush.bf16.msra.mxu0 0
      %2544 = vmatpush.bf16.msra.mxu0 0
      %2545 = vmatpush.bf16.msra.mxu0 0
      %2546 = vmatpush.bf16.msra.mxu0 %v2519
      %2547 = vmatpush.bf16.msra.mxu0 %v2517
      %2548 = vmatmul.bf16.gmra.mxu0 %v2525
      %v2549 = vpop.f32.mrf.mxu0
      %v2550 = vadd.f32 0.0, %v2549
      %v2551 = vpop.f32.mrf.mxu0
      %2552 = vdwg.mxu0
      %2553 = vrot.lane.b32.xlu0 %v579, 77
      %v2554 = vpop.permute.xlu0 %2553
      %2555 = vrot.lane.b32.xlu0 %v580, 77
      %v2556 = vpop.permute.xlu0 %2555
      %2557 = vrot.lane.b32.xlu0 %v581, 77
      %v2558 = vpop.permute.xlu0 %2557
      %2559 = vrot.lane.b32.xlu0 %v582, 77
      %v2560 = vpop.permute.xlu0 %2559
      %2561 = vrot.lane.b32.xlu0 %v583, 77
      %v2562 = vpop.permute.xlu0 %2561
      %2563 = vrot.lane.b32.xlu0 %v584, 77
      %v2564 = vpop.permute.xlu0 %2563
      %vm2565 = vcmask 629760
      %v2566 = vsel %vm2565, %v2554, %v2556
      %v2567 = vsel %vm2565, %v2556, %v2558
      %v2568 = vsel %vm2565, %v2560, %v2562
      %v2569 = vsel %vm2565, %v2562, %v2564
      %v2575 = vsel %vm606, %v2500, 0
      %2577 = vmatpush.bf16.msra.mxu0 0
      %2578 = vmatpush.bf16.msra.mxu0 0
      %2579 = vmatpush.bf16.msra.mxu0 0
      %2580 = vmatpush.bf16.msra.mxu0 0
      %2581 = vmatpush.bf16.msra.mxu0 0
      %2582 = vmatpush.bf16.msra.mxu0 0
      %2583 = vmatpush.bf16.msra.mxu0 %v2568
      %2584 = vmatpush.bf16.msra.mxu0 %v2566
      %2585 = vmatmul.bf16.gmra.mxu0 %v2575
      %v2586 = vpop.f32.mrf.mxu0
      %v2587 = vadd.f32 %v2537, %v2586
      %v2588 = vpop.f32.mrf.mxu0
      %2589 = vdwg.mxu0
      %2590 = vmatpush.bf16.msra.mxu0 0
      %2591 = vmatpush.bf16.msra.mxu0 0
      %2592 = vmatpush.bf16.msra.mxu0 0
      %2593 = vmatpush.bf16.msra.mxu0 0
      %2594 = vmatpush.bf16.msra.mxu0 0
      %2595 = vmatpush.bf16.msra.mxu0 0
      %2596 = vmatpush.bf16.msra.mxu0 %v2569
      %2597 = vmatpush.bf16.msra.mxu0 %v2567
      %2598 = vmatmul.bf16.gmra.mxu0 %v2575
      %v2599 = vpop.f32.mrf.mxu0
      %v2600 = vadd.f32 %v2550, %v2599
      %v2601 = vpop.f32.mrf.mxu0
      %2602 = vdwg.mxu0
      %s2603 = scalar_lea.vmem %s4, 66
      %v2604 = vld [vmem:[%s2603] sm:$0x3]
      %2605 = vrot.lane.b32.xlu0 %v790, 77
      %v2606 = vpop.permute.xlu0 %2605
      %2607 = vrot.lane.b32.xlu0 %v791, 77
      %v2608 = vpop.permute.xlu0 %2607
      %2609 = vrot.lane.b32.xlu0 %v792, 77
      %v2610 = vpop.permute.xlu0 %2609
      %2611 = vrot.lane.b32.xlu0 %v793, 77
      %v2612 = vpop.permute.xlu0 %2611
      %2613 = vrot.lane.b32.xlu0 %v794, 77
      %v2614 = vpop.permute.xlu0 %2613
      %2615 = vrot.lane.b32.xlu0 %v795, 77
      %v2616 = vpop.permute.xlu0 %2615
      %v2617 = vsel %vm2565, %v2606, %v2608
      %v2618 = vsel %vm2565, %v2608, %v2610
      %v2619 = vsel %vm2565, %v2612, %v2614
      %v2620 = vsel %vm2565, %v2614, %v2616
      %v2626 = vsel %vm606, %v2604, 0
      %2628 = vmatpush.bf16.msra.mxu0 0
      %2629 = vmatpush.bf16.msra.mxu0 0
      %2630 = vmatpush.bf16.msra.mxu0 0
      %2631 = vmatpush.bf16.msra.mxu0 0
      %2632 = vmatpush.bf16.msra.mxu0 0
      %2633 = vmatpush.bf16.msra.mxu0 0
      %2634 = vmatpush.bf16.msra.mxu0 %v2619
      %2635 = vmatpush.bf16.msra.mxu0 %v2617
      %2636 = vmatmul.bf16.gmra.mxu0 %v2626
      %v2637 = vpop.f32.mrf.mxu0
      %v2638 = vadd.f32 0.0, %v2637
      %v2639 = vpop.f32.mrf.mxu0
      %2640 = vdwg.mxu0
      %2641 = vmatpush.bf16.msra.mxu0 0
      %2642 = vmatpush.bf16.msra.mxu0 0
      %2643 = vmatpush.bf16.msra.mxu0 0
      %2644 = vmatpush.bf16.msra.mxu0 0
      %2645 = vmatpush.bf16.msra.mxu0 0
      %2646 = vmatpush.bf16.msra.mxu0 0
      %2647 = vmatpush.bf16.msra.mxu0 %v2620
      %2648 = vmatpush.bf16.msra.mxu0 %v2618
      %2649 = vmatmul.bf16.gmra.mxu0 %v2626
      %v2650 = vpop.f32.mrf.mxu0
      %v2651 = vadd.f32 0.0, %v2650
      %v2652 = vpop.f32.mrf.mxu0
      %2653 = vdwg.mxu0
      %v2654 = vadd.f32 %v2587, %v2638
      %v2655 = vadd.f32 %v2600, %v2651
      %vm2656 = vcmp.ge.s32.totalorder %v556, 4
      %vm2657 = vcmp.ge.s32.totalorder %v557, 4
      %v2658 = vsel %vm2656, 1, 0
      %v2659 = vsel %vm2657, 1, 0
      %v2660 = vcvt.s32.f32 %v2658
      %v2661 = vcvt.s32.f32 %v2659
      %v2662 = vmul.f32 %v2654, %v2660
      %v2663 = vmul.f32 %v2655, %v2661
      %s2664 = scalar_lea.vmem %s4, 56
      %v2665 = vld [vmem:[%s2664] sm:$0x3]
      %s2666 = scalar_lea.vmem %s4, 62
      %v2667 = vld [vmem:[%s2666] sm:$0x3]
      %v2669 = vsel %vm606, %v2667, 0
      %2671 = vmatpush.bf16.msra.mxu0 0
      %2672 = vmatpush.bf16.msra.mxu0 0
      %2673 = vmatpush.bf16.msra.mxu0 0
      %2674 = vmatpush.bf16.msra.mxu0 0
      %2675 = vmatpush.bf16.msra.mxu0 0
      %2676 = vmatpush.bf16.msra.mxu0 0
      %2677 = vmatpush.bf16.msra.mxu0 %v600
      %2678 = vmatpush.bf16.msra.mxu0 %v598
      %2679 = vmatmul.bf16.gmra.mxu0 %v2669
      %v2680 = vpop.f32.mrf.mxu0
      %v2681 = vadd.f32 0.0, %v2680
      %v2682 = vpop.f32.mrf.mxu0
      %2683 = vdwg.mxu0
      %2684 = vmatpush.bf16.msra.mxu0 0
      %2685 = vmatpush.bf16.msra.mxu0 0
      %2686 = vmatpush.bf16.msra.mxu0 0
      %2687 = vmatpush.bf16.msra.mxu0 0
      %2688 = vmatpush.bf16.msra.mxu0 0
      %2689 = vmatpush.bf16.msra.mxu0 0
      %2690 = vmatpush.bf16.msra.mxu0 %v601
      %2691 = vmatpush.bf16.msra.mxu0 %v599
      %2692 = vmatmul.bf16.gmra.mxu0 %v2669
      %v2693 = vpop.f32.mrf.mxu0
      %v2694 = vadd.f32 0.0, %v2693
      %v2695 = vpop.f32.mrf.mxu0
      %2696 = vdwg.mxu0
      %2697 = vrot.lane.b32.xlu0 %v579, 73
      %v2698 = vpop.permute.xlu0 %2697
      %2699 = vrot.lane.b32.xlu0 %v580, 73
      %v2700 = vpop.permute.xlu0 %2699
      %2701 = vrot.lane.b32.xlu0 %v581, 73
      %v2702 = vpop.permute.xlu0 %2701
      %2703 = vrot.lane.b32.xlu0 %v582, 73
      %v2704 = vpop.permute.xlu0 %2703
      %2705 = vrot.lane.b32.xlu0 %v583, 73
      %v2706 = vpop.permute.xlu0 %2705
      %2707 = vrot.lane.b32.xlu0 %v584, 73
      %v2708 = vpop.permute.xlu0 %2707
      %vm2709 = vcmask 596992
      %v2710 = vsel %vm2709, %v2698, %v2700
      %v2711 = vsel %vm2709, %v2700, %v2702
      %v2712 = vsel %vm2709, %v2704, %v2706
      %v2713 = vsel %vm2709, %v2706, %v2708
      %v2719 = vsel %vm606, %v2665, 0
      %2721 = vmatpush.bf16.msra.mxu0 0
      %2722 = vmatpush.bf16.msra.mxu0 0
      %2723 = vmatpush.bf16.msra.mxu0 0
      %2724 = vmatpush.bf16.msra.mxu0 0
      %2725 = vmatpush.bf16.msra.mxu0 0
      %2726 = vmatpush.bf16.msra.mxu0 0
      %2727 = vmatpush.bf16.msra.mxu0 %v2712
      %2728 = vmatpush.bf16.msra.mxu0 %v2710
      %2729 = vmatmul.bf16.gmra.mxu0 %v2719
      %v2730 = vpop.f32.mrf.mxu0
      %v2731 = vadd.f32 %v2681, %v2730
      %v2732 = vpop.f32.mrf.mxu0
      %2733 = vdwg.mxu0
      %2734 = vmatpush.bf16.msra.mxu0 0
      %2735 = vmatpush.bf16.msra.mxu0 0
      %2736 = vmatpush.bf16.msra.mxu0 0
      %2737 = vmatpush.bf16.msra.mxu0 0
      %2738 = vmatpush.bf16.msra.mxu0 0
      %2739 = vmatpush.bf16.msra.mxu0 0
      %2740 = vmatpush.bf16.msra.mxu0 %v2713
      %2741 = vmatpush.bf16.msra.mxu0 %v2711
      %2742 = vmatmul.bf16.gmra.mxu0 %v2719
      %v2743 = vpop.f32.mrf.mxu0
      %v2744 = vadd.f32 %v2694, %v2743
      %v2745 = vpop.f32.mrf.mxu0
      %2746 = vdwg.mxu0
      %s2747 = scalar_lea.vmem %s4, 68
      %v2748 = vld [vmem:[%s2747] sm:$0x3]
      %2749 = vrot.lane.b32.xlu0 %v790, 73
      %v2750 = vpop.permute.xlu0 %2749
      %2751 = vrot.lane.b32.xlu0 %v791, 73
      %v2752 = vpop.permute.xlu0 %2751
      %2753 = vrot.lane.b32.xlu0 %v792, 73
      %v2754 = vpop.permute.xlu0 %2753
      %2755 = vrot.lane.b32.xlu0 %v793, 73
      %v2756 = vpop.permute.xlu0 %2755
      %2757 = vrot.lane.b32.xlu0 %v794, 73
      %v2758 = vpop.permute.xlu0 %2757
      %2759 = vrot.lane.b32.xlu0 %v795, 73
      %v2760 = vpop.permute.xlu0 %2759
      %v2761 = vsel %vm2709, %v2750, %v2752
      %v2762 = vsel %vm2709, %v2752, %v2754
      %v2763 = vsel %vm2709, %v2756, %v2758
      %v2764 = vsel %vm2709, %v2758, %v2760
      %v2770 = vsel %vm606, %v2748, 0
      %2772 = vmatpush.bf16.msra.mxu0 0
      %2773 = vmatpush.bf16.msra.mxu0 0
      %2774 = vmatpush.bf16.msra.mxu0 0
      %2775 = vmatpush.bf16.msra.mxu0 0
      %2776 = vmatpush.bf16.msra.mxu0 0
      %2777 = vmatpush.bf16.msra.mxu0 0
      %2778 = vmatpush.bf16.msra.mxu0 %v2763
      %2779 = vmatpush.bf16.msra.mxu0 %v2761
      %2780 = vmatmul.bf16.gmra.mxu0 %v2770
      %v2781 = vpop.f32.mrf.mxu0
      %v2782 = vadd.f32 0.0, %v2781
      %v2783 = vpop.f32.mrf.mxu0
      %2784 = vdwg.mxu0
      %2785 = vmatpush.bf16.msra.mxu0 0
      %2786 = vmatpush.bf16.msra.mxu0 0
      %2787 = vmatpush.bf16.msra.mxu0 0
      %2788 = vmatpush.bf16.msra.mxu0 0
      %2789 = vmatpush.bf16.msra.mxu0 0
      %2790 = vmatpush.bf16.msra.mxu0 0
      %2791 = vmatpush.bf16.msra.mxu0 %v2764
      %2792 = vmatpush.bf16.msra.mxu0 %v2762
      %2793 = vmatmul.bf16.gmra.mxu0 %v2770
      %v2794 = vpop.f32.mrf.mxu0
      %v2795 = vadd.f32 0.0, %v2794
      %v2796 = vpop.f32.mrf.mxu0
      %2797 = vdwg.mxu0
      %v2798 = vadd.f32 %v2731, %v2782
      %v2799 = vadd.f32 %v2744, %v2795
      %v2800 = vadd.f32 %v2662, %v2798
      %v2801 = vadd.f32 %v2663, %v2799
      %s2802 = scalar_lea.vmem %s4, 58
      %v2803 = vld [vmem:[%s2802] sm:$0x3]
      %s2804 = scalar_lea.vmem %s4, 64
      %v2805 = vld [vmem:[%s2804] sm:$0x3]
      %2806 = vrot.lane.b32.xlu0 %v579, 5
      %v2807 = vpop.permute.xlu0 %2806
      %2808 = vrot.lane.b32.xlu0 %v580, 5
      %v2809 = vpop.permute.xlu0 %2808
      %2810 = vrot.lane.b32.xlu0 %v581, 5
      %v2811 = vpop.permute.xlu0 %2810
      %2812 = vrot.lane.b32.xlu0 %v582, 5
      %v2813 = vpop.permute.xlu0 %2812
      %2814 = vrot.lane.b32.xlu0 %v583, 5
      %v2815 = vpop.permute.xlu0 %2814
      %2816 = vrot.lane.b32.xlu0 %v584, 5
      %v2817 = vpop.permute.xlu0 %2816
      %vm2818 = vcmask 39936
      %v2819 = vsel %vm2818, %v2807, %v2809
      %v2820 = vsel %vm2818, %v2809, %v2811
      %v2821 = vsel %vm2818, %v2813, %v2815
      %v2822 = vsel %vm2818, %v2815, %v2817
      %v2828 = vsel %vm606, %v2805, 0
      %2830 = vmatpush.bf16.msra.mxu0 0
      %2831 = vmatpush.bf16.msra.mxu0 0
      %2832 = vmatpush.bf16.msra.mxu0 0
      %2833 = vmatpush.bf16.msra.mxu0 0
      %2834 = vmatpush.bf16.msra.mxu0 0
      %2835 = vmatpush.bf16.msra.mxu0 0
      %2836 = vmatpush.bf16.msra.mxu0 %v2821
      %2837 = vmatpush.bf16.msra.mxu0 %v2819
      %2838 = vmatmul.bf16.gmra.mxu0 %v2828
      %v2839 = vpop.f32.mrf.mxu0
      %v2840 = vadd.f32 0.0, %v2839
      %v2841 = vpop.f32.mrf.mxu0
      %2842 = vdwg.mxu0
      %2843 = vmatpush.bf16.msra.mxu0 0
      %2844 = vmatpush.bf16.msra.mxu0 0
      %2845 = vmatpush.bf16.msra.mxu0 0
      %2846 = vmatpush.bf16.msra.mxu0 0
      %2847 = vmatpush.bf16.msra.mxu0 0
      %2848 = vmatpush.bf16.msra.mxu0 0
      %2849 = vmatpush.bf16.msra.mxu0 %v2822
      %2850 = vmatpush.bf16.msra.mxu0 %v2820
      %2851 = vmatmul.bf16.gmra.mxu0 %v2828
      %v2852 = vpop.f32.mrf.mxu0
      %v2853 = vadd.f32 0.0, %v2852
      %v2854 = vpop.f32.mrf.mxu0
      %2855 = vdwg.mxu0
      %2856 = vrot.lane.b32.xlu0 %v579, 69
      %v2857 = vpop.permute.xlu0 %2856
      %2858 = vrot.lane.b32.xlu0 %v580, 69
      %v2859 = vpop.permute.xlu0 %2858
      %2860 = vrot.lane.b32.xlu0 %v581, 69
      %v2861 = vpop.permute.xlu0 %2860
      %2862 = vrot.lane.b32.xlu0 %v582, 69
      %v2863 = vpop.permute.xlu0 %2862
      %2864 = vrot.lane.b32.xlu0 %v583, 69
      %v2865 = vpop.permute.xlu0 %2864
      %2866 = vrot.lane.b32.xlu0 %v584, 69
      %v2867 = vpop.permute.xlu0 %2866
      %vm2868 = vcmask 564224
      %v2869 = vsel %vm2868, %v2857, %v2859
      %v2870 = vsel %vm2868, %v2859, %v2861
      %v2871 = vsel %vm2868, %v2863, %v2865
      %v2872 = vsel %vm2868, %v2865, %v2867
      %v2878 = vsel %vm606, %v2803, 0
      %2880 = vmatpush.bf16.msra.mxu0 0
      %2881 = vmatpush.bf16.msra.mxu0 0
      %2882 = vmatpush.bf16.msra.mxu0 0
      %2883 = vmatpush.bf16.msra.mxu0 0
      %2884 = vmatpush.bf16.msra.mxu0 0
      %2885 = vmatpush.bf16.msra.mxu0 0
      %2886 = vmatpush.bf16.msra.mxu0 %v2871
      %2887 = vmatpush.bf16.msra.mxu0 %v2869
      %2888 = vmatmul.bf16.gmra.mxu0 %v2878
      %v2889 = vpop.f32.mrf.mxu0
      %v2890 = vadd.f32 %v2840, %v2889
      %v2891 = vpop.f32.mrf.mxu0
      %2892 = vdwg.mxu0
      %2893 = vmatpush.bf16.msra.mxu0 0
      %2894 = vmatpush.bf16.msra.mxu0 0
      %2895 = vmatpush.bf16.msra.mxu0 0
      %2896 = vmatpush.bf16.msra.mxu0 0
      %2897 = vmatpush.bf16.msra.mxu0 0
      %2898 = vmatpush.bf16.msra.mxu0 0
      %2899 = vmatpush.bf16.msra.mxu0 %v2872
      %2900 = vmatpush.bf16.msra.mxu0 %v2870
      %2901 = vmatmul.bf16.gmra.mxu0 %v2878
      %v2902 = vpop.f32.mrf.mxu0
      %v2903 = vadd.f32 %v2853, %v2902
      %v2904 = vpop.f32.mrf.mxu0
      %2905 = vdwg.mxu0
      %s2906 = scalar_lea.vmem %s4, 70
      %v2907 = vld [vmem:[%s2906] sm:$0x3]
      %2908 = vrot.lane.b32.xlu0 %v790, 69
      %v2909 = vpop.permute.xlu0 %2908
      %2910 = vrot.lane.b32.xlu0 %v791, 69
      %v2911 = vpop.permute.xlu0 %2910
      %2912 = vrot.lane.b32.xlu0 %v792, 69
      %v2913 = vpop.permute.xlu0 %2912
      %2914 = vrot.lane.b32.xlu0 %v793, 69
      %v2915 = vpop.permute.xlu0 %2914
      %2916 = vrot.lane.b32.xlu0 %v794, 69
      %v2917 = vpop.permute.xlu0 %2916
      %2918 = vrot.lane.b32.xlu0 %v795, 69
      %v2919 = vpop.permute.xlu0 %2918
      %v2920 = vsel %vm2868, %v2909, %v2911
      %v2921 = vsel %vm2868, %v2911, %v2913
      %v2922 = vsel %vm2868, %v2915, %v2917
      %v2923 = vsel %vm2868, %v2917, %v2919
      %v2929 = vsel %vm606, %v2907, 0
      %2931 = vmatpush.bf16.msra.mxu0 0
      %2932 = vmatpush.bf16.msra.mxu0 0
      %2933 = vmatpush.bf16.msra.mxu0 0
      %2934 = vmatpush.bf16.msra.mxu0 0
      %2935 = vmatpush.bf16.msra.mxu0 0
      %2936 = vmatpush.bf16.msra.mxu0 0
      %2937 = vmatpush.bf16.msra.mxu0 %v2922
      %2938 = vmatpush.bf16.msra.mxu0 %v2920
      %2939 = vmatmul.bf16.gmra.mxu0 %v2929
      %v2940 = vpop.f32.mrf.mxu0
      %v2941 = vadd.f32 0.0, %v2940
      %v2942 = vpop.f32.mrf.mxu0
      %2943 = vdwg.mxu0
      %2944 = vmatpush.bf16.msra.mxu0 0
      %2945 = vmatpush.bf16.msra.mxu0 0
      %2946 = vmatpush.bf16.msra.mxu0 0
      %2947 = vmatpush.bf16.msra.mxu0 0
      %2948 = vmatpush.bf16.msra.mxu0 0
      %2949 = vmatpush.bf16.msra.mxu0 0
      %2950 = vmatpush.bf16.msra.mxu0 %v2923
      %2951 = vmatpush.bf16.msra.mxu0 %v2921
      %2952 = vmatmul.bf16.gmra.mxu0 %v2929
      %v2953 = vpop.f32.mrf.mxu0
      %v2954 = vadd.f32 0.0, %v2953
      %v2955 = vpop.f32.mrf.mxu0
      %2956 = vdwg.mxu0
      %v2957 = vadd.f32 %v2890, %v2941
      %v2958 = vadd.f32 %v2903, %v2954
      %vm2959 = vcmp.lt.s32.totalorder %v556, 12
      %vm2960 = vcmp.lt.s32.totalorder %v557, 12
      %v2961 = vsel %vm2959, 1, 0
      %v2962 = vsel %vm2960, 1, 0
      %v2963 = vcvt.s32.f32 %v2961
      %v2964 = vcvt.s32.f32 %v2962
      %v2965 = vmul.f32 %v2957, %v2963
      %v2966 = vmul.f32 %v2958, %v2964
      %v2967 = vadd.f32 %v2800, %v2965
      %v2968 = vadd.f32 %v2801, %v2966
      %s2969 = scalar_lea.vmem %s5, 12
      %v2970 = vld [vmem:[%s2969] sm:$0xf]
      %s2971 = scalar_lea.vmem %s6, 12
      %v2972 = vld [vmem:[%s2971] sm:$0xf]
      %2974 = vset.pattern.permute.xlu0 0
      %2975 = vperm.xlu0 %2974, %v2970
      %v2976 = vpop.permute.xlu0 %2975
      %v2978 = vmul.f32 %v2967, %v2976
      %v2979 = vmul.f32 %v2968, %v2976
      %2981 = vset.pattern.permute.xlu0 0
      %2982 = vperm.xlu0 %2981, %v2972
      %v2983 = vpop.permute.xlu0 %2982
      %v2985 = vadd.f32 %v2978, %v2983
      %v2986 = vadd.f32 %v2979, %v2983
      %v2987 = vmax.f32 %v2985, 0.0
      %v2988 = vmax.f32 %v2986, 0.0
      %v2989 = vpack.c.bf16 %v2987, %v2987
      %v2990 = vpack.c.bf16 %v2988, %v2988
      %s2991 = scalar_lea.vmem %s7, 6
      %v2992 = vld [vmem:[%s2991] sm:$0x3]
      %v2994 = vsel %vm1184, %v2992, 0
      %v2997 = vsel %vm1188, %v2989, 0
      %v3000 = vsel %vm1188, %v2990, 0
      %3002 = vmatpush.bf16.msra.mxu0 0
      %3003 = vmatpush.bf16.msra.mxu0 0
      %3004 = vmatpush.bf16.msra.mxu0 0
      %3005 = vmatpush.bf16.msra.mxu0 0
      %3006 = vmatpush.bf16.msra.mxu0 0
      %3007 = vmatpush.bf16.msra.mxu0 0
      %3008 = vmatpush.bf16.msra.mxu0 0
      %3009 = vmatpush.bf16.msra.mxu0 %v2997
      %3010 = vmatmul.bf16.gmra.mxu0 %v2994
      %v3011 = vpop.f32.mrf.mxu0
      %v3012 = vadd.f32 0.0, %v3011
      %v3013 = vpop.f32.mrf.mxu0
      %3014 = vdwg.mxu0
      %3015 = vmatpush.bf16.msra.mxu0 0
      %3016 = vmatpush.bf16.msra.mxu0 0
      %3017 = vmatpush.bf16.msra.mxu0 0
      %3018 = vmatpush.bf16.msra.mxu0 0
      %3019 = vmatpush.bf16.msra.mxu0 0
      %3020 = vmatpush.bf16.msra.mxu0 0
      %3021 = vmatpush.bf16.msra.mxu0 0
      %3022 = vmatpush.bf16.msra.mxu0 %v3000
      %3023 = vmatmul.bf16.gmra.mxu0 %v2994
      %v3024 = vpop.f32.mrf.mxu0
      %v3025 = vadd.f32 0.0, %v3024
      %v3026 = vpop.f32.mrf.mxu0
      %3027 = vdwg.mxu0
      %s3028 = scalar_lea.vmem %s8, 12
      %v3029 = vld [vmem:[%s3028] sm:$0xf]
      %s3030 = scalar_lea.vmem %s9, 12
      %v3031 = vld [vmem:[%s3030] sm:$0xf]
      %3033 = vset.pattern.permute.xlu0 0
      %3034 = vperm.xlu0 %3033, %v3029
      %v3035 = vpop.permute.xlu0 %3034
      %v3037 = vmul.f32 %v3012, %v3035
      %v3038 = vmul.f32 %v3025, %v3035
      %3040 = vset.pattern.permute.xlu0 0
      %3041 = vperm.xlu0 %3040, %v3031
      %v3042 = vpop.permute.xlu0 %3041
      %v3044 = vadd.f32 %v3037, %v3042
      %v3045 = vadd.f32 %v3038, %v3042
      %v3046 = vmax.f32 %v3044, 0.0
      %v3047 = vmax.f32 %v3045, 0.0
      %v3048 = vpack.c.bf16 %v3046, %v3046
      %v3049 = vpack.c.bf16 %v3047, %v3047
      %s3050 = scalar_lea.vmem %s13, 8
      %v3051 = vld [vmem:[%s3050] sm:$0x3]
      %v3053 = vsel %vm1184, %v3051, 0
      %v3056 = vsel %vm1188, %v3048, 0
      %v3059 = vsel %vm1188, %v3049, 0
      %3061 = vmatpush.bf16.msra.mxu0 0
      %3062 = vmatpush.bf16.msra.mxu0 0
      %3063 = vmatpush.bf16.msra.mxu0 0
      %3064 = vmatpush.bf16.msra.mxu0 0
      %3065 = vmatpush.bf16.msra.mxu0 0
      %3066 = vmatpush.bf16.msra.mxu0 0
      %3067 = vmatpush.bf16.msra.mxu0 0
      %3068 = vmatpush.bf16.msra.mxu0 %v3056
      %3069 = vmatmul.bf16.gmra.mxu0 %v3053
      %v3070 = vpop.f32.mrf.mxu0
      %v3071 = vadd.f32 0.0, %v3070
      %v3072 = vpop.f32.mrf.mxu0
      %3073 = vdwg.mxu0
      %3074 = vmatpush.bf16.msra.mxu0 0
      %3075 = vmatpush.bf16.msra.mxu0 0
      %3076 = vmatpush.bf16.msra.mxu0 0
      %3077 = vmatpush.bf16.msra.mxu0 0
      %3078 = vmatpush.bf16.msra.mxu0 0
      %3079 = vmatpush.bf16.msra.mxu0 0
      %3080 = vmatpush.bf16.msra.mxu0 0
      %3081 = vmatpush.bf16.msra.mxu0 %v3059
      %3082 = vmatmul.bf16.gmra.mxu0 %v3053
      %v3083 = vpop.f32.mrf.mxu0
      %v3084 = vadd.f32 0.0, %v3083
      %v3085 = vpop.f32.mrf.mxu0
      %3086 = vdwg.mxu0
      %v3087 = vadd.f32 %v2497, %v3071
      %v3088 = vadd.f32 %v2498, %v3084
      %s3089 = scalar_lea.vmem %s4, 72
      %v3090 = vld [vmem:[%s3089] sm:$0x3]
      %s3091 = scalar_lea.vmem %s4, 78
      %v3092 = vld [vmem:[%s3091] sm:$0x3]
      %3093 = vrot.lane.b32.xlu0 %v579, 14
      %v3094 = vpop.permute.xlu0 %3093
      %3095 = vrot.lane.b32.xlu0 %v580, 14
      %v3096 = vpop.permute.xlu0 %3095
      %3097 = vrot.lane.b32.xlu0 %v581, 14
      %v3098 = vpop.permute.xlu0 %3097
      %3099 = vrot.lane.b32.xlu0 %v582, 14
      %v3100 = vpop.permute.xlu0 %3099
      %3101 = vrot.lane.b32.xlu0 %v583, 14
      %v3102 = vpop.permute.xlu0 %3101
      %3103 = vrot.lane.b32.xlu0 %v584, 14
      %v3104 = vpop.permute.xlu0 %3103
      %vm3105 = vcmask 113664
      %v3106 = vsel %vm3105, %v3094, %v3096
      %v3107 = vsel %vm3105, %v3096, %v3098
      %v3108 = vsel %vm3105, %v3100, %v3102
      %v3109 = vsel %vm3105, %v3102, %v3104
      %v3115 = vsel %vm606, %v3092, 0
      %3117 = vmatpush.bf16.msra.mxu0 0
      %3118 = vmatpush.bf16.msra.mxu0 0
      %3119 = vmatpush.bf16.msra.mxu0 0
      %3120 = vmatpush.bf16.msra.mxu0 0
      %3121 = vmatpush.bf16.msra.mxu0 0
      %3122 = vmatpush.bf16.msra.mxu0 0
      %3123 = vmatpush.bf16.msra.mxu0 %v3108
      %3124 = vmatpush.bf16.msra.mxu0 %v3106
      %3125 = vmatmul.bf16.gmra.mxu0 %v3115
      %v3126 = vpop.f32.mrf.mxu0
      %v3127 = vadd.f32 0.0, %v3126
      %v3128 = vpop.f32.mrf.mxu0
      %3129 = vdwg.mxu0
      %3130 = vmatpush.bf16.msra.mxu0 0
      %3131 = vmatpush.bf16.msra.mxu0 0
      %3132 = vmatpush.bf16.msra.mxu0 0
      %3133 = vmatpush.bf16.msra.mxu0 0
      %3134 = vmatpush.bf16.msra.mxu0 0
      %3135 = vmatpush.bf16.msra.mxu0 0
      %3136 = vmatpush.bf16.msra.mxu0 %v3109
      %3137 = vmatpush.bf16.msra.mxu0 %v3107
      %3138 = vmatmul.bf16.gmra.mxu0 %v3115
      %v3139 = vpop.f32.mrf.mxu0
      %v3140 = vadd.f32 0.0, %v3139
      %v3141 = vpop.f32.mrf.mxu0
      %3142 = vdwg.mxu0
      %3143 = vrot.lane.b32.xlu0 %v579, 94
      %v3144 = vpop.permute.xlu0 %3143
      %3145 = vrot.lane.b32.xlu0 %v580, 94
      %v3146 = vpop.permute.xlu0 %3145
      %3147 = vrot.lane.b32.xlu0 %v581, 94
      %v3148 = vpop.permute.xlu0 %3147
      %3149 = vrot.lane.b32.xlu0 %v582, 94
      %v3150 = vpop.permute.xlu0 %3149
      %3151 = vrot.lane.b32.xlu0 %v583, 94
      %v3152 = vpop.permute.xlu0 %3151
      %3153 = vrot.lane.b32.xlu0 %v584, 94
      %v3154 = vpop.permute.xlu0 %3153
      %vm3155 = vcmask 769024
      %v3156 = vsel %vm3155, %v3144, %v3146
      %v3157 = vsel %vm3155, %v3146, %v3148
      %v3158 = vsel %vm3155, %v3150, %v3152
      %v3159 = vsel %vm3155, %v3152, %v3154
      %v3165 = vsel %vm606, %v3090, 0
      %3167 = vmatpush.bf16.msra.mxu0 0
      %3168 = vmatpush.bf16.msra.mxu0 0
      %3169 = vmatpush.bf16.msra.mxu0 0
      %3170 = vmatpush.bf16.msra.mxu0 0
      %3171 = vmatpush.bf16.msra.mxu0 0
      %3172 = vmatpush.bf16.msra.mxu0 0
      %3173 = vmatpush.bf16.msra.mxu0 %v3158
      %3174 = vmatpush.bf16.msra.mxu0 %v3156
      %3175 = vmatmul.bf16.gmra.mxu0 %v3165
      %v3176 = vpop.f32.mrf.mxu0
      %v3177 = vadd.f32 %v3127, %v3176
      %v3178 = vpop.f32.mrf.mxu0
      %3179 = vdwg.mxu0
      %3180 = vmatpush.bf16.msra.mxu0 0
      %3181 = vmatpush.bf16.msra.mxu0 0
      %3182 = vmatpush.bf16.msra.mxu0 0
      %3183 = vmatpush.bf16.msra.mxu0 0
      %3184 = vmatpush.bf16.msra.mxu0 0
      %3185 = vmatpush.bf16.msra.mxu0 0
      %3186 = vmatpush.bf16.msra.mxu0 %v3159
      %3187 = vmatpush.bf16.msra.mxu0 %v3157
      %3188 = vmatmul.bf16.gmra.mxu0 %v3165
      %v3189 = vpop.f32.mrf.mxu0
      %v3190 = vadd.f32 %v3140, %v3189
      %v3191 = vpop.f32.mrf.mxu0
      %3192 = vdwg.mxu0
      %s3193 = scalar_lea.vmem %s4, 84
      %v3194 = vld [vmem:[%s3193] sm:$0x3]
      %3195 = vrot.lane.b32.xlu0 %v790, 62
      %v3196 = vpop.permute.xlu0 %3195
      %3197 = vrot.lane.b32.xlu0 %v791, 62
      %v3198 = vpop.permute.xlu0 %3197
      %3199 = vrot.lane.b32.xlu0 %v792, 62
      %v3200 = vpop.permute.xlu0 %3199
      %3201 = vrot.lane.b32.xlu0 %v793, 62
      %v3202 = vpop.permute.xlu0 %3201
      %3203 = vrot.lane.b32.xlu0 %v794, 62
      %v3204 = vpop.permute.xlu0 %3203
      %3205 = vrot.lane.b32.xlu0 %v795, 62
      %v3206 = vpop.permute.xlu0 %3205
      %vm3207 = vcmask 506880
      %v3208 = vsel %vm3207, %v3196, %v3198
      %v3209 = vsel %vm3207, %v3198, %v3200
      %v3210 = vsel %vm3207, %v3202, %v3204
      %v3211 = vsel %vm3207, %v3204, %v3206
      %v3217 = vsel %vm606, %v3194, 0
      %3219 = vmatpush.bf16.msra.mxu0 0
      %3220 = vmatpush.bf16.msra.mxu0 0
      %3221 = vmatpush.bf16.msra.mxu0 0
      %3222 = vmatpush.bf16.msra.mxu0 0
      %3223 = vmatpush.bf16.msra.mxu0 0
      %3224 = vmatpush.bf16.msra.mxu0 0
      %3225 = vmatpush.bf16.msra.mxu0 %v3210
      %3226 = vmatpush.bf16.msra.mxu0 %v3208
      %3227 = vmatmul.bf16.gmra.mxu0 %v3217
      %v3228 = vpop.f32.mrf.mxu0
      %v3229 = vadd.f32 0.0, %v3228
      %v3230 = vpop.f32.mrf.mxu0
      %3231 = vdwg.mxu0
      %3232 = vmatpush.bf16.msra.mxu0 0
      %3233 = vmatpush.bf16.msra.mxu0 0
      %3234 = vmatpush.bf16.msra.mxu0 0
      %3235 = vmatpush.bf16.msra.mxu0 0
      %3236 = vmatpush.bf16.msra.mxu0 0
      %3237 = vmatpush.bf16.msra.mxu0 0
      %3238 = vmatpush.bf16.msra.mxu0 %v3211
      %3239 = vmatpush.bf16.msra.mxu0 %v3209
      %3240 = vmatmul.bf16.gmra.mxu0 %v3217
      %v3241 = vpop.f32.mrf.mxu0
      %v3242 = vadd.f32 0.0, %v3241
      %v3243 = vpop.f32.mrf.mxu0
      %3244 = vdwg.mxu0
      %v3245 = vadd.f32 %v3177, %v3229
      %v3246 = vadd.f32 %v3190, %v3242
      %vm3247 = vcmp.ge.s32.totalorder %v556, 5
      %vm3248 = vcmp.ge.s32.totalorder %v557, 5
      %v3249 = vsel %vm3247, 1, 0
      %v3250 = vsel %vm3248, 1, 0
      %v3251 = vcvt.s32.f32 %v3249
      %v3252 = vcvt.s32.f32 %v3250
      %v3253 = vmul.f32 %v3245, %v3251
      %v3254 = vmul.f32 %v3246, %v3252
      %s3255 = scalar_lea.vmem %s4, 74
      %v3256 = vld [vmem:[%s3255] sm:$0x3]
      %s3257 = scalar_lea.vmem %s4, 80
      %v3258 = vld [vmem:[%s3257] sm:$0x3]
      %v3260 = vsel %vm606, %v3258, 0
      %3262 = vmatpush.bf16.msra.mxu0 0
      %3263 = vmatpush.bf16.msra.mxu0 0
      %3264 = vmatpush.bf16.msra.mxu0 0
      %3265 = vmatpush.bf16.msra.mxu0 0
      %3266 = vmatpush.bf16.msra.mxu0 0
      %3267 = vmatpush.bf16.msra.mxu0 0
      %3268 = vmatpush.bf16.msra.mxu0 %v600
      %3269 = vmatpush.bf16.msra.mxu0 %v598
      %3270 = vmatmul.bf16.gmra.mxu0 %v3260
      %v3271 = vpop.f32.mrf.mxu0
      %v3272 = vadd.f32 0.0, %v3271
      %v3273 = vpop.f32.mrf.mxu0
      %3274 = vdwg.mxu0
      %3275 = vmatpush.bf16.msra.mxu0 0
      %3276 = vmatpush.bf16.msra.mxu0 0
      %3277 = vmatpush.bf16.msra.mxu0 0
      %3278 = vmatpush.bf16.msra.mxu0 0
      %3279 = vmatpush.bf16.msra.mxu0 0
      %3280 = vmatpush.bf16.msra.mxu0 0
      %3281 = vmatpush.bf16.msra.mxu0 %v601
      %3282 = vmatpush.bf16.msra.mxu0 %v599
      %3283 = vmatmul.bf16.gmra.mxu0 %v3260
      %v3284 = vpop.f32.mrf.mxu0
      %v3285 = vadd.f32 0.0, %v3284
      %v3286 = vpop.f32.mrf.mxu0
      %3287 = vdwg.mxu0
      %3288 = vrot.lane.b32.xlu0 %v579, 89
      %v3289 = vpop.permute.xlu0 %3288
      %3290 = vrot.lane.b32.xlu0 %v580, 89
      %v3291 = vpop.permute.xlu0 %3290
      %3292 = vrot.lane.b32.xlu0 %v581, 89
      %v3293 = vpop.permute.xlu0 %3292
      %3294 = vrot.lane.b32.xlu0 %v582, 89
      %v3295 = vpop.permute.xlu0 %3294
      %3296 = vrot.lane.b32.xlu0 %v583, 89
      %v3297 = vpop.permute.xlu0 %3296
      %3298 = vrot.lane.b32.xlu0 %v584, 89
      %v3299 = vpop.permute.xlu0 %3298
      %v3300 = vsel %vm2169, %v3289, %v3291
      %v3301 = vsel %vm2169, %v3291, %v3293
      %v3302 = vsel %vm2169, %v3295, %v3297
      %v3303 = vsel %vm2169, %v3297, %v3299
      %v3309 = vsel %vm606, %v3256, 0
      %3311 = vmatpush.bf16.msra.mxu0 0
      %3312 = vmatpush.bf16.msra.mxu0 0
      %3313 = vmatpush.bf16.msra.mxu0 0
      %3314 = vmatpush.bf16.msra.mxu0 0
      %3315 = vmatpush.bf16.msra.mxu0 0
      %3316 = vmatpush.bf16.msra.mxu0 0
      %3317 = vmatpush.bf16.msra.mxu0 %v3302
      %3318 = vmatpush.bf16.msra.mxu0 %v3300
      %3319 = vmatmul.bf16.gmra.mxu0 %v3309
      %v3320 = vpop.f32.mrf.mxu0
      %v3321 = vadd.f32 %v3272, %v3320
      %v3322 = vpop.f32.mrf.mxu0
      %3323 = vdwg.mxu0
      %3324 = vmatpush.bf16.msra.mxu0 0
      %3325 = vmatpush.bf16.msra.mxu0 0
      %3326 = vmatpush.bf16.msra.mxu0 0
      %3327 = vmatpush.bf16.msra.mxu0 0
      %3328 = vmatpush.bf16.msra.mxu0 0
      %3329 = vmatpush.bf16.msra.mxu0 0
      %3330 = vmatpush.bf16.msra.mxu0 %v3303
      %3331 = vmatpush.bf16.msra.mxu0 %v3301
      %3332 = vmatmul.bf16.gmra.mxu0 %v3309
      %v3333 = vpop.f32.mrf.mxu0
      %v3334 = vadd.f32 %v3285, %v3333
      %v3335 = vpop.f32.mrf.mxu0
      %3336 = vdwg.mxu0
      %s3337 = scalar_lea.vmem %s4, 86
      %v3338 = vld [vmem:[%s3337] sm:$0x3]
      %3339 = vrot.lane.b32.xlu0 %v790, 57
      %v3340 = vpop.permute.xlu0 %3339
      %3341 = vrot.lane.b32.xlu0 %v791, 57
      %v3342 = vpop.permute.xlu0 %3341
      %3343 = vrot.lane.b32.xlu0 %v792, 57
      %v3344 = vpop.permute.xlu0 %3343
      %3345 = vrot.lane.b32.xlu0 %v793, 57
      %v3346 = vpop.permute.xlu0 %3345
      %3347 = vrot.lane.b32.xlu0 %v794, 57
      %v3348 = vpop.permute.xlu0 %3347
      %3349 = vrot.lane.b32.xlu0 %v795, 57
      %v3350 = vpop.permute.xlu0 %3349
      %v3351 = vsel %vm2117, %v3340, %v3342
      %v3352 = vsel %vm2117, %v3342, %v3344
      %v3353 = vsel %vm2117, %v3346, %v3348
      %v3354 = vsel %vm2117, %v3348, %v3350
      %v3360 = vsel %vm606, %v3338, 0
      %3362 = vmatpush.bf16.msra.mxu0 0
      %3363 = vmatpush.bf16.msra.mxu0 0
      %3364 = vmatpush.bf16.msra.mxu0 0
      %3365 = vmatpush.bf16.msra.mxu0 0
      %3366 = vmatpush.bf16.msra.mxu0 0
      %3367 = vmatpush.bf16.msra.mxu0 0
      %3368 = vmatpush.bf16.msra.mxu0 %v3353
      %3369 = vmatpush.bf16.msra.mxu0 %v3351
      %3370 = vmatmul.bf16.gmra.mxu0 %v3360
      %v3371 = vpop.f32.mrf.mxu0
      %v3372 = vadd.f32 0.0, %v3371
      %v3373 = vpop.f32.mrf.mxu0
      %3374 = vdwg.mxu0
      %3375 = vmatpush.bf16.msra.mxu0 0
      %3376 = vmatpush.bf16.msra.mxu0 0
      %3377 = vmatpush.bf16.msra.mxu0 0
      %3378 = vmatpush.bf16.msra.mxu0 0
      %3379 = vmatpush.bf16.msra.mxu0 0
      %3380 = vmatpush.bf16.msra.mxu0 0
      %3381 = vmatpush.bf16.msra.mxu0 %v3354
      %3382 = vmatpush.bf16.msra.mxu0 %v3352
      %3383 = vmatmul.bf16.gmra.mxu0 %v3360
      %v3384 = vpop.f32.mrf.mxu0
      %v3385 = vadd.f32 0.0, %v3384
      %v3386 = vpop.f32.mrf.mxu0
      %3387 = vdwg.mxu0
      %v3388 = vadd.f32 %v3321, %v3372
      %v3389 = vadd.f32 %v3334, %v3385
      %v3390 = vadd.f32 %v3253, %v3388
      %v3391 = vadd.f32 %v3254, %v3389
      %s3392 = scalar_lea.vmem %s4, 76
      %v3393 = vld [vmem:[%s3392] sm:$0x3]
      %s3394 = scalar_lea.vmem %s4, 82
      %v3395 = vld [vmem:[%s3394] sm:$0x3]
      %3396 = vrot.lane.b32.xlu0 %v579, 4
      %v3397 = vpop.permute.xlu0 %3396
      %3398 = vrot.lane.b32.xlu0 %v580, 4
      %v3399 = vpop.permute.xlu0 %3398
      %3400 = vrot.lane.b32.xlu0 %v581, 4
      %v3401 = vpop.permute.xlu0 %3400
      %3402 = vrot.lane.b32.xlu0 %v582, 4
      %v3403 = vpop.permute.xlu0 %3402
      %3404 = vrot.lane.b32.xlu0 %v583, 4
      %v3405 = vpop.permute.xlu0 %3404
      %3406 = vrot.lane.b32.xlu0 %v584, 4
      %v3407 = vpop.permute.xlu0 %3406
      %vm3408 = vcmask 31744
      %v3409 = vsel %vm3408, %v3397, %v3399
      %v3410 = vsel %vm3408, %v3399, %v3401
      %v3411 = vsel %vm3408, %v3403, %v3405
      %v3412 = vsel %vm3408, %v3405, %v3407
      %v3418 = vsel %vm606, %v3395, 0
      %3420 = vmatpush.bf16.msra.mxu0 0
      %3421 = vmatpush.bf16.msra.mxu0 0
      %3422 = vmatpush.bf16.msra.mxu0 0
      %3423 = vmatpush.bf16.msra.mxu0 0
      %3424 = vmatpush.bf16.msra.mxu0 0
      %3425 = vmatpush.bf16.msra.mxu0 0
      %3426 = vmatpush.bf16.msra.mxu0 %v3411
      %3427 = vmatpush.bf16.msra.mxu0 %v3409
      %3428 = vmatmul.bf16.gmra.mxu0 %v3418
      %v3429 = vpop.f32.mrf.mxu0
      %v3430 = vadd.f32 0.0, %v3429
      %v3431 = vpop.f32.mrf.mxu0
      %3432 = vdwg.mxu0
      %3433 = vmatpush.bf16.msra.mxu0 0
      %3434 = vmatpush.bf16.msra.mxu0 0
      %3435 = vmatpush.bf16.msra.mxu0 0
      %3436 = vmatpush.bf16.msra.mxu0 0
      %3437 = vmatpush.bf16.msra.mxu0 0
      %3438 = vmatpush.bf16.msra.mxu0 0
      %3439 = vmatpush.bf16.msra.mxu0 %v3412
      %3440 = vmatpush.bf16.msra.mxu0 %v3410
      %3441 = vmatmul.bf16.gmra.mxu0 %v3418
      %v3442 = vpop.f32.mrf.mxu0
      %v3443 = vadd.f32 0.0, %v3442
      %v3444 = vpop.f32.mrf.mxu0
      %3445 = vdwg.mxu0
      %3446 = vrot.lane.b32.xlu0 %v579, 84
      %v3447 = vpop.permute.xlu0 %3446
      %3448 = vrot.lane.b32.xlu0 %v580, 84
      %v3449 = vpop.permute.xlu0 %3448
      %3450 = vrot.lane.b32.xlu0 %v581, 84
      %v3451 = vpop.permute.xlu0 %3450
      %3452 = vrot.lane.b32.xlu0 %v582, 84
      %v3453 = vpop.permute.xlu0 %3452
      %3454 = vrot.lane.b32.xlu0 %v583, 84
      %v3455 = vpop.permute.xlu0 %3454
      %3456 = vrot.lane.b32.xlu0 %v584, 84
      %v3457 = vpop.permute.xlu0 %3456
      %vm3458 = vcmask 687104
      %v3459 = vsel %vm3458, %v3447, %v3449
      %v3460 = vsel %vm3458, %v3449, %v3451
      %v3461 = vsel %vm3458, %v3453, %v3455
      %v3462 = vsel %vm3458, %v3455, %v3457
      %v3468 = vsel %vm606, %v3393, 0
      %3470 = vmatpush.bf16.msra.mxu0 0
      %3471 = vmatpush.bf16.msra.mxu0 0
      %3472 = vmatpush.bf16.msra.mxu0 0
      %3473 = vmatpush.bf16.msra.mxu0 0
      %3474 = vmatpush.bf16.msra.mxu0 0
      %3475 = vmatpush.bf16.msra.mxu0 0
      %3476 = vmatpush.bf16.msra.mxu0 %v3461
      %3477 = vmatpush.bf16.msra.mxu0 %v3459
      %3478 = vmatmul.bf16.gmra.mxu0 %v3468
      %v3479 = vpop.f32.mrf.mxu0
      %v3480 = vadd.f32 %v3430, %v3479
      %v3481 = vpop.f32.mrf.mxu0
      %3482 = vdwg.mxu0
      %3483 = vmatpush.bf16.msra.mxu0 0
      %3484 = vmatpush.bf16.msra.mxu0 0
      %3485 = vmatpush.bf16.msra.mxu0 0
      %3486 = vmatpush.bf16.msra.mxu0 0
      %3487 = vmatpush.bf16.msra.mxu0 0
      %3488 = vmatpush.bf16.msra.mxu0 0
      %3489 = vmatpush.bf16.msra.mxu0 %v3462
      %3490 = vmatpush.bf16.msra.mxu0 %v3460
      %3491 = vmatmul.bf16.gmra.mxu0 %v3468
      %v3492 = vpop.f32.mrf.mxu0
      %v3493 = vadd.f32 %v3443, %v3492
      %v3494 = vpop.f32.mrf.mxu0
      %3495 = vdwg.mxu0
      %s3496 = scalar_lea.vmem %s4, 88
      %v3497 = vld [vmem:[%s3496] sm:$0x3]
      %3498 = vrot.lane.b32.xlu0 %v790, 52
      %v3499 = vpop.permute.xlu0 %3498
      %3500 = vrot.lane.b32.xlu0 %v791, 52
      %v3501 = vpop.permute.xlu0 %3500
      %3502 = vrot.lane.b32.xlu0 %v792, 52
      %v3503 = vpop.permute.xlu0 %3502
      %3504 = vrot.lane.b32.xlu0 %v793, 52
      %v3505 = vpop.permute.xlu0 %3504
      %3506 = vrot.lane.b32.xlu0 %v794, 52
      %v3507 = vpop.permute.xlu0 %3506
      %3508 = vrot.lane.b32.xlu0 %v795, 52
      %v3509 = vpop.permute.xlu0 %3508
      %vm3510 = vcmask 424960
      %v3511 = vsel %vm3510, %v3499, %v3501
      %v3512 = vsel %vm3510, %v3501, %v3503
      %v3513 = vsel %vm3510, %v3505, %v3507
      %v3514 = vsel %vm3510, %v3507, %v3509
      %v3520 = vsel %vm606, %v3497, 0
      %3522 = vmatpush.bf16.msra.mxu0 0
      %3523 = vmatpush.bf16.msra.mxu0 0
      %3524 = vmatpush.bf16.msra.mxu0 0
      %3525 = vmatpush.bf16.msra.mxu0 0
      %3526 = vmatpush.bf16.msra.mxu0 0
      %3527 = vmatpush.bf16.msra.mxu0 0
      %3528 = vmatpush.bf16.msra.mxu0 %v3513
      %3529 = vmatpush.bf16.msra.mxu0 %v3511
      %3530 = vmatmul.bf16.gmra.mxu0 %v3520
      %v3531 = vpop.f32.mrf.mxu0
      %v3532 = vadd.f32 0.0, %v3531
      %v3533 = vpop.f32.mrf.mxu0
      %3534 = vdwg.mxu0
      %3535 = vmatpush.bf16.msra.mxu0 0
      %3536 = vmatpush.bf16.msra.mxu0 0
      %3537 = vmatpush.bf16.msra.mxu0 0
      %3538 = vmatpush.bf16.msra.mxu0 0
      %3539 = vmatpush.bf16.msra.mxu0 0
      %3540 = vmatpush.bf16.msra.mxu0 0
      %3541 = vmatpush.bf16.msra.mxu0 %v3514
      %3542 = vmatpush.bf16.msra.mxu0 %v3512
      %3543 = vmatmul.bf16.gmra.mxu0 %v3520
      %v3544 = vpop.f32.mrf.mxu0
      %v3545 = vadd.f32 0.0, %v3544
      %v3546 = vpop.f32.mrf.mxu0
      %3547 = vdwg.mxu0
      %v3548 = vadd.f32 %v3480, %v3532
      %v3549 = vadd.f32 %v3493, %v3545
      %vm3550 = vcmp.lt.s32.totalorder %v556, 11
      %vm3551 = vcmp.lt.s32.totalorder %v557, 11
      %v3552 = vsel %vm3550, 1, 0
      %v3553 = vsel %vm3551, 1, 0
      %v3554 = vcvt.s32.f32 %v3552
      %v3555 = vcvt.s32.f32 %v3553
      %v3556 = vmul.f32 %v3548, %v3554
      %v3557 = vmul.f32 %v3549, %v3555
      %v3558 = vadd.f32 %v3390, %v3556
      %v3559 = vadd.f32 %v3391, %v3557
      %s3560 = scalar_lea.vmem %s5, 16
      %v3561 = vld [vmem:[%s3560] sm:$0xf]
      %s3562 = scalar_lea.vmem %s6, 16
      %v3563 = vld [vmem:[%s3562] sm:$0xf]
      %3565 = vset.pattern.permute.xlu0 0
      %3566 = vperm.xlu0 %3565, %v3561
      %v3567 = vpop.permute.xlu0 %3566
      %v3569 = vmul.f32 %v3558, %v3567
      %v3570 = vmul.f32 %v3559, %v3567
      %3572 = vset.pattern.permute.xlu0 0
      %3573 = vperm.xlu0 %3572, %v3563
      %v3574 = vpop.permute.xlu0 %3573
      %v3576 = vadd.f32 %v3569, %v3574
      %v3577 = vadd.f32 %v3570, %v3574
      %v3578 = vmax.f32 %v3576, 0.0
      %v3579 = vmax.f32 %v3577, 0.0
      %v3580 = vpack.c.bf16 %v3578, %v3578
      %v3581 = vpack.c.bf16 %v3579, %v3579
      %s3582 = scalar_lea.vmem %s7, 8
      %v3583 = vld [vmem:[%s3582] sm:$0x3]
      %v3585 = vsel %vm1184, %v3583, 0
      %v3588 = vsel %vm1188, %v3580, 0
      %v3591 = vsel %vm1188, %v3581, 0
      %3593 = vmatpush.bf16.msra.mxu0 0
      %3594 = vmatpush.bf16.msra.mxu0 0
      %3595 = vmatpush.bf16.msra.mxu0 0
      %3596 = vmatpush.bf16.msra.mxu0 0
      %3597 = vmatpush.bf16.msra.mxu0 0
      %3598 = vmatpush.bf16.msra.mxu0 0
      %3599 = vmatpush.bf16.msra.mxu0 0
      %3600 = vmatpush.bf16.msra.mxu0 %v3588
      %3601 = vmatmul.bf16.gmra.mxu0 %v3585
      %v3602 = vpop.f32.mrf.mxu0
      %v3603 = vadd.f32 0.0, %v3602
      %v3604 = vpop.f32.mrf.mxu0
      %3605 = vdwg.mxu0
      %3606 = vmatpush.bf16.msra.mxu0 0
      %3607 = vmatpush.bf16.msra.mxu0 0
      %3608 = vmatpush.bf16.msra.mxu0 0
      %3609 = vmatpush.bf16.msra.mxu0 0
      %3610 = vmatpush.bf16.msra.mxu0 0
      %3611 = vmatpush.bf16.msra.mxu0 0
      %3612 = vmatpush.bf16.msra.mxu0 0
      %3613 = vmatpush.bf16.msra.mxu0 %v3591
      %3614 = vmatmul.bf16.gmra.mxu0 %v3585
      %v3615 = vpop.f32.mrf.mxu0
      %v3616 = vadd.f32 0.0, %v3615
      %v3617 = vpop.f32.mrf.mxu0
      %3618 = vdwg.mxu0
      %s3619 = scalar_lea.vmem %s8, 16
      %v3620 = vld [vmem:[%s3619] sm:$0xf]
      %s3621 = scalar_lea.vmem %s9, 16
      %v3622 = vld [vmem:[%s3621] sm:$0xf]
      %3624 = vset.pattern.permute.xlu0 0
      %3625 = vperm.xlu0 %3624, %v3620
      %v3626 = vpop.permute.xlu0 %3625
      %v3628 = vmul.f32 %v3603, %v3626
      %v3629 = vmul.f32 %v3616, %v3626
      %3631 = vset.pattern.permute.xlu0 0
      %3632 = vperm.xlu0 %3631, %v3622
      %v3633 = vpop.permute.xlu0 %3632
      %v3635 = vadd.f32 %v3628, %v3633
      %v3636 = vadd.f32 %v3629, %v3633
      %v3637 = vmax.f32 %v3635, 0.0
      %v3638 = vmax.f32 %v3636, 0.0
      %v3639 = vpack.c.bf16 %v3637, %v3637
      %v3640 = vpack.c.bf16 %v3638, %v3638
      %s3641 = scalar_lea.vmem %s13, 10
      %v3642 = vld [vmem:[%s3641] sm:$0x3]
      %v3644 = vsel %vm1184, %v3642, 0
      %v3647 = vsel %vm1188, %v3639, 0
      %v3650 = vsel %vm1188, %v3640, 0
      %3652 = vmatpush.bf16.msra.mxu0 0
      %3653 = vmatpush.bf16.msra.mxu0 0
      %3654 = vmatpush.bf16.msra.mxu0 0
      %3655 = vmatpush.bf16.msra.mxu0 0
      %3656 = vmatpush.bf16.msra.mxu0 0
      %3657 = vmatpush.bf16.msra.mxu0 0
      %3658 = vmatpush.bf16.msra.mxu0 0
      %3659 = vmatpush.bf16.msra.mxu0 %v3647
      %3660 = vmatmul.bf16.gmra.mxu0 %v3644
      %v3661 = vpop.f32.mrf.mxu0
      %v3662 = vadd.f32 0.0, %v3661
      %v3663 = vpop.f32.mrf.mxu0
      %3664 = vdwg.mxu0
      %3665 = vmatpush.bf16.msra.mxu0 0
      %3666 = vmatpush.bf16.msra.mxu0 0
      %3667 = vmatpush.bf16.msra.mxu0 0
      %3668 = vmatpush.bf16.msra.mxu0 0
      %3669 = vmatpush.bf16.msra.mxu0 0
      %3670 = vmatpush.bf16.msra.mxu0 0
      %3671 = vmatpush.bf16.msra.mxu0 0
      %3672 = vmatpush.bf16.msra.mxu0 %v3650
      %3673 = vmatmul.bf16.gmra.mxu0 %v3644
      %v3674 = vpop.f32.mrf.mxu0
      %v3675 = vadd.f32 0.0, %v3674
      %v3676 = vpop.f32.mrf.mxu0
      %3677 = vdwg.mxu0
      %v3678 = vadd.f32 %v3087, %v3662
      %v3679 = vadd.f32 %v3088, %v3675
      %s3680 = scalar_lea.vmem %s4, 90
      %v3681 = vld [vmem:[%s3680] sm:$0x3]
      %s3682 = scalar_lea.vmem %s4, 96
      %v3683 = vld [vmem:[%s3682] sm:$0x3]
      %3684 = vrot.lane.b32.xlu0 %v579, 15
      %v3685 = vpop.permute.xlu0 %3684
      %3686 = vrot.lane.b32.xlu0 %v580, 15
      %v3687 = vpop.permute.xlu0 %3686
      %3688 = vrot.lane.b32.xlu0 %v581, 15
      %v3689 = vpop.permute.xlu0 %3688
      %3690 = vrot.lane.b32.xlu0 %v582, 15
      %v3691 = vpop.permute.xlu0 %3690
      %3692 = vrot.lane.b32.xlu0 %v583, 15
      %v3693 = vpop.permute.xlu0 %3692
      %3694 = vrot.lane.b32.xlu0 %v584, 15
      %v3695 = vpop.permute.xlu0 %3694
      %vm3696 = vcmask 121856
      %v3697 = vsel %vm3696, %v3685, %v3687
      %v3698 = vsel %vm3696, %v3687, %v3689
      %v3699 = vsel %vm3696, %v3691, %v3693
      %v3700 = vsel %vm3696, %v3693, %v3695
      %v3706 = vsel %vm606, %v3683, 0
      %3708 = vmatpush.bf16.msra.mxu0 0
      %3709 = vmatpush.bf16.msra.mxu0 0
      %3710 = vmatpush.bf16.msra.mxu0 0
      %3711 = vmatpush.bf16.msra.mxu0 0
      %3712 = vmatpush.bf16.msra.mxu0 0
      %3713 = vmatpush.bf16.msra.mxu0 0
      %3714 = vmatpush.bf16.msra.mxu0 %v3699
      %3715 = vmatpush.bf16.msra.mxu0 %v3697
      %3716 = vmatmul.bf16.gmra.mxu0 %v3706
      %v3717 = vpop.f32.mrf.mxu0
      %v3718 = vadd.f32 0.0, %v3717
      %v3719 = vpop.f32.mrf.mxu0
      %3720 = vdwg.mxu0
      %3721 = vmatpush.bf16.msra.mxu0 0
      %3722 = vmatpush.bf16.msra.mxu0 0
      %3723 = vmatpush.bf16.msra.mxu0 0
      %3724 = vmatpush.bf16.msra.mxu0 0
      %3725 = vmatpush.bf16.msra.mxu0 0
      %3726 = vmatpush.bf16.msra.mxu0 0
      %3727 = vmatpush.bf16.msra.mxu0 %v3700
      %3728 = vmatpush.bf16.msra.mxu0 %v3698
      %3729 = vmatmul.bf16.gmra.mxu0 %v3706
      %v3730 = vpop.f32.mrf.mxu0
      %v3731 = vadd.f32 0.0, %v3730
      %v3732 = vpop.f32.mrf.mxu0
      %3733 = vdwg.mxu0
      %3734 = vrot.lane.b32.xlu0 %v579, 111
      %v3735 = vpop.permute.xlu0 %3734
      %3736 = vrot.lane.b32.xlu0 %v580, 111
      %v3737 = vpop.permute.xlu0 %3736
      %3738 = vrot.lane.b32.xlu0 %v581, 111
      %v3739 = vpop.permute.xlu0 %3738
      %3740 = vrot.lane.b32.xlu0 %v582, 111
      %v3741 = vpop.permute.xlu0 %3740
      %3742 = vrot.lane.b32.xlu0 %v583, 111
      %v3743 = vpop.permute.xlu0 %3742
      %3744 = vrot.lane.b32.xlu0 %v584, 111
      %v3745 = vpop.permute.xlu0 %3744
      %vm3746 = vcmask 908288
      %v3747 = vsel %vm3746, %v3735, %v3737
      %v3748 = vsel %vm3746, %v3737, %v3739
      %v3749 = vsel %vm3746, %v3741, %v3743
      %v3750 = vsel %vm3746, %v3743, %v3745
      %v3756 = vsel %vm606, %v3681, 0
      %3758 = vmatpush.bf16.msra.mxu0 0
      %3759 = vmatpush.bf16.msra.mxu0 0
      %3760 = vmatpush.bf16.msra.mxu0 0
      %3761 = vmatpush.bf16.msra.mxu0 0
      %3762 = vmatpush.bf16.msra.mxu0 0
      %3763 = vmatpush.bf16.msra.mxu0 0
      %3764 = vmatpush.bf16.msra.mxu0 %v3749
      %3765 = vmatpush.bf16.msra.mxu0 %v3747
      %3766 = vmatmul.bf16.gmra.mxu0 %v3756
      %v3767 = vpop.f32.mrf.mxu0
      %v3768 = vadd.f32 %v3718, %v3767
      %v3769 = vpop.f32.mrf.mxu0
      %3770 = vdwg.mxu0
      %3771 = vmatpush.bf16.msra.mxu0 0
      %3772 = vmatpush.bf16.msra.mxu0 0
      %3773 = vmatpush.bf16.msra.mxu0 0
      %3774 = vmatpush.bf16.msra.mxu0 0
      %3775 = vmatpush.bf16.msra.mxu0 0
      %3776 = vmatpush.bf16.msra.mxu0 0
      %3777 = vmatpush.bf16.msra.mxu0 %v3750
      %3778 = vmatpush.bf16.msra.mxu0 %v3748
      %3779 = vmatmul.bf16.gmra.mxu0 %v3756
      %v3780 = vpop.f32.mrf.mxu0
      %v3781 = vadd.f32 %v3731, %v3780
      %v3782 = vpop.f32.mrf.mxu0
      %3783 = vdwg.mxu0
      %s3784 = scalar_lea.vmem %s4, 102
      %v3785 = vld [vmem:[%s3784] sm:$0x3]
      %3786 = vrot.lane.b32.xlu0 %v790, 47
      %v3787 = vpop.permute.xlu0 %3786
      %3788 = vrot.lane.b32.xlu0 %v791, 47
      %v3789 = vpop.permute.xlu0 %3788
      %3790 = vrot.lane.b32.xlu0 %v792, 47
      %v3791 = vpop.permute.xlu0 %3790
      %3792 = vrot.lane.b32.xlu0 %v793, 47
      %v3793 = vpop.permute.xlu0 %3792
      %3794 = vrot.lane.b32.xlu0 %v794, 47
      %v3795 = vpop.permute.xlu0 %3794
      %3796 = vrot.lane.b32.xlu0 %v795, 47
      %v3797 = vpop.permute.xlu0 %3796
      %vm3798 = vcmask 384000
      %v3799 = vsel %vm3798, %v3787, %v3789
      %v3800 = vsel %vm3798, %v3789, %v3791
      %v3801 = vsel %vm3798, %v3793, %v3795
      %v3802 = vsel %vm3798, %v3795, %v3797
      %v3808 = vsel %vm606, %v3785, 0
      %3810 = vmatpush.bf16.msra.mxu0 0
      %3811 = vmatpush.bf16.msra.mxu0 0
      %3812 = vmatpush.bf16.msra.mxu0 0
      %3813 = vmatpush.bf16.msra.mxu0 0
      %3814 = vmatpush.bf16.msra.mxu0 0
      %3815 = vmatpush.bf16.msra.mxu0 0
      %3816 = vmatpush.bf16.msra.mxu0 %v3801
      %3817 = vmatpush.bf16.msra.mxu0 %v3799
      %3818 = vmatmul.bf16.gmra.mxu0 %v3808
      %v3819 = vpop.f32.mrf.mxu0
      %v3820 = vadd.f32 0.0, %v3819
      %v3821 = vpop.f32.mrf.mxu0
      %3822 = vdwg.mxu0
      %3823 = vmatpush.bf16.msra.mxu0 0
      %3824 = vmatpush.bf16.msra.mxu0 0
      %3825 = vmatpush.bf16.msra.mxu0 0
      %3826 = vmatpush.bf16.msra.mxu0 0
      %3827 = vmatpush.bf16.msra.mxu0 0
      %3828 = vmatpush.bf16.msra.mxu0 0
      %3829 = vmatpush.bf16.msra.mxu0 %v3802
      %3830 = vmatpush.bf16.msra.mxu0 %v3800
      %3831 = vmatmul.bf16.gmra.mxu0 %v3808
      %v3832 = vpop.f32.mrf.mxu0
      %v3833 = vadd.f32 0.0, %v3832
      %v3834 = vpop.f32.mrf.mxu0
      %3835 = vdwg.mxu0
      %v3836 = vadd.f32 %v3768, %v3820
      %v3837 = vadd.f32 %v3781, %v3833
      %vm3838 = vcmp.ge.s32.totalorder %v556, 6
      %vm3839 = vcmp.ge.s32.totalorder %v557, 6
      %v3840 = vsel %vm3838, 1, 0
      %v3841 = vsel %vm3839, 1, 0
      %v3842 = vcvt.s32.f32 %v3840
      %v3843 = vcvt.s32.f32 %v3841
      %v3844 = vmul.f32 %v3836, %v3842
      %v3845 = vmul.f32 %v3837, %v3843
      %s3846 = scalar_lea.vmem %s4, 92
      %v3847 = vld [vmem:[%s3846] sm:$0x3]
      %s3848 = scalar_lea.vmem %s4, 98
      %v3849 = vld [vmem:[%s3848] sm:$0x3]
      %v3851 = vsel %vm606, %v3849, 0
      %3853 = vmatpush.bf16.msra.mxu0 0
      %3854 = vmatpush.bf16.msra.mxu0 0
      %3855 = vmatpush.bf16.msra.mxu0 0
      %3856 = vmatpush.bf16.msra.mxu0 0
      %3857 = vmatpush.bf16.msra.mxu0 0
      %3858 = vmatpush.bf16.msra.mxu0 0
      %3859 = vmatpush.bf16.msra.mxu0 %v600
      %3860 = vmatpush.bf16.msra.mxu0 %v598
      %3861 = vmatmul.bf16.gmra.mxu0 %v3851
      %v3862 = vpop.f32.mrf.mxu0
      %v3863 = vadd.f32 0.0, %v3862
      %v3864 = vpop.f32.mrf.mxu0
      %3865 = vdwg.mxu0
      %3866 = vmatpush.bf16.msra.mxu0 0
      %3867 = vmatpush.bf16.msra.mxu0 0
      %3868 = vmatpush.bf16.msra.mxu0 0
      %3869 = vmatpush.bf16.msra.mxu0 0
      %3870 = vmatpush.bf16.msra.mxu0 0
      %3871 = vmatpush.bf16.msra.mxu0 0
      %3872 = vmatpush.bf16.msra.mxu0 %v601
      %3873 = vmatpush.bf16.msra.mxu0 %v599
      %3874 = vmatmul.bf16.gmra.mxu0 %v3851
      %v3875 = vpop.f32.mrf.mxu0
      %v3876 = vadd.f32 0.0, %v3875
      %v3877 = vpop.f32.mrf.mxu0
      %3878 = vdwg.mxu0
      %3879 = vrot.lane.b32.xlu0 %v579, 105
      %v3880 = vpop.permute.xlu0 %3879
      %3881 = vrot.lane.b32.xlu0 %v580, 105
      %v3882 = vpop.permute.xlu0 %3881
      %3883 = vrot.lane.b32.xlu0 %v581, 105
      %v3884 = vpop.permute.xlu0 %3883
      %3885 = vrot.lane.b32.xlu0 %v582, 105
      %v3886 = vpop.permute.xlu0 %3885
      %3887 = vrot.lane.b32.xlu0 %v583, 105
      %v3888 = vpop.permute.xlu0 %3887
      %3889 = vrot.lane.b32.xlu0 %v584, 105
      %v3890 = vpop.permute.xlu0 %3889
      %v3891 = vsel %vm1576, %v3880, %v3882
      %v3892 = vsel %vm1576, %v3882, %v3884
      %v3893 = vsel %vm1576, %v3886, %v3888
      %v3894 = vsel %vm1576, %v3888, %v3890
      %v3900 = vsel %vm606, %v3847, 0
      %3902 = vmatpush.bf16.msra.mxu0 0
      %3903 = vmatpush.bf16.msra.mxu0 0
      %3904 = vmatpush.bf16.msra.mxu0 0
      %3905 = vmatpush.bf16.msra.mxu0 0
      %3906 = vmatpush.bf16.msra.mxu0 0
      %3907 = vmatpush.bf16.msra.mxu0 0
      %3908 = vmatpush.bf16.msra.mxu0 %v3893
      %3909 = vmatpush.bf16.msra.mxu0 %v3891
      %3910 = vmatmul.bf16.gmra.mxu0 %v3900
      %v3911 = vpop.f32.mrf.mxu0
      %v3912 = vadd.f32 %v3863, %v3911
      %v3913 = vpop.f32.mrf.mxu0
      %3914 = vdwg.mxu0
      %3915 = vmatpush.bf16.msra.mxu0 0
      %3916 = vmatpush.bf16.msra.mxu0 0
      %3917 = vmatpush.bf16.msra.mxu0 0
      %3918 = vmatpush.bf16.msra.mxu0 0
      %3919 = vmatpush.bf16.msra.mxu0 0
      %3920 = vmatpush.bf16.msra.mxu0 0
      %3921 = vmatpush.bf16.msra.mxu0 %v3894
      %3922 = vmatpush.bf16.msra.mxu0 %v3892
      %3923 = vmatmul.bf16.gmra.mxu0 %v3900
      %v3924 = vpop.f32.mrf.mxu0
      %v3925 = vadd.f32 %v3876, %v3924
      %v3926 = vpop.f32.mrf.mxu0
      %3927 = vdwg.mxu0
      %s3928 = scalar_lea.vmem %s4, 104
      %v3929 = vld [vmem:[%s3928] sm:$0x3]
      %3930 = vrot.lane.b32.xlu0 %v790, 41
      %v3931 = vpop.permute.xlu0 %3930
      %3932 = vrot.lane.b32.xlu0 %v791, 41
      %v3933 = vpop.permute.xlu0 %3932
      %3934 = vrot.lane.b32.xlu0 %v792, 41
      %v3935 = vpop.permute.xlu0 %3934
      %3936 = vrot.lane.b32.xlu0 %v793, 41
      %v3937 = vpop.permute.xlu0 %3936
      %3938 = vrot.lane.b32.xlu0 %v794, 41
      %v3939 = vpop.permute.xlu0 %3938
      %3940 = vrot.lane.b32.xlu0 %v795, 41
      %v3941 = vpop.permute.xlu0 %3940
      %v3942 = vsel %vm1524, %v3931, %v3933
      %v3943 = vsel %vm1524, %v3933, %v3935
      %v3944 = vsel %vm1524, %v3937, %v3939
      %v3945 = vsel %vm1524, %v3939, %v3941
      %v3951 = vsel %vm606, %v3929, 0
      %3953 = vmatpush.bf16.msra.mxu0 0
      %3954 = vmatpush.bf16.msra.mxu0 0
      %3955 = vmatpush.bf16.msra.mxu0 0
      %3956 = vmatpush.bf16.msra.mxu0 0
      %3957 = vmatpush.bf16.msra.mxu0 0
      %3958 = vmatpush.bf16.msra.mxu0 0
      %3959 = vmatpush.bf16.msra.mxu0 %v3944
      %3960 = vmatpush.bf16.msra.mxu0 %v3942
      %3961 = vmatmul.bf16.gmra.mxu0 %v3951
      %v3962 = vpop.f32.mrf.mxu0
      %v3963 = vadd.f32 0.0, %v3962
      %v3964 = vpop.f32.mrf.mxu0
      %3965 = vdwg.mxu0
      %3966 = vmatpush.bf16.msra.mxu0 0
      %3967 = vmatpush.bf16.msra.mxu0 0
      %3968 = vmatpush.bf16.msra.mxu0 0
      %3969 = vmatpush.bf16.msra.mxu0 0
      %3970 = vmatpush.bf16.msra.mxu0 0
      %3971 = vmatpush.bf16.msra.mxu0 0
      %3972 = vmatpush.bf16.msra.mxu0 %v3945
      %3973 = vmatpush.bf16.msra.mxu0 %v3943
      %3974 = vmatmul.bf16.gmra.mxu0 %v3951
      %v3975 = vpop.f32.mrf.mxu0
      %v3976 = vadd.f32 0.0, %v3975
      %v3977 = vpop.f32.mrf.mxu0
      %3978 = vdwg.mxu0
      %v3979 = vadd.f32 %v3912, %v3963
      %v3980 = vadd.f32 %v3925, %v3976
      %v3981 = vadd.f32 %v3844, %v3979
      %v3982 = vadd.f32 %v3845, %v3980
      %s3983 = scalar_lea.vmem %s4, 94
      %v3984 = vld [vmem:[%s3983] sm:$0x3]
      %s3985 = scalar_lea.vmem %s4, 100
      %v3986 = vld [vmem:[%s3985] sm:$0x3]
      %3987 = vrot.lane.b32.xlu0 %v579, 3
      %v3988 = vpop.permute.xlu0 %3987
      %3989 = vrot.lane.b32.xlu0 %v580, 3
      %v3990 = vpop.permute.xlu0 %3989
      %3991 = vrot.lane.b32.xlu0 %v581, 3
      %v3992 = vpop.permute.xlu0 %3991
      %3993 = vrot.lane.b32.xlu0 %v582, 3
      %v3994 = vpop.permute.xlu0 %3993
      %3995 = vrot.lane.b32.xlu0 %v583, 3
      %v3996 = vpop.permute.xlu0 %3995
      %3997 = vrot.lane.b32.xlu0 %v584, 3
      %v3998 = vpop.permute.xlu0 %3997
      %vm3999 = vcmask 23552
      %v4000 = vsel %vm3999, %v3988, %v3990
      %v4001 = vsel %vm3999, %v3990, %v3992
      %v4002 = vsel %vm3999, %v3994, %v3996
      %v4003 = vsel %vm3999, %v3996, %v3998
      %v4009 = vsel %vm606, %v3986, 0
      %4011 = vmatpush.bf16.msra.mxu0 0
      %4012 = vmatpush.bf16.msra.mxu0 0
      %4013 = vmatpush.bf16.msra.mxu0 0
      %4014 = vmatpush.bf16.msra.mxu0 0
      %4015 = vmatpush.bf16.msra.mxu0 0
      %4016 = vmatpush.bf16.msra.mxu0 0
      %4017 = vmatpush.bf16.msra.mxu0 %v4002
      %4018 = vmatpush.bf16.msra.mxu0 %v4000
      %4019 = vmatmul.bf16.gmra.mxu0 %v4009
      %v4020 = vpop.f32.mrf.mxu0
      %v4021 = vadd.f32 0.0, %v4020
      %v4022 = vpop.f32.mrf.mxu0
      %4023 = vdwg.mxu0
      %4024 = vmatpush.bf16.msra.mxu0 0
      %4025 = vmatpush.bf16.msra.mxu0 0
      %4026 = vmatpush.bf16.msra.mxu0 0
      %4027 = vmatpush.bf16.msra.mxu0 0
      %4028 = vmatpush.bf16.msra.mxu0 0
      %4029 = vmatpush.bf16.msra.mxu0 0
      %4030 = vmatpush.bf16.msra.mxu0 %v4003
      %4031 = vmatpush.bf16.msra.mxu0 %v4001
      %4032 = vmatmul.bf16.gmra.mxu0 %v4009
      %v4033 = vpop.f32.mrf.mxu0
      %v4034 = vadd.f32 0.0, %v4033
      %v4035 = vpop.f32.mrf.mxu0
      %4036 = vdwg.mxu0
      %4037 = vrot.lane.b32.xlu0 %v579, 99
      %v4038 = vpop.permute.xlu0 %4037
      %4039 = vrot.lane.b32.xlu0 %v580, 99
      %v4040 = vpop.permute.xlu0 %4039
      %4041 = vrot.lane.b32.xlu0 %v581, 99
      %v4042 = vpop.permute.xlu0 %4041
      %4043 = vrot.lane.b32.xlu0 %v582, 99
      %v4044 = vpop.permute.xlu0 %4043
      %4045 = vrot.lane.b32.xlu0 %v583, 99
      %v4046 = vpop.permute.xlu0 %4045
      %4047 = vrot.lane.b32.xlu0 %v584, 99
      %v4048 = vpop.permute.xlu0 %4047
      %vm4049 = vcmask 809984
      %v4050 = vsel %vm4049, %v4038, %v4040
      %v4051 = vsel %vm4049, %v4040, %v4042
      %v4052 = vsel %vm4049, %v4044, %v4046
      %v4053 = vsel %vm4049, %v4046, %v4048
      %v4059 = vsel %vm606, %v3984, 0
      %4061 = vmatpush.bf16.msra.mxu0 0
      %4062 = vmatpush.bf16.msra.mxu0 0
      %4063 = vmatpush.bf16.msra.mxu0 0
      %4064 = vmatpush.bf16.msra.mxu0 0
      %4065 = vmatpush.bf16.msra.mxu0 0
      %4066 = vmatpush.bf16.msra.mxu0 0
      %4067 = vmatpush.bf16.msra.mxu0 %v4052
      %4068 = vmatpush.bf16.msra.mxu0 %v4050
      %4069 = vmatmul.bf16.gmra.mxu0 %v4059
      %v4070 = vpop.f32.mrf.mxu0
      %v4071 = vadd.f32 %v4021, %v4070
      %v4072 = vpop.f32.mrf.mxu0
      %4073 = vdwg.mxu0
      %4074 = vmatpush.bf16.msra.mxu0 0
      %4075 = vmatpush.bf16.msra.mxu0 0
      %4076 = vmatpush.bf16.msra.mxu0 0
      %4077 = vmatpush.bf16.msra.mxu0 0
      %4078 = vmatpush.bf16.msra.mxu0 0
      %4079 = vmatpush.bf16.msra.mxu0 0
      %4080 = vmatpush.bf16.msra.mxu0 %v4053
      %4081 = vmatpush.bf16.msra.mxu0 %v4051
      %4082 = vmatmul.bf16.gmra.mxu0 %v4059
      %v4083 = vpop.f32.mrf.mxu0
      %v4084 = vadd.f32 %v4034, %v4083
      %v4085 = vpop.f32.mrf.mxu0
      %4086 = vdwg.mxu0
      %s4087 = scalar_lea.vmem %s4, 106
      %v4088 = vld [vmem:[%s4087] sm:$0x3]
      %4089 = vrot.lane.b32.xlu0 %v790, 35
      %v4090 = vpop.permute.xlu0 %4089
      %4091 = vrot.lane.b32.xlu0 %v791, 35
      %v4092 = vpop.permute.xlu0 %4091
      %4093 = vrot.lane.b32.xlu0 %v792, 35
      %v4094 = vpop.permute.xlu0 %4093
      %4095 = vrot.lane.b32.xlu0 %v793, 35
      %v4096 = vpop.permute.xlu0 %4095
      %4097 = vrot.lane.b32.xlu0 %v794, 35
      %v4098 = vpop.permute.xlu0 %4097
      %4099 = vrot.lane.b32.xlu0 %v795, 35
      %v4100 = vpop.permute.xlu0 %4099
      %vm4101 = vcmask 285696
      %v4102 = vsel %vm4101, %v4090, %v4092
      %v4103 = vsel %vm4101, %v4092, %v4094
      %v4104 = vsel %vm4101, %v4096, %v4098
      %v4105 = vsel %vm4101, %v4098, %v4100
      %v4111 = vsel %vm606, %v4088, 0
      %4113 = vmatpush.bf16.msra.mxu0 0
      %4114 = vmatpush.bf16.msra.mxu0 0
      %4115 = vmatpush.bf16.msra.mxu0 0
      %4116 = vmatpush.bf16.msra.mxu0 0
      %4117 = vmatpush.bf16.msra.mxu0 0
      %4118 = vmatpush.bf16.msra.mxu0 0
      %4119 = vmatpush.bf16.msra.mxu0 %v4104
      %4120 = vmatpush.bf16.msra.mxu0 %v4102
      %4121 = vmatmul.bf16.gmra.mxu0 %v4111
      %v4122 = vpop.f32.mrf.mxu0
      %v4123 = vadd.f32 0.0, %v4122
      %v4124 = vpop.f32.mrf.mxu0
      %4125 = vdwg.mxu0
      %4126 = vmatpush.bf16.msra.mxu0 0
      %4127 = vmatpush.bf16.msra.mxu0 0
      %4128 = vmatpush.bf16.msra.mxu0 0
      %4129 = vmatpush.bf16.msra.mxu0 0
      %4130 = vmatpush.bf16.msra.mxu0 0
      %4131 = vmatpush.bf16.msra.mxu0 0
      %4132 = vmatpush.bf16.msra.mxu0 %v4105
      %4133 = vmatpush.bf16.msra.mxu0 %v4103
      %4134 = vmatmul.bf16.gmra.mxu0 %v4111
      %v4135 = vpop.f32.mrf.mxu0
      %v4136 = vadd.f32 0.0, %v4135
      %v4137 = vpop.f32.mrf.mxu0
      %4138 = vdwg.mxu0
      %v4139 = vadd.f32 %v4071, %v4123
      %v4140 = vadd.f32 %v4084, %v4136
      %vm4141 = vcmp.lt.s32.totalorder %v556, 10
      %vm4142 = vcmp.lt.s32.totalorder %v557, 10
      %v4143 = vsel %vm4141, 1, 0
      %v4144 = vsel %vm4142, 1, 0
      %v4145 = vcvt.s32.f32 %v4143
      %v4146 = vcvt.s32.f32 %v4144
      %v4147 = vmul.f32 %v4139, %v4145
      %v4148 = vmul.f32 %v4140, %v4146
      %v4149 = vadd.f32 %v3981, %v4147
      %v4150 = vadd.f32 %v3982, %v4148
      %s4151 = scalar_lea.vmem %s5, 20
      %v4152 = vld [vmem:[%s4151] sm:$0xf]
      %s4153 = scalar_lea.vmem %s6, 20
      %v4154 = vld [vmem:[%s4153] sm:$0xf]
      %4156 = vset.pattern.permute.xlu0 0
      %4157 = vperm.xlu0 %4156, %v4152
      %v4158 = vpop.permute.xlu0 %4157
      %v4160 = vmul.f32 %v4149, %v4158
      %v4161 = vmul.f32 %v4150, %v4158
      %4163 = vset.pattern.permute.xlu0 0
      %4164 = vperm.xlu0 %4163, %v4154
      %v4165 = vpop.permute.xlu0 %4164
      %v4167 = vadd.f32 %v4160, %v4165
      %v4168 = vadd.f32 %v4161, %v4165
      %v4169 = vmax.f32 %v4167, 0.0
      %v4170 = vmax.f32 %v4168, 0.0
      %v4171 = vpack.c.bf16 %v4169, %v4169
      %v4172 = vpack.c.bf16 %v4170, %v4170
      %s4173 = scalar_lea.vmem %s7, 10
      %v4174 = vld [vmem:[%s4173] sm:$0x3]
      %v4176 = vsel %vm1184, %v4174, 0
      %v4179 = vsel %vm1188, %v4171, 0
      %v4182 = vsel %vm1188, %v4172, 0
      %4184 = vmatpush.bf16.msra.mxu0 0
      %4185 = vmatpush.bf16.msra.mxu0 0
      %4186 = vmatpush.bf16.msra.mxu0 0
      %4187 = vmatpush.bf16.msra.mxu0 0
      %4188 = vmatpush.bf16.msra.mxu0 0
      %4189 = vmatpush.bf16.msra.mxu0 0
      %4190 = vmatpush.bf16.msra.mxu0 0
      %4191 = vmatpush.bf16.msra.mxu0 %v4179
      %4192 = vmatmul.bf16.gmra.mxu0 %v4176
      %v4193 = vpop.f32.mrf.mxu0
      %v4194 = vadd.f32 0.0, %v4193
      %v4195 = vpop.f32.mrf.mxu0
      %4196 = vdwg.mxu0
      %4197 = vmatpush.bf16.msra.mxu0 0
      %4198 = vmatpush.bf16.msra.mxu0 0
      %4199 = vmatpush.bf16.msra.mxu0 0
      %4200 = vmatpush.bf16.msra.mxu0 0
      %4201 = vmatpush.bf16.msra.mxu0 0
      %4202 = vmatpush.bf16.msra.mxu0 0
      %4203 = vmatpush.bf16.msra.mxu0 0
      %4204 = vmatpush.bf16.msra.mxu0 %v4182
      %4205 = vmatmul.bf16.gmra.mxu0 %v4176
      %v4206 = vpop.f32.mrf.mxu0
      %v4207 = vadd.f32 0.0, %v4206
      %v4208 = vpop.f32.mrf.mxu0
      %4209 = vdwg.mxu0
      %s4210 = scalar_lea.vmem %s8, 20
      %v4211 = vld [vmem:[%s4210] sm:$0xf]
      %s4212 = scalar_lea.vmem %s9, 20
      %v4213 = vld [vmem:[%s4212] sm:$0xf]
      %4215 = vset.pattern.permute.xlu0 0
      %4216 = vperm.xlu0 %4215, %v4211
      %v4217 = vpop.permute.xlu0 %4216
      %v4219 = vmul.f32 %v4194, %v4217
      %v4220 = vmul.f32 %v4207, %v4217
      %4222 = vset.pattern.permute.xlu0 0
      %4223 = vperm.xlu0 %4222, %v4213
      %v4224 = vpop.permute.xlu0 %4223
      %v4226 = vadd.f32 %v4219, %v4224
      %v4227 = vadd.f32 %v4220, %v4224
      %v4228 = vmax.f32 %v4226, 0.0
      %v4229 = vmax.f32 %v4227, 0.0
      %v4230 = vpack.c.bf16 %v4228, %v4228
      %v4231 = vpack.c.bf16 %v4229, %v4229
      %s4232 = scalar_lea.vmem %s13, 12
      %v4233 = vld [vmem:[%s4232] sm:$0x3]
      %v4235 = vsel %vm1184, %v4233, 0
      %v4238 = vsel %vm1188, %v4230, 0
      %v4241 = vsel %vm1188, %v4231, 0
      %4243 = vmatpush.bf16.msra.mxu0 0
      %4244 = vmatpush.bf16.msra.mxu0 0
      %4245 = vmatpush.bf16.msra.mxu0 0
      %4246 = vmatpush.bf16.msra.mxu0 0
      %4247 = vmatpush.bf16.msra.mxu0 0
      %4248 = vmatpush.bf16.msra.mxu0 0
      %4249 = vmatpush.bf16.msra.mxu0 0
      %4250 = vmatpush.bf16.msra.mxu0 %v4238
      %4251 = vmatmul.bf16.gmra.mxu0 %v4235
      %v4252 = vpop.f32.mrf.mxu0
      %v4253 = vadd.f32 0.0, %v4252
      %v4254 = vpop.f32.mrf.mxu0
      %4255 = vdwg.mxu0
      %4256 = vmatpush.bf16.msra.mxu0 0
      %4257 = vmatpush.bf16.msra.mxu0 0
      %4258 = vmatpush.bf16.msra.mxu0 0
      %4259 = vmatpush.bf16.msra.mxu0 0
      %4260 = vmatpush.bf16.msra.mxu0 0
      %4261 = vmatpush.bf16.msra.mxu0 0
      %4262 = vmatpush.bf16.msra.mxu0 0
      %4263 = vmatpush.bf16.msra.mxu0 %v4241
      %4264 = vmatmul.bf16.gmra.mxu0 %v4235
      %v4265 = vpop.f32.mrf.mxu0
      %v4266 = vadd.f32 0.0, %v4265
      %v4267 = vpop.f32.mrf.mxu0
      %4268 = vdwg.mxu0
      %v4269 = vadd.f32 %v3678, %v4253
      %v4270 = vadd.f32 %v3679, %v4266
      %v4271 = vld [vmem:[%s516] sm:$0xff]
      %v4272 = vld [vmem:[%s516 + $0x10] sm:$0xff]
      %v4273 = vld [vmem:[%s516 + $0x20] sm:$0xff]
      %v4274 = vld [vmem:[%s516 + $0x30] sm:$0xff]
      %s4275 = scalar_lea.vmem %s4, 108
      %v4276 = vld [vmem:[%s4275] sm:$0x3]
      %s4277 = scalar_lea.vmem %s4, 114
      %v4278 = vld [vmem:[%s4277] sm:$0x3]
      %4279 = vrot.lane.b32.xlu0 %v579, 16
      %v4280 = vpop.permute.xlu0 %4279
      %4281 = vrot.lane.b32.xlu0 %v580, 16
      %v4282 = vpop.permute.xlu0 %4281
      %4283 = vrot.lane.b32.xlu0 %v581, 16
      %v4284 = vpop.permute.xlu0 %4283
      %4285 = vrot.lane.b32.xlu0 %v582, 16
      %v4286 = vpop.permute.xlu0 %4285
      %4287 = vrot.lane.b32.xlu0 %v583, 16
      %v4288 = vpop.permute.xlu0 %4287
      %4289 = vrot.lane.b32.xlu0 %v584, 16
      %v4290 = vpop.permute.xlu0 %4289
      %vm4291 = vcmask 130048
      %v4292 = vsel %vm4291, %v4280, %v4282
      %v4293 = vsel %vm4291, %v4282, %v4284
      %v4294 = vsel %vm4291, %v4286, %v4288
      %v4295 = vsel %vm4291, %v4288, %v4290
      %v4301 = vsel %vm606, %v4278, 0
      %4303 = vmatpush.bf16.msra.mxu0 0
      %4304 = vmatpush.bf16.msra.mxu0 0
      %4305 = vmatpush.bf16.msra.mxu0 0
      %4306 = vmatpush.bf16.msra.mxu0 0
      %4307 = vmatpush.bf16.msra.mxu0 0
      %4308 = vmatpush.bf16.msra.mxu0 0
      %4309 = vmatpush.bf16.msra.mxu0 %v4294
      %4310 = vmatpush.bf16.msra.mxu0 %v4292
      %4311 = vmatmul.bf16.gmra.mxu0 %v4301
      %v4312 = vpop.f32.mrf.mxu0
      %v4313 = vadd.f32 0.0, %v4312
      %v4314 = vpop.f32.mrf.mxu0
      %4315 = vdwg.mxu0
      %4316 = vmatpush.bf16.msra.mxu0 0
      %4317 = vmatpush.bf16.msra.mxu0 0
      %4318 = vmatpush.bf16.msra.mxu0 0
      %4319 = vmatpush.bf16.msra.mxu0 0
      %4320 = vmatpush.bf16.msra.mxu0 0
      %4321 = vmatpush.bf16.msra.mxu0 0
      %4322 = vmatpush.bf16.msra.mxu0 %v4295
      %4323 = vmatpush.bf16.msra.mxu0 %v4293
      %4324 = vmatmul.bf16.gmra.mxu0 %v4301
      %v4325 = vpop.f32.mrf.mxu0
      %v4326 = vadd.f32 0.0, %v4325
      %v4327 = vpop.f32.mrf.mxu0
      %4328 = vdwg.mxu0
      %v4333 = vunpack.c.l.b16 %v4271
      %v4334 = vunpack.c.h.b16 %v4271
      %v4335 = vunpack.c.l.b16 %v4272
      %v4336 = vunpack.c.h.b16 %v4272
      %v4337 = vunpack.c.l.b16 %v4273
      %v4338 = vunpack.c.h.b16 %v4273
      %v4339 = vunpack.c.l.b16 %v4274
      %v4340 = vunpack.c.h.b16 %v4274
      %v4341 = vpack.c.b16 %v4335, %v4333
      %v4342 = vpack.c.b16 %v4336, %v4334
      %v4343 = vpack.c.b16 %v4339, %v4337
      %v4344 = vpack.c.b16 %v4340, %v4338
      %v4350 = vsel %vm606, %v4276, 0
      %4352 = vmatpush.bf16.msra.mxu0 0
      %4353 = vmatpush.bf16.msra.mxu0 0
      %4354 = vmatpush.bf16.msra.mxu0 0
      %4355 = vmatpush.bf16.msra.mxu0 0
      %4356 = vmatpush.bf16.msra.mxu0 0
      %4357 = vmatpush.bf16.msra.mxu0 0
      %4358 = vmatpush.bf16.msra.mxu0 %v4343
      %4359 = vmatpush.bf16.msra.mxu0 %v4341
      %4360 = vmatmul.bf16.gmra.mxu0 %v4350
      %v4361 = vpop.f32.mrf.mxu0
      %v4362 = vadd.f32 %v4313, %v4361
      %v4363 = vpop.f32.mrf.mxu0
      %4364 = vdwg.mxu0
      %4365 = vmatpush.bf16.msra.mxu0 0
      %4366 = vmatpush.bf16.msra.mxu0 0
      %4367 = vmatpush.bf16.msra.mxu0 0
      %4368 = vmatpush.bf16.msra.mxu0 0
      %4369 = vmatpush.bf16.msra.mxu0 0
      %4370 = vmatpush.bf16.msra.mxu0 0
      %4371 = vmatpush.bf16.msra.mxu0 %v4344
      %4372 = vmatpush.bf16.msra.mxu0 %v4342
      %4373 = vmatmul.bf16.gmra.mxu0 %v4350
      %v4374 = vpop.f32.mrf.mxu0
      %v4375 = vadd.f32 %v4326, %v4374
      %v4376 = vpop.f32.mrf.mxu0
      %4377 = vdwg.mxu0
      %s4378 = scalar_lea.vmem %s4, 120
      %v4379 = vld [vmem:[%s4378] sm:$0x3]
      %4380 = vrot.lane.b32.xlu0 %v790, 32
      %v4381 = vpop.permute.xlu0 %4380
      %4382 = vrot.lane.b32.xlu0 %v791, 32
      %v4383 = vpop.permute.xlu0 %4382
      %4384 = vrot.lane.b32.xlu0 %v792, 32
      %v4385 = vpop.permute.xlu0 %4384
      %4386 = vrot.lane.b32.xlu0 %v793, 32
      %v4387 = vpop.permute.xlu0 %4386
      %4388 = vrot.lane.b32.xlu0 %v794, 32
      %v4389 = vpop.permute.xlu0 %4388
      %4390 = vrot.lane.b32.xlu0 %v795, 32
      %v4391 = vpop.permute.xlu0 %4390
      %vm4392 = vcmask 261120
      %v4393 = vsel %vm4392, %v4381, %v4383
      %v4394 = vsel %vm4392, %v4383, %v4385
      %v4395 = vsel %vm4392, %v4387, %v4389
      %v4396 = vsel %vm4392, %v4389, %v4391
      %v4402 = vsel %vm606, %v4379, 0
      %4404 = vmatpush.bf16.msra.mxu0 0
      %4405 = vmatpush.bf16.msra.mxu0 0
      %4406 = vmatpush.bf16.msra.mxu0 0
      %4407 = vmatpush.bf16.msra.mxu0 0
      %4408 = vmatpush.bf16.msra.mxu0 0
      %4409 = vmatpush.bf16.msra.mxu0 0
      %4410 = vmatpush.bf16.msra.mxu0 %v4395
      %4411 = vmatpush.bf16.msra.mxu0 %v4393
      %4412 = vmatmul.bf16.gmra.mxu0 %v4402
      %v4413 = vpop.f32.mrf.mxu0
      %v4414 = vadd.f32 0.0, %v4413
      %v4415 = vpop.f32.mrf.mxu0
      %4416 = vdwg.mxu0
      %4417 = vmatpush.bf16.msra.mxu0 0
      %4418 = vmatpush.bf16.msra.mxu0 0
      %4419 = vmatpush.bf16.msra.mxu0 0
      %4420 = vmatpush.bf16.msra.mxu0 0
      %4421 = vmatpush.bf16.msra.mxu0 0
      %4422 = vmatpush.bf16.msra.mxu0 0
      %4423 = vmatpush.bf16.msra.mxu0 %v4396
      %4424 = vmatpush.bf16.msra.mxu0 %v4394
      %4425 = vmatmul.bf16.gmra.mxu0 %v4402
      %v4426 = vpop.f32.mrf.mxu0
      %v4427 = vadd.f32 0.0, %v4426
      %v4428 = vpop.f32.mrf.mxu0
      %4429 = vdwg.mxu0
      %v4430 = vadd.f32 %v4362, %v4414
      %v4431 = vadd.f32 %v4375, %v4427
      %vm4432 = vcmp.ge.s32.totalorder %v556, 7
      %vm4433 = vcmp.ge.s32.totalorder %v557, 7
      %v4434 = vsel %vm4432, 1, 0
      %v4435 = vsel %vm4433, 1, 0
      %v4436 = vcvt.s32.f32 %v4434
      %v4437 = vcvt.s32.f32 %v4435
      %v4438 = vmul.f32 %v4430, %v4436
      %v4439 = vmul.f32 %v4431, %v4437
      %s4440 = scalar_lea.vmem %s4, 110
      %v4441 = vld [vmem:[%s4440] sm:$0x3]
      %s4442 = scalar_lea.vmem %s4, 116
      %v4443 = vld [vmem:[%s4442] sm:$0x3]
      %v4445 = vsel %vm606, %v4443, 0
      %4447 = vmatpush.bf16.msra.mxu0 0
      %4448 = vmatpush.bf16.msra.mxu0 0
      %4449 = vmatpush.bf16.msra.mxu0 0
      %4450 = vmatpush.bf16.msra.mxu0 0
      %4451 = vmatpush.bf16.msra.mxu0 0
      %4452 = vmatpush.bf16.msra.mxu0 0
      %4453 = vmatpush.bf16.msra.mxu0 %v600
      %4454 = vmatpush.bf16.msra.mxu0 %v598
      %4455 = vmatmul.bf16.gmra.mxu0 %v4445
      %v4456 = vpop.f32.mrf.mxu0
      %v4457 = vadd.f32 0.0, %v4456
      %v4458 = vpop.f32.mrf.mxu0
      %4459 = vdwg.mxu0
      %4460 = vmatpush.bf16.msra.mxu0 0
      %4461 = vmatpush.bf16.msra.mxu0 0
      %4462 = vmatpush.bf16.msra.mxu0 0
      %4463 = vmatpush.bf16.msra.mxu0 0
      %4464 = vmatpush.bf16.msra.mxu0 0
      %4465 = vmatpush.bf16.msra.mxu0 0
      %4466 = vmatpush.bf16.msra.mxu0 %v601
      %4467 = vmatpush.bf16.msra.mxu0 %v599
      %4468 = vmatmul.bf16.gmra.mxu0 %v4445
      %v4469 = vpop.f32.mrf.mxu0
      %v4470 = vadd.f32 0.0, %v4469
      %v4471 = vpop.f32.mrf.mxu0
      %4472 = vdwg.mxu0
      %4473 = vrot.lane.b32.xlu0 %v579, 121
      %v4474 = vpop.permute.xlu0 %4473
      %4475 = vrot.lane.b32.xlu0 %v580, 121
      %v4476 = vpop.permute.xlu0 %4475
      %4477 = vrot.lane.b32.xlu0 %v581, 121
      %v4478 = vpop.permute.xlu0 %4477
      %4479 = vrot.lane.b32.xlu0 %v582, 121
      %v4480 = vpop.permute.xlu0 %4479
      %4481 = vrot.lane.b32.xlu0 %v583, 121
      %v4482 = vpop.permute.xlu0 %4481
      %4483 = vrot.lane.b32.xlu0 %v584, 121
      %v4484 = vpop.permute.xlu0 %4483
      %v4485 = vsel %vm953, %v4474, %v4476
      %v4486 = vsel %vm953, %v4476, %v4478
      %v4487 = vsel %vm953, %v4480, %v4482
      %v4488 = vsel %vm953, %v4482, %v4484
      %v4494 = vsel %vm606, %v4441, 0
      %4496 = vmatpush.bf16.msra.mxu0 0
      %4497 = vmatpush.bf16.msra.mxu0 0
      %4498 = vmatpush.bf16.msra.mxu0 0
      %4499 = vmatpush.bf16.msra.mxu0 0
      %4500 = vmatpush.bf16.msra.mxu0 0
      %4501 = vmatpush.bf16.msra.mxu0 0
      %4502 = vmatpush.bf16.msra.mxu0 %v4487
      %4503 = vmatpush.bf16.msra.mxu0 %v4485
      %4504 = vmatmul.bf16.gmra.mxu0 %v4494
      %v4505 = vpop.f32.mrf.mxu0
      %v4506 = vadd.f32 %v4457, %v4505
      %v4507 = vpop.f32.mrf.mxu0
      %4508 = vdwg.mxu0
      %4509 = vmatpush.bf16.msra.mxu0 0
      %4510 = vmatpush.bf16.msra.mxu0 0
      %4511 = vmatpush.bf16.msra.mxu0 0
      %4512 = vmatpush.bf16.msra.mxu0 0
      %4513 = vmatpush.bf16.msra.mxu0 0
      %4514 = vmatpush.bf16.msra.mxu0 0
      %4515 = vmatpush.bf16.msra.mxu0 %v4488
      %4516 = vmatpush.bf16.msra.mxu0 %v4486
      %4517 = vmatmul.bf16.gmra.mxu0 %v4494
      %v4518 = vpop.f32.mrf.mxu0
      %v4519 = vadd.f32 %v4470, %v4518
      %v4520 = vpop.f32.mrf.mxu0
      %4521 = vdwg.mxu0
      %s4522 = scalar_lea.vmem %s4, 122
      %v4523 = vld [vmem:[%s4522] sm:$0x3]
      %4524 = vrot.lane.b32.xlu0 %v790, 25
      %v4525 = vpop.permute.xlu0 %4524
      %4526 = vrot.lane.b32.xlu0 %v791, 25
      %v4527 = vpop.permute.xlu0 %4526
      %4528 = vrot.lane.b32.xlu0 %v792, 25
      %v4529 = vpop.permute.xlu0 %4528
      %4530 = vrot.lane.b32.xlu0 %v793, 25
      %v4531 = vpop.permute.xlu0 %4530
      %4532 = vrot.lane.b32.xlu0 %v794, 25
      %v4533 = vpop.permute.xlu0 %4532
      %4534 = vrot.lane.b32.xlu0 %v795, 25
      %v4535 = vpop.permute.xlu0 %4534
      %v4536 = vsel %vm901, %v4525, %v4527
      %v4537 = vsel %vm901, %v4527, %v4529
      %v4538 = vsel %vm901, %v4531, %v4533
      %v4539 = vsel %vm901, %v4533, %v4535
      %v4545 = vsel %vm606, %v4523, 0
      %4547 = vmatpush.bf16.msra.mxu0 0
      %4548 = vmatpush.bf16.msra.mxu0 0
      %4549 = vmatpush.bf16.msra.mxu0 0
      %4550 = vmatpush.bf16.msra.mxu0 0
      %4551 = vmatpush.bf16.msra.mxu0 0
      %4552 = vmatpush.bf16.msra.mxu0 0
      %4553 = vmatpush.bf16.msra.mxu0 %v4538
      %4554 = vmatpush.bf16.msra.mxu0 %v4536
      %4555 = vmatmul.bf16.gmra.mxu0 %v4545
      %v4556 = vpop.f32.mrf.mxu0
      %v4557 = vadd.f32 0.0, %v4556
      %v4558 = vpop.f32.mrf.mxu0
      %4559 = vdwg.mxu0
      %4560 = vmatpush.bf16.msra.mxu0 0
      %4561 = vmatpush.bf16.msra.mxu0 0
      %4562 = vmatpush.bf16.msra.mxu0 0
      %4563 = vmatpush.bf16.msra.mxu0 0
      %4564 = vmatpush.bf16.msra.mxu0 0
      %4565 = vmatpush.bf16.msra.mxu0 0
      %4566 = vmatpush.bf16.msra.mxu0 %v4539
      %4567 = vmatpush.bf16.msra.mxu0 %v4537
      %4568 = vmatmul.bf16.gmra.mxu0 %v4545
      %v4569 = vpop.f32.mrf.mxu0
      %v4570 = vadd.f32 0.0, %v4569
      %v4571 = vpop.f32.mrf.mxu0
      %4572 = vdwg.mxu0
      %v4573 = vadd.f32 %v4506, %v4557
      %v4574 = vadd.f32 %v4519, %v4570
      %v4575 = vadd.f32 %v4438, %v4573
      %v4576 = vadd.f32 %v4439, %v4574
      %s4577 = scalar_lea.vmem %s4, 112
      %v4578 = vld [vmem:[%s4577] sm:$0x3]
      %s4579 = scalar_lea.vmem %s4, 118
      %v4580 = vld [vmem:[%s4579] sm:$0x3]
      %4581 = vrot.lane.b32.xlu0 %v579, 2
      %v4582 = vpop.permute.xlu0 %4581
      %4583 = vrot.lane.b32.xlu0 %v580, 2
      %v4584 = vpop.permute.xlu0 %4583
      %4585 = vrot.lane.b32.xlu0 %v581, 2
      %v4586 = vpop.permute.xlu0 %4585
      %4587 = vrot.lane.b32.xlu0 %v582, 2
      %v4588 = vpop.permute.xlu0 %4587
      %4589 = vrot.lane.b32.xlu0 %v583, 2
      %v4590 = vpop.permute.xlu0 %4589
      %4591 = vrot.lane.b32.xlu0 %v584, 2
      %v4592 = vpop.permute.xlu0 %4591
      %vm4593 = vcmask 15360
      %v4594 = vsel %vm4593, %v4582, %v4584
      %v4595 = vsel %vm4593, %v4584, %v4586
      %v4596 = vsel %vm4593, %v4588, %v4590
      %v4597 = vsel %vm4593, %v4590, %v4592
      %v4603 = vsel %vm606, %v4580, 0
      %4605 = vmatpush.bf16.msra.mxu0 0
      %4606 = vmatpush.bf16.msra.mxu0 0
      %4607 = vmatpush.bf16.msra.mxu0 0
      %4608 = vmatpush.bf16.msra.mxu0 0
      %4609 = vmatpush.bf16.msra.mxu0 0
      %4610 = vmatpush.bf16.msra.mxu0 0
      %4611 = vmatpush.bf16.msra.mxu0 %v4596
      %4612 = vmatpush.bf16.msra.mxu0 %v4594
      %4613 = vmatmul.bf16.gmra.mxu0 %v4603
      %v4614 = vpop.f32.mrf.mxu0
      %v4615 = vadd.f32 0.0, %v4614
      %v4616 = vpop.f32.mrf.mxu0
      %4617 = vdwg.mxu0
      %4618 = vmatpush.bf16.msra.mxu0 0
      %4619 = vmatpush.bf16.msra.mxu0 0
      %4620 = vmatpush.bf16.msra.mxu0 0
      %4621 = vmatpush.bf16.msra.mxu0 0
      %4622 = vmatpush.bf16.msra.mxu0 0
      %4623 = vmatpush.bf16.msra.mxu0 0
      %4624 = vmatpush.bf16.msra.mxu0 %v4597
      %4625 = vmatpush.bf16.msra.mxu0 %v4595
      %4626 = vmatmul.bf16.gmra.mxu0 %v4603
      %v4627 = vpop.f32.mrf.mxu0
      %v4628 = vadd.f32 0.0, %v4627
      %v4629 = vpop.f32.mrf.mxu0
      %4630 = vdwg.mxu0
      %4631 = vrot.lane.b32.xlu0 %v579, 114
      %v4632 = vpop.permute.xlu0 %4631
      %4633 = vrot.lane.b32.xlu0 %v580, 114
      %v4634 = vpop.permute.xlu0 %4633
      %4635 = vrot.lane.b32.xlu0 %v581, 114
      %v4636 = vpop.permute.xlu0 %4635
      %4637 = vrot.lane.b32.xlu0 %v582, 114
      %v4638 = vpop.permute.xlu0 %4637
      %4639 = vrot.lane.b32.xlu0 %v583, 114
      %v4640 = vpop.permute.xlu0 %4639
      %4641 = vrot.lane.b32.xlu0 %v584, 114
      %v4642 = vpop.permute.xlu0 %4641
      %vm4643 = vcmask 932864
      %v4644 = vsel %vm4643, %v4632, %v4634
      %v4645 = vsel %vm4643, %v4634, %v4636
      %v4646 = vsel %vm4643, %v4638, %v4640
      %v4647 = vsel %vm4643, %v4640, %v4642
      %v4653 = vsel %vm606, %v4578, 0
      %4655 = vmatpush.bf16.msra.mxu0 0
      %4656 = vmatpush.bf16.msra.mxu0 0
      %4657 = vmatpush.bf16.msra.mxu0 0
      %4658 = vmatpush.bf16.msra.mxu0 0
      %4659 = vmatpush.bf16.msra.mxu0 0
      %4660 = vmatpush.bf16.msra.mxu0 0
      %4661 = vmatpush.bf16.msra.mxu0 %v4646
      %4662 = vmatpush.bf16.msra.mxu0 %v4644
      %4663 = vmatmul.bf16.gmra.mxu0 %v4653
      %v4664 = vpop.f32.mrf.mxu0
      %v4665 = vadd.f32 %v4615, %v4664
      %v4666 = vpop.f32.mrf.mxu0
      %4667 = vdwg.mxu0
      %4668 = vmatpush.bf16.msra.mxu0 0
      %4669 = vmatpush.bf16.msra.mxu0 0
      %4670 = vmatpush.bf16.msra.mxu0 0
      %4671 = vmatpush.bf16.msra.mxu0 0
      %4672 = vmatpush.bf16.msra.mxu0 0
      %4673 = vmatpush.bf16.msra.mxu0 0
      %4674 = vmatpush.bf16.msra.mxu0 %v4647
      %4675 = vmatpush.bf16.msra.mxu0 %v4645
      %4676 = vmatmul.bf16.gmra.mxu0 %v4653
      %v4677 = vpop.f32.mrf.mxu0
      %v4678 = vadd.f32 %v4628, %v4677
      %v4679 = vpop.f32.mrf.mxu0
      %4680 = vdwg.mxu0
      %s4681 = scalar_lea.vmem %s4, 124
      %v4682 = vld [vmem:[%s4681] sm:$0x3]
      %4683 = vrot.lane.b32.xlu0 %v790, 18
      %v4684 = vpop.permute.xlu0 %4683
      %4685 = vrot.lane.b32.xlu0 %v791, 18
      %v4686 = vpop.permute.xlu0 %4685
      %4687 = vrot.lane.b32.xlu0 %v792, 18
      %v4688 = vpop.permute.xlu0 %4687
      %4689 = vrot.lane.b32.xlu0 %v793, 18
      %v4690 = vpop.permute.xlu0 %4689
      %4691 = vrot.lane.b32.xlu0 %v794, 18
      %v4692 = vpop.permute.xlu0 %4691
      %4693 = vrot.lane.b32.xlu0 %v795, 18
      %v4694 = vpop.permute.xlu0 %4693
      %vm4695 = vcmask 146432
      %v4696 = vsel %vm4695, %v4684, %v4686
      %v4697 = vsel %vm4695, %v4686, %v4688
      %v4698 = vsel %vm4695, %v4690, %v4692
      %v4699 = vsel %vm4695, %v4692, %v4694
      %v4705 = vsel %vm606, %v4682, 0
      %4707 = vmatpush.bf16.msra.mxu0 0
      %4708 = vmatpush.bf16.msra.mxu0 0
      %4709 = vmatpush.bf16.msra.mxu0 0
      %4710 = vmatpush.bf16.msra.mxu0 0
      %4711 = vmatpush.bf16.msra.mxu0 0
      %4712 = vmatpush.bf16.msra.mxu0 0
      %4713 = vmatpush.bf16.msra.mxu0 %v4698
      %4714 = vmatpush.bf16.msra.mxu0 %v4696
      %4715 = vmatmul.bf16.gmra.mxu0 %v4705
      %v4716 = vpop.f32.mrf.mxu0
      %v4717 = vadd.f32 0.0, %v4716
      %v4718 = vpop.f32.mrf.mxu0
      %4719 = vdwg.mxu0
      %4720 = vmatpush.bf16.msra.mxu0 0
      %4721 = vmatpush.bf16.msra.mxu0 0
      %4722 = vmatpush.bf16.msra.mxu0 0
      %4723 = vmatpush.bf16.msra.mxu0 0
      %4724 = vmatpush.bf16.msra.mxu0 0
      %4725 = vmatpush.bf16.msra.mxu0 0
      %4726 = vmatpush.bf16.msra.mxu0 %v4699
      %4727 = vmatpush.bf16.msra.mxu0 %v4697
      %4728 = vmatmul.bf16.gmra.mxu0 %v4705
      %v4729 = vpop.f32.mrf.mxu0
      %v4730 = vadd.f32 0.0, %v4729
      %v4731 = vpop.f32.mrf.mxu0
      %4732 = vdwg.mxu0
      %v4733 = vadd.f32 %v4665, %v4717
      %v4734 = vadd.f32 %v4678, %v4730
      %vm4735 = vcmp.lt.s32.totalorder %v556, 9
      %vm4736 = vcmp.lt.s32.totalorder %v557, 9
      %v4737 = vsel %vm4735, 1, 0
      %v4738 = vsel %vm4736, 1, 0
      %v4739 = vcvt.s32.f32 %v4737
      %v4740 = vcvt.s32.f32 %v4738
      %v4741 = vmul.f32 %v4733, %v4739
      %v4742 = vmul.f32 %v4734, %v4740
      %v4743 = vadd.f32 %v4575, %v4741
      %v4744 = vadd.f32 %v4576, %v4742
      %s4745 = scalar_lea.vmem %s5, 24
      %v4746 = vld [vmem:[%s4745] sm:$0xf]
      %s4747 = scalar_lea.vmem %s6, 24
      %v4748 = vld [vmem:[%s4747] sm:$0xf]
      %4750 = vset.pattern.permute.xlu0 0
      %4751 = vperm.xlu0 %4750, %v4746
      %v4752 = vpop.permute.xlu0 %4751
      %v4754 = vmul.f32 %v4743, %v4752
      %v4755 = vmul.f32 %v4744, %v4752
      %4757 = vset.pattern.permute.xlu0 0
      %4758 = vperm.xlu0 %4757, %v4748
      %v4759 = vpop.permute.xlu0 %4758
      %v4761 = vadd.f32 %v4754, %v4759
      %v4762 = vadd.f32 %v4755, %v4759
      %v4763 = vmax.f32 %v4761, 0.0
      %v4764 = vmax.f32 %v4762, 0.0
      %v4765 = vpack.c.bf16 %v4763, %v4763
      %v4766 = vpack.c.bf16 %v4764, %v4764
      %s4767 = scalar_lea.vmem %s7, 12
      %v4768 = vld [vmem:[%s4767] sm:$0x3]
      %v4770 = vsel %vm1184, %v4768, 0
      %v4773 = vsel %vm1188, %v4765, 0
      %v4776 = vsel %vm1188, %v4766, 0
      %4778 = vmatpush.bf16.msra.mxu0 0
      %4779 = vmatpush.bf16.msra.mxu0 0
      %4780 = vmatpush.bf16.msra.mxu0 0
      %4781 = vmatpush.bf16.msra.mxu0 0
      %4782 = vmatpush.bf16.msra.mxu0 0
      %4783 = vmatpush.bf16.msra.mxu0 0
      %4784 = vmatpush.bf16.msra.mxu0 0
      %4785 = vmatpush.bf16.msra.mxu0 %v4773
      %4786 = vmatmul.bf16.gmra.mxu0 %v4770
      %v4787 = vpop.f32.mrf.mxu0
      %v4788 = vadd.f32 0.0, %v4787
      %v4789 = vpop.f32.mrf.mxu0
      %4790 = vdwg.mxu0
      %4791 = vmatpush.bf16.msra.mxu0 0
      %4792 = vmatpush.bf16.msra.mxu0 0
      %4793 = vmatpush.bf16.msra.mxu0 0
      %4794 = vmatpush.bf16.msra.mxu0 0
      %4795 = vmatpush.bf16.msra.mxu0 0
      %4796 = vmatpush.bf16.msra.mxu0 0
      %4797 = vmatpush.bf16.msra.mxu0 0
      %4798 = vmatpush.bf16.msra.mxu0 %v4776
      %4799 = vmatmul.bf16.gmra.mxu0 %v4770
      %v4800 = vpop.f32.mrf.mxu0
      %v4801 = vadd.f32 0.0, %v4800
      %v4802 = vpop.f32.mrf.mxu0
      %4803 = vdwg.mxu0
      %s4804 = scalar_lea.vmem %s8, 24
      %v4805 = vld [vmem:[%s4804] sm:$0xf]
      %s4806 = scalar_lea.vmem %s9, 24
      %v4807 = vld [vmem:[%s4806] sm:$0xf]
      %4809 = vset.pattern.permute.xlu0 0
      %4810 = vperm.xlu0 %4809, %v4805
      %v4811 = vpop.permute.xlu0 %4810
      %v4813 = vmul.f32 %v4788, %v4811
      %v4814 = vmul.f32 %v4801, %v4811
      %4816 = vset.pattern.permute.xlu0 0
      %4817 = vperm.xlu0 %4816, %v4807
      %v4818 = vpop.permute.xlu0 %4817
      %v4820 = vadd.f32 %v4813, %v4818
      %v4821 = vadd.f32 %v4814, %v4818
      %v4822 = vmax.f32 %v4820, 0.0
      %v4823 = vmax.f32 %v4821, 0.0
      %v4824 = vpack.c.bf16 %v4822, %v4822
      %v4825 = vpack.c.bf16 %v4823, %v4823
      %s4826 = scalar_lea.vmem %s13, 14
      %v4827 = vld [vmem:[%s4826] sm:$0x3]
      %v4829 = vsel %vm1184, %v4827, 0
      %v4832 = vsel %vm1188, %v4824, 0
      %v4835 = vsel %vm1188, %v4825, 0
      %4837 = vmatpush.bf16.msra.mxu0 0
      %4838 = vmatpush.bf16.msra.mxu0 0
      %4839 = vmatpush.bf16.msra.mxu0 0
      %4840 = vmatpush.bf16.msra.mxu0 0
      %4841 = vmatpush.bf16.msra.mxu0 0
      %4842 = vmatpush.bf16.msra.mxu0 0
      %4843 = vmatpush.bf16.msra.mxu0 0
      %4844 = vmatpush.bf16.msra.mxu0 %v4832
      %4845 = vmatmul.bf16.gmra.mxu0 %v4829
      %v4846 = vpop.f32.mrf.mxu0
      %v4847 = vadd.f32 0.0, %v4846
      %v4848 = vpop.f32.mrf.mxu0
      %4849 = vdwg.mxu0
      %4850 = vmatpush.bf16.msra.mxu0 0
      %4851 = vmatpush.bf16.msra.mxu0 0
      %4852 = vmatpush.bf16.msra.mxu0 0
      %4853 = vmatpush.bf16.msra.mxu0 0
      %4854 = vmatpush.bf16.msra.mxu0 0
      %4855 = vmatpush.bf16.msra.mxu0 0
      %4856 = vmatpush.bf16.msra.mxu0 0
      %4857 = vmatpush.bf16.msra.mxu0 %v4835
      %4858 = vmatmul.bf16.gmra.mxu0 %v4829
      %v4859 = vpop.f32.mrf.mxu0
      %v4860 = vadd.f32 0.0, %v4859
      %v4861 = vpop.f32.mrf.mxu0
      %4862 = vdwg.mxu0
      %v4863 = vadd.f32 %v4269, %v4847
      %v4864 = vadd.f32 %v4270, %v4860
      %v4865 = vunpack.c.l.bf16 %v523
      %v4866 = vunpack.c.h.bf16 %v523
      %v4867 = vunpack.c.l.bf16 %v524
      %v4868 = vunpack.c.l.bf16 %v525
      %v4869 = vunpack.c.h.bf16 %v525
      %v4870 = vunpack.c.l.bf16 %v526
      %v4871 = vunpack.c.l.bf16 %v527
      %v4872 = vunpack.c.h.bf16 %v527
      %v4873 = vunpack.c.l.bf16 %v528
      %v4874 = vunpack.c.l.bf16 %v529
      %v4875 = vunpack.c.h.bf16 %v529
      %v4876 = vunpack.c.l.bf16 %v530
      %4889 = vrot.lane.b32.xlu0 %v4865, 9
      %v4890 = vpop.permute.xlu0 %4889
      %4891 = vrot.lane.b32.xlu0 %v4866, 9
      %v4892 = vpop.permute.xlu0 %4891
      %4893 = vrot.lane.b32.xlu0 %v4867, 9
      %v4894 = vpop.permute.xlu0 %4893
      %4895 = vrot.lane.b32.xlu0 %v4868, 9
      %v4896 = vpop.permute.xlu0 %4895
      %4897 = vrot.lane.b32.xlu0 %v4869, 9
      %v4898 = vpop.permute.xlu0 %4897
      %4899 = vrot.lane.b32.xlu0 %v4870, 9
      %v4900 = vpop.permute.xlu0 %4899
      %4901 = vrot.lane.b32.xlu0 %v4871, 9
      %v4902 = vpop.permute.xlu0 %4901
      %4903 = vrot.lane.b32.xlu0 %v4872, 9
      %v4904 = vpop.permute.xlu0 %4903
      %4905 = vrot.lane.b32.xlu0 %v4873, 9
      %v4906 = vpop.permute.xlu0 %4905
      %4907 = vrot.lane.b32.xlu0 %v4874, 9
      %v4908 = vpop.permute.xlu0 %4907
      %4909 = vrot.lane.b32.xlu0 %v4875, 9
      %v4910 = vpop.permute.xlu0 %4909
      %4911 = vrot.lane.b32.xlu0 %v4876, 9
      %v4912 = vpop.permute.xlu0 %4911
      %vm4913 = vcmask 72704
      %v4914 = vsel %vm4913, %v4890, %v4892
      %v4915 = vsel %vm4913, %v4892, %v4894
      %v4916 = vsel %vm4913, %v4896, %v4898
      %v4917 = vsel %vm4913, %v4898, %v4900
      %v4918 = vsel %vm4913, %v4902, %v4904
      %v4919 = vsel %vm4913, %v4904, %v4906
      %v4920 = vsel %vm4913, %v4908, %v4910
      %v4921 = vsel %vm4913, %v4910, %v4912
      %v4930 = vadd.f32 %v4914, %v4915
      %4931 = vadd.xlane.f32.xlu0 %v4930
      %v4932 = vpop.xlane.xlu0 %4931
      %v4933 = vadd.f32 %v4916, %v4917
      %4934 = vadd.xlane.f32.xlu0 %v4933
      %v4935 = vpop.xlane.xlu0 %4934
      %v4936 = vadd.f32 %v4918, %v4919
      %4937 = vadd.xlane.f32.xlu0 %v4936
      %v4938 = vpop.xlane.xlu0 %4937
      %v4939 = vadd.f32 %v4920, %v4921
      %4940 = vadd.xlane.f32.xlu0 %v4939
      %v4941 = vpop.xlane.xlu0 %4940
      %v4942 = vrcp.pop 256.0
      %v4943 = vmul.f32 256.0, %v4942
      %v4944 = vsub.f32 1.0, %v4943
      %v4945 = vmul.f32 %v4942, %v4944
      %v4946 = vadd.f32 %v4942, %v4945
      %vm4947 = vweird.f32 %v4942
      %v4948 = vsel %vm4947, %v4942, %v4946
      %v4949 = vmul.f32 %v4932, %v4948
      %v4950 = vmul.f32 %v4935, %v4948
      %v4951 = vmul.f32 %v4938, %v4948
      %v4952 = vmul.f32 %v4941, %v4948
      %v4953 = vpack.c.bf16 %v4950, %v4949
      %v4954 = vpack.c.bf16 %v4952, %v4951
      %v4955 = vld [vmem:[%s10] sm:$0x3]
      %v4957 = vsel %vm606, %v4955, 0
      %4959 = vmatpush.bf16.msra.mxu0 0
      %4960 = vmatpush.bf16.msra.mxu0 0
      %4961 = vmatpush.bf16.msra.mxu0 0
      %4962 = vmatpush.bf16.msra.mxu0 0
      %4963 = vmatpush.bf16.msra.mxu0 0
      %4964 = vmatpush.bf16.msra.mxu0 0
      %4965 = vmatpush.bf16.msra.mxu0 %v4954
      %4966 = vmatpush.bf16.msra.mxu0 %v4953
      %4967 = vmatmul.bf16.gmra.mxu0 %v4957
      %v4968 = vpop.f32.mrf.mxu0
      %v4969 = vadd.f32 0.0, %v4968
      %v4970 = vpop.f32.mrf.mxu0
      %4971 = vdwg.mxu0
      %v4972 = vld [vmem:[%s11] sm:$0xf]
      %v4973 = vld [vmem:[%s12] sm:$0xf]
      %v4974 = vmul.f32 %v4969, %v4972
      %v4975 = vadd.f32 %v4974, %v4973
      %v4976 = vmax.f32 %v4975, 0.0
      %v4977 = vpack.c.bf16 %v4976, %v4976
      %s4978 = scalar_lea.vmem %s13, 16
      %v4979 = vld [vmem:[%s4978] sm:$0x3]
      %v4981 = vsel %vm1184, %v4979, 0
      %v4984 = vsel %vm1188, %v4977, 0
      %4986 = vmatpush.bf16.msra.mxu0 0
      %4987 = vmatpush.bf16.msra.mxu0 0
      %4988 = vmatpush.bf16.msra.mxu0 0
      %4989 = vmatpush.bf16.msra.mxu0 0
      %4990 = vmatpush.bf16.msra.mxu0 0
      %4991 = vmatpush.bf16.msra.mxu0 0
      %4992 = vmatpush.bf16.msra.mxu0 0
      %4993 = vmatpush.bf16.msra.mxu0 %v4984
      %4994 = vmatmul.bf16.gmra.mxu0 %v4981
      %v4995 = vpop.f32.mrf.mxu0
      %v4996 = vadd.f32 0.0, %v4995
      %v4997 = vpop.f32.mrf.mxu0
      %4998 = vdwg.mxu0
      %5000 = vset.pattern.permute.xlu0 0
      %5001 = vperm.xlu0 %5000, %v4996
      %v5002 = vpop.permute.xlu0 %5001
      %v5004 = vadd.f32 %v4863, %v5002
      %v5005 = vadd.f32 %v4864, %v5002
      %v5006 = vld [vmem:[%s14] sm:$0xf]
      %5008 = vset.pattern.permute.xlu0 0
      %5009 = vperm.xlu0 %5008, %v5006
      %v5010 = vpop.permute.xlu0 %5009
      %v5012 = vmul.f32 %v5004, %v5010
      %v5013 = vmul.f32 %v5005, %v5010
      %v5014 = vld [vmem:[%s15] sm:$0xf]
      %5016 = vset.pattern.permute.xlu0 0
      %5017 = vperm.xlu0 %5016, %v5014
      %v5018 = vpop.permute.xlu0 %5017
      %v5020 = vadd.f32 %v5012, %v5018
      %v5021 = vadd.f32 %v5013, %v5018
      %v5022 = vmax.f32 %v5020, 0.0
      %v5023 = vmax.f32 %v5021, 0.0
      %v5026 = vrot.slane %v5023, 4
      %vm5027 = vcmask 1043456
      %v5028 = vsel %vm5027, %v5022, %v5026
      %5030 = vst [vmem:[%s521] sm:$0xff] %v5028
      %p5031 = scmp.lt.s32.totalorder %s27, 1
      %s5032 = scalar_select %p5031, %s27, 1
      %s5033 = smul.addr %s5032, 2
      %s5034 = smul.addr %s5033, 4
      %s5035 = scalar_lea.vmem %s16, %s5034
      // Predicated region
      $region85: #{_lambda_.1} parent=83 // pred_check
        %p5036 = pneg %p386
      $region86: #{_lambda_.1} parent=83 // pred_check_branch
        %5038 = sbr.rel (%p5036) target = $region88
      $region87: #{_lambda_.1} parent=83 // pred_region
        _
      $region88: #{_lambda_.1} parent=83 // pred_fallthru
        _
    $region84: #{_lambda_.1} parent=5 // pred_fallthru
      _
    %p5039 = scmp.le.s32.totalorder 2, %s22
    // Predicated region
    $region89: #{_lambda_.1} parent=5 // pred_check
      %p5040 = pneg %p5039
    $region90: #{_lambda_.1} parent=5 // pred_check_branch
      %5042 = sbr.rel (%p5040) target = $region92
    $region91: #{_lambda_.1} parent=5 // pred_region
      %s5043 = ssub.s32 %s22, 2
      // Predicated region
      $region93: #{_lambda_.1} parent=91 // pred_check
        %p5044 = pneg %p392
      $region94: #{_lambda_.1} parent=91 // pred_check_branch
        %5046 = sbr.rel (%p5044) target = $region96
      $region95: #{_lambda_.1} parent=91 // pred_region
        %p5047 = scmp.lt.s32.totalorder %s28, 1
        %s5048 = scalar_select %p5047, %s28, 1
        %s5049 = smul.addr %s5048, 2
        %s5050 = smul.addr %s5049, 4
        %s5051 = scalar_lea.vmem %s16, %s5050
      $region96: #{_lambda_.1} parent=91 // pred_fallthru
        _
    $region92: #{_lambda_.1} parent=5 // pred_fallthru
      _
  $region6: #{_lambda_.1} parent=0 // loop_footer
    %s26 = sadd.s32 1, %s22
  $region7: #{_lambda_.1} parent=0 // loop_footer_branch
    %21 = sbr.rel target = $region3
  $region8: #{_lambda_.1} parent=0 // loop_exit
    _

</llo_original>
